<compile_context>
chip_gen: v6e
topology: v6e:2x2x1
jax: 0.10.0
libtpu: 0.0.40
codegen_flags: <defaults>
</compile_context>

<pallas_src>
import numpy as np

import jax
import jax.numpy as jnp
from jax.experimental import pallas as pl
from jax.experimental.pallas import tpu as pltpu

D = 256          # embed_dim_in == embed_dim_out == GCN width == layer_norm width
PIXELS = 10      # AdaptiveAvgPool2d output size
P2 = PIXELS * PIXELS
LN_EPS = 1e-5    # F.layer_norm default eps


# ---------------------------------------------------------------------------
# Kernel A: per-sample fused projection + softmax centers + adaptive pooling
#   student: proj = feats_c^T @ W + b ; centers_c = p_pix_c @ proj ; pool_c = Pkron @ proj
#   teacher: centers_t / pool_t directly off raw feats_t (no projection)
# Features arrive channel-major (D, HW): the HW axis is contracted in-kernel,
# so no HBM transposes are needed.  All outputs are bf16 (consumed as bf16).
# ---------------------------------------------------------------------------
def _centers_pool_kernel(prob_c_ref, prob_t_ref, feats_c_ref, feats_t_ref,
                         w_ref, b_ref, pk_ref,
                         cen_c_ref, cen_t_ref, pool_c_ref, pool_t_ref):
    pk = pk_ref[...].astype(jnp.bfloat16)                       # (100, HW)

    # ---- student (projected features) ----
    pc = jax.nn.softmax(prob_c_ref[0], axis=0)                  # softmax over classes
    pc = jax.nn.softmax(pc, axis=-1).astype(jnp.bfloat16)       # softmax over pixels
    fc = feats_c_ref[0].astype(jnp.bfloat16)                    # (D, HW)
    proj = jax.lax.dot_general(fc, w_ref[...],                  # (HW, D): feats^T @ W
                               (((0,), (0,)), ((), ())),
                               preferred_element_type=jnp.float32)
    proj = (proj + b_ref[...]).astype(jnp.bfloat16)
    cen_c_ref[0] = jnp.dot(pc, proj,
                           preferred_element_type=jnp.float32).astype(jnp.bfloat16)
    pool_c_ref[0] = jnp.dot(pk, proj,
                            preferred_element_type=jnp.float32).astype(jnp.bfloat16)

    # ---- teacher (raw features, contract HW axis directly) ----
    pt = jax.nn.softmax(prob_t_ref[0], axis=0)
    pt = jax.nn.softmax(pt, axis=-1).astype(jnp.bfloat16)
    ft = feats_t_ref[0].astype(jnp.bfloat16)                    # (D, HW)
    cen_t_ref[0] = jax.lax.dot_general(
        pt, ft, (((1,), (1,)), ((), ())),
        preferred_element_type=jnp.float32).astype(jnp.bfloat16)
    pool_t_ref[0] = jax.lax.dot_general(
        pk, ft, (((1,), (1,)), ((), ())),
        preferred_element_type=jnp.float32).astype(jnp.bfloat16)


# ---------------------------------------------------------------------------
# Kernel B: per-class C2N graph (student + teacher) + fused layernorm-MSE
#           + C2C graph/MSE tail at the last class.  Single SMEM scalar output.
# ---------------------------------------------------------------------------
def _graph_kernel(pool_c_ref, pool_t_ref, cen_c_ref, cen_t_ref,
                  wcn_ref, bcn_ref, wcc_ref, bcc_ref,
                  loss_ref,
                  xc_scr, xt_scr, abs_c_scr, abs_t_scr, acc_scr):
    i = pl.program_id(0)
    S = pool_c_ref.shape[0]            # B * 100 shared pooled rows
    B = cen_c_ref.shape[1]             # real center rows per class
    N_pad, Dd = xc_scr.shape           # padded graph size (multiple of 8)
    B_pad = N_pad - S
    N_real = S + B
    C = abs_c_scr.shape[0] // B_pad    # number of classes (== grid size)

    @pl.when(i == 0)
    def _init():
        # shared pooled rows written once; pad rows zeroed once (class axis is
        # "arbitrary" so these VMEM scratches persist across grid steps)
        xc_scr[pl.ds(0, S), :] = pool_c_ref[...]
        xt_scr[pl.ds(0, S), :] = pool_t_ref[...]
        pad0 = jnp.zeros((B_pad, Dd), jnp.bfloat16)
        xc_scr[pl.ds(S, B_pad), :] = pad0
        xt_scr[pl.ds(S, B_pad), :] = pad0
        acc_scr[0] = jnp.float32(0.0)
        loss_ref[0, 0] = jnp.float32(0.0)

    # only the B per-class center rows change each step
    xc_scr[pl.ds(S, B), :] = cen_c_ref[0]
    xt_scr[pl.ds(S, B), :] = cen_t_ref[0]

    def gcn_layernorm(x, w, b, col_mask):
        # Kipf GCN: out = softmax(x x^T) @ (x W) + b ; then affine-free layernorm
        logits = jax.lax.dot_general(x, x, (((1,), (1,)), ((), ())),
                                     preferred_element_type=jnp.float32)
        logits = jnp.where(col_mask, logits, -jnp.inf)          # mask padded columns
        adj = jax.nn.softmax(logits, axis=-1)
        support = jnp.dot(x, w,
                          preferred_element_type=jnp.float32).astype(jnp.bfloat16)
        out = jnp.dot(adj.astype(jnp.bfloat16), support,
                      preferred_element_type=jnp.float32) + b
        mu = jnp.mean(out, axis=-1, keepdims=True)
        var = jnp.mean((out - mu) ** 2, axis=-1, keepdims=True)
        ln = (out - mu) * jax.lax.rsqrt(var + LN_EPS)
        return out, ln

    cmask = jax.lax.broadcasted_iota(jnp.int32, (N_pad, N_pad), 1) < N_real
    out_c, ln_c = gcn_layernorm(xc_scr[...], wcn_ref[...], bcn_ref[...], cmask)
    out_t, ln_t = gcn_layernorm(xt_scr[...], wcn_ref[...], bcn_ref[...], cmask)

    # fused MSE partial: only real rows contribute
    rmask = jax.lax.broadcasted_iota(jnp.int32, (N_pad, 1), 0) < N_real
    diff = jnp.where(rmask, ln_c - ln_t, 0.0)
    acc_scr[0] += jnp.sum(diff * diff)

    # stash the (padded) per-class center rows of the pre-layernorm abstract
    off = pl.multiple_of(i * B_pad, B_pad)
    abs_c_scr[pl.ds(off, B_pad), :] = out_c[S:, :]
    abs_t_scr[pl.ds(off, B_pad), :] = out_t[S:, :]

    @pl.when(i == C - 1)
    def _tail():
        # C2C graph on the collected (C*B_pad, D) rows; padded rows are masked
        Mp = abs_c_scr.shape[0]
        xcc = abs_c_scr[...].astype(jnp.bfloat16)
        xct = abs_t_scr[...].astype(jnp.bfloat16)
        ccm = (jax.lax.broadcasted_iota(jnp.int32, (Mp, Mp), 1) % B_pad) < B
        _, ln_sc = gcn_layernorm(xcc, wcc_ref[...], bcc_ref[...], ccm)
        _, ln_st = gcn_layernorm(xct, wcc_ref[...], bcc_ref[...], ccm)
        crm = (jax.lax.broadcasted_iota(jnp.int32, (Mp, 1), 0) % B_pad) < B
        d2 = jnp.where(crm, ln_sc - ln_st, 0.0)
        loss_cc = jnp.sum(d2 * d2) / float(C * B * Dd)
        loss_cn = acc_scr[0] / float(C * N_real * Dd)
        loss_ref[0, 0] = loss_cn + loss_cc


# ---------------------------------------------------------------------------
# Adaptive average pool expressed as an averaging matrix (trace-time numpy const)
# ---------------------------------------------------------------------------
def adaptive_pool_matrix(in_size, out_size):
    P = np.zeros((out_size, in_size), np.float32)
    for i in range(out_size):
        s = (i * in_size) // out_size
        e = -((-(i + 1) * in_size) // out_size)   # ceil((i+1)*in/out)
        P[i, s:e] = 1.0 / (e - s)
    return P


# ---------------------------------------------------------------------------
# Full DistillC2C2N forward
# ---------------------------------------------------------------------------
def distill_forward(params, prob_c, feats_c, prob_t, feats_t):
    B, C, H, Wd = prob_c.shape
    _, d, _, _ = feats_c.shape
    HW = H * Wd
    S = B * P2                       # shared pooled rows per graph
    B_pad = ((B + 7) // 8) * 8       # center rows padded to a sublane multiple
    N_pad = S + B_pad

    # bf16 weights for the MXU (softmax / layernorm / MSE stay f32 in-kernel)
    w_proj = params["w_proj"].astype(jnp.bfloat16)
    w_cn = params["w_cn"].astype(jnp.bfloat16)
    w_cc = params["w_cc"].astype(jnp.bfloat16)

    # Kron'd pooling matrix: pooled(100, D) = Pkron(100, HW) @ feats(HW, D)
    pkron = jnp.asarray(np.kron(adaptive_pool_matrix(H, PIXELS),
                                adaptive_pool_matrix(Wd, PIXELS)))       # (100, HW)

    prob_c3 = prob_c.reshape(B, C, HW)
    prob_t3 = prob_t.reshape(B, C, HW)
    feats_c3 = feats_c.reshape(B, d, HW)     # channel-major; no HBM transpose
    feats_t3 = feats_t.reshape(B, d, HW)

    cen_c, cen_t, pool_c, pool_t = pl.pallas_call(
        _centers_pool_kernel,
        out_shape=(
            jax.ShapeDtypeStruct((B, C, d), jnp.bfloat16),
            jax.ShapeDtypeStruct((B, C, d), jnp.bfloat16),
            jax.ShapeDtypeStruct((B, P2, d), jnp.bfloat16),
            jax.ShapeDtypeStruct((B, P2, d), jnp.bfloat16),
        ),
        grid=(B,),
        in_specs=[
            pl.BlockSpec((1, C, HW), lambda b: (b, 0, 0)),
            pl.BlockSpec((1, C, HW), lambda b: (b, 0, 0)),
            pl.BlockSpec((1, d, HW), lambda b: (b, 0, 0)),
            pl.BlockSpec((1, d, HW), lambda b: (b, 0, 0)),
            pl.BlockSpec((d, d), lambda b: (0, 0)),      # w_proj resident
            pl.BlockSpec((1, d), lambda b: (0, 0)),      # b_proj resident
            pl.BlockSpec((P2, HW), lambda b: (0, 0)),    # pooling matrix resident
        ],
        out_specs=(
            pl.BlockSpec((1, C, d), lambda b: (b, 0, 0)),
            pl.BlockSpec((1, C, d), lambda b: (b, 0, 0)),
            pl.BlockSpec((1, P2, d), lambda b: (b, 0, 0)),
            pl.BlockSpec((1, P2, d), lambda b: (b, 0, 0)),
        ),
        compiler_params=pltpu.CompilerParams(dimension_semantics=("parallel",)),
    )(prob_c3, prob_t3, feats_c3, feats_t3, w_proj, params["b_proj"], pkron)

    centers_c = jnp.transpose(cen_c, (1, 0, 2))   # (C, B, D) bf16, ~KB-scale
    centers_t = jnp.transpose(cen_t, (1, 0, 2))
    shared_c = pool_c.reshape(S, d)               # (S, D) bf16
    shared_t = pool_t.reshape(S, d)

    loss = pl.pallas_call(
        _graph_kernel,
        out_shape=jax.ShapeDtypeStruct((1, 1), jnp.float32),
        grid=(C,),
        in_specs=[
            pl.BlockSpec((S, d), lambda i: (0, 0)),        # shared student rows
            pl.BlockSpec((S, d), lambda i: (0, 0)),        # shared teacher rows
            pl.BlockSpec((1, B, d), lambda i: (i, 0, 0)),  # per-class centers (student)
            pl.BlockSpec((1, B, d), lambda i: (i, 0, 0)),  # per-class centers (teacher)
            pl.BlockSpec((d, d), lambda i: (0, 0)),        # w_cn resident
            pl.BlockSpec((1, d), lambda i: (0, 0)),
            pl.BlockSpec((d, d), lambda i: (0, 0)),        # w_cc resident
            pl.BlockSpec((1, d), lambda i: (0, 0)),
        ],
        out_specs=pl.BlockSpec(memory_space=pltpu.MemorySpace.SMEM),
        scratch_shapes=[
            pltpu.VMEM((N_pad, d), jnp.bfloat16),          # student graph rows
            pltpu.VMEM((N_pad, d), jnp.bfloat16),          # teacher graph rows
            pltpu.VMEM((C * B_pad, d), jnp.float32),       # student abstract centers
            pltpu.VMEM((C * B_pad, d), jnp.float32),       # teacher abstract centers
            pltpu.SMEM((1,), jnp.float32),                 # C2N MSE accumulator
        ],
        compiler_params=pltpu.CompilerParams(dimension_semantics=("arbitrary",)),
    )(shared_c, shared_t, centers_c, centers_t,
      w_cn, params["b_cn"], w_cc, params["b_cc"])

    return loss[0, 0]


# ---------------------------------------------------------------------------
if __name__ == "__main__":
    B, C, H, W = 2, 4, 16, 16   # small batch / classes / spatial; D=256 fixed by module

    key = jax.random.PRNGKey(0)
    k = jax.random.split(key, 10)

    params = {
        "w_proj": jax.random.normal(k[0], (D, D), jnp.float32) * 0.02,
        "b_proj": jax.random.normal(k[1], (1, D), jnp.float32) * 0.02,
        "w_cn":   jax.random.normal(k[2], (D, D), jnp.float32) * 0.02,
        "b_cn":   jax.random.normal(k[3], (1, D), jnp.float32) * 0.02,
        "w_cc":   jax.random.normal(k[4], (D, D), jnp.float32) * 0.02,
        "b_cc":   jax.random.normal(k[5], (1, D), jnp.float32) * 0.02,
    }

    prob_c = jax.random.normal(k[6], (B, C, H, W), jnp.float32)
    feats_c = jax.random.normal(k[7], (B, D, H, W), jnp.float32)
    prob_t = jax.random.normal(k[8], (B, C, H, W), jnp.float32)
    feats_t = jax.random.normal(k[9], (B, D, H, W), jnp.float32)

    loss = jax.jit(distill_forward)(params, prob_c, feats_c, prob_t, feats_t)
    jax.block_until_ready(loss)
    assert loss.shape == () and jnp.isfinite(loss)
    print("KERNEL_OK")
</pallas_src>

<mosaic_0001>
module attributes {stable_mosaic.version = 11 : i64} {
  func.func @_centers_pool_kernel(%arg0: i32, %arg1: memref<1x4x256xf32, #tpu.memory_space<vmem>>, %arg2: memref<1x4x256xf32, #tpu.memory_space<vmem>>, %arg3: memref<1x256x256xf32, #tpu.memory_space<vmem>>, %arg4: memref<1x256x256xf32, #tpu.memory_space<vmem>>, %arg5: memref<256x256xbf16, #tpu.memory_space<vmem>>, %arg6: memref<1x256xf32, #tpu.memory_space<vmem>>, %arg7: memref<100x256xf32, #tpu.memory_space<vmem>>, %arg8: memref<1x4x256xbf16, #tpu.memory_space<vmem>>, %arg9: memref<1x4x256xbf16, #tpu.memory_space<vmem>>, %arg10: memref<1x100x256xbf16, #tpu.memory_space<vmem>>, %arg11: memref<1x100x256xbf16, #tpu.memory_space<vmem>>) attributes {dimension_semantics = [#tpu.dimension_semantics<parallel>], iteration_bounds = array<i64: 2>, scalar_prefetch = 0 : i64, scratch_operands = 0 : i64, tpu.core_type = #tpu.core_type<tc>, window_params = [{transform_indices = @transform_0, window_bounds = array<i64: 1, 4, 256>}, {transform_indices = @transform_1, window_bounds = array<i64: 1, 4, 256>}, {transform_indices = @transform_2, window_bounds = array<i64: 1, 256, 256>}, {transform_indices = @transform_3, window_bounds = array<i64: 1, 256, 256>}, {pipeline_mode = #tpu.pipeline_mode<synchronous>, transform_indices = @transform_4, window_bounds = array<i64: 256, 256>}, {pipeline_mode = #tpu.pipeline_mode<synchronous>, transform_indices = @transform_5, window_bounds = array<i64: 1, 256>}, {pipeline_mode = #tpu.pipeline_mode<synchronous>, transform_indices = @transform_6, window_bounds = array<i64: 100, 256>}, {transform_indices = @transform_7, window_bounds = array<i64: 1, 4, 256>}, {transform_indices = @transform_8, window_bounds = array<i64: 1, 4, 256>}, {transform_indices = @transform_9, window_bounds = array<i64: 1, 100, 256>}, {transform_indices = @transform_10, window_bounds = array<i64: 1, 100, 256>}]} {
    %c0 = arith.constant 0 : index
    %c0_0 = arith.constant 0 : index
    %0 = vector.load %arg7[%c0, %c0_0] : memref<100x256xf32, #tpu.memory_space<vmem>>, vector<100x256xf32>
    %1 = arith.truncf %0 : vector<100x256xf32> to vector<100x256xbf16>
    %c0_1 = arith.constant 0 : index
    %c0_2 = arith.constant 0 : index
    %c0_3 = arith.constant 0 : index
    %2 = vector.load %arg1[%c0_1, %c0_2, %c0_3] : memref<1x4x256xf32, #tpu.memory_space<vmem>>, vector<1x4x256xf32>
    %3 = vector.shape_cast %2 : vector<1x4x256xf32> to vector<4x256xf32>
    %cst = arith.constant dense<0xFF800000> : vector<256xf32>
    %4 = vector.multi_reduction <maximumf>, %3, %cst [0] : vector<4x256xf32> to vector<256xf32>
    %cst_4 = arith.constant 0xFF800000 : f32
    %5 = vector.broadcast %cst_4 : f32 to vector<256xf32>
    %6 = arith.maximumf %5, %4 : vector<256xf32>
    %7 = vector.shape_cast %6 : vector<256xf32> to vector<1x256xf32>
    %8 = vector.broadcast %7 : vector<1x256xf32> to vector<4x256xf32>
    %9 = arith.subf %3, %8 : vector<4x256xf32>
    %10 = math.exp %9 : vector<4x256xf32>
    %cst_5 = arith.constant dense<0.000000e+00> : vector<256xf32>
    %11 = vector.multi_reduction <add>, %10, %cst_5 [0] : vector<4x256xf32> to vector<256xf32>
    %12 = vector.shape_cast %11 : vector<256xf32> to vector<1x256xf32>
    %13 = vector.broadcast %12 : vector<1x256xf32> to vector<4x256xf32>
    %14 = arith.divf %10, %13 : vector<4x256xf32>
    %cst_6 = arith.constant dense<0xFF800000> : vector<4xf32>
    %15 = vector.multi_reduction <maximumf>, %14, %cst_6 [1] : vector<4x256xf32> to vector<4xf32>
    %cst_7 = arith.constant 0xFF800000 : f32
    %16 = vector.broadcast %cst_7 : f32 to vector<4xf32>
    %17 = arith.maximumf %16, %15 : vector<4xf32>
    %18 = vector.shape_cast %17 : vector<4xf32> to vector<4x1xf32>
    %19 = vector.broadcast %18 : vector<4x1xf32> to vector<4x256xf32>
    %20 = arith.subf %14, %19 : vector<4x256xf32>
    %21 = math.exp %20 : vector<4x256xf32>
    %cst_8 = arith.constant dense<0.000000e+00> : vector<4xf32>
    %22 = vector.multi_reduction <add>, %21, %cst_8 [1] : vector<4x256xf32> to vector<4xf32>
    %23 = vector.shape_cast %22 : vector<4xf32> to vector<4x1xf32>
    %24 = vector.broadcast %23 : vector<4x1xf32> to vector<4x256xf32>
    %25 = arith.divf %21, %24 : vector<4x256xf32>
    %26 = arith.truncf %25 : vector<4x256xf32> to vector<4x256xbf16>
    %c0_9 = arith.constant 0 : index
    %c0_10 = arith.constant 0 : index
    %c0_11 = arith.constant 0 : index
    %27 = vector.load %arg3[%c0_9, %c0_10, %c0_11] : memref<1x256x256xf32, #tpu.memory_space<vmem>>, vector<1x256x256xf32>
    %28 = vector.shape_cast %27 : vector<1x256x256xf32> to vector<256x256xf32>
    %29 = arith.truncf %28 : vector<256x256xf32> to vector<256x256xbf16>
    %c0_12 = arith.constant 0 : index
    %c0_13 = arith.constant 0 : index
    %30 = vector.load %arg5[%c0_12, %c0_13] : memref<256x256xbf16, #tpu.memory_space<vmem>>, vector<256x256xbf16>
    %cst_14 = arith.constant dense<0.000000e+00> : vector<256x256xf32>
    %31 = tpu.matmul %29, %30, %cst_14 {dimension_numbers = #tpu.dot_dimension_numbers<[0], [0], [1], [1], [0, 1, 1, 1], [], []>} : vector<256x256xbf16>, vector<256x256xbf16>, vector<256x256xf32> -> vector<256x256xf32>
    %c0_15 = arith.constant 0 : index
    %c0_16 = arith.constant 0 : index
    %32 = vector.load %arg6[%c0_15, %c0_16] : memref<1x256xf32, #tpu.memory_space<vmem>>, vector<1x256xf32>
    %33 = vector.broadcast %32 : vector<1x256xf32> to vector<256x256xf32>
    %34 = arith.addf %31, %33 : vector<256x256xf32>
    %35 = arith.truncf %34 : vector<256x256xf32> to vector<256x256xbf16>
    %cst_17 = arith.constant dense<0.000000e+00> : vector<4x256xf32>
    %36 = tpu.matmul %26, %35, %cst_17 {dimension_numbers = #tpu.dot_dimension_numbers<[1], [0], [0], [1], [0, 0, 1, 1], [], []>} : vector<4x256xbf16>, vector<256x256xbf16>, vector<4x256xf32> -> vector<4x256xf32>
    %37 = arith.truncf %36 : vector<4x256xf32> to vector<4x256xbf16>
    %c0_18 = arith.constant 0 : index
    %c0_19 = arith.constant 0 : index
    %c0_20 = arith.constant 0 : index
    %38 = vector.load %arg8[%c0_18, %c0_19, %c0_20] : memref<1x4x256xbf16, #tpu.memory_space<vmem>>, vector<1x4x256xbf16>
    %39 = vector.shape_cast %38 : vector<1x4x256xbf16> to vector<4x256xbf16>
    %40 = vector.shape_cast %37 : vector<4x256xbf16> to vector<1x4x256xbf16>
    tpu.vector_store %arg8[%c0_18, %c0_19, %c0_20], %40 {strides = array<i32>} : memref<1x4x256xbf16, #tpu.memory_space<vmem>>, vector<1x4x256xbf16>,
    %cst_21 = arith.constant dense<0.000000e+00> : vector<100x256xf32>
    %41 = tpu.matmul %1, %35, %cst_21 {dimension_numbers = #tpu.dot_dimension_numbers<[1], [0], [0], [1], [0, 0, 1, 1], [], []>} : vector<100x256xbf16>, vector<256x256xbf16>, vector<100x256xf32> -> vector<100x256xf32>
    %42 = arith.truncf %41 : vector<100x256xf32> to vector<100x256xbf16>
    %c0_22 = arith.constant 0 : index
    %c0_23 = arith.constant 0 : index
    %c0_24 = arith.constant 0 : index
    %43 = vector.load %arg10[%c0_22, %c0_23, %c0_24] : memref<1x100x256xbf16, #tpu.memory_space<vmem>>, vector<1x100x256xbf16>
    %44 = vector.shape_cast %43 : vector<1x100x256xbf16> to vector<100x256xbf16>
    %45 = vector.shape_cast %42 : vector<100x256xbf16> to vector<1x100x256xbf16>
    tpu.vector_store %arg10[%c0_22, %c0_23, %c0_24], %45 {strides = array<i32>} : memref<1x100x256xbf16, #tpu.memory_space<vmem>>, vector<1x100x256xbf16>,
    %c0_25 = arith.constant 0 : index
    %c0_26 = arith.constant 0 : index
    %c0_27 = arith.constant 0 : index
    %46 = vector.load %arg2[%c0_25, %c0_26, %c0_27] : memref<1x4x256xf32, #tpu.memory_space<vmem>>, vector<1x4x256xf32>
    %47 = vector.shape_cast %46 : vector<1x4x256xf32> to vector<4x256xf32>
    %cst_28 = arith.constant dense<0xFF800000> : vector<256xf32>
    %48 = vector.multi_reduction <maximumf>, %47, %cst_28 [0] : vector<4x256xf32> to vector<256xf32>
    %cst_29 = arith.constant 0xFF800000 : f32
    %49 = vector.broadcast %cst_29 : f32 to vector<256xf32>
    %50 = arith.maximumf %49, %48 : vector<256xf32>
    %51 = vector.shape_cast %50 : vector<256xf32> to vector<1x256xf32>
    %52 = vector.broadcast %51 : vector<1x256xf32> to vector<4x256xf32>
    %53 = arith.subf %47, %52 : vector<4x256xf32>
    %54 = math.exp %53 : vector<4x256xf32>
    %cst_30 = arith.constant dense<0.000000e+00> : vector<256xf32>
    %55 = vector.multi_reduction <add>, %54, %cst_30 [0] : vector<4x256xf32> to vector<256xf32>
    %56 = vector.shape_cast %55 : vector<256xf32> to vector<1x256xf32>
    %57 = vector.broadcast %56 : vector<1x256xf32> to vector<4x256xf32>
    %58 = arith.divf %54, %57 : vector<4x256xf32>
    %cst_31 = arith.constant dense<0xFF800000> : vector<4xf32>
    %59 = vector.multi_reduction <maximumf>, %58, %cst_31 [1] : vector<4x256xf32> to vector<4xf32>
    %cst_32 = arith.constant 0xFF800000 : f32
    %60 = vector.broadcast %cst_32 : f32 to vector<4xf32>
    %61 = arith.maximumf %60, %59 : vector<4xf32>
    %62 = vector.shape_cast %61 : vector<4xf32> to vector<4x1xf32>
    %63 = vector.broadcast %62 : vector<4x1xf32> to vector<4x256xf32>
    %64 = arith.subf %58, %63 : vector<4x256xf32>
    %65 = math.exp %64 : vector<4x256xf32>
    %cst_33 = arith.constant dense<0.000000e+00> : vector<4xf32>
    %66 = vector.multi_reduction <add>, %65, %cst_33 [1] : vector<4x256xf32> to vector<4xf32>
    %67 = vector.shape_cast %66 : vector<4xf32> to vector<4x1xf32>
    %68 = vector.broadcast %67 : vector<4x1xf32> to vector<4x256xf32>
    %69 = arith.divf %65, %68 : vector<4x256xf32>
    %70 = arith.truncf %69 : vector<4x256xf32> to vector<4x256xbf16>
    %c0_34 = arith.constant 0 : index
    %c0_35 = arith.constant 0 : index
    %c0_36 = arith.constant 0 : index
    %71 = vector.load %arg4[%c0_34, %c0_35, %c0_36] : memref<1x256x256xf32, #tpu.memory_space<vmem>>, vector<1x256x256xf32>
    %72 = vector.shape_cast %71 : vector<1x256x256xf32> to vector<256x256xf32>
    %73 = arith.truncf %72 : vector<256x256xf32> to vector<256x256xbf16>
    %cst_37 = arith.constant dense<0.000000e+00> : vector<4x256xf32>
    %74 = tpu.matmul %70, %73, %cst_37 {dimension_numbers = #tpu.dot_dimension_numbers<[1], [1], [0], [0], [0, 0, 1, 0], [], []>} : vector<4x256xbf16>, vector<256x256xbf16>, vector<4x256xf32> -> vector<4x256xf32>
    %75 = arith.truncf %74 : vector<4x256xf32> to vector<4x256xbf16>
    %c0_38 = arith.constant 0 : index
    %c0_39 = arith.constant 0 : index
    %c0_40 = arith.constant 0 : index
    %76 = vector.load %arg9[%c0_38, %c0_39, %c0_40] : memref<1x4x256xbf16, #tpu.memory_space<vmem>>, vector<1x4x256xbf16>
    %77 = vector.shape_cast %76 : vector<1x4x256xbf16> to vector<4x256xbf16>
    %78 = vector.shape_cast %75 : vector<4x256xbf16> to vector<1x4x256xbf16>
    tpu.vector_store %arg9[%c0_38, %c0_39, %c0_40], %78 {strides = array<i32>} : memref<1x4x256xbf16, #tpu.memory_space<vmem>>, vector<1x4x256xbf16>,
    %cst_41 = arith.constant dense<0.000000e+00> : vector<100x256xf32>
    %79 = tpu.matmul %1, %73, %cst_41 {dimension_numbers = #tpu.dot_dimension_numbers<[1], [1], [0], [0], [0, 0, 1, 0], [], []>} : vector<100x256xbf16>, vector<256x256xbf16>, vector<100x256xf32> -> vector<100x256xf32>
    %80 = arith.truncf %79 : vector<100x256xf32> to vector<100x256xbf16>
    %c0_42 = arith.constant 0 : index
    %c0_43 = arith.constant 0 : index
    %c0_44 = arith.constant 0 : index
    %81 = vector.load %arg11[%c0_42, %c0_43, %c0_44] : memref<1x100x256xbf16, #tpu.memory_space<vmem>>, vector<1x100x256xbf16>
    %82 = vector.shape_cast %81 : vector<1x100x256xbf16> to vector<100x256xbf16>
    %83 = vector.shape_cast %80 : vector<100x256xbf16> to vector<1x100x256xbf16>
    tpu.vector_store %arg11[%c0_42, %c0_43, %c0_44], %83 {strides = array<i32>} : memref<1x100x256xbf16, #tpu.memory_space<vmem>>, vector<1x100x256xbf16>,
    return
  }
  func.func @transform_0(%arg0: i32) -> (i32, i32, i32) {
    %c0_i32 = arith.constant 0 : i32
    %c0_i32_0 = arith.constant 0 : i32
    %c0_i32_1 = arith.constant 0 : i32
    return %arg0, %c0_i32, %c0_i32_0 : i32, i32, i32
  }
  func.func @transform_1(%arg0: i32) -> (i32, i32, i32) {
    %c0_i32 = arith.constant 0 : i32
    %c0_i32_0 = arith.constant 0 : i32
    %c0_i32_1 = arith.constant 0 : i32
    return %arg0, %c0_i32, %c0_i32_0 : i32, i32, i32
  }
  func.func @transform_2(%arg0: i32) -> (i32, i32, i32) {
    %c0_i32 = arith.constant 0 : i32
    %c0_i32_0 = arith.constant 0 : i32
    %c0_i32_1 = arith.constant 0 : i32
    return %arg0, %c0_i32, %c0_i32_0 : i32, i32, i32
  }
  func.func @transform_3(%arg0: i32) -> (i32, i32, i32) {
    %c0_i32 = arith.constant 0 : i32
    %c0_i32_0 = arith.constant 0 : i32
    %c0_i32_1 = arith.constant 0 : i32
    return %arg0, %c0_i32, %c0_i32_0 : i32, i32, i32
  }
  func.func @transform_4(%arg0: i32) -> (i32, i32) {
    %c0_i32 = arith.constant 0 : i32
    %c0_i32_0 = arith.constant 0 : i32
    %c0_i32_1 = arith.constant 0 : i32
    return %c0_i32, %c0_i32_0 : i32, i32
  }
  func.func @transform_5(%arg0: i32) -> (i32, i32) {
    %c0_i32 = arith.constant 0 : i32
    %c0_i32_0 = arith.constant 0 : i32
    %c0_i32_1 = arith.constant 0 : i32
    return %c0_i32, %c0_i32_0 : i32, i32
  }
  func.func @transform_6(%arg0: i32) -> (i32, i32) {
    %c0_i32 = arith.constant 0 : i32
    %c0_i32_0 = arith.constant 0 : i32
    %c0_i32_1 = arith.constant 0 : i32
    return %c0_i32, %c0_i32_0 : i32, i32
  }
  func.func @transform_7(%arg0: i32) -> (i32, i32, i32) {
    %c0_i32 = arith.constant 0 : i32
    %c0_i32_0 = arith.constant 0 : i32
    %c0_i32_1 = arith.constant 0 : i32
    return %arg0, %c0_i32, %c0_i32_0 : i32, i32, i32
  }
  func.func @transform_8(%arg0: i32) -> (i32, i32, i32) {
    %c0_i32 = arith.constant 0 : i32
    %c0_i32_0 = arith.constant 0 : i32
    %c0_i32_1 = arith.constant 0 : i32
    return %arg0, %c0_i32, %c0_i32_0 : i32, i32, i32
  }
  func.func @transform_9(%arg0: i32) -> (i32, i32, i32) {
    %c0_i32 = arith.constant 0 : i32
    %c0_i32_0 = arith.constant 0 : i32
    %c0_i32_1 = arith.constant 0 : i32
    return %arg0, %c0_i32, %c0_i32_0 : i32, i32, i32
  }
  func.func @transform_10(%arg0: i32) -> (i32, i32, i32) {
    %c0_i32 = arith.constant 0 : i32
    %c0_i32_0 = arith.constant 0 : i32
    %c0_i32_1 = arith.constant 0 : i32
    return %arg0, %c0_i32, %c0_i32_0 : i32, i32, i32
  }
}

module attributes {stable_mosaic.version = 11 : i64} {
  func.func @_graph_kernel(%arg0: i32, %arg1: memref<200x256xbf16, #tpu.memory_space<vmem>>, %arg2: memref<200x256xbf16, #tpu.memory_space<vmem>>, %arg3: memref<1x2x256xbf16, #tpu.memory_space<vmem>>, %arg4: memref<1x2x256xbf16, #tpu.memory_space<vmem>>, %arg5: memref<256x256xbf16, #tpu.memory_space<vmem>>, %arg6: memref<1x256xf32, #tpu.memory_space<vmem>>, %arg7: memref<256x256xbf16, #tpu.memory_space<vmem>>, %arg8: memref<1x256xf32, #tpu.memory_space<vmem>>, %arg9: memref<1x1xf32, #tpu.memory_space<smem>>, %arg10: memref<208x256xbf16, #tpu.memory_space<vmem>>, %arg11: memref<208x256xbf16, #tpu.memory_space<vmem>>, %arg12: memref<32x256xf32, #tpu.memory_space<vmem>>, %arg13: memref<32x256xf32, #tpu.memory_space<vmem>>, %arg14: memref<1xf32, #tpu.memory_space<smem>>) attributes {dimension_semantics = [#tpu.dimension_semantics<arbitrary>], iteration_bounds = array<i64: 4>, scalar_prefetch = 0 : i64, scratch_operands = 5 : i64, tpu.core_type = #tpu.core_type<tc>, window_params = [{pipeline_mode = #tpu.pipeline_mode<synchronous>, transform_indices = @transform_0, window_bounds = array<i64: 200, 256>}, {pipeline_mode = #tpu.pipeline_mode<synchronous>, transform_indices = @transform_1, window_bounds = array<i64: 200, 256>}, {transform_indices = @transform_2, window_bounds = array<i64: 1, 2, 256>}, {transform_indices = @transform_3, window_bounds = array<i64: 1, 2, 256>}, {pipeline_mode = #tpu.pipeline_mode<synchronous>, transform_indices = @transform_4, window_bounds = array<i64: 256, 256>}, {pipeline_mode = #tpu.pipeline_mode<synchronous>, transform_indices = @transform_5, window_bounds = array<i64: 1, 256>}, {pipeline_mode = #tpu.pipeline_mode<synchronous>, transform_indices = @transform_6, window_bounds = array<i64: 256, 256>}, {pipeline_mode = #tpu.pipeline_mode<synchronous>, transform_indices = @transform_7, window_bounds = array<i64: 1, 256>}, {transform_indices = @transform_8, window_bounds = array<i64: 1, 1>}]} {
    %c0_i32 = arith.constant 0 : i32
    %0 = arith.cmpi eq, %arg0, %c0_i32 : i32
    %1 = arith.extui %0 : i1 to i32
    %c0_i32_0 = arith.constant 0 : i32
    %2 = arith.cmpi ne, %1, %c0_i32_0 : i32
    scf.if %2 {
      %c0_52 = arith.constant 0 : index
      %c0_53 = arith.constant 0 : index
      %121 = vector.load %arg1[%c0_52, %c0_53] : memref<200x256xbf16, #tpu.memory_space<vmem>>, vector<200x256xbf16>
      %c0_54 = arith.constant 0 : index
      %c0_55 = arith.constant 0 : index
      %122 = vector.load %arg10[%c0_54, %c0_55] : memref<208x256xbf16, #tpu.memory_space<vmem>>, vector<200x256xbf16>
      tpu.vector_store %arg10[%c0_54, %c0_55], %121 {strides = array<i32>} : memref<208x256xbf16, #tpu.memory_space<vmem>>, vector<200x256xbf16>,
      %c0_56 = arith.constant 0 : index
      %c0_57 = arith.constant 0 : index
      %123 = vector.load %arg2[%c0_56, %c0_57] : memref<200x256xbf16, #tpu.memory_space<vmem>>, vector<200x256xbf16>
      %c0_58 = arith.constant 0 : index
      %c0_59 = arith.constant 0 : index
      %124 = vector.load %arg11[%c0_58, %c0_59] : memref<208x256xbf16, #tpu.memory_space<vmem>>, vector<200x256xbf16>
      tpu.vector_store %arg11[%c0_58, %c0_59], %123 {strides = array<i32>} : memref<208x256xbf16, #tpu.memory_space<vmem>>, vector<200x256xbf16>,
      %cst_60 = arith.constant 0.000000e+00 : bf16
      %125 = vector.broadcast %cst_60 : bf16 to vector<8x256xbf16>
      %c200_61 = arith.constant 200 : index
      %c0_62 = arith.constant 0 : index
      %126 = vector.load %arg10[%c200_61, %c0_62] : memref<208x256xbf16, #tpu.memory_space<vmem>>, vector<8x256xbf16>
      tpu.vector_store %arg10[%c200_61, %c0_62], %125 {strides = array<i32>} : memref<208x256xbf16, #tpu.memory_space<vmem>>, vector<8x256xbf16>,
      %c200_63 = arith.constant 200 : index
      %c0_64 = arith.constant 0 : index
      %127 = vector.load %arg11[%c200_63, %c0_64] : memref<208x256xbf16, #tpu.memory_space<vmem>>, vector<8x256xbf16>
      tpu.vector_store %arg11[%c200_63, %c0_64], %125 {strides = array<i32>} : memref<208x256xbf16, #tpu.memory_space<vmem>>, vector<8x256xbf16>,
      %cst_65 = arith.constant 0.000000e+00 : f32
      %c0_66 = arith.constant 0 : index
      %128 = memref.load %arg14[%c0_66] : memref<1xf32, #tpu.memory_space<smem>>
      memref.store %cst_65, %arg14[%c0_66] : memref<1xf32, #tpu.memory_space<smem>>
      %cst_67 = arith.constant 0.000000e+00 : f32
      %c0_68 = arith.constant 0 : index
      %c0_69 = arith.constant 0 : index
      %129 = memref.load %arg9[%c0_68, %c0_69] : memref<1x1xf32, #tpu.memory_space<smem>>
      memref.store %cst_67, %arg9[%c0_68, %c0_69] : memref<1x1xf32, #tpu.memory_space<smem>>
    } else {
    }
    %c0 = arith.constant 0 : index
    %c0_1 = arith.constant 0 : index
    %c0_2 = arith.constant 0 : index
    %3 = vector.load %arg3[%c0, %c0_1, %c0_2] : memref<1x2x256xbf16, #tpu.memory_space<vmem>>, vector<1x2x256xbf16>
    %4 = vector.shape_cast %3 : vector<1x2x256xbf16> to vector<2x256xbf16>
    %c200 = arith.constant 200 : index
    %c0_3 = arith.constant 0 : index
    %5 = vector.load %arg10[%c200, %c0_3] : memref<208x256xbf16, #tpu.memory_space<vmem>>, vector<2x256xbf16>
    tpu.vector_store %arg10[%c200, %c0_3], %4 {strides = array<i32>} : memref<208x256xbf16, #tpu.memory_space<vmem>>, vector<2x256xbf16>,
    %c0_4 = arith.constant 0 : index
    %c0_5 = arith.constant 0 : index
    %c0_6 = arith.constant 0 : index
    %6 = vector.load %arg4[%c0_4, %c0_5, %c0_6] : memref<1x2x256xbf16, #tpu.memory_space<vmem>>, vector<1x2x256xbf16>
    %7 = vector.shape_cast %6 : vector<1x2x256xbf16> to vector<2x256xbf16>
    %c200_7 = arith.constant 200 : index
    %c0_8 = arith.constant 0 : index
    %8 = vector.load %arg11[%c200_7, %c0_8] : memref<208x256xbf16, #tpu.memory_space<vmem>>, vector<2x256xbf16>
    tpu.vector_store %arg11[%c200_7, %c0_8], %7 {strides = array<i32>} : memref<208x256xbf16, #tpu.memory_space<vmem>>, vector<2x256xbf16>,
    %9 = tpu.iota {dimensions = array<i32: 1>} : vector<208x208xi32>
    %c202_i32 = arith.constant 202 : i32
    %10 = vector.broadcast %c202_i32 : i32 to vector<208x208xi32>
    %11 = arith.cmpi slt, %9, %10 : vector<208x208xi32>
    %c0_9 = arith.constant 0 : index
    %c0_10 = arith.constant 0 : index
    %12 = vector.load %arg10[%c0_9, %c0_10] : memref<208x256xbf16, #tpu.memory_space<vmem>>, vector<208x256xbf16>
    %c0_11 = arith.constant 0 : index
    %c0_12 = arith.constant 0 : index
    %13 = vector.load %arg5[%c0_11, %c0_12] : memref<256x256xbf16, #tpu.memory_space<vmem>>, vector<256x256xbf16>
    %c0_13 = arith.constant 0 : index
    %c0_14 = arith.constant 0 : index
    %14 = vector.load %arg6[%c0_13, %c0_14] : memref<1x256xf32, #tpu.memory_space<vmem>>, vector<1x256xf32>
    %cst = arith.constant dense<0.000000e+00> : vector<208x208xf32>
    %15 = tpu.matmul %12, %12, %cst {dimension_numbers = #tpu.dot_dimension_numbers<[1], [1], [0], [0], [0, 0, 1, 0], [], []>} : vector<208x256xbf16>, vector<208x256xbf16>, vector<208x208xf32> -> vector<208x208xf32>
    %cst_15 = arith.constant 0xFF800000 : f32
    %16 = vector.broadcast %cst_15 : f32 to vector<208x208xf32>
    %17 = arith.select %11, %15, %16 : vector<208x208xi1>, vector<208x208xf32>
    %cst_16 = arith.constant dense<0xFF800000> : vector<208xf32>
    %18 = vector.multi_reduction <maximumf>, %17, %cst_16 [1] : vector<208x208xf32> to vector<208xf32>
    %cst_17 = arith.constant 0xFF800000 : f32
    %19 = vector.broadcast %cst_17 : f32 to vector<208xf32>
    %20 = arith.maximumf %19, %18 : vector<208xf32>
    %21 = vector.shape_cast %20 : vector<208xf32> to vector<208x1xf32>
    %22 = vector.broadcast %21 : vector<208x1xf32> to vector<208x208xf32>
    %23 = arith.subf %17, %22 : vector<208x208xf32>
    %24 = math.exp %23 : vector<208x208xf32>
    %cst_18 = arith.constant dense<0.000000e+00> : vector<208xf32>
    %25 = vector.multi_reduction <add>, %24, %cst_18 [1] : vector<208x208xf32> to vector<208xf32>
    %26 = vector.shape_cast %25 : vector<208xf32> to vector<208x1xf32>
    %27 = vector.broadcast %26 : vector<208x1xf32> to vector<208x208xf32>
    %28 = arith.divf %24, %27 : vector<208x208xf32>
    %cst_19 = arith.constant dense<0.000000e+00> : vector<208x256xf32>
    %29 = tpu.matmul %12, %13, %cst_19 {dimension_numbers = #tpu.dot_dimension_numbers<[1], [0], [0], [1], [0, 0, 1, 1], [], []>} : vector<208x256xbf16>, vector<256x256xbf16>, vector<208x256xf32> -> vector<208x256xf32>
    %30 = arith.truncf %29 : vector<208x256xf32> to vector<208x256xbf16>
    %31 = arith.truncf %28 : vector<208x208xf32> to vector<208x208xbf16>
    %cst_20 = arith.constant dense<0.000000e+00> : vector<208x256xf32>
    %32 = tpu.matmul %31, %30, %cst_20 {dimension_numbers = #tpu.dot_dimension_numbers<[1], [0], [0], [1], [0, 0, 1, 1], [], []>} : vector<208x208xbf16>, vector<208x256xbf16>, vector<208x256xf32> -> vector<208x256xf32>
    %33 = vector.broadcast %14 : vector<1x256xf32> to vector<208x256xf32>
    %34 = arith.addf %32, %33 : vector<208x256xf32>
    %cst_21 = arith.constant dense<0.000000e+00> : vector<208xf32>
    %35 = vector.multi_reduction <add>, %34, %cst_21 [1] : vector<208x256xf32> to vector<208xf32>
    %36 = vector.shape_cast %35 : vector<208xf32> to vector<208x1xf32>
    %cst_22 = arith.constant 2.560000e+02 : f32
    %37 = vector.broadcast %cst_22 : f32 to vector<208x1xf32>
    %38 = arith.divf %36, %37 : vector<208x1xf32>
    %39 = vector.broadcast %38 : vector<208x1xf32> to vector<208x256xf32>
    %40 = arith.subf %34, %39 : vector<208x256xf32>
    %41 = arith.mulf %40, %40 : vector<208x256xf32>
    %cst_23 = arith.constant dense<0.000000e+00> : vector<208xf32>
    %42 = vector.multi_reduction <add>, %41, %cst_23 [1] : vector<208x256xf32> to vector<208xf32>
    %43 = vector.shape_cast %42 : vector<208xf32> to vector<208x1xf32>
    %cst_24 = arith.constant 2.560000e+02 : f32
    %44 = vector.broadcast %cst_24 : f32 to vector<208x1xf32>
    %45 = arith.divf %43, %44 : vector<208x1xf32>
    %46 = vector.broadcast %38 : vector<208x1xf32> to vector<208x256xf32>
    %47 = arith.subf %34, %46 : vector<208x256xf32>
    %cst_25 = arith.constant 9.99999974E-6 : f32
    %48 = vector.broadcast %cst_25 : f32 to vector<208x1xf32>
    %49 = arith.addf %45, %48 : vector<208x1xf32>
    %50 = math.rsqrt %49 : vector<208x1xf32>
    %51 = vector.broadcast %50 : vector<208x1xf32> to vector<208x256xf32>
    %52 = arith.mulf %47, %51 : vector<208x256xf32>
    %c0_26 = arith.constant 0 : index
    %c0_27 = arith.constant 0 : index
    %53 = vector.load %arg11[%c0_26, %c0_27] : memref<208x256xbf16, #tpu.memory_space<vmem>>, vector<208x256xbf16>
    %c0_28 = arith.constant 0 : index
    %c0_29 = arith.constant 0 : index
    %54 = vector.load %arg5[%c0_28, %c0_29] : memref<256x256xbf16, #tpu.memory_space<vmem>>, vector<256x256xbf16>
    %c0_30 = arith.constant 0 : index
    %c0_31 = arith.constant 0 : index
    %55 = vector.load %arg6[%c0_30, %c0_31] : memref<1x256xf32, #tpu.memory_space<vmem>>, vector<1x256xf32>
    %cst_32 = arith.constant dense<0.000000e+00> : vector<208x208xf32>
    %56 = tpu.matmul %53, %53, %cst_32 {dimension_numbers = #tpu.dot_dimension_numbers<[1], [1], [0], [0], [0, 0, 1, 0], [], []>} : vector<208x256xbf16>, vector<208x256xbf16>, vector<208x208xf32> -> vector<208x208xf32>
    %cst_33 = arith.constant 0xFF800000 : f32
    %57 = vector.broadcast %cst_33 : f32 to vector<208x208xf32>
    %58 = arith.select %11, %56, %57 : vector<208x208xi1>, vector<208x208xf32>
    %cst_34 = arith.constant dense<0xFF800000> : vector<208xf32>
    %59 = vector.multi_reduction <maximumf>, %58, %cst_34 [1] : vector<208x208xf32> to vector<208xf32>
    %cst_35 = arith.constant 0xFF800000 : f32
    %60 = vector.broadcast %cst_35 : f32 to vector<208xf32>
    %61 = arith.maximumf %60, %59 : vector<208xf32>
    %62 = vector.shape_cast %61 : vector<208xf32> to vector<208x1xf32>
    %63 = vector.broadcast %62 : vector<208x1xf32> to vector<208x208xf32>
    %64 = arith.subf %58, %63 : vector<208x208xf32>
    %65 = math.exp %64 : vector<208x208xf32>
    %cst_36 = arith.constant dense<0.000000e+00> : vector<208xf32>
    %66 = vector.multi_reduction <add>, %65, %cst_36 [1] : vector<208x208xf32> to vector<208xf32>
    %67 = vector.shape_cast %66 : vector<208xf32> to vector<208x1xf32>
    %68 = vector.broadcast %67 : vector<208x1xf32> to vector<208x208xf32>
    %69 = arith.divf %65, %68 : vector<208x208xf32>
    %cst_37 = arith.constant dense<0.000000e+00> : vector<208x256xf32>
    %70 = tpu.matmul %53, %54, %cst_37 {dimension_numbers = #tpu.dot_dimension_numbers<[1], [0], [0], [1], [0, 0, 1, 1], [], []>} : vector<208x256xbf16>, vector<256x256xbf16>, vector<208x256xf32> -> vector<208x256xf32>
    %71 = arith.truncf %70 : vector<208x256xf32> to vector<208x256xbf16>
    %72 = arith.truncf %69 : vector<208x208xf32> to vector<208x208xbf16>
    %cst_38 = arith.constant dense<0.000000e+00> : vector<208x256xf32>
    %73 = tpu.matmul %72, %71, %cst_38 {dimension_numbers = #tpu.dot_dimension_numbers<[1], [0], [0], [1], [0, 0, 1, 1], [], []>} : vector<208x208xbf16>, vector<208x256xbf16>, vector<208x256xf32> -> vector<208x256xf32>
    %74 = vector.broadcast %55 : vector<1x256xf32> to vector<208x256xf32>
    %75 = arith.addf %73, %74 : vector<208x256xf32>
    %cst_39 = arith.constant dense<0.000000e+00> : vector<208xf32>
    %76 = vector.multi_reduction <add>, %75, %cst_39 [1] : vector<208x256xf32> to vector<208xf32>
    %77 = vector.shape_cast %76 : vector<208xf32> to vector<208x1xf32>
    %cst_40 = arith.constant 2.560000e+02 : f32
    %78 = vector.broadcast %cst_40 : f32 to vector<208x1xf32>
    %79 = arith.divf %77, %78 : vector<208x1xf32>
    %80 = vector.broadcast %79 : vector<208x1xf32> to vector<208x256xf32>
    %81 = arith.subf %75, %80 : vector<208x256xf32>
    %82 = arith.mulf %81, %81 : vector<208x256xf32>
    %cst_41 = arith.constant dense<0.000000e+00> : vector<208xf32>
    %83 = vector.multi_reduction <add>, %82, %cst_41 [1] : vector<208x256xf32> to vector<208xf32>
    %84 = vector.shape_cast %83 : vector<208xf32> to vector<208x1xf32>
    %cst_42 = arith.constant 2.560000e+02 : f32
    %85 = vector.broadcast %cst_42 : f32 to vector<208x1xf32>
    %86 = arith.divf %84, %85 : vector<208x1xf32>
    %87 = vector.broadcast %79 : vector<208x1xf32> to vector<208x256xf32>
    %88 = arith.subf %75, %87 : vector<208x256xf32>
    %cst_43 = arith.constant 9.99999974E-6 : f32
    %89 = vector.broadcast %cst_43 : f32 to vector<208x1xf32>
    %90 = arith.addf %86, %89 : vector<208x1xf32>
    %91 = math.rsqrt %90 : vector<208x1xf32>
    %92 = vector.broadcast %91 : vector<208x1xf32> to vector<208x256xf32>
    %93 = arith.mulf %88, %92 : vector<208x256xf32>
    %94 = tpu.iota {dimensions = array<i32: 0>} : vector<208x1xi32>
    %c202_i32_44 = arith.constant 202 : i32
    %95 = vector.broadcast %c202_i32_44 : i32 to vector<208x1xi32>
    %96 = arith.cmpi slt, %94, %95 : vector<208x1xi32>
    %97 = arith.subf %52, %93 : vector<208x256xf32>
    %cst_45 = arith.constant 0.000000e+00 : f32
    %98 = vector.shape_cast %96 : vector<208x1xi1> to vector<208x1xi1>
    %99 = vector.broadcast %98 : vector<208x1xi1> to vector<208x256xi1>
    %100 = vector.broadcast %cst_45 : f32 to vector<208x256xf32>
    %101 = arith.select %99, %97, %100 : vector<208x256xi1>, vector<208x256xf32>
    %c0_46 = arith.constant 0 : index
    %102 = memref.load %arg14[%c0_46] : memref<1xf32, #tpu.memory_space<smem>>
    %103 = arith.mulf %101, %101 : vector<208x256xf32>
    %104 = vector.shape_cast %103 : vector<208x256xf32> to vector<1x208x256xf32>
    %cst_47 = arith.constant dense<0.000000e+00> : vector<1xf32>
    %105 = vector.multi_reduction <add>, %104, %cst_47 [1, 2] : vector<1x208x256xf32> to vector<1xf32>
    %106 = vector.shape_cast %105 : vector<1xf32> to vector<1x1x1xf32>
    %107 = vector.extract %106[0, 0, 0] : f32 from vector<1x1x1xf32>
    %108 = arith.addf %102, %107 : f32
    %c0_48 = arith.constant 0 : index
    %109 = memref.load %arg14[%c0_48] : memref<1xf32, #tpu.memory_space<smem>>
    memref.store %108, %arg14[%c0_48] : memref<1xf32, #tpu.memory_space<smem>>
    %c8_i32 = arith.constant 8 : i32
    %110 = arith.muli %arg0, %c8_i32 : i32
    %111 = tpu.assume_multiple %110, 8 : i32
    %112 = vector.extract_strided_slice %34 {offsets = [200, 0], sizes = [8, 256], strides = [1, 1]} : vector<208x256xf32> to vector<8x256xf32>
    %113 = arith.index_cast %111 : i32 to index
    %c0_49 = arith.constant 0 : index
    %114 = vector.load %arg12[%113, %c0_49] : memref<32x256xf32, #tpu.memory_space<vmem>>, vector<8x256xf32>
    tpu.vector_store %arg12[%113, %c0_49], %112 {strides = array<i32>} : memref<32x256xf32, #tpu.memory_space<vmem>>, vector<8x256xf32>,
    %115 = vector.extract_strided_slice %75 {offsets = [200, 0], sizes = [8, 256], strides = [1, 1]} : vector<208x256xf32> to vector<8x256xf32>
    %116 = arith.index_cast %111 : i32 to index
    %c0_50 = arith.constant 0 : index
    %117 = vector.load %arg13[%116, %c0_50] : memref<32x256xf32, #tpu.memory_space<vmem>>, vector<8x256xf32>
    tpu.vector_store %arg13[%116, %c0_50], %115 {strides = array<i32>} : memref<32x256xf32, #tpu.memory_space<vmem>>, vector<8x256xf32>,
    %c3_i32 = arith.constant 3 : i32
    %118 = arith.cmpi eq, %arg0, %c3_i32 : i32
    %119 = arith.extui %118 : i1 to i32
    %c0_i32_51 = arith.constant 0 : i32
    %120 = arith.cmpi ne, %119, %c0_i32_51 : i32
    scf.if %120 {
      %c0_52 = arith.constant 0 : index
      %c0_53 = arith.constant 0 : index
      %121 = vector.load %arg12[%c0_52, %c0_53] : memref<32x256xf32, #tpu.memory_space<vmem>>, vector<32x256xf32>
      %122 = arith.truncf %121 : vector<32x256xf32> to vector<32x256xbf16>
      %c0_54 = arith.constant 0 : index
      %c0_55 = arith.constant 0 : index
      %123 = vector.load %arg13[%c0_54, %c0_55] : memref<32x256xf32, #tpu.memory_space<vmem>>, vector<32x256xf32>
      %124 = arith.truncf %123 : vector<32x256xf32> to vector<32x256xbf16>
      %125 = tpu.iota {dimensions = array<i32: 1>} : vector<32x32xi32>
      %c8_i32_56 = arith.constant 8 : i32
      %c0_i32_57 = arith.constant 0 : i32
      %126 = arith.cmpi eq, %c8_i32_56, %c0_i32_57 : i32
      %c1_i32 = arith.constant 1 : i32
      %127 = arith.select %126, %c1_i32, %c8_i32_56 : i32
      %128 = vector.broadcast %127 : i32 to vector<32x32xi32>
      %129 = arith.remsi %125, %128 : vector<32x32xi32>
      %c0_i32_58 = arith.constant 0 : i32
      %130 = vector.broadcast %c0_i32_58 : i32 to vector<32x32xi32>
      %131 = arith.cmpi ne, %129, %130 : vector<32x32xi32>
      %c0_i32_59 = arith.constant 0 : i32
      %132 = vector.broadcast %c0_i32_59 : i32 to vector<32x32xi32>
      %133 = arith.cmpi slt, %129, %132 : vector<32x32xi32>
      %c0_i32_60 = arith.constant 0 : i32
      %134 = arith.cmpi slt, %127, %c0_i32_60 : i32
      %135 = vector.broadcast %134 : i1 to vector<32x32xi1>
      %136 = vector.broadcast %135 : vector<32x32xi1> to vector<32x32xi1>
      %137 = arith.xori %133, %136 : vector<32x32xi1>
      %138 = arith.andi %137, %131 : vector<32x32xi1>
      %139 = vector.broadcast %127 : i32 to vector<32x32xi32>
      %140 = arith.addi %129, %139 : vector<32x32xi32>
      %141 = arith.select %138, %140, %129 : vector<32x32xi1>, vector<32x32xi32>
      %c2_i32 = arith.constant 2 : i32
      %142 = vector.broadcast %c2_i32 : i32 to vector<32x32xi32>
      %143 = arith.cmpi slt, %141, %142 : vector<32x32xi32>
      %c0_61 = arith.constant 0 : index
      %c0_62 = arith.constant 0 : index
      %144 = vector.load %arg7[%c0_61, %c0_62] : memref<256x256xbf16, #tpu.memory_space<vmem>>, vector<256x256xbf16>
      %c0_63 = arith.constant 0 : index
      %c0_64 = arith.constant 0 : index
      %145 = vector.load %arg8[%c0_63, %c0_64] : memref<1x256xf32, #tpu.memory_space<vmem>>, vector<1x256xf32>
      %cst_65 = arith.constant dense<0.000000e+00> : vector<32x32xf32>
      %146 = tpu.matmul %122, %122, %cst_65 {dimension_numbers = #tpu.dot_dimension_numbers<[1], [1], [0], [0], [0, 0, 1, 0], [], []>} : vector<32x256xbf16>, vector<32x256xbf16>, vector<32x32xf32> -> vector<32x32xf32>
      %cst_66 = arith.constant 0xFF800000 : f32
      %147 = vector.broadcast %cst_66 : f32 to vector<32x32xf32>
      %148 = arith.select %143, %146, %147 : vector<32x32xi1>, vector<32x32xf32>
      %cst_67 = arith.constant dense<0xFF800000> : vector<32xf32>
      %149 = vector.multi_reduction <maximumf>, %148, %cst_67 [1] : vector<32x32xf32> to vector<32xf32>
      %cst_68 = arith.constant 0xFF800000 : f32
      %150 = vector.broadcast %cst_68 : f32 to vector<32xf32>
      %151 = arith.maximumf %150, %149 : vector<32xf32>
      %152 = vector.shape_cast %151 : vector<32xf32> to vector<32x1xf32>
      %153 = vector.broadcast %152 : vector<32x1xf32> to vector<32x32xf32>
      %154 = arith.subf %148, %153 : vector<32x32xf32>
      %155 = math.exp %154 : vector<32x32xf32>
      %cst_69 = arith.constant dense<0.000000e+00> : vector<32xf32>
      %156 = vector.multi_reduction <add>, %155, %cst_69 [1] : vector<32x32xf32> to vector<32xf32>
      %157 = vector.shape_cast %156 : vector<32xf32> to vector<32x1xf32>
      %158 = vector.broadcast %157 : vector<32x1xf32> to vector<32x32xf32>
      %159 = arith.divf %155, %158 : vector<32x32xf32>
      %cst_70 = arith.constant dense<0.000000e+00> : vector<32x256xf32>
      %160 = tpu.matmul %122, %144, %cst_70 {dimension_numbers = #tpu.dot_dimension_numbers<[1], [0], [0], [1], [0, 0, 1, 1], [], []>} : vector<32x256xbf16>, vector<256x256xbf16>, vector<32x256xf32> -> vector<32x256xf32>
      %161 = arith.truncf %160 : vector<32x256xf32> to vector<32x256xbf16>
      %162 = arith.truncf %159 : vector<32x32xf32> to vector<32x32xbf16>
      %cst_71 = arith.constant dense<0.000000e+00> : vector<32x256xf32>
      %163 = tpu.matmul %162, %161, %cst_71 {dimension_numbers = #tpu.dot_dimension_numbers<[1], [0], [0], [1], [0, 0, 1, 1], [], []>} : vector<32x32xbf16>, vector<32x256xbf16>, vector<32x256xf32> -> vector<32x256xf32>
      %164 = vector.broadcast %145 : vector<1x256xf32> to vector<32x256xf32>
      %165 = arith.addf %163, %164 : vector<32x256xf32>
      %cst_72 = arith.constant dense<0.000000e+00> : vector<32xf32>
      %166 = vector.multi_reduction <add>, %165, %cst_72 [1] : vector<32x256xf32> to vector<32xf32>
      %167 = vector.shape_cast %166 : vector<32xf32> to vector<32x1xf32>
      %cst_73 = arith.constant 2.560000e+02 : f32
      %168 = vector.broadcast %cst_73 : f32 to vector<32x1xf32>
      %169 = arith.divf %167, %168 : vector<32x1xf32>
      %170 = vector.broadcast %169 : vector<32x1xf32> to vector<32x256xf32>
      %171 = arith.subf %165, %170 : vector<32x256xf32>
      %172 = arith.mulf %171, %171 : vector<32x256xf32>
      %cst_74 = arith.constant dense<0.000000e+00> : vector<32xf32>
      %173 = vector.multi_reduction <add>, %172, %cst_74 [1] : vector<32x256xf32> to vector<32xf32>
      %174 = vector.shape_cast %173 : vector<32xf32> to vector<32x1xf32>
      %cst_75 = arith.constant 2.560000e+02 : f32
      %175 = vector.broadcast %cst_75 : f32 to vector<32x1xf32>
      %176 = arith.divf %174, %175 : vector<32x1xf32>
      %177 = vector.broadcast %169 : vector<32x1xf32> to vector<32x256xf32>
      %178 = arith.subf %165, %177 : vector<32x256xf32>
      %cst_76 = arith.constant 9.99999974E-6 : f32
      %179 = vector.broadcast %cst_76 : f32 to vector<32x1xf32>
      %180 = arith.addf %176, %179 : vector<32x1xf32>
      %181 = math.rsqrt %180 : vector<32x1xf32>
      %182 = vector.broadcast %181 : vector<32x1xf32> to vector<32x256xf32>
      %183 = arith.mulf %178, %182 : vector<32x256xf32>
      %c0_77 = arith.constant 0 : index
      %c0_78 = arith.constant 0 : index
      %184 = vector.load %arg7[%c0_77, %c0_78] : memref<256x256xbf16, #tpu.memory_space<vmem>>, vector<256x256xbf16>
      %c0_79 = arith.constant 0 : index
      %c0_80 = arith.constant 0 : index
      %185 = vector.load %arg8[%c0_79, %c0_80] : memref<1x256xf32, #tpu.memory_space<vmem>>, vector<1x256xf32>
      %cst_81 = arith.constant dense<0.000000e+00> : vector<32x32xf32>
      %186 = tpu.matmul %124, %124, %cst_81 {dimension_numbers = #tpu.dot_dimension_numbers<[1], [1], [0], [0], [0, 0, 1, 0], [], []>} : vector<32x256xbf16>, vector<32x256xbf16>, vector<32x32xf32> -> vector<32x32xf32>
      %cst_82 = arith.constant 0xFF800000 : f32
      %187 = vector.broadcast %cst_82 : f32 to vector<32x32xf32>
      %188 = arith.select %143, %186, %187 : vector<32x32xi1>, vector<32x32xf32>
      %cst_83 = arith.constant dense<0xFF800000> : vector<32xf32>
      %189 = vector.multi_reduction <maximumf>, %188, %cst_83 [1] : vector<32x32xf32> to vector<32xf32>
      %cst_84 = arith.constant 0xFF800000 : f32
      %190 = vector.broadcast %cst_84 : f32 to vector<32xf32>
      %191 = arith.maximumf %190, %189 : vector<32xf32>
      %192 = vector.shape_cast %191 : vector<32xf32> to vector<32x1xf32>
      %193 = vector.broadcast %192 : vector<32x1xf32> to vector<32x32xf32>
      %194 = arith.subf %188, %193 : vector<32x32xf32>
      %195 = math.exp %194 : vector<32x32xf32>
      %cst_85 = arith.constant dense<0.000000e+00> : vector<32xf32>
      %196 = vector.multi_reduction <add>, %195, %cst_85 [1] : vector<32x32xf32> to vector<32xf32>
      %197 = vector.shape_cast %196 : vector<32xf32> to vector<32x1xf32>
      %198 = vector.broadcast %197 : vector<32x1xf32> to vector<32x32xf32>
      %199 = arith.divf %195, %198 : vector<32x32xf32>
      %cst_86 = arith.constant dense<0.000000e+00> : vector<32x256xf32>
      %200 = tpu.matmul %124, %184, %cst_86 {dimension_numbers = #tpu.dot_dimension_numbers<[1], [0], [0], [1], [0, 0, 1, 1], [], []>} : vector<32x256xbf16>, vector<256x256xbf16>, vector<32x256xf32> -> vector<32x256xf32>
      %201 = arith.truncf %200 : vector<32x256xf32> to vector<32x256xbf16>
      %202 = arith.truncf %199 : vector<32x32xf32> to vector<32x32xbf16>
      %cst_87 = arith.constant dense<0.000000e+00> : vector<32x256xf32>
      %203 = tpu.matmul %202, %201, %cst_87 {dimension_numbers = #tpu.dot_dimension_numbers<[1], [0], [0], [1], [0, 0, 1, 1], [], []>} : vector<32x32xbf16>, vector<32x256xbf16>, vector<32x256xf32> -> vector<32x256xf32>
      %204 = vector.broadcast %185 : vector<1x256xf32> to vector<32x256xf32>
      %205 = arith.addf %203, %204 : vector<32x256xf32>
      %cst_88 = arith.constant dense<0.000000e+00> : vector<32xf32>
      %206 = vector.multi_reduction <add>, %205, %cst_88 [1] : vector<32x256xf32> to vector<32xf32>
      %207 = vector.shape_cast %206 : vector<32xf32> to vector<32x1xf32>
      %cst_89 = arith.constant 2.560000e+02 : f32
      %208 = vector.broadcast %cst_89 : f32 to vector<32x1xf32>
      %209 = arith.divf %207, %208 : vector<32x1xf32>
      %210 = vector.broadcast %209 : vector<32x1xf32> to vector<32x256xf32>
      %211 = arith.subf %205, %210 : vector<32x256xf32>
      %212 = arith.mulf %211, %211 : vector<32x256xf32>
      %cst_90 = arith.constant dense<0.000000e+00> : vector<32xf32>
      %213 = vector.multi_reduction <add>, %212, %cst_90 [1] : vector<32x256xf32> to vector<32xf32>
      %214 = vector.shape_cast %213 : vector<32xf32> to vector<32x1xf32>
      %cst_91 = arith.constant 2.560000e+02 : f32
      %215 = vector.broadcast %cst_91 : f32 to vector<32x1xf32>
      %216 = arith.divf %214, %215 : vector<32x1xf32>
      %217 = vector.broadcast %209 : vector<32x1xf32> to vector<32x256xf32>
      %218 = arith.subf %205, %217 : vector<32x256xf32>
      %cst_92 = arith.constant 9.99999974E-6 : f32
      %219 = vector.broadcast %cst_92 : f32 to vector<32x1xf32>
      %220 = arith.addf %216, %219 : vector<32x1xf32>
      %221 = math.rsqrt %220 : vector<32x1xf32>
      %222 = vector.broadcast %221 : vector<32x1xf32> to vector<32x256xf32>
      %223 = arith.mulf %218, %222 : vector<32x256xf32>
      %224 = tpu.iota {dimensions = array<i32: 0>} : vector<32x1xi32>
      %c8_i32_93 = arith.constant 8 : i32
      %c0_i32_94 = arith.constant 0 : i32
      %225 = arith.cmpi eq, %c8_i32_93, %c0_i32_94 : i32
      %c1_i32_95 = arith.constant 1 : i32
      %226 = arith.select %225, %c1_i32_95, %c8_i32_93 : i32
      %227 = vector.broadcast %226 : i32 to vector<32x1xi32>
      %228 = arith.remsi %224, %227 : vector<32x1xi32>
      %c0_i32_96 = arith.constant 0 : i32
      %229 = vector.broadcast %c0_i32_96 : i32 to vector<32x1xi32>
      %230 = arith.cmpi ne, %228, %229 : vector<32x1xi32>
      %c0_i32_97 = arith.constant 0 : i32
      %231 = vector.broadcast %c0_i32_97 : i32 to vector<32x1xi32>
      %232 = arith.cmpi slt, %228, %231 : vector<32x1xi32>
      %c0_i32_98 = arith.constant 0 : i32
      %233 = arith.cmpi slt, %226, %c0_i32_98 : i32
      %234 = vector.broadcast %233 : i1 to vector<32x1xi1>
      %235 = vector.broadcast %234 : vector<32x1xi1> to vector<32x1xi1>
      %236 = arith.xori %232, %235 : vector<32x1xi1>
      %237 = arith.andi %236, %230 : vector<32x1xi1>
      %238 = vector.broadcast %226 : i32 to vector<32x1xi32>
      %239 = arith.addi %228, %238 : vector<32x1xi32>
      %240 = arith.select %237, %239, %228 : vector<32x1xi1>, vector<32x1xi32>
      %c2_i32_99 = arith.constant 2 : i32
      %241 = vector.broadcast %c2_i32_99 : i32 to vector<32x1xi32>
      %242 = arith.cmpi slt, %240, %241 : vector<32x1xi32>
      %243 = arith.subf %183, %223 : vector<32x256xf32>
      %cst_100 = arith.constant 0.000000e+00 : f32
      %244 = vector.shape_cast %242 : vector<32x1xi1> to vector<32x1xi1>
      %245 = vector.broadcast %244 : vector<32x1xi1> to vector<32x256xi1>
      %246 = vector.broadcast %cst_100 : f32 to vector<32x256xf32>
      %247 = arith.select %245, %243, %246 : vector<32x256xi1>, vector<32x256xf32>
      %248 = arith.mulf %247, %247 : vector<32x256xf32>
      %249 = vector.shape_cast %248 : vector<32x256xf32> to vector<1x32x256xf32>
      %cst_101 = arith.constant dense<0.000000e+00> : vector<1xf32>
      %250 = vector.multi_reduction <add>, %249, %cst_101 [1, 2] : vector<1x32x256xf32> to vector<1xf32>
      %251 = vector.shape_cast %250 : vector<1xf32> to vector<1x1x1xf32>
      %252 = vector.extract %251[0, 0, 0] : f32 from vector<1x1x1xf32>
      %cst_102 = arith.constant 2.048000e+03 : f32
      %253 = arith.divf %252, %cst_102 : f32
      %c0_103 = arith.constant 0 : index
      %254 = memref.load %arg14[%c0_103] : memref<1xf32, #tpu.memory_space<smem>>
      %cst_104 = arith.constant 2.068480e+05 : f32
      %255 = arith.divf %254, %cst_104 : f32
      %256 = arith.addf %255, %253 : f32
      %c0_105 = arith.constant 0 : index
      %c0_106 = arith.constant 0 : index
      %257 = memref.load %arg9[%c0_105, %c0_106] : memref<1x1xf32, #tpu.memory_space<smem>>
      memref.store %256, %arg9[%c0_105, %c0_106] : memref<1x1xf32, #tpu.memory_space<smem>>
    } else {
    }
    return
  }
  func.func @transform_0(%arg0: i32) -> (i32, i32) {
    %c0_i32 = arith.constant 0 : i32
    %c0_i32_0 = arith.constant 0 : i32
    %c0_i32_1 = arith.constant 0 : i32
    return %c0_i32, %c0_i32_0 : i32, i32
  }
  func.func @transform_1(%arg0: i32) -> (i32, i32) {
    %c0_i32 = arith.constant 0 : i32
    %c0_i32_0 = arith.constant 0 : i32
    %c0_i32_1 = arith.constant 0 : i32
    return %c0_i32, %c0_i32_0 : i32, i32
  }
  func.func @transform_2(%arg0: i32) -> (i32, i32, i32) {
    %c0_i32 = arith.constant 0 : i32
    %c0_i32_0 = arith.constant 0 : i32
    %c0_i32_1 = arith.constant 0 : i32
    return %arg0, %c0_i32, %c0_i32_0 : i32, i32, i32
  }
  func.func @transform_3(%arg0: i32) -> (i32, i32, i32) {
    %c0_i32 = arith.constant 0 : i32
    %c0_i32_0 = arith.constant 0 : i32
    %c0_i32_1 = arith.constant 0 : i32
    return %arg0, %c0_i32, %c0_i32_0 : i32, i32, i32
  }
  func.func @transform_4(%arg0: i32) -> (i32, i32) {
    %c0_i32 = arith.constant 0 : i32
    %c0_i32_0 = arith.constant 0 : i32
    %c0_i32_1 = arith.constant 0 : i32
    return %c0_i32, %c0_i32_0 : i32, i32
  }
  func.func @transform_5(%arg0: i32) -> (i32, i32) {
    %c0_i32 = arith.constant 0 : i32
    %c0_i32_0 = arith.constant 0 : i32
    %c0_i32_1 = arith.constant 0 : i32
    return %c0_i32, %c0_i32_0 : i32, i32
  }
  func.func @transform_6(%arg0: i32) -> (i32, i32) {
    %c0_i32 = arith.constant 0 : i32
    %c0_i32_0 = arith.constant 0 : i32
    %c0_i32_1 = arith.constant 0 : i32
    return %c0_i32, %c0_i32_0 : i32, i32
  }
  func.func @transform_7(%arg0: i32) -> (i32, i32) {
    %c0_i32 = arith.constant 0 : i32
    %c0_i32_0 = arith.constant 0 : i32
    %c0_i32_1 = arith.constant 0 : i32
    return %c0_i32, %c0_i32_0 : i32, i32
  }
  func.func @transform_8(%arg0: i32) -> (i32, i32) {
    %c0_i32 = arith.constant 0 : i32
    %c0_i32_0 = arith.constant 0 : i32
    %c0_i32_1 = arith.constant 0 : i32
    return %c0_i32, %c0_i32_0 : i32, i32
  }
}

</mosaic_0001>

<llo_original>
// kernel: distill_forward.2
$region0: #{distill_forward.2}
  #allocation0 [shape = 'u32[]', space=smem, size = 0x4, offset = 0x4, fixed_abs, tag = 'smem constant byte address 0x4 - core index']
  #allocation1 [shape = 'u32[144,128]{1,0:T(1,128)}', space=vmem, size = 0x12000, scoped, tag = 'internal scratch']
  %s0 = inlined_call_operand.vmem [shape: f32[2,4,256], index: 0, kind: input, shape index: {}]
  %s1 = inlined_call_operand.vmem [shape: f32[2,4,256], index: 1, kind: input, shape index: {}]
  %s2 = inlined_call_operand.vmem [shape: f32[2,256,256], index: 2, kind: input, shape index: {}]
  %s3 = inlined_call_operand.vmem [shape: f32[2,256,256], index: 3, kind: input, shape index: {}]
  %s4 = inlined_call_operand.vmem [shape: bf16[256,256], index: 4, kind: input, shape index: {}]
  %s5 = inlined_call_operand.vmem [shape: f32[1,256], index: 5, kind: input, shape index: {}]
  %s6 = inlined_call_operand.vmem [shape: f32[100,256], index: 6, kind: input, shape index: {}]
  %s7 = inlined_call_operand.vmem [shape: bf16[2,4,256], index: 7, kind: output, shape index: {0}]
  %s8 = inlined_call_operand.vmem [shape: bf16[2,4,256], index: 8, kind: output, shape index: {1}]
  %s9 = inlined_call_operand.vmem [shape: bf16[2,100,256], index: 9, kind: output, shape index: {2}]
  %s10 = inlined_call_operand.vmem [shape: bf16[2,100,256], index: 10, kind: output, shape index: {3}]
  %11 = xla_tuple %s7, %s8, %s9, %s10
  %s12 = sld [smem:[#allocation0]]
  $region85: #{distill_forward.2} parent=0
    _
  %s14 = ssub.s32 1, %s12
  %s15 = scalar_select 0, %s14, %s12
  loop: start=0, step=1, limit=4
  $region2: #{distill_forward.2} parent=0 // loop_pre_header
    _
  $region3: #{distill_forward.2} parent=0 // loop_header
    %s17 = sphi 0, %s21
    %p18 = scmp.ge.s32.totalorder %s17, 4
    %s27 = sphi 0, %s29
    %s30 = sphi 0, %s27
    %s31 = sphi 0, %s30
    %s47 = sphi 0, %s31
    %s53 = sphi 0, %s55
    %s56 = sphi 0, %s53
    %s57 = sphi 0, %s56
    %s73 = sphi 0, %s57
    %s79 = sphi 0, %s81
    %s82 = sphi 0, %s79
    %s83 = sphi 0, %s82
    %s99 = sphi 0, %s83
    %s105 = sphi 0, %s107
    %s108 = sphi 0, %s105
    %s109 = sphi 0, %s108
    %s125 = sphi 0, %s109
    %s129 = sphi 0, %s129
    %s131 = sphi 0, %s129
    %s132 = sphi 0, %s131
    %s146 = sphi 0, %s132
    %s150 = sphi 0, %s150
    %s152 = sphi 0, %s150
    %s153 = sphi 0, %s152
    %s167 = sphi 0, %s153
    %s171 = sphi 0, %s171
    %s173 = sphi 0, %s171
    %s174 = sphi 0, %s173
    %s188 = sphi 0, %s174
    %s194 = sphi 0, %s196
    %s197 = sphi 0, %s194
    %s198 = sphi 0, %s197
    %s214 = sphi 0, %s198
    %s220 = sphi 0, %s222
    %s223 = sphi 0, %s220
    %s224 = sphi 0, %s223
    %s240 = sphi 0, %s224
    %s246 = sphi 0, %s248
    %s249 = sphi 0, %s246
    %s250 = sphi 0, %s249
    %s266 = sphi 0, %s250
    %s272 = sphi 0, %s274
    %s275 = sphi 0, %s272
    %s276 = sphi 0, %s275
    %s292 = sphi 0, %s276
  $region4: #{distill_forward.2} parent=0 // loop_header_branch
    %20 = sbr.rel (%p18) target = $region8
  $region5: #{distill_forward.2} parent=0 // loop_body
    %s22 = ssub.s32 %s17, 1
    %s23 = ssub.s32 %s17, 2
    %s24 = sadd.s32 %s17, 1
    %s25 = ssub.s32 %s17, %s24
    %p26 = scmp.eq.s32.totalorder %s25, 0
    %s28 = sadd.s32 %s27, 1
    %s29 = scalar_select %p26, %s27, %s28
    %p32 = pneg %p26
    %p33 = scmp.eq.s32.totalorder %s17, 1
    %p34 = por %p32, %p33
    %p35 = scmp.ne.s32.totalorder %s27, %s30
    %p36 = scmp.eq.s32.totalorder %s17, 0
    %p37 = por %p35, %p36
    %p38 = scmp.ne.s32.totalorder %s27, %s30
    %p39 = scmp.eq.s32.totalorder %s22, 1
    %p40 = por %p38, %p39
    %p41 = scmp.ne.s32.totalorder %s30, %s31
    %p42 = scmp.eq.s32.totalorder %s22, 0
    %p43 = por %p41, %p42
    %p44 = scmp.ne.s32.totalorder %s30, %s31
    %p45 = scmp.eq.s32.totalorder %s23, 1
    %p46 = por %p44, %p45
    %p48 = scmp.ne.s32.totalorder %s31, %s47
    %p49 = scmp.eq.s32.totalorder %s23, 0
    %p50 = por %p48, %p49
    %s51 = ssub.s32 %s17, %s24
    %p52 = scmp.eq.s32.totalorder %s51, 0
    %s54 = sadd.s32 %s53, 1
    %s55 = scalar_select %p52, %s53, %s54
    %p58 = pneg %p52
    %p59 = scmp.eq.s32.totalorder %s17, 1
    %p60 = por %p58, %p59
    %p61 = scmp.ne.s32.totalorder %s53, %s56
    %p62 = scmp.eq.s32.totalorder %s17, 0
    %p63 = por %p61, %p62
    %p64 = scmp.ne.s32.totalorder %s53, %s56
    %p65 = scmp.eq.s32.totalorder %s22, 1
    %p66 = por %p64, %p65
    %p67 = scmp.ne.s32.totalorder %s56, %s57
    %p68 = scmp.eq.s32.totalorder %s22, 0
    %p69 = por %p67, %p68
    %p70 = scmp.ne.s32.totalorder %s56, %s57
    %p71 = scmp.eq.s32.totalorder %s23, 1
    %p72 = por %p70, %p71
    %p74 = scmp.ne.s32.totalorder %s57, %s73
    %p75 = scmp.eq.s32.totalorder %s23, 0
    %p76 = por %p74, %p75
    %s77 = ssub.s32 %s17, %s24
    %p78 = scmp.eq.s32.totalorder %s77, 0
    %s80 = sadd.s32 %s79, 1
    %s81 = scalar_select %p78, %s79, %s80
    %p84 = pneg %p78
    %p85 = scmp.eq.s32.totalorder %s17, 1
    %p86 = por %p84, %p85
    %p87 = scmp.ne.s32.totalorder %s79, %s82
    %p88 = scmp.eq.s32.totalorder %s17, 0
    %p89 = por %p87, %p88
    %p90 = scmp.ne.s32.totalorder %s79, %s82
    %p91 = scmp.eq.s32.totalorder %s22, 1
    %p92 = por %p90, %p91
    %p93 = scmp.ne.s32.totalorder %s82, %s83
    %p94 = scmp.eq.s32.totalorder %s22, 0
    %p95 = por %p93, %p94
    %p96 = scmp.ne.s32.totalorder %s82, %s83
    %p97 = scmp.eq.s32.totalorder %s23, 1
    %p98 = por %p96, %p97
    %p100 = scmp.ne.s32.totalorder %s83, %s99
    %p101 = scmp.eq.s32.totalorder %s23, 0
    %p102 = por %p100, %p101
    %s103 = ssub.s32 %s17, %s24
    %p104 = scmp.eq.s32.totalorder %s103, 0
    %s106 = sadd.s32 %s105, 1
    %s107 = scalar_select %p104, %s105, %s106
    %p110 = pneg %p104
    %p111 = scmp.eq.s32.totalorder %s17, 1
    %p112 = por %p110, %p111
    %p113 = scmp.ne.s32.totalorder %s105, %s108
    %p114 = scmp.eq.s32.totalorder %s17, 0
    %p115 = por %p113, %p114
    %p116 = scmp.ne.s32.totalorder %s105, %s108
    %p117 = scmp.eq.s32.totalorder %s22, 1
    %p118 = por %p116, %p117
    %p119 = scmp.ne.s32.totalorder %s108, %s109
    %p120 = scmp.eq.s32.totalorder %s22, 0
    %p121 = por %p119, %p120
    %p122 = scmp.ne.s32.totalorder %s108, %s109
    %p123 = scmp.eq.s32.totalorder %s23, 1
    %p124 = por %p122, %p123
    %p126 = scmp.ne.s32.totalorder %s109, %s125
    %p127 = scmp.eq.s32.totalorder %s23, 0
    %p128 = por %p126, %p127
    %s130 = sadd.s32 %s129, 1
    %p133 = scmp.eq.s32.totalorder %s17, 1
    %p134 = scmp.ne.s32.totalorder %s129, %s131
    %p135 = scmp.eq.s32.totalorder %s17, 0
    %p136 = por %p134, %p135
    %p137 = scmp.ne.s32.totalorder %s129, %s131
    %p138 = scmp.eq.s32.totalorder %s22, 1
    %p139 = por %p137, %p138
    %p140 = scmp.ne.s32.totalorder %s131, %s132
    %p141 = scmp.eq.s32.totalorder %s22, 0
    %p142 = por %p140, %p141
    %p143 = scmp.ne.s32.totalorder %s131, %s132
    %p144 = scmp.eq.s32.totalorder %s23, 1
    %p145 = por %p143, %p144
    %p147 = scmp.ne.s32.totalorder %s132, %s146
    %p148 = scmp.eq.s32.totalorder %s23, 0
    %p149 = por %p147, %p148
    %s151 = sadd.s32 %s150, 1
    %p154 = scmp.eq.s32.totalorder %s17, 1
    %p155 = scmp.ne.s32.totalorder %s150, %s152
    %p156 = scmp.eq.s32.totalorder %s17, 0
    %p157 = por %p155, %p156
    %p158 = scmp.ne.s32.totalorder %s150, %s152
    %p159 = scmp.eq.s32.totalorder %s22, 1
    %p160 = por %p158, %p159
    %p161 = scmp.ne.s32.totalorder %s152, %s153
    %p162 = scmp.eq.s32.totalorder %s22, 0
    %p163 = por %p161, %p162
    %p164 = scmp.ne.s32.totalorder %s152, %s153
    %p165 = scmp.eq.s32.totalorder %s23, 1
    %p166 = por %p164, %p165
    %p168 = scmp.ne.s32.totalorder %s153, %s167
    %p169 = scmp.eq.s32.totalorder %s23, 0
    %p170 = por %p168, %p169
    %s172 = sadd.s32 %s171, 1
    %p175 = scmp.eq.s32.totalorder %s17, 1
    %p176 = scmp.ne.s32.totalorder %s171, %s173
    %p177 = scmp.eq.s32.totalorder %s17, 0
    %p178 = por %p176, %p177
    %p179 = scmp.ne.s32.totalorder %s171, %s173
    %p180 = scmp.eq.s32.totalorder %s22, 1
    %p181 = por %p179, %p180
    %p182 = scmp.ne.s32.totalorder %s173, %s174
    %p183 = scmp.eq.s32.totalorder %s22, 0
    %p184 = por %p182, %p183
    %p185 = scmp.ne.s32.totalorder %s173, %s174
    %p186 = scmp.eq.s32.totalorder %s23, 1
    %p187 = por %p185, %p186
    %p189 = scmp.ne.s32.totalorder %s174, %s188
    %p190 = scmp.eq.s32.totalorder %s23, 0
    %p191 = por %p189, %p190
    %s192 = ssub.s32 %s17, %s24
    %p193 = scmp.eq.s32.totalorder %s192, 0
    %s195 = sadd.s32 %s194, 1
    %s196 = scalar_select %p193, %s194, %s195
    %p199 = pneg %p193
    %p200 = scmp.eq.s32.totalorder %s17, 1
    %p201 = por %p199, %p200
    %p202 = scmp.ne.s32.totalorder %s194, %s197
    %p203 = scmp.eq.s32.totalorder %s17, 0
    %p204 = por %p202, %p203
    %p205 = scmp.ne.s32.totalorder %s194, %s197
    %p206 = scmp.eq.s32.totalorder %s22, 1
    %p207 = por %p205, %p206
    %p208 = scmp.ne.s32.totalorder %s197, %s198
    %p209 = scmp.eq.s32.totalorder %s22, 0
    %p210 = por %p208, %p209
    %p211 = scmp.ne.s32.totalorder %s197, %s198
    %p212 = scmp.eq.s32.totalorder %s23, 1
    %p213 = por %p211, %p212
    %p215 = scmp.ne.s32.totalorder %s198, %s214
    %p216 = scmp.eq.s32.totalorder %s23, 0
    %p217 = por %p215, %p216
    %s218 = ssub.s32 %s17, %s24
    %p219 = scmp.eq.s32.totalorder %s218, 0
    %s221 = sadd.s32 %s220, 1
    %s222 = scalar_select %p219, %s220, %s221
    %p225 = pneg %p219
    %p226 = scmp.eq.s32.totalorder %s17, 1
    %p227 = por %p225, %p226
    %p228 = scmp.ne.s32.totalorder %s220, %s223
    %p229 = scmp.eq.s32.totalorder %s17, 0
    %p230 = por %p228, %p229
    %p231 = scmp.ne.s32.totalorder %s220, %s223
    %p232 = scmp.eq.s32.totalorder %s22, 1
    %p233 = por %p231, %p232
    %p234 = scmp.ne.s32.totalorder %s223, %s224
    %p235 = scmp.eq.s32.totalorder %s22, 0
    %p236 = por %p234, %p235
    %p237 = scmp.ne.s32.totalorder %s223, %s224
    %p238 = scmp.eq.s32.totalorder %s23, 1
    %p239 = por %p237, %p238
    %p241 = scmp.ne.s32.totalorder %s224, %s240
    %p242 = scmp.eq.s32.totalorder %s23, 0
    %p243 = por %p241, %p242
    %s244 = ssub.s32 %s17, %s24
    %p245 = scmp.eq.s32.totalorder %s244, 0
    %s247 = sadd.s32 %s246, 1
    %s248 = scalar_select %p245, %s246, %s247
    %p251 = pneg %p245
    %p252 = scmp.eq.s32.totalorder %s17, 1
    %p253 = por %p251, %p252
    %p254 = scmp.ne.s32.totalorder %s246, %s249
    %p255 = scmp.eq.s32.totalorder %s17, 0
    %p256 = por %p254, %p255
    %p257 = scmp.ne.s32.totalorder %s246, %s249
    %p258 = scmp.eq.s32.totalorder %s22, 1
    %p259 = por %p257, %p258
    %p260 = scmp.ne.s32.totalorder %s249, %s250
    %p261 = scmp.eq.s32.totalorder %s22, 0
    %p262 = por %p260, %p261
    %p263 = scmp.ne.s32.totalorder %s249, %s250
    %p264 = scmp.eq.s32.totalorder %s23, 1
    %p265 = por %p263, %p264
    %p267 = scmp.ne.s32.totalorder %s250, %s266
    %p268 = scmp.eq.s32.totalorder %s23, 0
    %p269 = por %p267, %p268
    %s270 = ssub.s32 %s17, %s24
    %p271 = scmp.eq.s32.totalorder %s270, 0
    %s273 = sadd.s32 %s272, 1
    %s274 = scalar_select %p271, %s272, %s273
    %p277 = pneg %p271
    %p278 = scmp.eq.s32.totalorder %s17, 1
    %p279 = por %p277, %p278
    %p280 = scmp.ne.s32.totalorder %s272, %s275
    %p281 = scmp.eq.s32.totalorder %s17, 0
    %p282 = por %p280, %p281
    %p283 = scmp.ne.s32.totalorder %s272, %s275
    %p284 = scmp.eq.s32.totalorder %s22, 1
    %p285 = por %p283, %p284
    %p286 = scmp.ne.s32.totalorder %s275, %s276
    %p287 = scmp.eq.s32.totalorder %s22, 0
    %p288 = por %p286, %p287
    %p289 = scmp.ne.s32.totalorder %s275, %s276
    %p290 = scmp.eq.s32.totalorder %s23, 1
    %p291 = por %p289, %p290
    %p293 = scmp.ne.s32.totalorder %s276, %s292
    %p294 = scmp.eq.s32.totalorder %s23, 0
    %p295 = por %p293, %p294
    %p296 = scmp.le.s32.totalorder 1, %s17
    %p297 = scmp.lt.s32.totalorder %s17, 3
    %p298 = pnand %p296, %p297
    %p299 = pneg %p298
    // Predicated region
    $region9: #{distill_forward.2} parent=5 // pred_check
      _
    $region10: #{distill_forward.2} parent=5 // pred_check_branch
      %301 = sbr.rel (%p298) target = $region12
    $region11: #{distill_forward.2} parent=5 // pred_region
      %s302 = ssub.s32 %s17, 1
      // Predicated region
      $region13: #{distill_forward.2} parent=11 // pred_check
        %p303 = pneg %p142
      $region14: #{distill_forward.2} parent=11 // pred_check_branch
        %305 = sbr.rel (%p303) target = $region16
      $region15: #{distill_forward.2} parent=11 // pred_region
        _
      $region16: #{distill_forward.2} parent=11 // pred_fallthru
        _
      // Predicated region
      $region17: #{distill_forward.2} parent=11 // pred_check
        %p306 = pneg %p163
      $region18: #{distill_forward.2} parent=11 // pred_check_branch
        %308 = sbr.rel (%p306) target = $region20
      $region19: #{distill_forward.2} parent=11 // pred_region
        _
      $region20: #{distill_forward.2} parent=11 // pred_fallthru
        _
      // Predicated region
      $region21: #{distill_forward.2} parent=11 // pred_check
        %p309 = pneg %p184
      $region22: #{distill_forward.2} parent=11 // pred_check_branch
        %311 = sbr.rel (%p309) target = $region24
      $region23: #{distill_forward.2} parent=11 // pred_region
        _
      $region24: #{distill_forward.2} parent=11 // pred_fallthru
        _
    $region12: #{distill_forward.2} parent=5 // pred_fallthru
      _
    %p312 = scmp.lt.s32.totalorder %s17, 2
    // Predicated region
    $region25: #{distill_forward.2} parent=5 // pred_check
      %p313 = pneg %p312
    $region26: #{distill_forward.2} parent=5 // pred_check_branch
      %315 = sbr.rel (%p313) target = $region28
    $region27: #{distill_forward.2} parent=5 // pred_region
      // Predicated region
      $region29: #{distill_forward.2} parent=27 // pred_check
        %p316 = pneg %p37
      $region30: #{distill_forward.2} parent=27 // pred_check_branch
        %318 = sbr.rel (%p316) target = $region32
      $region31: #{distill_forward.2} parent=27 // pred_region
        %p319 = scmp.lt.s32.totalorder %s17, 1
        %s320 = scalar_select %p319, %s17, 1
        %s321 = smul.addr %s320, 2
        %s322 = smul.addr %s321, 4
        %s323 = scalar_lea.vmem %s0, %s322
      $region32: #{distill_forward.2} parent=27 // pred_fallthru
        _
      // Predicated region
      $region33: #{distill_forward.2} parent=27 // pred_check
        %p324 = pneg %p63
      $region34: #{distill_forward.2} parent=27 // pred_check_branch
        %326 = sbr.rel (%p324) target = $region36
      $region35: #{distill_forward.2} parent=27 // pred_region
        %p327 = scmp.lt.s32.totalorder %s17, 1
        %s328 = scalar_select %p327, %s17, 1
        %s329 = smul.addr %s328, 2
        %s330 = smul.addr %s329, 4
        %s331 = scalar_lea.vmem %s1, %s330
      $region36: #{distill_forward.2} parent=27 // pred_fallthru
        _
      // Predicated region
      $region37: #{distill_forward.2} parent=27 // pred_check
        %p332 = pneg %p89
      $region38: #{distill_forward.2} parent=27 // pred_check_branch
        %334 = sbr.rel (%p332) target = $region40
      $region39: #{distill_forward.2} parent=27 // pred_region
        %p335 = scmp.lt.s32.totalorder %s17, 1
        %s336 = scalar_select %p335, %s17, 1
        %s337 = smul.addr %s336, 64
        %s338 = smul.addr %s337, 8
        %s339 = scalar_lea.vmem %s2, %s338
      $region40: #{distill_forward.2} parent=27 // pred_fallthru
        _
      // Predicated region
      $region41: #{distill_forward.2} parent=27 // pred_check
        %p340 = pneg %p115
      $region42: #{distill_forward.2} parent=27 // pred_check_branch
        %342 = sbr.rel (%p340) target = $region44
      $region43: #{distill_forward.2} parent=27 // pred_region
        %p343 = scmp.lt.s32.totalorder %s17, 1
        %s344 = scalar_select %p343, %s17, 1
        %s345 = smul.addr %s344, 64
        %s346 = smul.addr %s345, 8
        %s347 = scalar_lea.vmem %s3, %s346
      $region44: #{distill_forward.2} parent=27 // pred_fallthru
        _
    $region28: #{distill_forward.2} parent=5 // pred_fallthru
      _
    %p348 = scmp.le.s32.totalorder 1, %s17
    %p349 = scmp.lt.s32.totalorder %s17, 3
    %p350 = pnand %p348, %p349
    %p351 = pneg %p350
    // Predicated region
    $region45: #{distill_forward.2} parent=5 // pred_check
      _
    $region46: #{distill_forward.2} parent=5 // pred_check_branch
      %353 = sbr.rel (%p350) target = $region48
    $region47: #{distill_forward.2} parent=5 // pred_region
      %s354 = ssub.s32 %s17, 1
      %p355 = scmp.lt.s32.totalorder %s22, 1
      %s356 = scalar_select %p355, %s22, 1
      %s357 = smul.addr %s356, 2
      %s358 = smul.addr %s357, 4
      %s359 = scalar_lea.vmem %s0, %s358
      %p360 = pneg %p43
      %p361 = pneg %p40
      %p362 = scmp.lt.s32.totalorder %s22, 1
      %s363 = scalar_select %p362, %s22, 1
      %s364 = smul.addr %s363, 2
      %s365 = smul.addr %s364, 4
      %s366 = scalar_lea.vmem %s1, %s365
      %p367 = pneg %p69
      %p368 = pneg %p66
      %p369 = scmp.lt.s32.totalorder %s22, 1
      %s370 = scalar_select %p369, %s22, 1
      %s371 = smul.addr %s370, 64
      %s372 = smul.addr %s371, 8
      %s373 = scalar_lea.vmem %s2, %s372
      %p374 = pneg %p95
      %p375 = pneg %p92
      %p376 = scmp.lt.s32.totalorder %s22, 1
      %s377 = scalar_select %p376, %s22, 1
      %s378 = smul.addr %s377, 64
      %s379 = smul.addr %s378, 8
      %s380 = scalar_lea.vmem %s3, %s379
      %p381 = pneg %p121
      %p382 = pneg %p118
      %p383 = pneg %p142
      %p384 = pneg %p139
      %p385 = pneg %p163
      %p386 = pneg %p160
      %p387 = pneg %p184
      %p388 = pneg %p181
      %p389 = pneg %p210
      %p390 = pneg %p207
      %p391 = scmp.lt.s32.totalorder %s22, 1
      %s392 = scalar_select %p391, %s22, 1
      %s393 = smul.addr %s392, 2
      %s394 = smul.addr %s393, 2
      %s395 = scalar_lea.vmem %s7, %s394
      %p396 = pneg %p236
      %p397 = pneg %p233
      %p398 = scmp.lt.s32.totalorder %s22, 1
      %s399 = scalar_select %p398, %s22, 1
      %s400 = smul.addr %s399, 2
      %s401 = smul.addr %s400, 2
      %s402 = scalar_lea.vmem %s8, %s401
      %p403 = pneg %p262
      %p404 = pneg %p259
      %p405 = scmp.lt.s32.totalorder %s22, 1
      %s406 = scalar_select %p405, %s22, 1
      %s407 = smul.addr %s406, 26
      %s408 = smul.addr %s407, 4
      %s409 = scalar_lea.vmem %s9, %s408
      %p410 = pneg %p288
      %p411 = pneg %p285
      %p412 = scmp.lt.s32.totalorder %s22, 1
      %s413 = scalar_select %p412, %s22, 1
      %s414 = smul.addr %s413, 26
      %s415 = smul.addr %s414, 4
      %s416 = scalar_lea.vmem %s10, %s415
      %p417 = scmp.lt.s32.totalorder %s22, 1
      %s418 = scalar_select %p417, %s22, 1
      %s419 = smul.addr %s418, 2
      %s420 = smul.addr %s419, 4
      %s421 = scalar_lea.vmem %s0, %s420
      %p422 = scmp.lt.s32.totalorder %s22, 1
      %s423 = scalar_select %p422, %s22, 1
      %s424 = smul.addr %s423, 2
      %s425 = smul.addr %s424, 4
      %s426 = scalar_lea.vmem %s1, %s425
      %p427 = scmp.lt.s32.totalorder %s22, 1
      %s428 = scalar_select %p427, %s22, 1
      %s429 = smul.addr %s428, 64
      %s430 = smul.addr %s429, 8
      %s431 = scalar_lea.vmem %s2, %s430
      %p432 = scmp.lt.s32.totalorder %s22, 1
      %s433 = scalar_select %p432, %s22, 1
      %s434 = smul.addr %s433, 64
      %s435 = smul.addr %s434, 8
      %s436 = scalar_lea.vmem %s3, %s435
      %p437 = scmp.lt.s32.totalorder %s22, 1
      %s438 = scalar_select %p437, %s22, 1
      %s439 = smul.addr %s438, 2
      %s440 = smul.addr %s439, 2
      %s441 = scalar_lea.vmem %s7, %s440
      %p442 = scmp.lt.s32.totalorder %s22, 1
      %s443 = scalar_select %p442, %s22, 1
      %s444 = smul.addr %s443, 2
      %s445 = smul.addr %s444, 2
      %s446 = scalar_lea.vmem %s8, %s445
      %p447 = scmp.lt.s32.totalorder %s22, 1
      %s448 = scalar_select %p447, %s22, 1
      %s449 = smul.addr %s448, 26
      %s450 = smul.addr %s449, 4
      %s451 = scalar_lea.vmem %s9, %s450
      %p452 = scmp.lt.s32.totalorder %s22, 1
      %s453 = scalar_select %p452, %s22, 1
      %s454 = smul.addr %s453, 26
      %s455 = smul.addr %s454, 4
      %s456 = scalar_lea.vmem %s10, %s455
      %v457 = vld [vmem:[%s6] sm:$0xff]
      %v458 = vld [vmem:[%s6 + $0x8] sm:$0xff]
      %v459 = vld [vmem:[%s6 + $0x10] sm:$0xff]
      %v460 = vld [vmem:[%s6 + $0x18] sm:$0xff]
      %v461 = vld [vmem:[%s6 + $0x20] sm:$0xff]
      %v462 = vld [vmem:[%s6 + $0x28] sm:$0xff]
      %v463 = vld [vmem:[%s6 + $0x30] sm:$0xff]
      %v464 = vld [vmem:[%s6 + $0x38] sm:$0xff]
      %v465 = vld [vmem:[%s6 + $0x40] sm:$0xff]
      %v466 = vld [vmem:[%s6 + $0x48] sm:$0xff]
      %v467 = vld [vmem:[%s6 + $0x50] sm:$0xff]
      %v468 = vld [vmem:[%s6 + $0x58] sm:$0xff]
      %v469 = vld [vmem:[%s6 + $0x60] sm:$0xff]
      %v470 = vld [vmem:[%s6 + $0x68] sm:$0xff]
      %v471 = vld [vmem:[%s6 + $0x70] sm:$0xff]
      %v472 = vld [vmem:[%s6 + $0x78] sm:$0xff]
      %v473 = vld [vmem:[%s6 + $0x80] sm:$0xff]
      %v474 = vld [vmem:[%s6 + $0x88] sm:$0xff]
      %v475 = vld [vmem:[%s6 + $0x90] sm:$0xff]
      %v476 = vld [vmem:[%s6 + $0x98] sm:$0xff]
      %v477 = vld [vmem:[%s6 + $0xa0] sm:$0xff]
      %v478 = vld [vmem:[%s6 + $0xa8] sm:$0xff]
      %v479 = vld [vmem:[%s6 + $0xb0] sm:$0xff]
      %v480 = vld [vmem:[%s6 + $0xb8] sm:$0xff]
      %v481 = vld [vmem:[%s6 + $0xc0] sm:$0xf]
      %v482 = vld [vmem:[%s6 + $0xc8] sm:$0xf]
      %v483 = vpack.c.bf16 %v459, %v457
      %v484 = vpack.c.bf16 %v460, %v458
      %v485 = vpack.c.bf16 %v463, %v461
      %v486 = vpack.c.bf16 %v464, %v462
      %v487 = vpack.c.bf16 %v467, %v465
      %v488 = vpack.c.bf16 %v468, %v466
      %v489 = vpack.c.bf16 %v471, %v469
      %v490 = vpack.c.bf16 %v472, %v470
      %v491 = vpack.c.bf16 %v475, %v473
      %v492 = vpack.c.bf16 %v476, %v474
      %v493 = vpack.c.bf16 %v479, %v477
      %v494 = vpack.c.bf16 %v480, %v478
      %v495 = vpack.c.bf16 %v481, %v481
      %v496 = vpack.c.bf16 %v482, %v482
      %v497 = vld [vmem:[%s421] sm:$0xff]
      %v499 = vcombine.high %v497, %v497
      %vm501 = vcmask 1043456
      %v502 = vsel %vm501, %v497, -inf
      %v503 = vrot.slane %v502, 4
      %v504 = vmax.f32 %v502, %v503
      %v505 = vrot.slane %v504, 2
      %v506 = vmax.f32 %v504, %v505
      %v507 = vrot.slane %v506, 1
      %v508 = vmax.f32 %v506, %v507
      %v509 = vsel %vm501, %v499, -inf
      %v510 = vrot.slane %v509, 4
      %v511 = vmax.f32 %v509, %v510
      %v512 = vrot.slane %v511, 2
      %v513 = vmax.f32 %v511, %v512
      %v514 = vrot.slane %v513, 1
      %v515 = vmax.f32 %v513, %v514
      %v518 = vcombine.low %v508, %v515
      %v520 = vsub.f32 %v497, %v518
      %v521 = vmul.f32 %v520, 1.442695
      %v522 = vpow.pop %v521
      %v524 = vcombine.high %v522, %v522
      %v526 = vsel %vm501, %v522, 0.0
      %v527 = vrot.slane %v526, 4
      %v528 = vadd.f32 %v526, %v527
      %v529 = vrot.slane %v528, 2
      %v530 = vadd.f32 %v528, %v529
      %v531 = vrot.slane %v530, 1
      %v532 = vadd.f32 %v530, %v531
      %v533 = vsel %vm501, %v524, 0.0
      %v534 = vrot.slane %v533, 4
      %v535 = vadd.f32 %v533, %v534
      %v536 = vrot.slane %v535, 2
      %v537 = vadd.f32 %v535, %v536
      %v538 = vrot.slane %v537, 1
      %v539 = vadd.f32 %v537, %v538
      %v542 = vcombine.low %v532, %v539
      %v544 = vrcp.pop %v542
      %v545 = vmul.f32 %v522, %v544
      %v547 = vcombine.high %v545, %v545
      %v549 = vsel %vm501, %v545, -inf
      %v550 = vsel %vm501, %v547, -inf
      %v551 = vmax.f32 %v549, %v550
      %552 = vmax.xlane.f32.xlu0 %v551
      %v553 = vpop.xlane.xlu0 %552
      %v556 = vunpack.c.l.s4 839922192
      %v557 = vunpack.c.0.s8 %v556
      %v558 = vlaneseq
      %v559 = vshrl.u32 %v558, 7
      %v560 = vsub.s32 %v557, %v559
      %v561 = vrot.slane %v553, %v560
      %v563 = vsub.f32 %v545, %v561
      %v564 = vmul.f32 %v563, 1.442695
      %v565 = vpow.pop %v564
      %v567 = vcombine.high %v565, %v565
      %v569 = vsel %vm501, %v565, 0.0
      %v570 = vsel %vm501, %v567, 0.0
      %v571 = vadd.f32 %v569, %v570
      %572 = vadd.xlane.f32.xlu0 %v571
      %v573 = vpop.xlane.xlu0 %572
      %v576 = vunpack.c.l.s4 839922192
      %v577 = vunpack.c.0.s8 %v576
      %v578 = vlaneseq
      %v579 = vshrl.u32 %v578, 7
      %v580 = vsub.s32 %v577, %v579
      %v581 = vrot.slane %v573, %v580
      %v583 = vrcp.pop %v581
      %v584 = vmul.f32 %v565, %v583
      %v586 = vcombine.high %v584, %v584
      %v588 = vpack.c.bf16 %v584, %v584
      %v589 = vpack.c.bf16 %v586, %v586
      %v590 = vld [vmem:[%s431] sm:$0xff]
      %v591 = vld [vmem:[%s431 + $0x8] sm:$0xff]
      %v592 = vld [vmem:[%s431 + $0x10] sm:$0xff]
      %v593 = vld [vmem:[%s431 + $0x18] sm:$0xff]
      %v594 = vld [vmem:[%s431 + $0x20] sm:$0xff]
      %v595 = vld [vmem:[%s431 + $0x28] sm:$0xff]
      %v596 = vld [vmem:[%s431 + $0x30] sm:$0xff]
      %v597 = vld [vmem:[%s431 + $0x38] sm:$0xff]
      %v598 = vld [vmem:[%s431 + $0x40] sm:$0xff]
      %v599 = vld [vmem:[%s431 + $0x48] sm:$0xff]
      %v600 = vld [vmem:[%s431 + $0x50] sm:$0xff]
      %v601 = vld [vmem:[%s431 + $0x58] sm:$0xff]
      %v602 = vld [vmem:[%s431 + $0x60] sm:$0xff]
      %v603 = vld [vmem:[%s431 + $0x68] sm:$0xff]
      %v604 = vld [vmem:[%s431 + $0x70] sm:$0xff]
      %v605 = vld [vmem:[%s431 + $0x78] sm:$0xff]
      %v606 = vld [vmem:[%s431 + $0x80] sm:$0xff]
      %v607 = vld [vmem:[%s431 + $0x88] sm:$0xff]
      %v608 = vld [vmem:[%s431 + $0x90] sm:$0xff]
      %v609 = vld [vmem:[%s431 + $0x98] sm:$0xff]
      %v610 = vld [vmem:[%s431 + $0xa0] sm:$0xff]
      %v611 = vld [vmem:[%s431 + $0xa8] sm:$0xff]
      %v612 = vld [vmem:[%s431 + $0xb0] sm:$0xff]
      %v613 = vld [vmem:[%s431 + $0xb8] sm:$0xff]
      %v614 = vld [vmem:[%s431 + $0xc0] sm:$0xff]
      %v615 = vld [vmem:[%s431 + $0xc8] sm:$0xff]
      %v616 = vld [vmem:[%s431 + $0xd0] sm:$0xff]
      %v617 = vld [vmem:[%s431 + $0xd8] sm:$0xff]
      %v618 = vld [vmem:[%s431 + $0xe0] sm:$0xff]
      %v619 = vld [vmem:[%s431 + $0xe8] sm:$0xff]
      %v620 = vld [vmem:[%s431 + $0xf0] sm:$0xff]
      %v621 = vld [vmem:[%s431 + $0xf8] sm:$0xff]
      %v622 = vld [vmem:[%s431 + $0x100] sm:$0xff]
      %v623 = vld [vmem:[%s431 + $0x108] sm:$0xff]
      %v624 = vld [vmem:[%s431 + $0x110] sm:$0xff]
      %v625 = vld [vmem:[%s431 + $0x118] sm:$0xff]
      %v626 = vld [vmem:[%s431 + $0x120] sm:$0xff]
      %v627 = vld [vmem:[%s431 + $0x128] sm:$0xff]
      %v628 = vld [vmem:[%s431 + $0x130] sm:$0xff]
      %v629 = vld [vmem:[%s431 + $0x138] sm:$0xff]
      %v630 = vld [vmem:[%s431 + $0x140] sm:$0xff]
      %v631 = vld [vmem:[%s431 + $0x148] sm:$0xff]
      %v632 = vld [vmem:[%s431 + $0x150] sm:$0xff]
      %v633 = vld [vmem:[%s431 + $0x158] sm:$0xff]
      %v634 = vld [vmem:[%s431 + $0x160] sm:$0xff]
      %v635 = vld [vmem:[%s431 + $0x168] sm:$0xff]
      %v636 = vld [vmem:[%s431 + $0x170] sm:$0xff]
      %v637 = vld [vmem:[%s431 + $0x178] sm:$0xff]
      %v638 = vld [vmem:[%s431 + $0x180] sm:$0xff]
      %v639 = vld [vmem:[%s431 + $0x188] sm:$0xff]
      %v640 = vld [vmem:[%s431 + $0x190] sm:$0xff]
      %v641 = vld [vmem:[%s431 + $0x198] sm:$0xff]
      %v642 = vld [vmem:[%s431 + $0x1a0] sm:$0xff]
      %v643 = vld [vmem:[%s431 + $0x1a8] sm:$0xff]
      %v644 = vld [vmem:[%s431 + $0x1b0] sm:$0xff]
      %v645 = vld [vmem:[%s431 + $0x1b8] sm:$0xff]
      %v646 = vld [vmem:[%s431 + $0x1c0] sm:$0xff]
      %v647 = vld [vmem:[%s431 + $0x1c8] sm:$0xff]
      %v648 = vld [vmem:[%s431 + $0x1d0] sm:$0xff]
      %v649 = vld [vmem:[%s431 + $0x1d8] sm:$0xff]
      %v650 = vld [vmem:[%s431 + $0x1e0] sm:$0xff]
      %v651 = vld [vmem:[%s431 + $0x1e8] sm:$0xff]
      %v652 = vld [vmem:[%s431 + $0x1f0] sm:$0xff]
      %v653 = vld [vmem:[%s431 + $0x1f8] sm:$0xff]
      %v654 = vpack.c.bf16 %v592, %v590
      %v655 = vpack.c.bf16 %v593, %v591
      %v656 = vpack.c.bf16 %v596, %v594
      %v657 = vpack.c.bf16 %v597, %v595
      %v658 = vpack.c.bf16 %v600, %v598
      %v659 = vpack.c.bf16 %v601, %v599
      %v660 = vpack.c.bf16 %v604, %v602
      %v661 = vpack.c.bf16 %v605, %v603
      %v662 = vpack.c.bf16 %v608, %v606
      %v663 = vpack.c.bf16 %v609, %v607
      %v664 = vpack.c.bf16 %v612, %v610
      %v665 = vpack.c.bf16 %v613, %v611
      %v666 = vpack.c.bf16 %v616, %v614
      %v667 = vpack.c.bf16 %v617, %v615
      %v668 = vpack.c.bf16 %v620, %v618
      %v669 = vpack.c.bf16 %v621, %v619
      %v670 = vpack.c.bf16 %v624, %v622
      %v671 = vpack.c.bf16 %v625, %v623
      %v672 = vpack.c.bf16 %v628, %v626
      %v673 = vpack.c.bf16 %v629, %v627
      %v674 = vpack.c.bf16 %v632, %v630
      %v675 = vpack.c.bf16 %v633, %v631
      %v676 = vpack.c.bf16 %v636, %v634
      %v677 = vpack.c.bf16 %v637, %v635
      %v678 = vpack.c.bf16 %v640, %v638
      %v679 = vpack.c.bf16 %v641, %v639
      %v680 = vpack.c.bf16 %v644, %v642
      %v681 = vpack.c.bf16 %v645, %v643
      %v682 = vpack.c.bf16 %v648, %v646
      %v683 = vpack.c.bf16 %v649, %v647
      %v684 = vpack.c.bf16 %v652, %v650
      %v685 = vpack.c.bf16 %v653, %v651
      %v686 = vld [vmem:[%s4] sm:$0xff]
      %v687 = vld [vmem:[%s4 + $0x8] sm:$0xff]
      %v688 = vld [vmem:[%s4 + $0x10] sm:$0xff]
      %v689 = vld [vmem:[%s4 + $0x18] sm:$0xff]
      %v690 = vld [vmem:[%s4 + $0x20] sm:$0xff]
      %v691 = vld [vmem:[%s4 + $0x28] sm:$0xff]
      %v692 = vld [vmem:[%s4 + $0x30] sm:$0xff]
      %v693 = vld [vmem:[%s4 + $0x38] sm:$0xff]
      %v694 = vld [vmem:[%s4 + $0x40] sm:$0xff]
      %v695 = vld [vmem:[%s4 + $0x48] sm:$0xff]
      %v696 = vld [vmem:[%s4 + $0x50] sm:$0xff]
      %v697 = vld [vmem:[%s4 + $0x58] sm:$0xff]
      %v698 = vld [vmem:[%s4 + $0x60] sm:$0xff]
      %v699 = vld [vmem:[%s4 + $0x68] sm:$0xff]
      %v700 = vld [vmem:[%s4 + $0x70] sm:$0xff]
      %v701 = vld [vmem:[%s4 + $0x78] sm:$0xff]
      %v702 = vld [vmem:[%s4 + $0x80] sm:$0xff]
      %v703 = vld [vmem:[%s4 + $0x88] sm:$0xff]
      %v704 = vld [vmem:[%s4 + $0x90] sm:$0xff]
      %v705 = vld [vmem:[%s4 + $0x98] sm:$0xff]
      %v706 = vld [vmem:[%s4 + $0xa0] sm:$0xff]
      %v707 = vld [vmem:[%s4 + $0xa8] sm:$0xff]
      %v708 = vld [vmem:[%s4 + $0xb0] sm:$0xff]
      %v709 = vld [vmem:[%s4 + $0xb8] sm:$0xff]
      %v710 = vld [vmem:[%s4 + $0xc0] sm:$0xff]
      %v711 = vld [vmem:[%s4 + $0xc8] sm:$0xff]
      %v712 = vld [vmem:[%s4 + $0xd0] sm:$0xff]
      %v713 = vld [vmem:[%s4 + $0xd8] sm:$0xff]
      %v714 = vld [vmem:[%s4 + $0xe0] sm:$0xff]
      %v715 = vld [vmem:[%s4 + $0xe8] sm:$0xff]
      %v716 = vld [vmem:[%s4 + $0xf0] sm:$0xff]
      %v717 = vld [vmem:[%s4 + $0xf8] sm:$0xff]
      %v718 = vld [vmem:[%s5] sm:$0x3]
      %v720 = vlaneseq
      %v721 = vshrl.u32 %v720, 7
      %v722 = vsub.s32 0, %v721
      %v723 = vrot.slane %v718, %v722
      %v724 = vlaneseq
      %v725 = vshrl.u32 %v724, 7
      %v726 = vsub.s32 1, %v725
      %v727 = vrot.slane %v718, %v726
      %730 = vxpose.xlu0.c.b16.start [1/8] %v654, 128
      %731 = vxpose.xlu0.c.b16.cont [2/8] %v656, 128
      %732 = vxpose.xlu0.c.b16.cont [3/8] %v658, 128
      %733 = vxpose.xlu0.c.b16.cont [4/8] %v660, 128
      %734 = vxpose.xlu0.c.b16.cont [5/8] %v662, 128
      %735 = vxpose.xlu0.c.b16.cont [6/8] %v664, 128
      %736 = vxpose.xlu0.c.b16.cont [7/8] %v666, 128
      %737 = vxpose.xlu0.c.b16.end [8/8] %v668, 128
      %v738 = vpop.trf.xlu0
      %v739 = vpop.trf.xlu0
      %v740 = vpop.trf.xlu0
      %v741 = vpop.trf.xlu0
      %v742 = vpop.trf.xlu0
      %v743 = vpop.trf.xlu0
      %v744 = vpop.trf.xlu0
      %v745 = vpop.trf.xlu0
      %746 = vxpose.xlu0.c.b16.start [1/8] %v655, 128
      %747 = vxpose.xlu0.c.b16.cont [2/8] %v657, 128
      %748 = vxpose.xlu0.c.b16.cont [3/8] %v659, 128
      %749 = vxpose.xlu0.c.b16.cont [4/8] %v661, 128
      %750 = vxpose.xlu0.c.b16.cont [5/8] %v663, 128
      %751 = vxpose.xlu0.c.b16.cont [6/8] %v665, 128
      %752 = vxpose.xlu0.c.b16.cont [7/8] %v667, 128
      %753 = vxpose.xlu0.c.b16.end [8/8] %v669, 128
      %v754 = vpop.trf.xlu0
      %v755 = vpop.trf.xlu0
      %v756 = vpop.trf.xlu0
      %v757 = vpop.trf.xlu0
      %v758 = vpop.trf.xlu0
      %v759 = vpop.trf.xlu0
      %v760 = vpop.trf.xlu0
      %v761 = vpop.trf.xlu0
      %762 = vxpose.xlu0.c.b16.start [1/8] %v670, 128
      %763 = vxpose.xlu0.c.b16.cont [2/8] %v672, 128
      %764 = vxpose.xlu0.c.b16.cont [3/8] %v674, 128
      %765 = vxpose.xlu0.c.b16.cont [4/8] %v676, 128
      %766 = vxpose.xlu0.c.b16.cont [5/8] %v678, 128
      %767 = vxpose.xlu0.c.b16.cont [6/8] %v680, 128
      %768 = vxpose.xlu0.c.b16.cont [7/8] %v682, 128
      %769 = vxpose.xlu0.c.b16.end [8/8] %v684, 128
      %v770 = vpop.trf.xlu0
      %v771 = vpop.trf.xlu0
      %v772 = vpop.trf.xlu0
      %v773 = vpop.trf.xlu0
      %v774 = vpop.trf.xlu0
      %v775 = vpop.trf.xlu0
      %v776 = vpop.trf.xlu0
      %v777 = vpop.trf.xlu0
      %778 = vxpose.xlu0.c.b16.start [1/8] %v671, 128
      %779 = vxpose.xlu0.c.b16.cont [2/8] %v673, 128
      %780 = vxpose.xlu0.c.b16.cont [3/8] %v675, 128
      %781 = vxpose.xlu0.c.b16.cont [4/8] %v677, 128
      %782 = vxpose.xlu0.c.b16.cont [5/8] %v679, 128
      %783 = vxpose.xlu0.c.b16.cont [6/8] %v681, 128
      %784 = vxpose.xlu0.c.b16.cont [7/8] %v683, 128
      %785 = vxpose.xlu0.c.b16.end [8/8] %v685, 128
      %v786 = vpop.trf.xlu0
      %v787 = vpop.trf.xlu0
      %v788 = vpop.trf.xlu0
      %v789 = vpop.trf.xlu0
      %v790 = vpop.trf.xlu0
      %v791 = vpop.trf.xlu0
      %v792 = vpop.trf.xlu0
      %v793 = vpop.trf.xlu0
      %v826 = vunpack.c.l.b16 %v686
      %v827 = vunpack.c.h.b16 %v686
      %v828 = vunpack.c.l.b16 %v687
      %v829 = vunpack.c.h.b16 %v687
      %v830 = vunpack.c.l.b16 %v688
      %v831 = vunpack.c.h.b16 %v688
      %v832 = vunpack.c.l.b16 %v689
      %v833 = vunpack.c.h.b16 %v689
      %v834 = vunpack.c.l.b16 %v690
      %v835 = vunpack.c.h.b16 %v690
      %v836 = vunpack.c.l.b16 %v691
      %v837 = vunpack.c.h.b16 %v691
      %v838 = vunpack.c.l.b16 %v692
      %v839 = vunpack.c.h.b16 %v692
      %v840 = vunpack.c.l.b16 %v693
      %v841 = vunpack.c.h.b16 %v693
      %v842 = vunpack.c.l.b16 %v694
      %v843 = vunpack.c.h.b16 %v694
      %v844 = vunpack.c.l.b16 %v695
      %v845 = vunpack.c.h.b16 %v695
      %v846 = vunpack.c.l.b16 %v696
      %v847 = vunpack.c.h.b16 %v696
      %v848 = vunpack.c.l.b16 %v697
      %v849 = vunpack.c.h.b16 %v697
      %v850 = vunpack.c.l.b16 %v698
      %v851 = vunpack.c.h.b16 %v698
      %v852 = vunpack.c.l.b16 %v699
      %v853 = vunpack.c.h.b16 %v699
      %v854 = vunpack.c.l.b16 %v700
      %v855 = vunpack.c.h.b16 %v700
      %v856 = vunpack.c.l.b16 %v701
      %v857 = vunpack.c.h.b16 %v701
      %v858 = vunpack.c.l.b16 %v702
      %v859 = vunpack.c.h.b16 %v702
      %v860 = vunpack.c.l.b16 %v703
      %v861 = vunpack.c.h.b16 %v703
      %v862 = vunpack.c.l.b16 %v704
      %v863 = vunpack.c.h.b16 %v704
      %v864 = vunpack.c.l.b16 %v705
      %v865 = vunpack.c.h.b16 %v705
      %v866 = vunpack.c.l.b16 %v706
      %v867 = vunpack.c.h.b16 %v706
      %v868 = vunpack.c.l.b16 %v707
      %v869 = vunpack.c.h.b16 %v707
      %v870 = vunpack.c.l.b16 %v708
      %v871 = vunpack.c.h.b16 %v708
      %v872 = vunpack.c.l.b16 %v709
      %v873 = vunpack.c.h.b16 %v709
      %v874 = vunpack.c.l.b16 %v710
      %v875 = vunpack.c.h.b16 %v710
      %v876 = vunpack.c.l.b16 %v711
      %v877 = vunpack.c.h.b16 %v711
      %v878 = vunpack.c.l.b16 %v712
      %v879 = vunpack.c.h.b16 %v712
      %v880 = vunpack.c.l.b16 %v713
      %v881 = vunpack.c.h.b16 %v713
      %v882 = vunpack.c.l.b16 %v714
      %v883 = vunpack.c.h.b16 %v714
      %v884 = vunpack.c.l.b16 %v715
      %v885 = vunpack.c.h.b16 %v715
      %v886 = vunpack.c.l.b16 %v716
      %v887 = vunpack.c.h.b16 %v716
      %v888 = vunpack.c.l.b16 %v717
      %v889 = vunpack.c.h.b16 %v717
      %v890 = vpack.c.b16 %v828, %v826
      %v891 = vpack.c.b16 %v829, %v827
      %v892 = vpack.c.b16 %v832, %v830
      %v893 = vpack.c.b16 %v833, %v831
      %v894 = vpack.c.b16 %v836, %v834
      %v895 = vpack.c.b16 %v837, %v835
      %v896 = vpack.c.b16 %v840, %v838
      %v897 = vpack.c.b16 %v841, %v839
      %v898 = vpack.c.b16 %v844, %v842
      %v899 = vpack.c.b16 %v845, %v843
      %v900 = vpack.c.b16 %v848, %v846
      %v901 = vpack.c.b16 %v849, %v847
      %v902 = vpack.c.b16 %v852, %v850
      %v903 = vpack.c.b16 %v853, %v851
      %v904 = vpack.c.b16 %v856, %v854
      %v905 = vpack.c.b16 %v857, %v855
      %v906 = vpack.c.b16 %v860, %v858
      %v907 = vpack.c.b16 %v861, %v859
      %v908 = vpack.c.b16 %v864, %v862
      %v909 = vpack.c.b16 %v865, %v863
      %v910 = vpack.c.b16 %v868, %v866
      %v911 = vpack.c.b16 %v869, %v867
      %v912 = vpack.c.b16 %v872, %v870
      %v913 = vpack.c.b16 %v873, %v871
      %v914 = vpack.c.b16 %v876, %v874
      %v915 = vpack.c.b16 %v877, %v875
      %v916 = vpack.c.b16 %v880, %v878
      %v917 = vpack.c.b16 %v881, %v879
      %v918 = vpack.c.b16 %v884, %v882
      %v919 = vpack.c.b16 %v885, %v883
      %v920 = vpack.c.b16 %v888, %v886
      %v921 = vpack.c.b16 %v889, %v887
      %954 = vmatprep.subr.bf16.mxu0 %v905
      %955 = vmatpush1.bf16.msra.mxu0 %v904
      %956 = vmatprep.subr.bf16.mxu0 %v903
      %957 = vmatpush1.bf16.msra.mxu0 %v902
      %958 = vmatprep.subr.bf16.mxu0 %v901
      %959 = vmatpush1.bf16.msra.mxu0 %v900
      %960 = vmatprep.subr.bf16.mxu0 %v899
      %961 = vmatpush1.bf16.msra.mxu0 %v898
      %962 = vmatprep.subr.bf16.mxu0 %v897
      %963 = vmatpush1.bf16.msra.mxu0 %v896
      %964 = vmatprep.subr.bf16.mxu0 %v895
      %965 = vmatpush1.bf16.msra.mxu0 %v894
      %966 = vmatprep.subr.bf16.mxu0 %v893
      %967 = vmatpush1.bf16.msra.mxu0 %v892
      %968 = vmatprep.subr.bf16.mxu0 %v891
      %969 = vmatpush1.bf16.msra.mxu0 %v890
      %970 = vmatprep.subr.bf16.mxu0 %v921
      %971 = vmatpush2.bf16.msra.mxu0 %v920
      %972 = vmatprep.subr.bf16.mxu0 %v919
      %973 = vmatpush2.bf16.msra.mxu0 %v918
      %974 = vmatprep.subr.bf16.mxu0 %v917
      %975 = vmatpush2.bf16.msra.mxu0 %v916
      %976 = vmatprep.subr.bf16.mxu0 %v915
      %977 = vmatpush2.bf16.msra.mxu0 %v914
      %978 = vmatprep.subr.bf16.mxu0 %v913
      %979 = vmatpush2.bf16.msra.mxu0 %v912
      %980 = vmatprep.subr.bf16.mxu0 %v911
      %981 = vmatpush2.bf16.msra.mxu0 %v910
      %982 = vmatprep.subr.bf16.mxu0 %v909
      %983 = vmatpush2.bf16.msra.mxu0 %v908
      %984 = vmatprep.subr.bf16.mxu0 %v907
      %985 = vmatpush2.bf16.msra.mxu0 %v906
      %986 = vmatprep.mubr.bf16.mxu0 %v770
      %987 = vmatmul.mubr.bf16.gmra.mxu0 %v738
      %v988 = vpop.f32.mrf.mxu0
      %v989 = vadd.f32 %v723, %v988
      %v990 = vpop.f32.mrf.mxu0
      %v991 = vadd.f32 %v727, %v990
      %v992 = vpop.f32.mrf.mxu0
      %v993 = vadd.f32 %v723, %v992
      %v994 = vpop.f32.mrf.mxu0
      %v995 = vadd.f32 %v727, %v994
      %996 = vmatprep.mubr.bf16.mxu0 %v771
      %997 = vmatmul.mubr.bf16.gmra.mxu0 %v739
      %v998 = vpop.f32.mrf.mxu0
      %v999 = vadd.f32 %v723, %v998
      %v1000 = vpop.f32.mrf.mxu0
      %v1001 = vadd.f32 %v727, %v1000
      %v1002 = vpop.f32.mrf.mxu0
      %v1003 = vadd.f32 %v723, %v1002
      %v1004 = vpop.f32.mrf.mxu0
      %v1005 = vadd.f32 %v727, %v1004
      %1006 = vmatprep.mubr.bf16.mxu0 %v772
      %1007 = vmatmul.mubr.bf16.gmra.mxu0 %v740
      %v1008 = vpop.f32.mrf.mxu0
      %v1009 = vadd.f32 %v723, %v1008
      %v1010 = vpop.f32.mrf.mxu0
      %v1011 = vadd.f32 %v727, %v1010
      %v1012 = vpop.f32.mrf.mxu0
      %v1013 = vadd.f32 %v723, %v1012
      %v1014 = vpop.f32.mrf.mxu0
      %v1015 = vadd.f32 %v727, %v1014
      %1016 = vmatprep.mubr.bf16.mxu0 %v773
      %1017 = vmatmul.mubr.bf16.gmra.mxu0 %v741
      %v1018 = vpop.f32.mrf.mxu0
      %v1019 = vadd.f32 %v723, %v1018
      %v1020 = vpop.f32.mrf.mxu0
      %v1021 = vadd.f32 %v727, %v1020
      %v1022 = vpop.f32.mrf.mxu0
      %v1023 = vadd.f32 %v723, %v1022
      %v1024 = vpop.f32.mrf.mxu0
      %v1025 = vadd.f32 %v727, %v1024
      %1026 = vmatprep.mubr.bf16.mxu0 %v774
      %1027 = vmatmul.mubr.bf16.gmra.mxu0 %v742
      %v1028 = vpop.f32.mrf.mxu0
      %v1029 = vadd.f32 %v723, %v1028
      %v1030 = vpop.f32.mrf.mxu0
      %v1031 = vadd.f32 %v727, %v1030
      %v1032 = vpop.f32.mrf.mxu0
      %v1033 = vadd.f32 %v723, %v1032
      %v1034 = vpop.f32.mrf.mxu0
      %v1035 = vadd.f32 %v727, %v1034
      %1036 = vmatprep.mubr.bf16.mxu0 %v775
      %1037 = vmatmul.mubr.bf16.gmra.mxu0 %v743
      %v1038 = vpop.f32.mrf.mxu0
      %v1039 = vadd.f32 %v723, %v1038
      %v1040 = vpop.f32.mrf.mxu0
      %v1041 = vadd.f32 %v727, %v1040
      %v1042 = vpop.f32.mrf.mxu0
      %v1043 = vadd.f32 %v723, %v1042
      %v1044 = vpop.f32.mrf.mxu0
      %v1045 = vadd.f32 %v727, %v1044
      %1046 = vmatprep.mubr.bf16.mxu0 %v776
      %1047 = vmatmul.mubr.bf16.gmra.mxu0 %v744
      %v1048 = vpop.f32.mrf.mxu0
      %v1049 = vadd.f32 %v723, %v1048
      %v1050 = vpop.f32.mrf.mxu0
      %v1051 = vadd.f32 %v727, %v1050
      %v1052 = vpop.f32.mrf.mxu0
      %v1053 = vadd.f32 %v723, %v1052
      %v1054 = vpop.f32.mrf.mxu0
      %v1055 = vadd.f32 %v727, %v1054
      %1056 = vmatprep.mubr.bf16.mxu0 %v777
      %1057 = vmatmul.mubr.bf16.gmra.mxu0 %v745
      %v1058 = vpop.f32.mrf.mxu0
      %v1059 = vadd.f32 %v723, %v1058
      %v1060 = vpop.f32.mrf.mxu0
      %v1061 = vadd.f32 %v727, %v1060
      %v1062 = vpop.f32.mrf.mxu0
      %v1063 = vadd.f32 %v723, %v1062
      %v1064 = vpop.f32.mrf.mxu0
      %v1065 = vadd.f32 %v727, %v1064
      %1066 = vmatprep.mubr.bf16.mxu0 %v786
      %1067 = vmatmul.mubr.bf16.gmra.mxu0 %v754
      %v1068 = vpop.f32.mrf.mxu0
      %v1069 = vadd.f32 %v723, %v1068
      %v1070 = vpop.f32.mrf.mxu0
      %v1071 = vadd.f32 %v727, %v1070
      %v1072 = vpop.f32.mrf.mxu0
      %v1073 = vadd.f32 %v723, %v1072
      %v1074 = vpop.f32.mrf.mxu0
      %v1075 = vadd.f32 %v727, %v1074
      %1076 = vmatprep.mubr.bf16.mxu0 %v787
      %1077 = vmatmul.mubr.bf16.gmra.mxu0 %v755
      %v1078 = vpop.f32.mrf.mxu0
      %v1079 = vadd.f32 %v723, %v1078
      %v1080 = vpop.f32.mrf.mxu0
      %v1081 = vadd.f32 %v727, %v1080
      %v1082 = vpop.f32.mrf.mxu0
      %v1083 = vadd.f32 %v723, %v1082
      %v1084 = vpop.f32.mrf.mxu0
      %v1085 = vadd.f32 %v727, %v1084
      %1086 = vmatprep.mubr.bf16.mxu0 %v788
      %1087 = vmatmul.mubr.bf16.gmra.mxu0 %v756
      %v1088 = vpop.f32.mrf.mxu0
      %v1089 = vadd.f32 %v723, %v1088
      %v1090 = vpop.f32.mrf.mxu0
      %v1091 = vadd.f32 %v727, %v1090
      %v1092 = vpop.f32.mrf.mxu0
      %v1093 = vadd.f32 %v723, %v1092
      %v1094 = vpop.f32.mrf.mxu0
      %v1095 = vadd.f32 %v727, %v1094
      %1096 = vmatprep.mubr.bf16.mxu0 %v789
      %1097 = vmatmul.mubr.bf16.gmra.mxu0 %v757
      %v1098 = vpop.f32.mrf.mxu0
      %v1099 = vadd.f32 %v723, %v1098
      %v1100 = vpop.f32.mrf.mxu0
      %v1101 = vadd.f32 %v727, %v1100
      %v1102 = vpop.f32.mrf.mxu0
      %v1103 = vadd.f32 %v723, %v1102
      %v1104 = vpop.f32.mrf.mxu0
      %v1105 = vadd.f32 %v727, %v1104
      %1106 = vmatprep.mubr.bf16.mxu0 %v790
      %1107 = vmatmul.mubr.bf16.gmra.mxu0 %v758
      %v1108 = vpop.f32.mrf.mxu0
      %v1109 = vadd.f32 %v723, %v1108
      %v1110 = vpop.f32.mrf.mxu0
      %v1111 = vadd.f32 %v727, %v1110
      %v1112 = vpop.f32.mrf.mxu0
      %v1113 = vadd.f32 %v723, %v1112
      %v1114 = vpop.f32.mrf.mxu0
      %v1115 = vadd.f32 %v727, %v1114
      %1116 = vmatprep.mubr.bf16.mxu0 %v791
      %1117 = vmatmul.mubr.bf16.gmra.mxu0 %v759
      %v1118 = vpop.f32.mrf.mxu0
      %v1119 = vadd.f32 %v723, %v1118
      %v1120 = vpop.f32.mrf.mxu0
      %v1121 = vadd.f32 %v727, %v1120
      %v1122 = vpop.f32.mrf.mxu0
      %v1123 = vadd.f32 %v723, %v1122
      %v1124 = vpop.f32.mrf.mxu0
      %v1125 = vadd.f32 %v727, %v1124
      %1126 = vmatprep.mubr.bf16.mxu0 %v792
      %1127 = vmatmul.mubr.bf16.gmra.mxu0 %v760
      %v1128 = vpop.f32.mrf.mxu0
      %v1129 = vadd.f32 %v723, %v1128
      %v1130 = vpop.f32.mrf.mxu0
      %v1131 = vadd.f32 %v727, %v1130
      %v1132 = vpop.f32.mrf.mxu0
      %v1133 = vadd.f32 %v723, %v1132
      %v1134 = vpop.f32.mrf.mxu0
      %v1135 = vadd.f32 %v727, %v1134
      %1136 = vmatprep.mubr.bf16.mxu0 %v793
      %1137 = vmatmul.mubr.bf16.gmra.mxu0 %v761
      %v1138 = vpop.f32.mrf.mxu0
      %v1139 = vadd.f32 %v723, %v1138
      %v1140 = vpop.f32.mrf.mxu0
      %v1141 = vadd.f32 %v727, %v1140
      %v1142 = vpop.f32.mrf.mxu0
      %v1143 = vadd.f32 %v723, %v1142
      %v1144 = vpop.f32.mrf.mxu0
      %v1145 = vadd.f32 %v727, %v1144
      %1146 = vdwg.mxu0
      %v1147 = vpack.c.bf16 %v993, %v989
      %v1148 = vpack.c.bf16 %v995, %v991
      %v1149 = vpack.c.bf16 %v1003, %v999
      %v1150 = vpack.c.bf16 %v1005, %v1001
      %v1151 = vpack.c.bf16 %v1013, %v1009
      %v1152 = vpack.c.bf16 %v1015, %v1011
      %v1153 = vpack.c.bf16 %v1023, %v1019
      %v1154 = vpack.c.bf16 %v1025, %v1021
      %v1155 = vpack.c.bf16 %v1033, %v1029
      %v1156 = vpack.c.bf16 %v1035, %v1031
      %v1157 = vpack.c.bf16 %v1043, %v1039
      %v1158 = vpack.c.bf16 %v1045, %v1041
      %v1159 = vpack.c.bf16 %v1053, %v1049
      %v1160 = vpack.c.bf16 %v1055, %v1051
      %v1161 = vpack.c.bf16 %v1063, %v1059
      %v1162 = vpack.c.bf16 %v1065, %v1061
      %v1163 = vpack.c.bf16 %v1073, %v1069
      %v1164 = vpack.c.bf16 %v1075, %v1071
      %v1165 = vpack.c.bf16 %v1083, %v1079
      %v1166 = vpack.c.bf16 %v1085, %v1081
      %v1167 = vpack.c.bf16 %v1093, %v1089
      %v1168 = vpack.c.bf16 %v1095, %v1091
      %v1169 = vpack.c.bf16 %v1103, %v1099
      %v1170 = vpack.c.bf16 %v1105, %v1101
      %v1171 = vpack.c.bf16 %v1113, %v1109
      %v1172 = vpack.c.bf16 %v1115, %v1111
      %v1173 = vpack.c.bf16 %v1123, %v1119
      %v1174 = vpack.c.bf16 %v1125, %v1121
      %v1175 = vpack.c.bf16 %v1133, %v1129
      %v1176 = vpack.c.bf16 %v1135, %v1131
      %v1177 = vpack.c.bf16 %v1143, %v1139
      %v1178 = vpack.c.bf16 %v1145, %v1141
      %1179 = vmatprep.subr.bf16.mxu0 %v1162
      %1180 = vmatpush1.bf16.msra.mxu0 %v1161
      %1181 = vmatprep.subr.bf16.mxu0 %v1160
      %1182 = vmatpush1.bf16.msra.mxu0 %v1159
      %1183 = vmatprep.subr.bf16.mxu0 %v1158
      %1184 = vmatpush1.bf16.msra.mxu0 %v1157
      %1185 = vmatprep.subr.bf16.mxu0 %v1156
      %1186 = vmatpush1.bf16.msra.mxu0 %v1155
      %1187 = vmatprep.subr.bf16.mxu0 %v1154
      %1188 = vmatpush1.bf16.msra.mxu0 %v1153
      %1189 = vmatprep.subr.bf16.mxu0 %v1152
      %1190 = vmatpush1.bf16.msra.mxu0 %v1151
      %1191 = vmatprep.subr.bf16.mxu0 %v1150
      %1192 = vmatpush1.bf16.msra.mxu0 %v1149
      %1193 = vmatprep.subr.bf16.mxu0 %v1148
      %1194 = vmatpush1.bf16.msra.mxu0 %v1147
      %1195 = vmatprep.subr.bf16.mxu0 %v1178
      %1196 = vmatpush2.bf16.msra.mxu0 %v1177
      %1197 = vmatprep.subr.bf16.mxu0 %v1176
      %1198 = vmatpush2.bf16.msra.mxu0 %v1175
      %1199 = vmatprep.subr.bf16.mxu0 %v1174
      %1200 = vmatpush2.bf16.msra.mxu0 %v1173
      %1201 = vmatprep.subr.bf16.mxu0 %v1172
      %1202 = vmatpush2.bf16.msra.mxu0 %v1171
      %1203 = vmatprep.subr.bf16.mxu0 %v1170
      %1204 = vmatpush2.bf16.msra.mxu0 %v1169
      %1205 = vmatprep.subr.bf16.mxu0 %v1168
      %1206 = vmatpush2.bf16.msra.mxu0 %v1167
      %1207 = vmatprep.subr.bf16.mxu0 %v1166
      %1208 = vmatpush2.bf16.msra.mxu0 %v1165
      %1209 = vmatprep.subr.bf16.mxu0 %v1164
      %1210 = vmatpush2.bf16.msra.mxu0 %v1163
      %1211 = vmatprep.mubr.bf16.mxu0 %v589
      %1212 = vmatmul.mubr.bf16.gmra.mxu0 %v588
      %v1213 = vpop.f32.mrf.mxu0
      %v1214 = vadd.f32 0.0, %v1213
      %v1215 = vpop.f32.mrf.mxu0
      %v1216 = vadd.f32 0.0, %v1215
      %v1217 = vpop.f32.mrf.mxu0
      %v1218 = vpop.f32.mrf.mxu0
      %1219 = vdwg.mxu0
      %v1220 = vpack.c.bf16 %v1214, %v1214
      %v1221 = vpack.c.bf16 %v1216, %v1216
      %v1224 = vcombine.low %v1220, %v1221
      %v1226 = vunpack.c.l.s4 1983009808
      %v1227 = vunpack.c.0.s8 %v1226
      %v1228 = vlaneseq
      %v1229 = vshrl.u32 %v1228, 7
      %v1230 = vsub.s32 %v1227, %v1229
      %v1231 = vrot.slane %v1224, %v1230
      %1233 = vst [vmem:[%s441] sm:$0xf] %v1231
      %1234 = vmatprep.subr.bf16.mxu0 %v1162
      %1235 = vmatpush1.bf16.msra.mxu0 %v1161
      %1236 = vmatprep.subr.bf16.mxu0 %v1160
      %1237 = vmatpush1.bf16.msra.mxu0 %v1159
      %1238 = vmatprep.subr.bf16.mxu0 %v1158
      %1239 = vmatpush1.bf16.msra.mxu0 %v1157
      %1240 = vmatprep.subr.bf16.mxu0 %v1156
      %1241 = vmatpush1.bf16.msra.mxu0 %v1155
      %1242 = vmatprep.subr.bf16.mxu0 %v1154
      %1243 = vmatpush1.bf16.msra.mxu0 %v1153
      %1244 = vmatprep.subr.bf16.mxu0 %v1152
      %1245 = vmatpush1.bf16.msra.mxu0 %v1151
      %1246 = vmatprep.subr.bf16.mxu0 %v1150
      %1247 = vmatpush1.bf16.msra.mxu0 %v1149
      %1248 = vmatprep.subr.bf16.mxu0 %v1148
      %1249 = vmatpush1.bf16.msra.mxu0 %v1147
      %1250 = vmatprep.subr.bf16.mxu0 %v1178
      %1251 = vmatpush2.bf16.msra.mxu0 %v1177
      %1252 = vmatprep.subr.bf16.mxu0 %v1176
      %1253 = vmatpush2.bf16.msra.mxu0 %v1175
      %1254 = vmatprep.subr.bf16.mxu0 %v1174
      %1255 = vmatpush2.bf16.msra.mxu0 %v1173
      %1256 = vmatprep.subr.bf16.mxu0 %v1172
      %1257 = vmatpush2.bf16.msra.mxu0 %v1171
      %1258 = vmatprep.subr.bf16.mxu0 %v1170
      %1259 = vmatpush2.bf16.msra.mxu0 %v1169
      %1260 = vmatprep.subr.bf16.mxu0 %v1168
      %1261 = vmatpush2.bf16.msra.mxu0 %v1167
      %1262 = vmatprep.subr.bf16.mxu0 %v1166
      %1263 = vmatpush2.bf16.msra.mxu0 %v1165
      %1264 = vmatprep.subr.bf16.mxu0 %v1164
      %1265 = vmatpush2.bf16.msra.mxu0 %v1163
      %1266 = vmatprep.mubr.bf16.mxu0 %v484
      %1267 = vmatmul.mubr.bf16.gmra.mxu0 %v483
      %v1268 = vpop.f32.mrf.mxu0
      %v1269 = vadd.f32 0.0, %v1268
      %v1270 = vpop.f32.mrf.mxu0
      %v1271 = vadd.f32 0.0, %v1270
      %v1272 = vpop.f32.mrf.mxu0
      %v1273 = vadd.f32 0.0, %v1272
      %v1274 = vpop.f32.mrf.mxu0
      %v1275 = vadd.f32 0.0, %v1274
      %1276 = vmatprep.mubr.bf16.mxu0 %v486
      %1277 = vmatmul.mubr.bf16.gmra.mxu0 %v485
      %v1278 = vpop.f32.mrf.mxu0
      %v1279 = vadd.f32 0.0, %v1278
      %v1280 = vpop.f32.mrf.mxu0
      %v1281 = vadd.f32 0.0, %v1280
      %v1282 = vpop.f32.mrf.mxu0
      %v1283 = vadd.f32 0.0, %v1282
      %v1284 = vpop.f32.mrf.mxu0
      %v1285 = vadd.f32 0.0, %v1284
      %1286 = vmatprep.mubr.bf16.mxu0 %v488
      %1287 = vmatmul.mubr.bf16.gmra.mxu0 %v487
      %v1288 = vpop.f32.mrf.mxu0
      %v1289 = vadd.f32 0.0, %v1288
      %v1290 = vpop.f32.mrf.mxu0
      %v1291 = vadd.f32 0.0, %v1290
      %v1292 = vpop.f32.mrf.mxu0
      %v1293 = vadd.f32 0.0, %v1292
      %v1294 = vpop.f32.mrf.mxu0
      %v1295 = vadd.f32 0.0, %v1294
      %1296 = vmatprep.mubr.bf16.mxu0 %v490
      %1297 = vmatmul.mubr.bf16.gmra.mxu0 %v489
      %v1298 = vpop.f32.mrf.mxu0
      %v1299 = vadd.f32 0.0, %v1298
      %v1300 = vpop.f32.mrf.mxu0
      %v1301 = vadd.f32 0.0, %v1300
      %v1302 = vpop.f32.mrf.mxu0
      %v1303 = vadd.f32 0.0, %v1302
      %v1304 = vpop.f32.mrf.mxu0
      %v1305 = vadd.f32 0.0, %v1304
      %1306 = vmatprep.mubr.bf16.mxu0 %v492
      %1307 = vmatmul.mubr.bf16.gmra.mxu0 %v491
      %v1308 = vpop.f32.mrf.mxu0
      %v1309 = vadd.f32 0.0, %v1308
      %v1310 = vpop.f32.mrf.mxu0
      %v1311 = vadd.f32 0.0, %v1310
      %v1312 = vpop.f32.mrf.mxu0
      %v1313 = vadd.f32 0.0, %v1312
      %v1314 = vpop.f32.mrf.mxu0
      %v1315 = vadd.f32 0.0, %v1314
      %1316 = vmatprep.mubr.bf16.mxu0 %v494
      %1317 = vmatmul.mubr.bf16.gmra.mxu0 %v493
      %v1318 = vpop.f32.mrf.mxu0
      %v1319 = vadd.f32 0.0, %v1318
      %v1320 = vpop.f32.mrf.mxu0
      %v1321 = vadd.f32 0.0, %v1320
      %v1322 = vpop.f32.mrf.mxu0
      %v1323 = vadd.f32 0.0, %v1322
      %v1324 = vpop.f32.mrf.mxu0
      %v1325 = vadd.f32 0.0, %v1324
      %1326 = vmatprep.mubr.bf16.mxu0 %v496
      %1327 = vmatmul.mubr.bf16.gmra.mxu0 %v495
      %v1328 = vpop.f32.mrf.mxu0
      %v1329 = vadd.f32 0.0, %v1328
      %v1330 = vpop.f32.mrf.mxu0
      %v1331 = vadd.f32 0.0, %v1330
      %v1332 = vpop.f32.mrf.mxu0
      %v1333 = vpop.f32.mrf.mxu0
      %1334 = vdwg.mxu0
      %v1335 = vpack.c.bf16 %v1273, %v1269
      %v1336 = vpack.c.bf16 %v1275, %v1271
      %v1337 = vpack.c.bf16 %v1283, %v1279
      %v1338 = vpack.c.bf16 %v1285, %v1281
      %v1339 = vpack.c.bf16 %v1293, %v1289
      %v1340 = vpack.c.bf16 %v1295, %v1291
      %v1341 = vpack.c.bf16 %v1303, %v1299
      %v1342 = vpack.c.bf16 %v1305, %v1301
      %v1343 = vpack.c.bf16 %v1313, %v1309
      %v1344 = vpack.c.bf16 %v1315, %v1311
      %v1345 = vpack.c.bf16 %v1323, %v1319
      %v1346 = vpack.c.bf16 %v1325, %v1321
      %v1347 = vpack.c.bf16 %v1329, %v1329
      %v1348 = vpack.c.bf16 %v1331, %v1331
      %v1363 = vunpack.c.l.b16 %v1335
      %v1364 = vunpack.c.l.b16 %v1336
      %v1365 = vunpack.c.h.b16 %v1335
      %v1366 = vunpack.c.h.b16 %v1336
      %v1367 = vunpack.c.l.b16 %v1337
      %v1368 = vunpack.c.l.b16 %v1338
      %v1369 = vunpack.c.h.b16 %v1337
      %v1370 = vunpack.c.h.b16 %v1338
      %v1371 = vunpack.c.l.b16 %v1339
      %v1372 = vunpack.c.l.b16 %v1340
      %v1373 = vunpack.c.h.b16 %v1339
      %v1374 = vunpack.c.h.b16 %v1340
      %v1375 = vunpack.c.l.b16 %v1341
      %v1376 = vunpack.c.l.b16 %v1342
      %v1377 = vunpack.c.h.b16 %v1341
      %v1378 = vunpack.c.h.b16 %v1342
      %v1379 = vunpack.c.l.b16 %v1343
      %v1380 = vunpack.c.l.b16 %v1344
      %v1381 = vunpack.c.h.b16 %v1343
      %v1382 = vunpack.c.h.b16 %v1344
      %v1383 = vunpack.c.l.b16 %v1345
      %v1384 = vunpack.c.l.b16 %v1346
      %v1385 = vunpack.c.h.b16 %v1345
      %v1386 = vunpack.c.h.b16 %v1346
      %v1387 = vunpack.c.l.b16 %v1347
      %v1388 = vunpack.c.l.b16 %v1348
      %v1389 = vpack.c.b16 %v1364, %v1363
      %v1390 = vpack.c.b16 %v1366, %v1365
      %v1391 = vpack.c.b16 %v1368, %v1367
      %v1392 = vpack.c.b16 %v1370, %v1369
      %v1393 = vpack.c.b16 %v1372, %v1371
      %v1394 = vpack.c.b16 %v1374, %v1373
      %v1395 = vpack.c.b16 %v1376, %v1375
      %v1396 = vpack.c.b16 %v1378, %v1377
      %v1397 = vpack.c.b16 %v1380, %v1379
      %v1398 = vpack.c.b16 %v1382, %v1381
      %v1399 = vpack.c.b16 %v1384, %v1383
      %v1400 = vpack.c.b16 %v1386, %v1385
      %v1401 = vpack.c.b16 %v1388, %v1387
      %1415 = vst [vmem:[%s451] sm:$0xff] %v1389
      %1416 = vst [vmem:[%s451 + $0x8] sm:$0xff] %v1390
      %1417 = vst [vmem:[%s451 + $0x10] sm:$0xff] %v1391
      %1418 = vst [vmem:[%s451 + $0x18] sm:$0xff] %v1392
      %1419 = vst [vmem:[%s451 + $0x20] sm:$0xff] %v1393
      %1420 = vst [vmem:[%s451 + $0x28] sm:$0xff] %v1394
      %1421 = vst [vmem:[%s451 + $0x30] sm:$0xff] %v1395
      %1422 = vst [vmem:[%s451 + $0x38] sm:$0xff] %v1396
      %1423 = vst [vmem:[%s451 + $0x40] sm:$0xff] %v1397
      %1424 = vst [vmem:[%s451 + $0x48] sm:$0xff] %v1398
      %1425 = vst [vmem:[%s451 + $0x50] sm:$0xff] %v1399
      %1426 = vst [vmem:[%s451 + $0x58] sm:$0xff] %v1400
      %1427 = vst [vmem:[%s451 + $0x60] sm:$0x33] %v1401
      %v1428 = vld [vmem:[%s426] sm:$0xff]
      %v1430 = vcombine.high %v1428, %v1428
      %v1432 = vsel %vm501, %v1428, -inf
      %v1433 = vrot.slane %v1432, 4
      %v1434 = vmax.f32 %v1432, %v1433
      %v1435 = vrot.slane %v1434, 2
      %v1436 = vmax.f32 %v1434, %v1435
      %v1437 = vrot.slane %v1436, 1
      %v1438 = vmax.f32 %v1436, %v1437
      %v1439 = vsel %vm501, %v1430, -inf
      %v1440 = vrot.slane %v1439, 4
      %v1441 = vmax.f32 %v1439, %v1440
      %v1442 = vrot.slane %v1441, 2
      %v1443 = vmax.f32 %v1441, %v1442
      %v1444 = vrot.slane %v1443, 1
      %v1445 = vmax.f32 %v1443, %v1444
      %v1448 = vcombine.low %v1438, %v1445
      %v1450 = vsub.f32 %v1428, %v1448
      %v1451 = vmul.f32 %v1450, 1.442695
      %v1452 = vpow.pop %v1451
      %v1454 = vcombine.high %v1452, %v1452
      %v1456 = vsel %vm501, %v1452, 0.0
      %v1457 = vrot.slane %v1456, 4
      %v1458 = vadd.f32 %v1456, %v1457
      %v1459 = vrot.slane %v1458, 2
      %v1460 = vadd.f32 %v1458, %v1459
      %v1461 = vrot.slane %v1460, 1
      %v1462 = vadd.f32 %v1460, %v1461
      %v1463 = vsel %vm501, %v1454, 0.0
      %v1464 = vrot.slane %v1463, 4
      %v1465 = vadd.f32 %v1463, %v1464
      %v1466 = vrot.slane %v1465, 2
      %v1467 = vadd.f32 %v1465, %v1466
      %v1468 = vrot.slane %v1467, 1
      %v1469 = vadd.f32 %v1467, %v1468
      %v1472 = vcombine.low %v1462, %v1469
      %v1474 = vrcp.pop %v1472
      %v1475 = vmul.f32 %v1452, %v1474
      %v1477 = vcombine.high %v1475, %v1475
      %v1479 = vsel %vm501, %v1475, -inf
      %v1480 = vsel %vm501, %v1477, -inf
      %v1481 = vmax.f32 %v1479, %v1480
      %1482 = vmax.xlane.f32.xlu0 %v1481
      %v1483 = vpop.xlane.xlu0 %1482
      %v1486 = vunpack.c.l.s4 839922192
      %v1487 = vunpack.c.0.s8 %v1486
      %v1488 = vlaneseq
      %v1489 = vshrl.u32 %v1488, 7
      %v1490 = vsub.s32 %v1487, %v1489
      %v1491 = vrot.slane %v1483, %v1490
      %v1493 = vsub.f32 %v1475, %v1491
      %v1494 = vmul.f32 %v1493, 1.442695
      %v1495 = vpow.pop %v1494
      %v1497 = vcombine.high %v1495, %v1495
      %v1499 = vsel %vm501, %v1495, 0.0
      %v1500 = vsel %vm501, %v1497, 0.0
      %v1501 = vadd.f32 %v1499, %v1500
      %1502 = vadd.xlane.f32.xlu0 %v1501
      %v1503 = vpop.xlane.xlu0 %1502
      %v1506 = vunpack.c.l.s4 839922192
      %v1507 = vunpack.c.0.s8 %v1506
      %v1508 = vlaneseq
      %v1509 = vshrl.u32 %v1508, 7
      %v1510 = vsub.s32 %v1507, %v1509
      %v1511 = vrot.slane %v1503, %v1510
      %v1513 = vrcp.pop %v1511
      %v1514 = vmul.f32 %v1495, %v1513
      %v1516 = vcombine.high %v1514, %v1514
      %v1518 = vpack.c.bf16 %v1514, %v1514
      %v1519 = vpack.c.bf16 %v1516, %v1516
      %v1520 = vld [vmem:[%s436] sm:$0xff]
      %v1521 = vld [vmem:[%s436 + $0x8] sm:$0xff]
      %v1522 = vld [vmem:[%s436 + $0x10] sm:$0xff]
      %v1523 = vld [vmem:[%s436 + $0x18] sm:$0xff]
      %v1524 = vld [vmem:[%s436 + $0x20] sm:$0xff]
      %v1525 = vld [vmem:[%s436 + $0x28] sm:$0xff]
      %v1526 = vld [vmem:[%s436 + $0x30] sm:$0xff]
      %v1527 = vld [vmem:[%s436 + $0x38] sm:$0xff]
      %v1528 = vld [vmem:[%s436 + $0x40] sm:$0xff]
      %v1529 = vld [vmem:[%s436 + $0x48] sm:$0xff]
      %v1530 = vld [vmem:[%s436 + $0x50] sm:$0xff]
      %v1531 = vld [vmem:[%s436 + $0x58] sm:$0xff]
      %v1532 = vld [vmem:[%s436 + $0x60] sm:$0xff]
      %v1533 = vld [vmem:[%s436 + $0x68] sm:$0xff]
      %v1534 = vld [vmem:[%s436 + $0x70] sm:$0xff]
      %v1535 = vld [vmem:[%s436 + $0x78] sm:$0xff]
      %v1536 = vld [vmem:[%s436 + $0x80] sm:$0xff]
      %v1537 = vld [vmem:[%s436 + $0x88] sm:$0xff]
      %v1538 = vld [vmem:[%s436 + $0x90] sm:$0xff]
      %v1539 = vld [vmem:[%s436 + $0x98] sm:$0xff]
      %v1540 = vld [vmem:[%s436 + $0xa0] sm:$0xff]
      %v1541 = vld [vmem:[%s436 + $0xa8] sm:$0xff]
      %v1542 = vld [vmem:[%s436 + $0xb0] sm:$0xff]
      %v1543 = vld [vmem:[%s436 + $0xb8] sm:$0xff]
      %v1544 = vld [vmem:[%s436 + $0xc0] sm:$0xff]
      %v1545 = vld [vmem:[%s436 + $0xc8] sm:$0xff]
      %v1546 = vld [vmem:[%s436 + $0xd0] sm:$0xff]
      %v1547 = vld [vmem:[%s436 + $0xd8] sm:$0xff]
      %v1548 = vld [vmem:[%s436 + $0xe0] sm:$0xff]
      %v1549 = vld [vmem:[%s436 + $0xe8] sm:$0xff]
      %v1550 = vld [vmem:[%s436 + $0xf0] sm:$0xff]
      %v1551 = vld [vmem:[%s436 + $0xf8] sm:$0xff]
      %v1552 = vld [vmem:[%s436 + $0x100] sm:$0xff]
      %v1553 = vld [vmem:[%s436 + $0x108] sm:$0xff]
      %v1554 = vld [vmem:[%s436 + $0x110] sm:$0xff]
      %v1555 = vld [vmem:[%s436 + $0x118] sm:$0xff]
      %v1556 = vld [vmem:[%s436 + $0x120] sm:$0xff]
      %v1557 = vld [vmem:[%s436 + $0x128] sm:$0xff]
      %v1558 = vld [vmem:[%s436 + $0x130] sm:$0xff]
      %v1559 = vld [vmem:[%s436 + $0x138] sm:$0xff]
      %v1560 = vld [vmem:[%s436 + $0x140] sm:$0xff]
      %v1561 = vld [vmem:[%s436 + $0x148] sm:$0xff]
      %v1562 = vld [vmem:[%s436 + $0x150] sm:$0xff]
      %v1563 = vld [vmem:[%s436 + $0x158] sm:$0xff]
      %v1564 = vld [vmem:[%s436 + $0x160] sm:$0xff]
      %v1565 = vld [vmem:[%s436 + $0x168] sm:$0xff]
      %v1566 = vld [vmem:[%s436 + $0x170] sm:$0xff]
      %v1567 = vld [vmem:[%s436 + $0x178] sm:$0xff]
      %v1568 = vld [vmem:[%s436 + $0x180] sm:$0xff]
      %v1569 = vld [vmem:[%s436 + $0x188] sm:$0xff]
      %v1570 = vld [vmem:[%s436 + $0x190] sm:$0xff]
      %v1571 = vld [vmem:[%s436 + $0x198] sm:$0xff]
      %v1572 = vld [vmem:[%s436 + $0x1a0] sm:$0xff]
      %v1573 = vld [vmem:[%s436 + $0x1a8] sm:$0xff]
      %v1574 = vld [vmem:[%s436 + $0x1b0] sm:$0xff]
      %v1575 = vld [vmem:[%s436 + $0x1b8] sm:$0xff]
      %v1576 = vld [vmem:[%s436 + $0x1c0] sm:$0xff]
      %v1577 = vld [vmem:[%s436 + $0x1c8] sm:$0xff]
      %v1578 = vld [vmem:[%s436 + $0x1d0] sm:$0xff]
      %v1579 = vld [vmem:[%s436 + $0x1d8] sm:$0xff]
      %v1580 = vld [vmem:[%s436 + $0x1e0] sm:$0xff]
      %v1581 = vld [vmem:[%s436 + $0x1e8] sm:$0xff]
      %v1582 = vld [vmem:[%s436 + $0x1f0] sm:$0xff]
      %v1583 = vld [vmem:[%s436 + $0x1f8] sm:$0xff]
      %v1584 = vpack.c.bf16 %v1522, %v1520
      %v1585 = vpack.c.bf16 %v1523, %v1521
      %v1586 = vpack.c.bf16 %v1526, %v1524
      %v1587 = vpack.c.bf16 %v1527, %v1525
      %v1588 = vpack.c.bf16 %v1530, %v1528
      %v1589 = vpack.c.bf16 %v1531, %v1529
      %v1590 = vpack.c.bf16 %v1534, %v1532
      %v1591 = vpack.c.bf16 %v1535, %v1533
      %v1592 = vpack.c.bf16 %v1538, %v1536
      %v1593 = vpack.c.bf16 %v1539, %v1537
      %v1594 = vpack.c.bf16 %v1542, %v1540
      %v1595 = vpack.c.bf16 %v1543, %v1541
      %v1596 = vpack.c.bf16 %v1546, %v1544
      %v1597 = vpack.c.bf16 %v1547, %v1545
      %v1598 = vpack.c.bf16 %v1550, %v1548
      %v1599 = vpack.c.bf16 %v1551, %v1549
      %v1600 = vpack.c.bf16 %v1554, %v1552
      %v1601 = vpack.c.bf16 %v1555, %v1553
      %v1602 = vpack.c.bf16 %v1558, %v1556
      %v1603 = vpack.c.bf16 %v1559, %v1557
      %v1604 = vpack.c.bf16 %v1562, %v1560
      %v1605 = vpack.c.bf16 %v1563, %v1561
      %v1606 = vpack.c.bf16 %v1566, %v1564
      %v1607 = vpack.c.bf16 %v1567, %v1565
      %v1608 = vpack.c.bf16 %v1570, %v1568
      %v1609 = vpack.c.bf16 %v1571, %v1569
      %v1610 = vpack.c.bf16 %v1574, %v1572
      %v1611 = vpack.c.bf16 %v1575, %v1573
      %v1612 = vpack.c.bf16 %v1578, %v1576
      %v1613 = vpack.c.bf16 %v1579, %v1577
      %v1614 = vpack.c.bf16 %v1582, %v1580
      %v1615 = vpack.c.bf16 %v1583, %v1581
      %1616 = vmatprep.subr.bf16.mxu0 %v1599
      %1617 = vmatpush1.bf16.xpose.msra.mxu0 %v1598
      %1618 = vmatprep.subr.bf16.mxu0 %v1597
      %1619 = vmatpush1.bf16.xpose.msra.mxu0 %v1596
      %1620 = vmatprep.subr.bf16.mxu0 %v1595
      %1621 = vmatpush1.bf16.xpose.msra.mxu0 %v1594
      %1622 = vmatprep.subr.bf16.mxu0 %v1593
      %1623 = vmatpush1.bf16.xpose.msra.mxu0 %v1592
      %1624 = vmatprep.subr.bf16.mxu0 %v1591
      %1625 = vmatpush1.bf16.xpose.msra.mxu0 %v1590
      %1626 = vmatprep.subr.bf16.mxu0 %v1589
      %1627 = vmatpush1.bf16.xpose.msra.mxu0 %v1588
      %1628 = vmatprep.subr.bf16.mxu0 %v1587
      %1629 = vmatpush1.bf16.xpose.msra.mxu0 %v1586
      %1630 = vmatprep.subr.bf16.mxu0 %v1585
      %1631 = vmatpush1.bf16.xpose.msra.mxu0 %v1584
      %1632 = vmatprep.subr.bf16.mxu0 %v1615
      %1633 = vmatpush2.bf16.xpose.msra.mxu0 %v1614
      %1634 = vmatprep.subr.bf16.mxu0 %v1613
      %1635 = vmatpush2.bf16.xpose.msra.mxu0 %v1612
      %1636 = vmatprep.subr.bf16.mxu0 %v1611
      %1637 = vmatpush2.bf16.xpose.msra.mxu0 %v1610
      %1638 = vmatprep.subr.bf16.mxu0 %v1609
      %1639 = vmatpush2.bf16.xpose.msra.mxu0 %v1608
      %1640 = vmatprep.subr.bf16.mxu0 %v1607
      %1641 = vmatpush2.bf16.xpose.msra.mxu0 %v1606
      %1642 = vmatprep.subr.bf16.mxu0 %v1605
      %1643 = vmatpush2.bf16.xpose.msra.mxu0 %v1604
      %1644 = vmatprep.subr.bf16.mxu0 %v1603
      %1645 = vmatpush2.bf16.xpose.msra.mxu0 %v1602
      %1646 = vmatprep.subr.bf16.mxu0 %v1601
      %1647 = vmatpush2.bf16.xpose.msra.mxu0 %v1600
      %1648 = vmatprep.mubr.bf16.mxu0 %v1519
      %1649 = vmatmul.mubr.bf16.gmra.mxu0 %v1518
      %v1650 = vpop.f32.mrf.mxu0
      %v1651 = vadd.f32 0.0, %v1650
      %v1652 = vpop.f32.mrf.mxu0
      %v1653 = vadd.f32 0.0, %v1652
      %v1654 = vpop.f32.mrf.mxu0
      %v1655 = vpop.f32.mrf.mxu0
      %1656 = vdwg.mxu0
      %v1657 = vpack.c.bf16 %v1651, %v1651
      %v1658 = vpack.c.bf16 %v1653, %v1653
      %v1661 = vcombine.low %v1657, %v1658
      %v1663 = vunpack.c.l.s4 1983009808
      %v1664 = vunpack.c.0.s8 %v1663
      %v1665 = vlaneseq
      %v1666 = vshrl.u32 %v1665, 7
      %v1667 = vsub.s32 %v1664, %v1666
      %v1668 = vrot.slane %v1661, %v1667
      %1670 = vst [vmem:[%s446] sm:$0xf] %v1668
      %1671 = vmatprep.subr.bf16.mxu0 %v1599
      %1672 = vmatpush1.bf16.xpose.msra.mxu0 %v1598
      %1673 = vmatprep.subr.bf16.mxu0 %v1597
      %1674 = vmatpush1.bf16.xpose.msra.mxu0 %v1596
      %1675 = vmatprep.subr.bf16.mxu0 %v1595
      %1676 = vmatpush1.bf16.xpose.msra.mxu0 %v1594
      %1677 = vmatprep.subr.bf16.mxu0 %v1593
      %1678 = vmatpush1.bf16.xpose.msra.mxu0 %v1592
      %1679 = vmatprep.subr.bf16.mxu0 %v1591
      %1680 = vmatpush1.bf16.xpose.msra.mxu0 %v1590
      %1681 = vmatprep.subr.bf16.mxu0 %v1589
      %1682 = vmatpush1.bf16.xpose.msra.mxu0 %v1588
      %1683 = vmatprep.subr.bf16.mxu0 %v1587
      %1684 = vmatpush1.bf16.xpose.msra.mxu0 %v1586
      %1685 = vmatprep.subr.bf16.mxu0 %v1585
      %1686 = vmatpush1.bf16.xpose.msra.mxu0 %v1584
      %1687 = vmatprep.subr.bf16.mxu0 %v1615
      %1688 = vmatpush2.bf16.xpose.msra.mxu0 %v1614
      %1689 = vmatprep.subr.bf16.mxu0 %v1613
      %1690 = vmatpush2.bf16.xpose.msra.mxu0 %v1612
      %1691 = vmatprep.subr.bf16.mxu0 %v1611
      %1692 = vmatpush2.bf16.xpose.msra.mxu0 %v1610
      %1693 = vmatprep.subr.bf16.mxu0 %v1609
      %1694 = vmatpush2.bf16.xpose.msra.mxu0 %v1608
      %1695 = vmatprep.subr.bf16.mxu0 %v1607
      %1696 = vmatpush2.bf16.xpose.msra.mxu0 %v1606
      %1697 = vmatprep.subr.bf16.mxu0 %v1605
      %1698 = vmatpush2.bf16.xpose.msra.mxu0 %v1604
      %1699 = vmatprep.subr.bf16.mxu0 %v1603
      %1700 = vmatpush2.bf16.xpose.msra.mxu0 %v1602
      %1701 = vmatprep.subr.bf16.mxu0 %v1601
      %1702 = vmatpush2.bf16.xpose.msra.mxu0 %v1600
      %1703 = vmatprep.mubr.bf16.mxu0 %v484
      %1704 = vmatmul.mubr.bf16.gmra.mxu0 %v483
      %v1705 = vpop.f32.mrf.mxu0
      %v1706 = vadd.f32 0.0, %v1705
      %v1707 = vpop.f32.mrf.mxu0
      %v1708 = vadd.f32 0.0, %v1707
      %v1709 = vpop.f32.mrf.mxu0
      %v1710 = vadd.f32 0.0, %v1709
      %v1711 = vpop.f32.mrf.mxu0
      %v1712 = vadd.f32 0.0, %v1711
      %1713 = vmatprep.mubr.bf16.mxu0 %v486
      %1714 = vmatmul.mubr.bf16.gmra.mxu0 %v485
      %v1715 = vpop.f32.mrf.mxu0
      %v1716 = vadd.f32 0.0, %v1715
      %v1717 = vpop.f32.mrf.mxu0
      %v1718 = vadd.f32 0.0, %v1717
      %v1719 = vpop.f32.mrf.mxu0
      %v1720 = vadd.f32 0.0, %v1719
      %v1721 = vpop.f32.mrf.mxu0
      %v1722 = vadd.f32 0.0, %v1721
      %1723 = vmatprep.mubr.bf16.mxu0 %v488
      %1724 = vmatmul.mubr.bf16.gmra.mxu0 %v487
      %v1725 = vpop.f32.mrf.mxu0
      %v1726 = vadd.f32 0.0, %v1725
      %v1727 = vpop.f32.mrf.mxu0
      %v1728 = vadd.f32 0.0, %v1727
      %v1729 = vpop.f32.mrf.mxu0
      %v1730 = vadd.f32 0.0, %v1729
      %v1731 = vpop.f32.mrf.mxu0
      %v1732 = vadd.f32 0.0, %v1731
      %1733 = vmatprep.mubr.bf16.mxu0 %v490
      %1734 = vmatmul.mubr.bf16.gmra.mxu0 %v489
      %v1735 = vpop.f32.mrf.mxu0
      %v1736 = vadd.f32 0.0, %v1735
      %v1737 = vpop.f32.mrf.mxu0
      %v1738 = vadd.f32 0.0, %v1737
      %v1739 = vpop.f32.mrf.mxu0
      %v1740 = vadd.f32 0.0, %v1739
      %v1741 = vpop.f32.mrf.mxu0
      %v1742 = vadd.f32 0.0, %v1741
      %1743 = vmatprep.mubr.bf16.mxu0 %v492
      %1744 = vmatmul.mubr.bf16.gmra.mxu0 %v491
      %v1745 = vpop.f32.mrf.mxu0
      %v1746 = vadd.f32 0.0, %v1745
      %v1747 = vpop.f32.mrf.mxu0
      %v1748 = vadd.f32 0.0, %v1747
      %v1749 = vpop.f32.mrf.mxu0
      %v1750 = vadd.f32 0.0, %v1749
      %v1751 = vpop.f32.mrf.mxu0
      %v1752 = vadd.f32 0.0, %v1751
      %1753 = vmatprep.mubr.bf16.mxu0 %v494
      %1754 = vmatmul.mubr.bf16.gmra.mxu0 %v493
      %v1755 = vpop.f32.mrf.mxu0
      %v1756 = vadd.f32 0.0, %v1755
      %v1757 = vpop.f32.mrf.mxu0
      %v1758 = vadd.f32 0.0, %v1757
      %v1759 = vpop.f32.mrf.mxu0
      %v1760 = vadd.f32 0.0, %v1759
      %v1761 = vpop.f32.mrf.mxu0
      %v1762 = vadd.f32 0.0, %v1761
      %1763 = vmatprep.mubr.bf16.mxu0 %v496
      %1764 = vmatmul.mubr.bf16.gmra.mxu0 %v495
      %v1765 = vpop.f32.mrf.mxu0
      %v1766 = vadd.f32 0.0, %v1765
      %v1767 = vpop.f32.mrf.mxu0
      %v1768 = vadd.f32 0.0, %v1767
      %v1769 = vpop.f32.mrf.mxu0
      %v1770 = vpop.f32.mrf.mxu0
      %1771 = vdwg.mxu0
      %v1772 = vpack.c.bf16 %v1710, %v1706
      %v1773 = vpack.c.bf16 %v1712, %v1708
      %v1774 = vpack.c.bf16 %v1720, %v1716
      %v1775 = vpack.c.bf16 %v1722, %v1718
      %v1776 = vpack.c.bf16 %v1730, %v1726
      %v1777 = vpack.c.bf16 %v1732, %v1728
      %v1778 = vpack.c.bf16 %v1740, %v1736
      %v1779 = vpack.c.bf16 %v1742, %v1738
      %v1780 = vpack.c.bf16 %v1750, %v1746
      %v1781 = vpack.c.bf16 %v1752, %v1748
      %v1782 = vpack.c.bf16 %v1760, %v1756
      %v1783 = vpack.c.bf16 %v1762, %v1758
      %v1784 = vpack.c.bf16 %v1766, %v1766
      %v1785 = vpack.c.bf16 %v1768, %v1768
      %v1800 = vunpack.c.l.b16 %v1772
      %v1801 = vunpack.c.l.b16 %v1773
      %v1802 = vunpack.c.h.b16 %v1772
      %v1803 = vunpack.c.h.b16 %v1773
      %v1804 = vunpack.c.l.b16 %v1774
      %v1805 = vunpack.c.l.b16 %v1775
      %v1806 = vunpack.c.h.b16 %v1774
      %v1807 = vunpack.c.h.b16 %v1775
      %v1808 = vunpack.c.l.b16 %v1776
      %v1809 = vunpack.c.l.b16 %v1777
      %v1810 = vunpack.c.h.b16 %v1776
      %v1811 = vunpack.c.h.b16 %v1777
      %v1812 = vunpack.c.l.b16 %v1778
      %v1813 = vunpack.c.l.b16 %v1779
      %v1814 = vunpack.c.h.b16 %v1778
      %v1815 = vunpack.c.h.b16 %v1779
      %v1816 = vunpack.c.l.b16 %v1780
      %v1817 = vunpack.c.l.b16 %v1781
      %v1818 = vunpack.c.h.b16 %v1780
      %v1819 = vunpack.c.h.b16 %v1781
      %v1820 = vunpack.c.l.b16 %v1782
      %v1821 = vunpack.c.l.b16 %v1783
      %v1822 = vunpack.c.h.b16 %v1782
      %v1823 = vunpack.c.h.b16 %v1783
      %v1824 = vunpack.c.l.b16 %v1784
      %v1825 = vunpack.c.l.b16 %v1785
      %v1826 = vpack.c.b16 %v1801, %v1800
      %v1827 = vpack.c.b16 %v1803, %v1802
      %v1828 = vpack.c.b16 %v1805, %v1804
      %v1829 = vpack.c.b16 %v1807, %v1806
      %v1830 = vpack.c.b16 %v1809, %v1808
      %v1831 = vpack.c.b16 %v1811, %v1810
      %v1832 = vpack.c.b16 %v1813, %v1812
      %v1833 = vpack.c.b16 %v1815, %v1814
      %v1834 = vpack.c.b16 %v1817, %v1816
      %v1835 = vpack.c.b16 %v1819, %v1818
      %v1836 = vpack.c.b16 %v1821, %v1820
      %v1837 = vpack.c.b16 %v1823, %v1822
      %v1838 = vpack.c.b16 %v1825, %v1824
      %1852 = vst [vmem:[%s456] sm:$0xff] %v1826
      %1853 = vst [vmem:[%s456 + $0x8] sm:$0xff] %v1827
      %1854 = vst [vmem:[%s456 + $0x10] sm:$0xff] %v1828
      %1855 = vst [vmem:[%s456 + $0x18] sm:$0xff] %v1829
      %1856 = vst [vmem:[%s456 + $0x20] sm:$0xff] %v1830
      %1857 = vst [vmem:[%s456 + $0x28] sm:$0xff] %v1831
      %1858 = vst [vmem:[%s456 + $0x30] sm:$0xff] %v1832
      %1859 = vst [vmem:[%s456 + $0x38] sm:$0xff] %v1833
      %1860 = vst [vmem:[%s456 + $0x40] sm:$0xff] %v1834
      %1861 = vst [vmem:[%s456 + $0x48] sm:$0xff] %v1835
      %1862 = vst [vmem:[%s456 + $0x50] sm:$0xff] %v1836
      %1863 = vst [vmem:[%s456 + $0x58] sm:$0xff] %v1837
      %1864 = vst [vmem:[%s456 + $0x60] sm:$0x33] %v1838
      %p1865 = scmp.lt.s32.totalorder %s22, 1
      %s1866 = scalar_select %p1865, %s22, 1
      %s1867 = smul.addr %s1866, 2
      %s1868 = smul.addr %s1867, 2
      %s1869 = scalar_lea.vmem %s7, %s1868
      %p1870 = scmp.lt.s32.totalorder %s22, 1
      %s1871 = scalar_select %p1870, %s22, 1
      %s1872 = smul.addr %s1871, 2
      %s1873 = smul.addr %s1872, 2
      %s1874 = scalar_lea.vmem %s8, %s1873
      %p1875 = scmp.lt.s32.totalorder %s22, 1
      %s1876 = scalar_select %p1875, %s22, 1
      %s1877 = smul.addr %s1876, 26
      %s1878 = smul.addr %s1877, 4
      %s1879 = scalar_lea.vmem %s9, %s1878
      %p1880 = scmp.lt.s32.totalorder %s22, 1
      %s1881 = scalar_select %p1880, %s22, 1
      %s1882 = smul.addr %s1881, 26
      %s1883 = smul.addr %s1882, 4
      %s1884 = scalar_lea.vmem %s10, %s1883
      // Predicated region
      $region49: #{distill_forward.2} parent=47 // pred_check
        %p1885 = pneg %p207
      $region50: #{distill_forward.2} parent=47 // pred_check_branch
        %1887 = sbr.rel (%p1885) target = $region52
      $region51: #{distill_forward.2} parent=47 // pred_region
        _
      $region52: #{distill_forward.2} parent=47 // pred_fallthru
        _
      // Predicated region
      $region53: #{distill_forward.2} parent=47 // pred_check
        %p1888 = pneg %p233
      $region54: #{distill_forward.2} parent=47 // pred_check_branch
        %1890 = sbr.rel (%p1888) target = $region56
      $region55: #{distill_forward.2} parent=47 // pred_region
        _
      $region56: #{distill_forward.2} parent=47 // pred_fallthru
        _
      // Predicated region
      $region57: #{distill_forward.2} parent=47 // pred_check
        %p1891 = pneg %p259
      $region58: #{distill_forward.2} parent=47 // pred_check_branch
        %1893 = sbr.rel (%p1891) target = $region60
      $region59: #{distill_forward.2} parent=47 // pred_region
        _
      $region60: #{distill_forward.2} parent=47 // pred_fallthru
        _
      // Predicated region
      $region61: #{distill_forward.2} parent=47 // pred_check
        %p1894 = pneg %p285
      $region62: #{distill_forward.2} parent=47 // pred_check_branch
        %1896 = sbr.rel (%p1894) target = $region64
      $region63: #{distill_forward.2} parent=47 // pred_region
        _
      $region64: #{distill_forward.2} parent=47 // pred_fallthru
        _
    $region48: #{distill_forward.2} parent=5 // pred_fallthru
      _
    %p1897 = scmp.le.s32.totalorder 2, %s17
    // Predicated region
    $region65: #{distill_forward.2} parent=5 // pred_check
      %p1898 = pneg %p1897
    $region66: #{distill_forward.2} parent=5 // pred_check_branch
      %1900 = sbr.rel (%p1898) target = $region68
    $region67: #{distill_forward.2} parent=5 // pred_region
      %s1901 = ssub.s32 %s17, 2
      // Predicated region
      $region69: #{distill_forward.2} parent=67 // pred_check
        %p1902 = pneg %p213
      $region70: #{distill_forward.2} parent=67 // pred_check_branch
        %1904 = sbr.rel (%p1902) target = $region72
      $region71: #{distill_forward.2} parent=67 // pred_region
        %p1905 = scmp.lt.s32.totalorder %s23, 1
        %s1906 = scalar_select %p1905, %s23, 1
        %s1907 = smul.addr %s1906, 2
        %s1908 = smul.addr %s1907, 2
        %s1909 = scalar_lea.vmem %s7, %s1908
      $region72: #{distill_forward.2} parent=67 // pred_fallthru
        _
      // Predicated region
      $region73: #{distill_forward.2} parent=67 // pred_check
        %p1910 = pneg %p239
      $region74: #{distill_forward.2} parent=67 // pred_check_branch
        %1912 = sbr.rel (%p1910) target = $region76
      $region75: #{distill_forward.2} parent=67 // pred_region
        %p1913 = scmp.lt.s32.totalorder %s23, 1
        %s1914 = scalar_select %p1913, %s23, 1
        %s1915 = smul.addr %s1914, 2
        %s1916 = smul.addr %s1915, 2
        %s1917 = scalar_lea.vmem %s8, %s1916
      $region76: #{distill_forward.2} parent=67 // pred_fallthru
        _
      // Predicated region
      $region77: #{distill_forward.2} parent=67 // pred_check
        %p1918 = pneg %p265
      $region78: #{distill_forward.2} parent=67 // pred_check_branch
        %1920 = sbr.rel (%p1918) target = $region80
      $region79: #{distill_forward.2} parent=67 // pred_region
        %p1921 = scmp.lt.s32.totalorder %s23, 1
        %s1922 = scalar_select %p1921, %s23, 1
        %s1923 = smul.addr %s1922, 26
        %s1924 = smul.addr %s1923, 4
        %s1925 = scalar_lea.vmem %s9, %s1924
      $region80: #{distill_forward.2} parent=67 // pred_fallthru
        _
      // Predicated region
      $region81: #{distill_forward.2} parent=67 // pred_check
        %p1926 = pneg %p291
      $region82: #{distill_forward.2} parent=67 // pred_check_branch
        %1928 = sbr.rel (%p1926) target = $region84
      $region83: #{distill_forward.2} parent=67 // pred_region
        %p1929 = scmp.lt.s32.totalorder %s23, 1
        %s1930 = scalar_select %p1929, %s23, 1
        %s1931 = smul.addr %s1930, 26
        %s1932 = smul.addr %s1931, 4
        %s1933 = scalar_lea.vmem %s10, %s1932
      $region84: #{distill_forward.2} parent=67 // pred_fallthru
        _
    $region68: #{distill_forward.2} parent=5 // pred_fallthru
      _
  $region6: #{distill_forward.2} parent=0 // loop_footer
    %s21 = sadd.s32 1, %s17
  $region7: #{distill_forward.2} parent=0 // loop_footer_branch
    %16 = sbr.rel target = $region3
  $region8: #{distill_forward.2} parent=0 // loop_exit
    _

// kernel: distill_forward.3
$region0: #{distill_forward.3}
  #allocation0 [shape = 'u32[]', space=smem, size = 0x4, offset = 0x4, fixed_abs, tag = 'smem constant byte address 0x4 - core index']
  #allocation1 [shape = 'u32[144,128]{1,0:T(1,128)}', space=vmem, size = 0x12000, scoped, tag = 'internal scratch']
  #allocation2 [shape = 'bf16[208,256]{1,0:T(8,128)(2,1)}', space=vmem, size = 0x1a000, scoped, tag = 'scratch operand']
  #allocation3 [shape = 'bf16[208,256]{1,0:T(8,128)(2,1)}', space=vmem, size = 0x1a000, scoped, tag = 'scratch operand']
  #allocation4 [shape = 'f32[32,256]{1,0:T(8,128)}', space=vmem, size = 0x8000, scoped, tag = 'scratch operand']
  #allocation5 [shape = 'f32[32,256]{1,0:T(8,128)}', space=vmem, size = 0x8000, scoped, tag = 'scratch operand']
  #allocation6 [shape = 'f32[1]{0:T(128)}', space=smem, size = 0x200, scoped, tag = 'scratch operand']
  %s0 = inlined_call_operand.vmem [shape: bf16[200,256], index: 0, kind: input, shape index: {}]
  %s1 = inlined_call_operand.vmem [shape: bf16[200,256], index: 1, kind: input, shape index: {}]
  %s2 = inlined_call_operand.vmem [shape: bf16[4,2,256], index: 2, kind: input, shape index: {}]
  %s3 = inlined_call_operand.vmem [shape: bf16[4,2,256], index: 3, kind: input, shape index: {}]
  %s4 = inlined_call_operand.vmem [shape: bf16[256,256], index: 4, kind: input, shape index: {}]
  %s5 = inlined_call_operand.vmem [shape: f32[1,256], index: 5, kind: input, shape index: {}]
  %s6 = inlined_call_operand.vmem [shape: bf16[256,256], index: 6, kind: input, shape index: {}]
  %s7 = inlined_call_operand.vmem [shape: f32[1,256], index: 7, kind: input, shape index: {}]
  %s8 = inlined_call_operand.hbm [shape: f32[1,1], index: 8, kind: output, shape index: {}]
  %s9 = sld [smem:[#allocation0]]
  $region73: #{distill_forward.3} parent=0
    _
  %s11 = ssub.s32 1, %s9
  %s12 = scalar_select 0, %s11, %s9
  $region1: #{distill_forward.3} parent=0
    #allocation7 [shape = 'u8[512]{0}', space=smem, size = 0x200, scoped, tag = 'output window, operand 0, single buffered']
    #allocation8 [shape = 's32[2]{0}', space=sflag, size = 0x8, scoped, tag = 'scoped memory for distill_forward.3']
    %13 = vsyncpa [#allocation8], 0
    loop: start=0, step=1, limit=6
    $region2: #{distill_forward.3} parent=1 // loop_pre_header
      _
    $region3: #{distill_forward.3} parent=1 // loop_header
      %s15 = sphi 0, %s19
      %p16 = scmp.ge.s32.totalorder %s15, 6
      %s23 = sphi 0, %s23
      %s25 = sphi 0, %s23
      %s26 = sphi 0, %s25
      %s40 = sphi 0, %s26
      %s44 = sphi 0, %s44
      %s46 = sphi 0, %s44
      %s47 = sphi 0, %s46
      %s61 = sphi 0, %s47
      %s67 = sphi 0, %s69
      %s70 = sphi 0, %s67
      %s71 = sphi 0, %s70
      %s87 = sphi 0, %s71
      %s93 = sphi 0, %s95
      %s96 = sphi 0, %s93
      %s97 = sphi 0, %s96
      %s113 = sphi 0, %s97
      %s117 = sphi 0, %s117
      %s119 = sphi 0, %s117
      %s120 = sphi 0, %s119
      %s134 = sphi 0, %s120
      %s138 = sphi 0, %s138
      %s140 = sphi 0, %s138
      %s141 = sphi 0, %s140
      %s155 = sphi 0, %s141
      %s159 = sphi 0, %s159
      %s161 = sphi 0, %s159
      %s162 = sphi 0, %s161
      %s176 = sphi 0, %s162
      %s180 = sphi 0, %s180
      %s182 = sphi 0, %s180
      %s183 = sphi 0, %s182
      %s197 = sphi 0, %s183
      %s201 = sphi 0, %s201
      %s203 = sphi 0, %s201
      %s204 = sphi 0, %s203
      %s218 = sphi 0, %s204
    $region4: #{distill_forward.3} parent=1 // loop_header_branch
      %18 = sbr.rel (%p16) target = $region8
    $region5: #{distill_forward.3} parent=1 // loop_body
      %s20 = ssub.s32 %s15, 1
      %s21 = ssub.s32 %s15, 2
      %s22 = sadd.s32 %s15, 1
      %s24 = sadd.s32 %s23, 1
      %p27 = scmp.eq.s32.totalorder %s15, 3
      %p28 = scmp.ne.s32.totalorder %s23, %s25
      %p29 = scmp.eq.s32.totalorder %s15, 0
      %p30 = por %p28, %p29
      %p31 = scmp.ne.s32.totalorder %s23, %s25
      %p32 = scmp.eq.s32.totalorder %s20, 3
      %p33 = por %p31, %p32
      %p34 = scmp.ne.s32.totalorder %s25, %s26
      %p35 = scmp.eq.s32.totalorder %s20, 0
      %p36 = por %p34, %p35
      %p37 = scmp.ne.s32.totalorder %s25, %s26
      %p38 = scmp.eq.s32.totalorder %s21, 3
      %p39 = por %p37, %p38
      %p41 = scmp.ne.s32.totalorder %s26, %s40
      %p42 = scmp.eq.s32.totalorder %s21, 0
      %p43 = por %p41, %p42
      %s45 = sadd.s32 %s44, 1
      %p48 = scmp.eq.s32.totalorder %s15, 3
      %p49 = scmp.ne.s32.totalorder %s44, %s46
      %p50 = scmp.eq.s32.totalorder %s15, 0
      %p51 = por %p49, %p50
      %p52 = scmp.ne.s32.totalorder %s44, %s46
      %p53 = scmp.eq.s32.totalorder %s20, 3
      %p54 = por %p52, %p53
      %p55 = scmp.ne.s32.totalorder %s46, %s47
      %p56 = scmp.eq.s32.totalorder %s20, 0
      %p57 = por %p55, %p56
      %p58 = scmp.ne.s32.totalorder %s46, %s47
      %p59 = scmp.eq.s32.totalorder %s21, 3
      %p60 = por %p58, %p59
      %p62 = scmp.ne.s32.totalorder %s47, %s61
      %p63 = scmp.eq.s32.totalorder %s21, 0
      %p64 = por %p62, %p63
      %s65 = ssub.s32 %s15, %s22
      %p66 = scmp.eq.s32.totalorder %s65, 0
      %s68 = sadd.s32 %s67, 1
      %s69 = scalar_select %p66, %s67, %s68
      %p72 = pneg %p66
      %p73 = scmp.eq.s32.totalorder %s15, 3
      %p74 = por %p72, %p73
      %p75 = scmp.ne.s32.totalorder %s67, %s70
      %p76 = scmp.eq.s32.totalorder %s15, 0
      %p77 = por %p75, %p76
      %p78 = scmp.ne.s32.totalorder %s67, %s70
      %p79 = scmp.eq.s32.totalorder %s20, 3
      %p80 = por %p78, %p79
      %p81 = scmp.ne.s32.totalorder %s70, %s71
      %p82 = scmp.eq.s32.totalorder %s20, 0
      %p83 = por %p81, %p82
      %p84 = scmp.ne.s32.totalorder %s70, %s71
      %p85 = scmp.eq.s32.totalorder %s21, 3
      %p86 = por %p84, %p85
      %p88 = scmp.ne.s32.totalorder %s71, %s87
      %p89 = scmp.eq.s32.totalorder %s21, 0
      %p90 = por %p88, %p89
      %s91 = ssub.s32 %s15, %s22
      %p92 = scmp.eq.s32.totalorder %s91, 0
      %s94 = sadd.s32 %s93, 1
      %s95 = scalar_select %p92, %s93, %s94
      %p98 = pneg %p92
      %p99 = scmp.eq.s32.totalorder %s15, 3
      %p100 = por %p98, %p99
      %p101 = scmp.ne.s32.totalorder %s93, %s96
      %p102 = scmp.eq.s32.totalorder %s15, 0
      %p103 = por %p101, %p102
      %p104 = scmp.ne.s32.totalorder %s93, %s96
      %p105 = scmp.eq.s32.totalorder %s20, 3
      %p106 = por %p104, %p105
      %p107 = scmp.ne.s32.totalorder %s96, %s97
      %p108 = scmp.eq.s32.totalorder %s20, 0
      %p109 = por %p107, %p108
      %p110 = scmp.ne.s32.totalorder %s96, %s97
      %p111 = scmp.eq.s32.totalorder %s21, 3
      %p112 = por %p110, %p111
      %p114 = scmp.ne.s32.totalorder %s97, %s113
      %p115 = scmp.eq.s32.totalorder %s21, 0
      %p116 = por %p114, %p115
      %s118 = sadd.s32 %s117, 1
      %p121 = scmp.eq.s32.totalorder %s15, 3
      %p122 = scmp.ne.s32.totalorder %s117, %s119
      %p123 = scmp.eq.s32.totalorder %s15, 0
      %p124 = por %p122, %p123
      %p125 = scmp.ne.s32.totalorder %s117, %s119
      %p126 = scmp.eq.s32.totalorder %s20, 3
      %p127 = por %p125, %p126
      %p128 = scmp.ne.s32.totalorder %s119, %s120
      %p129 = scmp.eq.s32.totalorder %s20, 0
      %p130 = por %p128, %p129
      %p131 = scmp.ne.s32.totalorder %s119, %s120
      %p132 = scmp.eq.s32.totalorder %s21, 3
      %p133 = por %p131, %p132
      %p135 = scmp.ne.s32.totalorder %s120, %s134
      %p136 = scmp.eq.s32.totalorder %s21, 0
      %p137 = por %p135, %p136
      %s139 = sadd.s32 %s138, 1
      %p142 = scmp.eq.s32.totalorder %s15, 3
      %p143 = scmp.ne.s32.totalorder %s138, %s140
      %p144 = scmp.eq.s32.totalorder %s15, 0
      %p145 = por %p143, %p144
      %p146 = scmp.ne.s32.totalorder %s138, %s140
      %p147 = scmp.eq.s32.totalorder %s20, 3
      %p148 = por %p146, %p147
      %p149 = scmp.ne.s32.totalorder %s140, %s141
      %p150 = scmp.eq.s32.totalorder %s20, 0
      %p151 = por %p149, %p150
      %p152 = scmp.ne.s32.totalorder %s140, %s141
      %p153 = scmp.eq.s32.totalorder %s21, 3
      %p154 = por %p152, %p153
      %p156 = scmp.ne.s32.totalorder %s141, %s155
      %p157 = scmp.eq.s32.totalorder %s21, 0
      %p158 = por %p156, %p157
      %s160 = sadd.s32 %s159, 1
      %p163 = scmp.eq.s32.totalorder %s15, 3
      %p164 = scmp.ne.s32.totalorder %s159, %s161
      %p165 = scmp.eq.s32.totalorder %s15, 0
      %p166 = por %p164, %p165
      %p167 = scmp.ne.s32.totalorder %s159, %s161
      %p168 = scmp.eq.s32.totalorder %s20, 3
      %p169 = por %p167, %p168
      %p170 = scmp.ne.s32.totalorder %s161, %s162
      %p171 = scmp.eq.s32.totalorder %s20, 0
      %p172 = por %p170, %p171
      %p173 = scmp.ne.s32.totalorder %s161, %s162
      %p174 = scmp.eq.s32.totalorder %s21, 3
      %p175 = por %p173, %p174
      %p177 = scmp.ne.s32.totalorder %s162, %s176
      %p178 = scmp.eq.s32.totalorder %s21, 0
      %p179 = por %p177, %p178
      %s181 = sadd.s32 %s180, 1
      %p184 = scmp.eq.s32.totalorder %s15, 3
      %p185 = scmp.ne.s32.totalorder %s180, %s182
      %p186 = scmp.eq.s32.totalorder %s15, 0
      %p187 = por %p185, %p186
      %p188 = scmp.ne.s32.totalorder %s180, %s182
      %p189 = scmp.eq.s32.totalorder %s20, 3
      %p190 = por %p188, %p189
      %p191 = scmp.ne.s32.totalorder %s182, %s183
      %p192 = scmp.eq.s32.totalorder %s20, 0
      %p193 = por %p191, %p192
      %p194 = scmp.ne.s32.totalorder %s182, %s183
      %p195 = scmp.eq.s32.totalorder %s21, 3
      %p196 = por %p194, %p195
      %p198 = scmp.ne.s32.totalorder %s183, %s197
      %p199 = scmp.eq.s32.totalorder %s21, 0
      %p200 = por %p198, %p199
      %s202 = sadd.s32 %s201, 1
      %p205 = scmp.eq.s32.totalorder %s15, 3
      %p206 = scmp.ne.s32.totalorder %s201, %s203
      %p207 = scmp.eq.s32.totalorder %s15, 0
      %p208 = por %p206, %p207
      %p209 = scmp.ne.s32.totalorder %s201, %s203
      %p210 = scmp.eq.s32.totalorder %s20, 3
      %p211 = por %p209, %p210
      %p212 = scmp.ne.s32.totalorder %s203, %s204
      %p213 = scmp.eq.s32.totalorder %s20, 0
      %p214 = por %p212, %p213
      %p215 = scmp.ne.s32.totalorder %s203, %s204
      %p216 = scmp.eq.s32.totalorder %s21, 3
      %p217 = por %p215, %p216
      %p219 = scmp.ne.s32.totalorder %s204, %s218
      %p220 = scmp.eq.s32.totalorder %s21, 0
      %p221 = por %p219, %p220
      %p222 = scmp.le.s32.totalorder 1, %s15
      %p223 = scmp.lt.s32.totalorder %s15, 5
      %p224 = pnand %p222, %p223
      %p225 = pneg %p224
      // Predicated region
      $region9: #{distill_forward.3} parent=5 // pred_check
        _
      $region10: #{distill_forward.3} parent=5 // pred_check_branch
        %227 = sbr.rel (%p224) target = $region12
      $region11: #{distill_forward.3} parent=5 // pred_region
        %s228 = ssub.s32 %s15, 1
        // Predicated region
        $region13: #{distill_forward.3} parent=11 // pred_check
          %p229 = pneg %p36
        $region14: #{distill_forward.3} parent=11 // pred_check_branch
          %231 = sbr.rel (%p229) target = $region16
        $region15: #{distill_forward.3} parent=11 // pred_region
          _
        $region16: #{distill_forward.3} parent=11 // pred_fallthru
          _
        // Predicated region
        $region17: #{distill_forward.3} parent=11 // pred_check
          %p232 = pneg %p57
        $region18: #{distill_forward.3} parent=11 // pred_check_branch
          %234 = sbr.rel (%p232) target = $region20
        $region19: #{distill_forward.3} parent=11 // pred_region
          _
        $region20: #{distill_forward.3} parent=11 // pred_fallthru
          _
        // Predicated region
        $region21: #{distill_forward.3} parent=11 // pred_check
          %p235 = pneg %p130
        $region22: #{distill_forward.3} parent=11 // pred_check_branch
          %237 = sbr.rel (%p235) target = $region24
        $region23: #{distill_forward.3} parent=11 // pred_region
          _
        $region24: #{distill_forward.3} parent=11 // pred_fallthru
          _
        // Predicated region
        $region25: #{distill_forward.3} parent=11 // pred_check
          %p238 = pneg %p151
        $region26: #{distill_forward.3} parent=11 // pred_check_branch
          %240 = sbr.rel (%p238) target = $region28
        $region27: #{distill_forward.3} parent=11 // pred_region
          _
        $region28: #{distill_forward.3} parent=11 // pred_fallthru
          _
        // Predicated region
        $region29: #{distill_forward.3} parent=11 // pred_check
          %p241 = pneg %p172
        $region30: #{distill_forward.3} parent=11 // pred_check_branch
          %243 = sbr.rel (%p241) target = $region32
        $region31: #{distill_forward.3} parent=11 // pred_region
          _
        $region32: #{distill_forward.3} parent=11 // pred_fallthru
          _
        // Predicated region
        $region33: #{distill_forward.3} parent=11 // pred_check
          %p244 = pneg %p193
        $region34: #{distill_forward.3} parent=11 // pred_check_branch
          %246 = sbr.rel (%p244) target = $region36
        $region35: #{distill_forward.3} parent=11 // pred_region
          _
        $region36: #{distill_forward.3} parent=11 // pred_fallthru
          _
      $region12: #{distill_forward.3} parent=5 // pred_fallthru
        _
      %p247 = scmp.lt.s32.totalorder %s15, 4
      // Predicated region
      $region37: #{distill_forward.3} parent=5 // pred_check
        %p248 = pneg %p247
      $region38: #{distill_forward.3} parent=5 // pred_check_branch
        %250 = sbr.rel (%p248) target = $region40
      $region39: #{distill_forward.3} parent=5 // pred_region
        // Predicated region
        $region41: #{distill_forward.3} parent=39 // pred_check
          %p251 = pneg %p77
        $region42: #{distill_forward.3} parent=39 // pred_check_branch
          %253 = sbr.rel (%p251) target = $region44
        $region43: #{distill_forward.3} parent=39 // pred_region
          %p254 = scmp.lt.s32.totalorder %s15, 3
          %s255 = scalar_select %p254, %s15, 3
          %s256 = smul.addr %s255, 2
          %s257 = scalar_lea.vmem %s2, %s256
        $region44: #{distill_forward.3} parent=39 // pred_fallthru
          _
        // Predicated region
        $region45: #{distill_forward.3} parent=39 // pred_check
          %p258 = pneg %p103
        $region46: #{distill_forward.3} parent=39 // pred_check_branch
          %260 = sbr.rel (%p258) target = $region48
        $region47: #{distill_forward.3} parent=39 // pred_region
          %p261 = scmp.lt.s32.totalorder %s15, 3
          %s262 = scalar_select %p261, %s15, 3
          %s263 = smul.addr %s262, 2
          %s264 = scalar_lea.vmem %s3, %s263
        $region48: #{distill_forward.3} parent=39 // pred_fallthru
          _
      $region40: #{distill_forward.3} parent=5 // pred_fallthru
        _
      %p265 = scmp.le.s32.totalorder 1, %s15
      %p266 = scmp.lt.s32.totalorder %s15, 5
      %p267 = pnand %p265, %p266
      %p268 = pneg %p267
      // Predicated region
      $region49: #{distill_forward.3} parent=5 // pred_check
        _
      $region50: #{distill_forward.3} parent=5 // pred_check_branch
        %270 = sbr.rel (%p267) target = $region52
      $region51: #{distill_forward.3} parent=5 // pred_region
        %s271 = ssub.s32 %s15, 1
        %p272 = pneg %p36
        %p273 = pneg %p33
        %p274 = pneg %p57
        %p275 = pneg %p54
        %p276 = scmp.lt.s32.totalorder %s20, 3
        %s277 = scalar_select %p276, %s20, 3
        %s278 = smul.addr %s277, 2
        %s279 = scalar_lea.vmem %s2, %s278
        %p280 = pneg %p83
        %p281 = pneg %p80
        %p282 = scmp.lt.s32.totalorder %s20, 3
        %s283 = scalar_select %p282, %s20, 3
        %s284 = smul.addr %s283, 2
        %s285 = scalar_lea.vmem %s3, %s284
        %p286 = pneg %p109
        %p287 = pneg %p106
        %p288 = pneg %p130
        %p289 = pneg %p127
        %p290 = pneg %p151
        %p291 = pneg %p148
        %p292 = pneg %p172
        %p293 = pneg %p169
        %p294 = pneg %p193
        %p295 = pneg %p190
        %p296 = pneg %p214
        %p297 = pneg %p211
        %p298 = scmp.lt.s32.totalorder %s20, 3
        %s299 = scalar_select %p298, %s20, 3
        %s300 = smul.addr %s299, 2
        %s301 = scalar_lea.vmem %s2, %s300
        %p302 = scmp.lt.s32.totalorder %s20, 3
        %s303 = scalar_select %p302, %s20, 3
        %s304 = smul.addr %s303, 2
        %s305 = scalar_lea.vmem %s3, %s304
        %p307 = scmp.eq.s32.totalorder %s20, 0
        // Predicated region
        $region53: #{distill_forward.3} parent=51 // pred_check
          %p308 = pneg %p307
        $region54: #{distill_forward.3} parent=51 // pred_check_branch
          %310 = sbr.rel (%p308) target = $region56
        $region55: #{distill_forward.3} parent=51 // pred_region
          %v311 = vld [vmem:[%s0] sm:$0xff]
          %v312 = vld [vmem:[%s0 + $0x8] sm:$0xff]
          %v313 = vld [vmem:[%s0 + $0x10] sm:$0xff]
          %v314 = vld [vmem:[%s0 + $0x18] sm:$0xff]
          %v315 = vld [vmem:[%s0 + $0x20] sm:$0xff]
          %v316 = vld [vmem:[%s0 + $0x28] sm:$0xff]
          %v317 = vld [vmem:[%s0 + $0x30] sm:$0xff]
          %v318 = vld [vmem:[%s0 + $0x38] sm:$0xff]
          %v319 = vld [vmem:[%s0 + $0x40] sm:$0xff]
          %v320 = vld [vmem:[%s0 + $0x48] sm:$0xff]
          %v321 = vld [vmem:[%s0 + $0x50] sm:$0xff]
          %v322 = vld [vmem:[%s0 + $0x58] sm:$0xff]
          %v323 = vld [vmem:[%s0 + $0x60] sm:$0xff]
          %v324 = vld [vmem:[%s0 + $0x68] sm:$0xff]
          %v325 = vld [vmem:[%s0 + $0x70] sm:$0xff]
          %v326 = vld [vmem:[%s0 + $0x78] sm:$0xff]
          %v327 = vld [vmem:[%s0 + $0x80] sm:$0xff]
          %v328 = vld [vmem:[%s0 + $0x88] sm:$0xff]
          %v329 = vld [vmem:[%s0 + $0x90] sm:$0xff]
          %v330 = vld [vmem:[%s0 + $0x98] sm:$0xff]
          %v331 = vld [vmem:[%s0 + $0xa0] sm:$0xff]
          %v332 = vld [vmem:[%s0 + $0xa8] sm:$0xff]
          %v333 = vld [vmem:[%s0 + $0xb0] sm:$0xff]
          %v334 = vld [vmem:[%s0 + $0xb8] sm:$0xff]
          %v335 = vld [vmem:[%s0 + $0xc0] sm:$0xff]
          %336 = vst [vmem:[#allocation2] sm:$0xff] %v311
          %337 = vst [vmem:[#allocation2 + $0x8] sm:$0xff] %v312
          %338 = vst [vmem:[#allocation2 + $0x10] sm:$0xff] %v313
          %339 = vst [vmem:[#allocation2 + $0x18] sm:$0xff] %v314
          %340 = vst [vmem:[#allocation2 + $0x20] sm:$0xff] %v315
          %341 = vst [vmem:[#allocation2 + $0x28] sm:$0xff] %v316
          %342 = vst [vmem:[#allocation2 + $0x30] sm:$0xff] %v317
          %343 = vst [vmem:[#allocation2 + $0x38] sm:$0xff] %v318
          %344 = vst [vmem:[#allocation2 + $0x40] sm:$0xff] %v319
          %345 = vst [vmem:[#allocation2 + $0x48] sm:$0xff] %v320
          %346 = vst [vmem:[#allocation2 + $0x50] sm:$0xff] %v321
          %347 = vst [vmem:[#allocation2 + $0x58] sm:$0xff] %v322
          %348 = vst [vmem:[#allocation2 + $0x60] sm:$0xff] %v323
          %349 = vst [vmem:[#allocation2 + $0x68] sm:$0xff] %v324
          %350 = vst [vmem:[#allocation2 + $0x70] sm:$0xff] %v325
          %351 = vst [vmem:[#allocation2 + $0x78] sm:$0xff] %v326
          %352 = vst [vmem:[#allocation2 + $0x80] sm:$0xff] %v327
          %353 = vst [vmem:[#allocation2 + $0x88] sm:$0xff] %v328
          %354 = vst [vmem:[#allocation2 + $0x90] sm:$0xff] %v329
          %355 = vst [vmem:[#allocation2 + $0x98] sm:$0xff] %v330
          %356 = vst [vmem:[#allocation2 + $0xa0] sm:$0xff] %v331
          %357 = vst [vmem:[#allocation2 + $0xa8] sm:$0xff] %v332
          %358 = vst [vmem:[#allocation2 + $0xb0] sm:$0xff] %v333
          %359 = vst [vmem:[#allocation2 + $0xb8] sm:$0xff] %v334
          %360 = vst [vmem:[#allocation2 + $0xc0] sm:$0xff] %v335
          %v361 = vld [vmem:[%s1] sm:$0xff]
          %v362 = vld [vmem:[%s1 + $0x8] sm:$0xff]
          %v363 = vld [vmem:[%s1 + $0x10] sm:$0xff]
          %v364 = vld [vmem:[%s1 + $0x18] sm:$0xff]
          %v365 = vld [vmem:[%s1 + $0x20] sm:$0xff]
          %v366 = vld [vmem:[%s1 + $0x28] sm:$0xff]
          %v367 = vld [vmem:[%s1 + $0x30] sm:$0xff]
          %v368 = vld [vmem:[%s1 + $0x38] sm:$0xff]
          %v369 = vld [vmem:[%s1 + $0x40] sm:$0xff]
          %v370 = vld [vmem:[%s1 + $0x48] sm:$0xff]
          %v371 = vld [vmem:[%s1 + $0x50] sm:$0xff]
          %v372 = vld [vmem:[%s1 + $0x58] sm:$0xff]
          %v373 = vld [vmem:[%s1 + $0x60] sm:$0xff]
          %v374 = vld [vmem:[%s1 + $0x68] sm:$0xff]
          %v375 = vld [vmem:[%s1 + $0x70] sm:$0xff]
          %v376 = vld [vmem:[%s1 + $0x78] sm:$0xff]
          %v377 = vld [vmem:[%s1 + $0x80] sm:$0xff]
          %v378 = vld [vmem:[%s1 + $0x88] sm:$0xff]
          %v379 = vld [vmem:[%s1 + $0x90] sm:$0xff]
          %v380 = vld [vmem:[%s1 + $0x98] sm:$0xff]
          %v381 = vld [vmem:[%s1 + $0xa0] sm:$0xff]
          %v382 = vld [vmem:[%s1 + $0xa8] sm:$0xff]
          %v383 = vld [vmem:[%s1 + $0xb0] sm:$0xff]
          %v384 = vld [vmem:[%s1 + $0xb8] sm:$0xff]
          %v385 = vld [vmem:[%s1 + $0xc0] sm:$0xff]
          %386 = vst [vmem:[#allocation3] sm:$0xff] %v361
          %387 = vst [vmem:[#allocation3 + $0x8] sm:$0xff] %v362
          %388 = vst [vmem:[#allocation3 + $0x10] sm:$0xff] %v363
          %389 = vst [vmem:[#allocation3 + $0x18] sm:$0xff] %v364
          %390 = vst [vmem:[#allocation3 + $0x20] sm:$0xff] %v365
          %391 = vst [vmem:[#allocation3 + $0x28] sm:$0xff] %v366
          %392 = vst [vmem:[#allocation3 + $0x30] sm:$0xff] %v367
          %393 = vst [vmem:[#allocation3 + $0x38] sm:$0xff] %v368
          %394 = vst [vmem:[#allocation3 + $0x40] sm:$0xff] %v369
          %395 = vst [vmem:[#allocation3 + $0x48] sm:$0xff] %v370
          %396 = vst [vmem:[#allocation3 + $0x50] sm:$0xff] %v371
          %397 = vst [vmem:[#allocation3 + $0x58] sm:$0xff] %v372
          %398 = vst [vmem:[#allocation3 + $0x60] sm:$0xff] %v373
          %399 = vst [vmem:[#allocation3 + $0x68] sm:$0xff] %v374
          %400 = vst [vmem:[#allocation3 + $0x70] sm:$0xff] %v375
          %401 = vst [vmem:[#allocation3 + $0x78] sm:$0xff] %v376
          %402 = vst [vmem:[#allocation3 + $0x80] sm:$0xff] %v377
          %403 = vst [vmem:[#allocation3 + $0x88] sm:$0xff] %v378
          %404 = vst [vmem:[#allocation3 + $0x90] sm:$0xff] %v379
          %405 = vst [vmem:[#allocation3 + $0x98] sm:$0xff] %v380
          %406 = vst [vmem:[#allocation3 + $0xa0] sm:$0xff] %v381
          %407 = vst [vmem:[#allocation3 + $0xa8] sm:$0xff] %v382
          %408 = vst [vmem:[#allocation3 + $0xb0] sm:$0xff] %v383
          %409 = vst [vmem:[#allocation3 + $0xb8] sm:$0xff] %v384
          %410 = vst [vmem:[#allocation3 + $0xc0] sm:$0xff] %v385
          %411 = vst [vmem:[#allocation2 + $0xc8] sm:$0xff] 0
          %412 = vst [vmem:[#allocation3 + $0xc8] sm:$0xff] 0
          %s413 = scalar_lea.smem [#allocation6], 0
          %414 = sst [smem:[%s413]] 0.0
          %s415 = scalar_lea.smem [#allocation7], 0
          %416 = sst [smem:[%s415]] 0.0
        $region56: #{distill_forward.3} parent=51 // pred_fallthru
          _
        %v417 = vld [vmem:[%s301] sm:$0x3]
        %v420 = vunpack.c.l.s4 1935823168
        %v421 = vunpack.c.0.s8 %v420
        %v422 = vlaneseq
        %v423 = vshrl.u32 %v422, 7
        %v424 = vsub.s32 %v421, %v423
        %v425 = vrot.slane %v417, %v424
        %v427 = vunpack.c.l.s4 1935823168
        %v428 = vunpack.c.0.s8 %v427
        %v429 = vlaneseq
        %v430 = vshrl.u32 %v429, 7
        %v431 = vsub.s32 %v428, %v430
        %v432 = vrot.slane %v425, %v431
        %434 = vst [vmem:[#allocation2 + $0xc8] sm:$0x11] %v432
        %v435 = vld [vmem:[%s305] sm:$0x3]
        %v438 = vunpack.c.l.s4 1935823168
        %v439 = vunpack.c.0.s8 %v438
        %v440 = vlaneseq
        %v441 = vshrl.u32 %v440, 7
        %v442 = vsub.s32 %v439, %v441
        %v443 = vrot.slane %v435, %v442
        %v445 = vunpack.c.l.s4 1935823168
        %v446 = vunpack.c.0.s8 %v445
        %v447 = vlaneseq
        %v448 = vshrl.u32 %v447, 7
        %v449 = vsub.s32 %v446, %v448
        %v450 = vrot.slane %v443, %v449
        %452 = vst [vmem:[#allocation3 + $0xc8] sm:$0x11] %v450
        %v453 = vlaneseq
        %v454 = vand.u32 %v453, 127
        %v455 = vadd.s32 %v454, 128
        %vm456 = vcmp.lt.s32.totalorder %v454, 202
        %vm457 = vcmp.lt.s32.totalorder %v455, 202
        %v458 = vld [vmem:[#allocation2] sm:$0xff]
        %v459 = vld [vmem:[#allocation2 + $0x8] sm:$0xff]
        %v460 = vld [vmem:[#allocation2 + $0x10] sm:$0xff]
        %v461 = vld [vmem:[#allocation2 + $0x18] sm:$0xff]
        %v462 = vld [vmem:[#allocation2 + $0x20] sm:$0xff]
        %v463 = vld [vmem:[#allocation2 + $0x28] sm:$0xff]
        %v464 = vld [vmem:[#allocation2 + $0x30] sm:$0xff]
        %v465 = vld [vmem:[#allocation2 + $0x38] sm:$0xff]
        %v466 = vld [vmem:[#allocation2 + $0x40] sm:$0xff]
        %v467 = vld [vmem:[#allocation2 + $0x48] sm:$0xff]
        %v468 = vld [vmem:[#allocation2 + $0x50] sm:$0xff]
        %v469 = vld [vmem:[#allocation2 + $0x58] sm:$0xff]
        %v470 = vld [vmem:[#allocation2 + $0x60] sm:$0xff]
        %v471 = vld [vmem:[#allocation2 + $0x68] sm:$0xff]
        %v472 = vld [vmem:[#allocation2 + $0x70] sm:$0xff]
        %v473 = vld [vmem:[#allocation2 + $0x78] sm:$0xff]
        %v474 = vld [vmem:[#allocation2 + $0x80] sm:$0xff]
        %v475 = vld [vmem:[#allocation2 + $0x88] sm:$0xff]
        %v476 = vld [vmem:[#allocation2 + $0x90] sm:$0xff]
        %v477 = vld [vmem:[#allocation2 + $0x98] sm:$0xff]
        %v478 = vld [vmem:[#allocation2 + $0xa0] sm:$0xff]
        %v479 = vld [vmem:[#allocation2 + $0xa8] sm:$0xff]
        %v480 = vld [vmem:[#allocation2 + $0xb0] sm:$0xff]
        %v481 = vld [vmem:[#allocation2 + $0xb8] sm:$0xff]
        %v482 = vld [vmem:[#allocation2 + $0xc0] sm:$0xff]
        %v483 = vld [vmem:[#allocation2 + $0xc8] sm:$0xff]
        %v484 = vld [vmem:[%s4] sm:$0xff]
        %v485 = vld [vmem:[%s4 + $0x8] sm:$0xff]
        %v486 = vld [vmem:[%s4 + $0x10] sm:$0xff]
        %v487 = vld [vmem:[%s4 + $0x18] sm:$0xff]
        %v488 = vld [vmem:[%s4 + $0x20] sm:$0xff]
        %v489 = vld [vmem:[%s4 + $0x28] sm:$0xff]
        %v490 = vld [vmem:[%s4 + $0x30] sm:$0xff]
        %v491 = vld [vmem:[%s4 + $0x38] sm:$0xff]
        %v492 = vld [vmem:[%s4 + $0x40] sm:$0xff]
        %v493 = vld [vmem:[%s4 + $0x48] sm:$0xff]
        %v494 = vld [vmem:[%s4 + $0x50] sm:$0xff]
        %v495 = vld [vmem:[%s4 + $0x58] sm:$0xff]
        %v496 = vld [vmem:[%s4 + $0x60] sm:$0xff]
        %v497 = vld [vmem:[%s4 + $0x68] sm:$0xff]
        %v498 = vld [vmem:[%s4 + $0x70] sm:$0xff]
        %v499 = vld [vmem:[%s4 + $0x78] sm:$0xff]
        %v500 = vld [vmem:[%s4 + $0x80] sm:$0xff]
        %v501 = vld [vmem:[%s4 + $0x88] sm:$0xff]
        %v502 = vld [vmem:[%s4 + $0x90] sm:$0xff]
        %v503 = vld [vmem:[%s4 + $0x98] sm:$0xff]
        %v504 = vld [vmem:[%s4 + $0xa0] sm:$0xff]
        %v505 = vld [vmem:[%s4 + $0xa8] sm:$0xff]
        %v506 = vld [vmem:[%s4 + $0xb0] sm:$0xff]
        %v507 = vld [vmem:[%s4 + $0xb8] sm:$0xff]
        %v508 = vld [vmem:[%s4 + $0xc0] sm:$0xff]
        %v509 = vld [vmem:[%s4 + $0xc8] sm:$0xff]
        %v510 = vld [vmem:[%s4 + $0xd0] sm:$0xff]
        %v511 = vld [vmem:[%s4 + $0xd8] sm:$0xff]
        %v512 = vld [vmem:[%s4 + $0xe0] sm:$0xff]
        %v513 = vld [vmem:[%s4 + $0xe8] sm:$0xff]
        %v514 = vld [vmem:[%s4 + $0xf0] sm:$0xff]
        %v515 = vld [vmem:[%s4 + $0xf8] sm:$0xff]
        %v516 = vld [vmem:[%s5] sm:$0x3]
        %v543 = vunpack.c.l.b16 %v458
        %v544 = vunpack.c.h.b16 %v458
        %v545 = vunpack.c.l.b16 %v459
        %v546 = vunpack.c.h.b16 %v459
        %v547 = vunpack.c.l.b16 %v460
        %v548 = vunpack.c.h.b16 %v460
        %v549 = vunpack.c.l.b16 %v461
        %v550 = vunpack.c.h.b16 %v461
        %v551 = vunpack.c.l.b16 %v462
        %v552 = vunpack.c.h.b16 %v462
        %v553 = vunpack.c.l.b16 %v463
        %v554 = vunpack.c.h.b16 %v463
        %v555 = vunpack.c.l.b16 %v464
        %v556 = vunpack.c.h.b16 %v464
        %v557 = vunpack.c.l.b16 %v465
        %v558 = vunpack.c.h.b16 %v465
        %v559 = vunpack.c.l.b16 %v466
        %v560 = vunpack.c.h.b16 %v466
        %v561 = vunpack.c.l.b16 %v467
        %v562 = vunpack.c.h.b16 %v467
        %v563 = vunpack.c.l.b16 %v468
        %v564 = vunpack.c.h.b16 %v468
        %v565 = vunpack.c.l.b16 %v469
        %v566 = vunpack.c.h.b16 %v469
        %v567 = vunpack.c.l.b16 %v470
        %v568 = vunpack.c.h.b16 %v470
        %v569 = vunpack.c.l.b16 %v471
        %v570 = vunpack.c.h.b16 %v471
        %v571 = vunpack.c.l.b16 %v472
        %v572 = vunpack.c.h.b16 %v472
        %v573 = vunpack.c.l.b16 %v473
        %v574 = vunpack.c.h.b16 %v473
        %v575 = vunpack.c.l.b16 %v474
        %v576 = vunpack.c.h.b16 %v474
        %v577 = vunpack.c.l.b16 %v475
        %v578 = vunpack.c.h.b16 %v475
        %v579 = vunpack.c.l.b16 %v476
        %v580 = vunpack.c.h.b16 %v476
        %v581 = vunpack.c.l.b16 %v477
        %v582 = vunpack.c.h.b16 %v477
        %v583 = vunpack.c.l.b16 %v478
        %v584 = vunpack.c.h.b16 %v478
        %v585 = vunpack.c.l.b16 %v479
        %v586 = vunpack.c.h.b16 %v479
        %v587 = vunpack.c.l.b16 %v480
        %v588 = vunpack.c.h.b16 %v480
        %v589 = vunpack.c.l.b16 %v481
        %v590 = vunpack.c.h.b16 %v481
        %v591 = vunpack.c.l.b16 %v482
        %v592 = vunpack.c.h.b16 %v482
        %v593 = vunpack.c.l.b16 %v483
        %v594 = vunpack.c.h.b16 %v483
        %v595 = vpack.c.b16 %v545, %v543
        %v596 = vpack.c.b16 %v546, %v544
        %v597 = vpack.c.b16 %v549, %v547
        %v598 = vpack.c.b16 %v550, %v548
        %v599 = vpack.c.b16 %v553, %v551
        %v600 = vpack.c.b16 %v554, %v552
        %v601 = vpack.c.b16 %v557, %v555
        %v602 = vpack.c.b16 %v558, %v556
        %v603 = vpack.c.b16 %v561, %v559
        %v604 = vpack.c.b16 %v562, %v560
        %v605 = vpack.c.b16 %v565, %v563
        %v606 = vpack.c.b16 %v566, %v564
        %v607 = vpack.c.b16 %v569, %v567
        %v608 = vpack.c.b16 %v570, %v568
        %v609 = vpack.c.b16 %v573, %v571
        %v610 = vpack.c.b16 %v574, %v572
        %v611 = vpack.c.b16 %v577, %v575
        %v612 = vpack.c.b16 %v578, %v576
        %v613 = vpack.c.b16 %v581, %v579
        %v614 = vpack.c.b16 %v582, %v580
        %v615 = vpack.c.b16 %v585, %v583
        %v616 = vpack.c.b16 %v586, %v584
        %v617 = vpack.c.b16 %v589, %v587
        %v618 = vpack.c.b16 %v590, %v588
        %v619 = vpack.c.b16 %v593, %v591
        %v620 = vpack.c.b16 %v594, %v592
        %647 = vmatprep.subr.bf16.mxu0 %v610
        %648 = vmatpush1.bf16.xpose.msra.mxu0 %v609
        %649 = vmatprep.subr.bf16.mxu0 %v608
        %650 = vmatpush1.bf16.xpose.msra.mxu0 %v607
        %651 = vmatprep.subr.bf16.mxu0 %v606
        %652 = vmatpush1.bf16.xpose.msra.mxu0 %v605
        %653 = vmatprep.subr.bf16.mxu0 %v604
        %654 = vmatpush1.bf16.xpose.msra.mxu0 %v603
        %655 = vmatprep.subr.bf16.mxu0 %v602
        %656 = vmatpush1.bf16.xpose.msra.mxu0 %v601
        %657 = vmatprep.subr.bf16.mxu0 %v600
        %658 = vmatpush1.bf16.xpose.msra.mxu0 %v599
        %659 = vmatprep.subr.bf16.mxu0 %v598
        %660 = vmatpush1.bf16.xpose.msra.mxu0 %v597
        %661 = vmatprep.subr.bf16.mxu0 %v596
        %662 = vmatpush1.bf16.xpose.msra.mxu0 %v595
        %663 = vmatprep.subr.bf16.mxu0 0
        %664 = vmatpush2.bf16.xpose.msra.mxu0 0
        %665 = vmatprep.subr.bf16.mxu0 0
        %666 = vmatpush2.bf16.xpose.msra.mxu0 0
        %667 = vmatprep.subr.bf16.mxu0 0
        %668 = vmatpush2.bf16.xpose.msra.mxu0 0
        %669 = vmatprep.subr.bf16.mxu0 %v620
        %670 = vmatpush2.bf16.xpose.msra.mxu0 %v619
        %671 = vmatprep.subr.bf16.mxu0 %v618
        %672 = vmatpush2.bf16.xpose.msra.mxu0 %v617
        %673 = vmatprep.subr.bf16.mxu0 %v616
        %674 = vmatpush2.bf16.xpose.msra.mxu0 %v615
        %675 = vmatprep.subr.bf16.mxu0 %v614
        %676 = vmatpush2.bf16.xpose.msra.mxu0 %v613
        %677 = vmatprep.subr.bf16.mxu0 %v612
        %678 = vmatpush2.bf16.xpose.msra.mxu0 %v611
        %679 = vmatprep.mubr.bf16.mxu0 %v596
        %680 = vmatmul.mubr.bf16.gmra.mxu0 %v595
        %v681 = vpop.f32.mrf.mxu0
        %v682 = vadd.f32 0.0, %v681
        %v683 = vpop.f32.mrf.mxu0
        %v684 = vadd.f32 0.0, %v683
        %v685 = vpop.f32.mrf.mxu0
        %v686 = vadd.f32 0.0, %v685
        %v687 = vpop.f32.mrf.mxu0
        %v688 = vadd.f32 0.0, %v687
        %689 = vmatprep.mubr.bf16.mxu0 %v598
        %690 = vmatmul.mubr.bf16.gmra.mxu0 %v597
        %v691 = vpop.f32.mrf.mxu0
        %v692 = vadd.f32 0.0, %v691
        %v693 = vpop.f32.mrf.mxu0
        %v694 = vadd.f32 0.0, %v693
        %v695 = vpop.f32.mrf.mxu0
        %v696 = vadd.f32 0.0, %v695
        %v697 = vpop.f32.mrf.mxu0
        %v698 = vadd.f32 0.0, %v697
        %699 = vmatprep.mubr.bf16.mxu0 %v600
        %700 = vmatmul.mubr.bf16.gmra.mxu0 %v599
        %v701 = vpop.f32.mrf.mxu0
        %v702 = vadd.f32 0.0, %v701
        %v703 = vpop.f32.mrf.mxu0
        %v704 = vadd.f32 0.0, %v703
        %v705 = vpop.f32.mrf.mxu0
        %v706 = vadd.f32 0.0, %v705
        %v707 = vpop.f32.mrf.mxu0
        %v708 = vadd.f32 0.0, %v707
        %709 = vmatprep.mubr.bf16.mxu0 %v602
        %710 = vmatmul.mubr.bf16.gmra.mxu0 %v601
        %v711 = vpop.f32.mrf.mxu0
        %v712 = vadd.f32 0.0, %v711
        %v713 = vpop.f32.mrf.mxu0
        %v714 = vadd.f32 0.0, %v713
        %v715 = vpop.f32.mrf.mxu0
        %v716 = vadd.f32 0.0, %v715
        %v717 = vpop.f32.mrf.mxu0
        %v718 = vadd.f32 0.0, %v717
        %719 = vmatprep.mubr.bf16.mxu0 %v604
        %720 = vmatmul.mubr.bf16.gmra.mxu0 %v603
        %v721 = vpop.f32.mrf.mxu0
        %v722 = vadd.f32 0.0, %v721
        %v723 = vpop.f32.mrf.mxu0
        %v724 = vadd.f32 0.0, %v723
        %v725 = vpop.f32.mrf.mxu0
        %v726 = vadd.f32 0.0, %v725
        %v727 = vpop.f32.mrf.mxu0
        %v728 = vadd.f32 0.0, %v727
        %729 = vmatprep.mubr.bf16.mxu0 %v606
        %730 = vmatmul.mubr.bf16.gmra.mxu0 %v605
        %v731 = vpop.f32.mrf.mxu0
        %v732 = vadd.f32 0.0, %v731
        %v733 = vpop.f32.mrf.mxu0
        %v734 = vadd.f32 0.0, %v733
        %v735 = vpop.f32.mrf.mxu0
        %v736 = vadd.f32 0.0, %v735
        %v737 = vpop.f32.mrf.mxu0
        %v738 = vadd.f32 0.0, %v737
        %739 = vmatprep.mubr.bf16.mxu0 %v608
        %740 = vmatmul.mubr.bf16.gmra.mxu0 %v607
        %v741 = vpop.f32.mrf.mxu0
        %v742 = vadd.f32 0.0, %v741
        %v743 = vpop.f32.mrf.mxu0
        %v744 = vadd.f32 0.0, %v743
        %v745 = vpop.f32.mrf.mxu0
        %v746 = vadd.f32 0.0, %v745
        %v747 = vpop.f32.mrf.mxu0
        %v748 = vadd.f32 0.0, %v747
        %749 = vmatprep.mubr.bf16.mxu0 %v610
        %750 = vmatmul.mubr.bf16.gmra.mxu0 %v609
        %v751 = vpop.f32.mrf.mxu0
        %v752 = vadd.f32 0.0, %v751
        %v753 = vpop.f32.mrf.mxu0
        %v754 = vadd.f32 0.0, %v753
        %v755 = vpop.f32.mrf.mxu0
        %v756 = vadd.f32 0.0, %v755
        %v757 = vpop.f32.mrf.mxu0
        %v758 = vadd.f32 0.0, %v757
        %759 = vmatprep.mubr.bf16.mxu0 %v612
        %760 = vmatmul.mubr.bf16.gmra.mxu0 %v611
        %v761 = vpop.f32.mrf.mxu0
        %v762 = vadd.f32 0.0, %v761
        %v763 = vpop.f32.mrf.mxu0
        %v764 = vadd.f32 0.0, %v763
        %v765 = vpop.f32.mrf.mxu0
        %v766 = vadd.f32 0.0, %v765
        %v767 = vpop.f32.mrf.mxu0
        %v768 = vadd.f32 0.0, %v767
        %769 = vmatprep.mubr.bf16.mxu0 %v614
        %770 = vmatmul.mubr.bf16.gmra.mxu0 %v613
        %v771 = vpop.f32.mrf.mxu0
        %v772 = vadd.f32 0.0, %v771
        %v773 = vpop.f32.mrf.mxu0
        %v774 = vadd.f32 0.0, %v773
        %v775 = vpop.f32.mrf.mxu0
        %v776 = vadd.f32 0.0, %v775
        %v777 = vpop.f32.mrf.mxu0
        %v778 = vadd.f32 0.0, %v777
        %779 = vmatprep.mubr.bf16.mxu0 %v616
        %780 = vmatmul.mubr.bf16.gmra.mxu0 %v615
        %v781 = vpop.f32.mrf.mxu0
        %v782 = vadd.f32 0.0, %v781
        %v783 = vpop.f32.mrf.mxu0
        %v784 = vadd.f32 0.0, %v783
        %v785 = vpop.f32.mrf.mxu0
        %v786 = vadd.f32 0.0, %v785
        %v787 = vpop.f32.mrf.mxu0
        %v788 = vadd.f32 0.0, %v787
        %789 = vmatprep.mubr.bf16.mxu0 %v618
        %790 = vmatmul.mubr.bf16.gmra.mxu0 %v617
        %v791 = vpop.f32.mrf.mxu0
        %v792 = vadd.f32 0.0, %v791
        %v793 = vpop.f32.mrf.mxu0
        %v794 = vadd.f32 0.0, %v793
        %v795 = vpop.f32.mrf.mxu0
        %v796 = vadd.f32 0.0, %v795
        %v797 = vpop.f32.mrf.mxu0
        %v798 = vadd.f32 0.0, %v797
        %799 = vmatprep.mubr.bf16.mxu0 %v620
        %800 = vmatmul.mubr.bf16.gmra.mxu0 %v619
        %v801 = vpop.f32.mrf.mxu0
        %v802 = vadd.f32 0.0, %v801
        %v803 = vpop.f32.mrf.mxu0
        %v804 = vadd.f32 0.0, %v803
        %v805 = vpop.f32.mrf.mxu0
        %v806 = vadd.f32 0.0, %v805
        %v807 = vpop.f32.mrf.mxu0
        %v808 = vadd.f32 0.0, %v807
        %809 = vdwg.mxu0
        %v810 = vsel %vm456, %v682, -inf
        %v811 = vsel %vm457, %v684, -inf
        %v812 = vsel %vm456, %v686, -inf
        %v813 = vsel %vm457, %v688, -inf
        %v814 = vsel %vm456, %v692, -inf
        %v815 = vsel %vm457, %v694, -inf
        %v816 = vsel %vm456, %v696, -inf
        %v817 = vsel %vm457, %v698, -inf
        %v818 = vsel %vm456, %v702, -inf
        %v819 = vsel %vm457, %v704, -inf
        %v820 = vsel %vm456, %v706, -inf
        %v821 = vsel %vm457, %v708, -inf
        %v822 = vsel %vm456, %v712, -inf
        %v823 = vsel %vm457, %v714, -inf
        %v824 = vsel %vm456, %v716, -inf
        %v825 = vsel %vm457, %v718, -inf
        %v826 = vsel %vm456, %v722, -inf
        %v827 = vsel %vm457, %v724, -inf
        %v828 = vsel %vm456, %v726, -inf
        %v829 = vsel %vm457, %v728, -inf
        %v830 = vsel %vm456, %v732, -inf
        %v831 = vsel %vm457, %v734, -inf
        %v832 = vsel %vm456, %v736, -inf
        %v833 = vsel %vm457, %v738, -inf
        %v834 = vsel %vm456, %v742, -inf
        %v835 = vsel %vm457, %v744, -inf
        %v836 = vsel %vm456, %v746, -inf
        %v837 = vsel %vm457, %v748, -inf
        %v838 = vsel %vm456, %v752, -inf
        %v839 = vsel %vm457, %v754, -inf
        %v840 = vsel %vm456, %v756, -inf
        %v841 = vsel %vm457, %v758, -inf
        %v842 = vsel %vm456, %v762, -inf
        %v843 = vsel %vm457, %v764, -inf
        %v844 = vsel %vm456, %v766, -inf
        %v845 = vsel %vm457, %v768, -inf
        %v846 = vsel %vm456, %v772, -inf
        %v847 = vsel %vm457, %v774, -inf
        %v848 = vsel %vm456, %v776, -inf
        %v849 = vsel %vm457, %v778, -inf
        %v850 = vsel %vm456, %v782, -inf
        %v851 = vsel %vm457, %v784, -inf
        %v852 = vsel %vm456, %v786, -inf
        %v853 = vsel %vm457, %v788, -inf
        %v854 = vsel %vm456, %v792, -inf
        %v855 = vsel %vm457, %v794, -inf
        %v856 = vsel %vm456, %v796, -inf
        %v857 = vsel %vm457, %v798, -inf
        %v858 = vsel %vm456, %v802, -inf
        %v859 = vsel %vm457, %v804, -inf
        %v860 = vsel %vm456, %v806, -inf
        %v861 = vsel %vm457, %v808, -inf
        %vm862 = vcmask 654336
        %v863 = vsel %vm862, %v811, -inf
        %v864 = vmax.f32 %v810, %v863
        %865 = vmax.xlane.f32.xlu0 %v864
        %v866 = vpop.xlane.xlu0 %865
        %v867 = vsel %vm862, %v813, -inf
        %v868 = vmax.f32 %v812, %v867
        %869 = vmax.xlane.f32.xlu0 %v868
        %v870 = vpop.xlane.xlu0 %869
        %v871 = vsel %vm862, %v815, -inf
        %v872 = vmax.f32 %v814, %v871
        %873 = vmax.xlane.f32.xlu0 %v872
        %v874 = vpop.xlane.xlu0 %873
        %v875 = vsel %vm862, %v817, -inf
        %v876 = vmax.f32 %v816, %v875
        %877 = vmax.xlane.f32.xlu0 %v876
        %v878 = vpop.xlane.xlu0 %877
        %v879 = vsel %vm862, %v819, -inf
        %v880 = vmax.f32 %v818, %v879
        %881 = vmax.xlane.f32.xlu0 %v880
        %v882 = vpop.xlane.xlu0 %881
        %v883 = vsel %vm862, %v821, -inf
        %v884 = vmax.f32 %v820, %v883
        %885 = vmax.xlane.f32.xlu0 %v884
        %v886 = vpop.xlane.xlu0 %885
        %v887 = vsel %vm862, %v823, -inf
        %v888 = vmax.f32 %v822, %v887
        %889 = vmax.xlane.f32.xlu0 %v888
        %v890 = vpop.xlane.xlu0 %889
        %v891 = vsel %vm862, %v825, -inf
        %v892 = vmax.f32 %v824, %v891
        %893 = vmax.xlane.f32.xlu0 %v892
        %v894 = vpop.xlane.xlu0 %893
        %v895 = vsel %vm862, %v827, -inf
        %v896 = vmax.f32 %v826, %v895
        %897 = vmax.xlane.f32.xlu0 %v896
        %v898 = vpop.xlane.xlu0 %897
        %v899 = vsel %vm862, %v829, -inf
        %v900 = vmax.f32 %v828, %v899
        %901 = vmax.xlane.f32.xlu0 %v900
        %v902 = vpop.xlane.xlu0 %901
        %v903 = vsel %vm862, %v831, -inf
        %v904 = vmax.f32 %v830, %v903
        %905 = vmax.xlane.f32.xlu0 %v904
        %v906 = vpop.xlane.xlu0 %905
        %v907 = vsel %vm862, %v833, -inf
        %v908 = vmax.f32 %v832, %v907
        %909 = vmax.xlane.f32.xlu0 %v908
        %v910 = vpop.xlane.xlu0 %909
        %v911 = vsel %vm862, %v835, -inf
        %v912 = vmax.f32 %v834, %v911
        %913 = vmax.xlane.f32.xlu0 %v912
        %v914 = vpop.xlane.xlu0 %913
        %v915 = vsel %vm862, %v837, -inf
        %v916 = vmax.f32 %v836, %v915
        %917 = vmax.xlane.f32.xlu0 %v916
        %v918 = vpop.xlane.xlu0 %917
        %v919 = vsel %vm862, %v839, -inf
        %v920 = vmax.f32 %v838, %v919
        %921 = vmax.xlane.f32.xlu0 %v920
        %v922 = vpop.xlane.xlu0 %921
        %v923 = vsel %vm862, %v841, -inf
        %v924 = vmax.f32 %v840, %v923
        %925 = vmax.xlane.f32.xlu0 %v924
        %v926 = vpop.xlane.xlu0 %925
        %v927 = vsel %vm862, %v843, -inf
        %v928 = vmax.f32 %v842, %v927
        %929 = vmax.xlane.f32.xlu0 %v928
        %v930 = vpop.xlane.xlu0 %929
        %v931 = vsel %vm862, %v845, -inf
        %v932 = vmax.f32 %v844, %v931
        %933 = vmax.xlane.f32.xlu0 %v932
        %v934 = vpop.xlane.xlu0 %933
        %v935 = vsel %vm862, %v847, -inf
        %v936 = vmax.f32 %v846, %v935
        %937 = vmax.xlane.f32.xlu0 %v936
        %v938 = vpop.xlane.xlu0 %937
        %v939 = vsel %vm862, %v849, -inf
        %v940 = vmax.f32 %v848, %v939
        %941 = vmax.xlane.f32.xlu0 %v940
        %v942 = vpop.xlane.xlu0 %941
        %v943 = vsel %vm862, %v851, -inf
        %v944 = vmax.f32 %v850, %v943
        %945 = vmax.xlane.f32.xlu0 %v944
        %v946 = vpop.xlane.xlu0 %945
        %v947 = vsel %vm862, %v853, -inf
        %v948 = vmax.f32 %v852, %v947
        %949 = vmax.xlane.f32.xlu0 %v948
        %v950 = vpop.xlane.xlu0 %949
        %v951 = vsel %vm862, %v855, -inf
        %v952 = vmax.f32 %v854, %v951
        %953 = vmax.xlane.f32.xlu0 %v952
        %v954 = vpop.xlane.xlu0 %953
        %v955 = vsel %vm862, %v857, -inf
        %v956 = vmax.f32 %v856, %v955
        %957 = vmax.xlane.f32.xlu0 %v956
        %v958 = vpop.xlane.xlu0 %957
        %v959 = vsel %vm862, %v859, -inf
        %v960 = vmax.f32 %v858, %v959
        %961 = vmax.xlane.f32.xlu0 %v960
        %v962 = vpop.xlane.xlu0 %961
        %v963 = vsel %vm862, %v861, -inf
        %v964 = vmax.f32 %v860, %v963
        %965 = vmax.xlane.f32.xlu0 %v964
        %v966 = vpop.xlane.xlu0 %965
        %v967 = vsub.f32 %v810, %v866
        %v968 = vsub.f32 %v811, %v866
        %v969 = vsub.f32 %v812, %v870
        %v970 = vsub.f32 %v813, %v870
        %v971 = vsub.f32 %v814, %v874
        %v972 = vsub.f32 %v815, %v874
        %v973 = vsub.f32 %v816, %v878
        %v974 = vsub.f32 %v817, %v878
        %v975 = vsub.f32 %v818, %v882
        %v976 = vsub.f32 %v819, %v882
        %v977 = vsub.f32 %v820, %v886
        %v978 = vsub.f32 %v821, %v886
        %v979 = vsub.f32 %v822, %v890
        %v980 = vsub.f32 %v823, %v890
        %v981 = vsub.f32 %v824, %v894
        %v982 = vsub.f32 %v825, %v894
        %v983 = vsub.f32 %v826, %v898
        %v984 = vsub.f32 %v827, %v898
        %v985 = vsub.f32 %v828, %v902
        %v986 = vsub.f32 %v829, %v902
        %v987 = vsub.f32 %v830, %v906
        %v988 = vsub.f32 %v831, %v906
        %v989 = vsub.f32 %v832, %v910
        %v990 = vsub.f32 %v833, %v910
        %v991 = vsub.f32 %v834, %v914
        %v992 = vsub.f32 %v835, %v914
        %v993 = vsub.f32 %v836, %v918
        %v994 = vsub.f32 %v837, %v918
        %v995 = vsub.f32 %v838, %v922
        %v996 = vsub.f32 %v839, %v922
        %v997 = vsub.f32 %v840, %v926
        %v998 = vsub.f32 %v841, %v926
        %v999 = vsub.f32 %v842, %v930
        %v1000 = vsub.f32 %v843, %v930
        %v1001 = vsub.f32 %v844, %v934
        %v1002 = vsub.f32 %v845, %v934
        %v1003 = vsub.f32 %v846, %v938
        %v1004 = vsub.f32 %v847, %v938
        %v1005 = vsub.f32 %v848, %v942
        %v1006 = vsub.f32 %v849, %v942
        %v1007 = vsub.f32 %v850, %v946
        %v1008 = vsub.f32 %v851, %v946
        %v1009 = vsub.f32 %v852, %v950
        %v1010 = vsub.f32 %v853, %v950
        %v1011 = vsub.f32 %v854, %v954
        %v1012 = vsub.f32 %v855, %v954
        %v1013 = vsub.f32 %v856, %v958
        %v1014 = vsub.f32 %v857, %v958
        %v1015 = vsub.f32 %v858, %v962
        %v1016 = vsub.f32 %v859, %v962
        %v1017 = vsub.f32 %v860, %v966
        %v1018 = vsub.f32 %v861, %v966
        %v1019 = vmul.f32 %v967, 1.442695
        %v1020 = vpow.pop %v1019
        %v1021 = vmul.f32 %v968, 1.442695
        %v1022 = vpow.pop %v1021
        %v1023 = vmul.f32 %v969, 1.442695
        %v1024 = vpow.pop %v1023
        %v1025 = vmul.f32 %v970, 1.442695
        %v1026 = vpow.pop %v1025
        %v1027 = vmul.f32 %v971, 1.442695
        %v1028 = vpow.pop %v1027
        %v1029 = vmul.f32 %v972, 1.442695
        %v1030 = vpow.pop %v1029
        %v1031 = vmul.f32 %v973, 1.442695
        %v1032 = vpow.pop %v1031
        %v1033 = vmul.f32 %v974, 1.442695
        %v1034 = vpow.pop %v1033
        %v1035 = vmul.f32 %v975, 1.442695
        %v1036 = vpow.pop %v1035
        %v1037 = vmul.f32 %v976, 1.442695
        %v1038 = vpow.pop %v1037
        %v1039 = vmul.f32 %v977, 1.442695
        %v1040 = vpow.pop %v1039
        %v1041 = vmul.f32 %v978, 1.442695
        %v1042 = vpow.pop %v1041
        %v1043 = vmul.f32 %v979, 1.442695
        %v1044 = vpow.pop %v1043
        %v1045 = vmul.f32 %v980, 1.442695
        %v1046 = vpow.pop %v1045
        %v1047 = vmul.f32 %v981, 1.442695
        %v1048 = vpow.pop %v1047
        %v1049 = vmul.f32 %v982, 1.442695
        %v1050 = vpow.pop %v1049
        %v1051 = vmul.f32 %v983, 1.442695
        %v1052 = vpow.pop %v1051
        %v1053 = vmul.f32 %v984, 1.442695
        %v1054 = vpow.pop %v1053
        %v1055 = vmul.f32 %v985, 1.442695
        %v1056 = vpow.pop %v1055
        %v1057 = vmul.f32 %v986, 1.442695
        %v1058 = vpow.pop %v1057
        %v1059 = vmul.f32 %v987, 1.442695
        %v1060 = vpow.pop %v1059
        %v1061 = vmul.f32 %v988, 1.442695
        %v1062 = vpow.pop %v1061
        %v1063 = vmul.f32 %v989, 1.442695
        %v1064 = vpow.pop %v1063
        %v1065 = vmul.f32 %v990, 1.442695
        %v1066 = vpow.pop %v1065
        %v1067 = vmul.f32 %v991, 1.442695
        %v1068 = vpow.pop %v1067
        %v1069 = vmul.f32 %v992, 1.442695
        %v1070 = vpow.pop %v1069
        %v1071 = vmul.f32 %v993, 1.442695
        %v1072 = vpow.pop %v1071
        %v1073 = vmul.f32 %v994, 1.442695
        %v1074 = vpow.pop %v1073
        %v1075 = vmul.f32 %v995, 1.442695
        %v1076 = vpow.pop %v1075
        %v1077 = vmul.f32 %v996, 1.442695
        %v1078 = vpow.pop %v1077
        %v1079 = vmul.f32 %v997, 1.442695
        %v1080 = vpow.pop %v1079
        %v1081 = vmul.f32 %v998, 1.442695
        %v1082 = vpow.pop %v1081
        %v1083 = vmul.f32 %v999, 1.442695
        %v1084 = vpow.pop %v1083
        %v1085 = vmul.f32 %v1000, 1.442695
        %v1086 = vpow.pop %v1085
        %v1087 = vmul.f32 %v1001, 1.442695
        %v1088 = vpow.pop %v1087
        %v1089 = vmul.f32 %v1002, 1.442695
        %v1090 = vpow.pop %v1089
        %v1091 = vmul.f32 %v1003, 1.442695
        %v1092 = vpow.pop %v1091
        %v1093 = vmul.f32 %v1004, 1.442695
        %v1094 = vpow.pop %v1093
        %v1095 = vmul.f32 %v1005, 1.442695
        %v1096 = vpow.pop %v1095
        %v1097 = vmul.f32 %v1006, 1.442695
        %v1098 = vpow.pop %v1097
        %v1099 = vmul.f32 %v1007, 1.442695
        %v1100 = vpow.pop %v1099
        %v1101 = vmul.f32 %v1008, 1.442695
        %v1102 = vpow.pop %v1101
        %v1103 = vmul.f32 %v1009, 1.442695
        %v1104 = vpow.pop %v1103
        %v1105 = vmul.f32 %v1010, 1.442695
        %v1106 = vpow.pop %v1105
        %v1107 = vmul.f32 %v1011, 1.442695
        %v1108 = vpow.pop %v1107
        %v1109 = vmul.f32 %v1012, 1.442695
        %v1110 = vpow.pop %v1109
        %v1111 = vmul.f32 %v1013, 1.442695
        %v1112 = vpow.pop %v1111
        %v1113 = vmul.f32 %v1014, 1.442695
        %v1114 = vpow.pop %v1113
        %v1115 = vmul.f32 %v1015, 1.442695
        %v1116 = vpow.pop %v1115
        %v1117 = vmul.f32 %v1016, 1.442695
        %v1118 = vpow.pop %v1117
        %v1119 = vmul.f32 %v1017, 1.442695
        %v1120 = vpow.pop %v1119
        %v1121 = vmul.f32 %v1018, 1.442695
        %v1122 = vpow.pop %v1121
        %v1123 = vsel %vm862, %v1022, 0.0
        %v1124 = vadd.f32 %v1020, %v1123
        %1125 = vadd.xlane.f32.xlu0 %v1124
        %v1126 = vpop.xlane.xlu0 %1125
        %v1127 = vsel %vm862, %v1026, 0.0
        %v1128 = vadd.f32 %v1024, %v1127
        %1129 = vadd.xlane.f32.xlu0 %v1128
        %v1130 = vpop.xlane.xlu0 %1129
        %v1131 = vsel %vm862, %v1030, 0.0
        %v1132 = vadd.f32 %v1028, %v1131
        %1133 = vadd.xlane.f32.xlu0 %v1132
        %v1134 = vpop.xlane.xlu0 %1133
        %v1135 = vsel %vm862, %v1034, 0.0
        %v1136 = vadd.f32 %v1032, %v1135
        %1137 = vadd.xlane.f32.xlu0 %v1136
        %v1138 = vpop.xlane.xlu0 %1137
        %v1139 = vsel %vm862, %v1038, 0.0
        %v1140 = vadd.f32 %v1036, %v1139
        %1141 = vadd.xlane.f32.xlu0 %v1140
        %v1142 = vpop.xlane.xlu0 %1141
        %v1143 = vsel %vm862, %v1042, 0.0
        %v1144 = vadd.f32 %v1040, %v1143
        %1145 = vadd.xlane.f32.xlu0 %v1144
        %v1146 = vpop.xlane.xlu0 %1145
        %v1147 = vsel %vm862, %v1046, 0.0
        %v1148 = vadd.f32 %v1044, %v1147
        %1149 = vadd.xlane.f32.xlu0 %v1148
        %v1150 = vpop.xlane.xlu0 %1149
        %v1151 = vsel %vm862, %v1050, 0.0
        %v1152 = vadd.f32 %v1048, %v1151
        %1153 = vadd.xlane.f32.xlu0 %v1152
        %v1154 = vpop.xlane.xlu0 %1153
        %v1155 = vsel %vm862, %v1054, 0.0
        %v1156 = vadd.f32 %v1052, %v1155
        %1157 = vadd.xlane.f32.xlu0 %v1156
        %v1158 = vpop.xlane.xlu0 %1157
        %v1159 = vsel %vm862, %v1058, 0.0
        %v1160 = vadd.f32 %v1056, %v1159
        %1161 = vadd.xlane.f32.xlu0 %v1160
        %v1162 = vpop.xlane.xlu0 %1161
        %v1163 = vsel %vm862, %v1062, 0.0
        %v1164 = vadd.f32 %v1060, %v1163
        %1165 = vadd.xlane.f32.xlu0 %v1164
        %v1166 = vpop.xlane.xlu0 %1165
        %v1167 = vsel %vm862, %v1066, 0.0
        %v1168 = vadd.f32 %v1064, %v1167
        %1169 = vadd.xlane.f32.xlu0 %v1168
        %v1170 = vpop.xlane.xlu0 %1169
        %v1171 = vsel %vm862, %v1070, 0.0
        %v1172 = vadd.f32 %v1068, %v1171
        %1173 = vadd.xlane.f32.xlu0 %v1172
        %v1174 = vpop.xlane.xlu0 %1173
        %v1175 = vsel %vm862, %v1074, 0.0
        %v1176 = vadd.f32 %v1072, %v1175
        %1177 = vadd.xlane.f32.xlu0 %v1176
        %v1178 = vpop.xlane.xlu0 %1177
        %v1179 = vsel %vm862, %v1078, 0.0
        %v1180 = vadd.f32 %v1076, %v1179
        %1181 = vadd.xlane.f32.xlu0 %v1180
        %v1182 = vpop.xlane.xlu0 %1181
        %v1183 = vsel %vm862, %v1082, 0.0
        %v1184 = vadd.f32 %v1080, %v1183
        %1185 = vadd.xlane.f32.xlu0 %v1184
        %v1186 = vpop.xlane.xlu0 %1185
        %v1187 = vsel %vm862, %v1086, 0.0
        %v1188 = vadd.f32 %v1084, %v1187
        %1189 = vadd.xlane.f32.xlu0 %v1188
        %v1190 = vpop.xlane.xlu0 %1189
        %v1191 = vsel %vm862, %v1090, 0.0
        %v1192 = vadd.f32 %v1088, %v1191
        %1193 = vadd.xlane.f32.xlu0 %v1192
        %v1194 = vpop.xlane.xlu0 %1193
        %v1195 = vsel %vm862, %v1094, 0.0
        %v1196 = vadd.f32 %v1092, %v1195
        %1197 = vadd.xlane.f32.xlu0 %v1196
        %v1198 = vpop.xlane.xlu0 %1197
        %v1199 = vsel %vm862, %v1098, 0.0
        %v1200 = vadd.f32 %v1096, %v1199
        %1201 = vadd.xlane.f32.xlu0 %v1200
        %v1202 = vpop.xlane.xlu0 %1201
        %v1203 = vsel %vm862, %v1102, 0.0
        %v1204 = vadd.f32 %v1100, %v1203
        %1205 = vadd.xlane.f32.xlu0 %v1204
        %v1206 = vpop.xlane.xlu0 %1205
        %v1207 = vsel %vm862, %v1106, 0.0
        %v1208 = vadd.f32 %v1104, %v1207
        %1209 = vadd.xlane.f32.xlu0 %v1208
        %v1210 = vpop.xlane.xlu0 %1209
        %v1211 = vsel %vm862, %v1110, 0.0
        %v1212 = vadd.f32 %v1108, %v1211
        %1213 = vadd.xlane.f32.xlu0 %v1212
        %v1214 = vpop.xlane.xlu0 %1213
        %v1215 = vsel %vm862, %v1114, 0.0
        %v1216 = vadd.f32 %v1112, %v1215
        %1217 = vadd.xlane.f32.xlu0 %v1216
        %v1218 = vpop.xlane.xlu0 %1217
        %v1219 = vsel %vm862, %v1118, 0.0
        %v1220 = vadd.f32 %v1116, %v1219
        %1221 = vadd.xlane.f32.xlu0 %v1220
        %v1222 = vpop.xlane.xlu0 %1221
        %v1223 = vsel %vm862, %v1122, 0.0
        %v1224 = vadd.f32 %v1120, %v1223
        %1225 = vadd.xlane.f32.xlu0 %v1224
        %v1226 = vpop.xlane.xlu0 %1225
        %v1227 = vrcp.pop %v1126
        %v1228 = vmul.f32 %v1020, %v1227
        %v1229 = vmul.f32 %v1022, %v1227
        %v1230 = vrcp.pop %v1130
        %v1231 = vmul.f32 %v1024, %v1230
        %v1232 = vmul.f32 %v1026, %v1230
        %v1233 = vrcp.pop %v1134
        %v1234 = vmul.f32 %v1028, %v1233
        %v1235 = vmul.f32 %v1030, %v1233
        %v1236 = vrcp.pop %v1138
        %v1237 = vmul.f32 %v1032, %v1236
        %v1238 = vmul.f32 %v1034, %v1236
        %v1239 = vrcp.pop %v1142
        %v1240 = vmul.f32 %v1036, %v1239
        %v1241 = vmul.f32 %v1038, %v1239
        %v1242 = vrcp.pop %v1146
        %v1243 = vmul.f32 %v1040, %v1242
        %v1244 = vmul.f32 %v1042, %v1242
        %v1245 = vrcp.pop %v1150
        %v1246 = vmul.f32 %v1044, %v1245
        %v1247 = vmul.f32 %v1046, %v1245
        %v1248 = vrcp.pop %v1154
        %v1249 = vmul.f32 %v1048, %v1248
        %v1250 = vmul.f32 %v1050, %v1248
        %v1251 = vrcp.pop %v1158
        %v1252 = vmul.f32 %v1052, %v1251
        %v1253 = vmul.f32 %v1054, %v1251
        %v1254 = vrcp.pop %v1162
        %v1255 = vmul.f32 %v1056, %v1254
        %v1256 = vmul.f32 %v1058, %v1254
        %v1257 = vrcp.pop %v1166
        %v1258 = vmul.f32 %v1060, %v1257
        %v1259 = vmul.f32 %v1062, %v1257
        %v1260 = vrcp.pop %v1170
        %v1261 = vmul.f32 %v1064, %v1260
        %v1262 = vmul.f32 %v1066, %v1260
        %v1263 = vrcp.pop %v1174
        %v1264 = vmul.f32 %v1068, %v1263
        %v1265 = vmul.f32 %v1070, %v1263
        %v1266 = vrcp.pop %v1178
        %v1267 = vmul.f32 %v1072, %v1266
        %v1268 = vmul.f32 %v1074, %v1266
        %v1269 = vrcp.pop %v1182
        %v1270 = vmul.f32 %v1076, %v1269
        %v1271 = vmul.f32 %v1078, %v1269
        %v1272 = vrcp.pop %v1186
        %v1273 = vmul.f32 %v1080, %v1272
        %v1274 = vmul.f32 %v1082, %v1272
        %v1275 = vrcp.pop %v1190
        %v1276 = vmul.f32 %v1084, %v1275
        %v1277 = vmul.f32 %v1086, %v1275
        %v1278 = vrcp.pop %v1194
        %v1279 = vmul.f32 %v1088, %v1278
        %v1280 = vmul.f32 %v1090, %v1278
        %v1281 = vrcp.pop %v1198
        %v1282 = vmul.f32 %v1092, %v1281
        %v1283 = vmul.f32 %v1094, %v1281
        %v1284 = vrcp.pop %v1202
        %v1285 = vmul.f32 %v1096, %v1284
        %v1286 = vmul.f32 %v1098, %v1284
        %v1287 = vrcp.pop %v1206
        %v1288 = vmul.f32 %v1100, %v1287
        %v1289 = vmul.f32 %v1102, %v1287
        %v1290 = vrcp.pop %v1210
        %v1291 = vmul.f32 %v1104, %v1290
        %v1292 = vmul.f32 %v1106, %v1290
        %v1293 = vrcp.pop %v1214
        %v1294 = vmul.f32 %v1108, %v1293
        %v1295 = vmul.f32 %v1110, %v1293
        %v1296 = vrcp.pop %v1218
        %v1297 = vmul.f32 %v1112, %v1296
        %v1298 = vmul.f32 %v1114, %v1296
        %v1299 = vrcp.pop %v1222
        %v1300 = vmul.f32 %v1116, %v1299
        %v1301 = vmul.f32 %v1118, %v1299
        %v1302 = vrcp.pop %v1226
        %v1303 = vmul.f32 %v1120, %v1302
        %v1304 = vmul.f32 %v1122, %v1302
        %v1337 = vunpack.c.l.b16 %v484
        %v1338 = vunpack.c.h.b16 %v484
        %v1339 = vunpack.c.l.b16 %v485
        %v1340 = vunpack.c.h.b16 %v485
        %v1341 = vunpack.c.l.b16 %v486
        %v1342 = vunpack.c.h.b16 %v486
        %v1343 = vunpack.c.l.b16 %v487
        %v1344 = vunpack.c.h.b16 %v487
        %v1345 = vunpack.c.l.b16 %v488
        %v1346 = vunpack.c.h.b16 %v488
        %v1347 = vunpack.c.l.b16 %v489
        %v1348 = vunpack.c.h.b16 %v489
        %v1349 = vunpack.c.l.b16 %v490
        %v1350 = vunpack.c.h.b16 %v490
        %v1351 = vunpack.c.l.b16 %v491
        %v1352 = vunpack.c.h.b16 %v491
        %v1353 = vunpack.c.l.b16 %v492
        %v1354 = vunpack.c.h.b16 %v492
        %v1355 = vunpack.c.l.b16 %v493
        %v1356 = vunpack.c.h.b16 %v493
        %v1357 = vunpack.c.l.b16 %v494
        %v1358 = vunpack.c.h.b16 %v494
        %v1359 = vunpack.c.l.b16 %v495
        %v1360 = vunpack.c.h.b16 %v495
        %v1361 = vunpack.c.l.b16 %v496
        %v1362 = vunpack.c.h.b16 %v496
        %v1363 = vunpack.c.l.b16 %v497
        %v1364 = vunpack.c.h.b16 %v497
        %v1365 = vunpack.c.l.b16 %v498
        %v1366 = vunpack.c.h.b16 %v498
        %v1367 = vunpack.c.l.b16 %v499
        %v1368 = vunpack.c.h.b16 %v499
        %v1369 = vunpack.c.l.b16 %v500
        %v1370 = vunpack.c.h.b16 %v500
        %v1371 = vunpack.c.l.b16 %v501
        %v1372 = vunpack.c.h.b16 %v501
        %v1373 = vunpack.c.l.b16 %v502
        %v1374 = vunpack.c.h.b16 %v502
        %v1375 = vunpack.c.l.b16 %v503
        %v1376 = vunpack.c.h.b16 %v503
        %v1377 = vunpack.c.l.b16 %v504
        %v1378 = vunpack.c.h.b16 %v504
        %v1379 = vunpack.c.l.b16 %v505
        %v1380 = vunpack.c.h.b16 %v505
        %v1381 = vunpack.c.l.b16 %v506
        %v1382 = vunpack.c.h.b16 %v506
        %v1383 = vunpack.c.l.b16 %v507
        %v1384 = vunpack.c.h.b16 %v507
        %v1385 = vunpack.c.l.b16 %v508
        %v1386 = vunpack.c.h.b16 %v508
        %v1387 = vunpack.c.l.b16 %v509
        %v1388 = vunpack.c.h.b16 %v509
        %v1389 = vunpack.c.l.b16 %v510
        %v1390 = vunpack.c.h.b16 %v510
        %v1391 = vunpack.c.l.b16 %v511
        %v1392 = vunpack.c.h.b16 %v511
        %v1393 = vunpack.c.l.b16 %v512
        %v1394 = vunpack.c.h.b16 %v512
        %v1395 = vunpack.c.l.b16 %v513
        %v1396 = vunpack.c.h.b16 %v513
        %v1397 = vunpack.c.l.b16 %v514
        %v1398 = vunpack.c.h.b16 %v514
        %v1399 = vunpack.c.l.b16 %v515
        %v1400 = vunpack.c.h.b16 %v515
        %v1401 = vpack.c.b16 %v1339, %v1337
        %v1402 = vpack.c.b16 %v1340, %v1338
        %v1403 = vpack.c.b16 %v1343, %v1341
        %v1404 = vpack.c.b16 %v1344, %v1342
        %v1405 = vpack.c.b16 %v1347, %v1345
        %v1406 = vpack.c.b16 %v1348, %v1346
        %v1407 = vpack.c.b16 %v1351, %v1349
        %v1408 = vpack.c.b16 %v1352, %v1350
        %v1409 = vpack.c.b16 %v1355, %v1353
        %v1410 = vpack.c.b16 %v1356, %v1354
        %v1411 = vpack.c.b16 %v1359, %v1357
        %v1412 = vpack.c.b16 %v1360, %v1358
        %v1413 = vpack.c.b16 %v1363, %v1361
        %v1414 = vpack.c.b16 %v1364, %v1362
        %v1415 = vpack.c.b16 %v1367, %v1365
        %v1416 = vpack.c.b16 %v1368, %v1366
        %v1417 = vpack.c.b16 %v1371, %v1369
        %v1418 = vpack.c.b16 %v1372, %v1370
        %v1419 = vpack.c.b16 %v1375, %v1373
        %v1420 = vpack.c.b16 %v1376, %v1374
        %v1421 = vpack.c.b16 %v1379, %v1377
        %v1422 = vpack.c.b16 %v1380, %v1378
        %v1423 = vpack.c.b16 %v1383, %v1381
        %v1424 = vpack.c.b16 %v1384, %v1382
        %v1425 = vpack.c.b16 %v1387, %v1385
        %v1426 = vpack.c.b16 %v1388, %v1386
        %v1427 = vpack.c.b16 %v1391, %v1389
        %v1428 = vpack.c.b16 %v1392, %v1390
        %v1429 = vpack.c.b16 %v1395, %v1393
        %v1430 = vpack.c.b16 %v1396, %v1394
        %v1431 = vpack.c.b16 %v1399, %v1397
        %v1432 = vpack.c.b16 %v1400, %v1398
        %1465 = vmatprep.subr.bf16.mxu0 %v1416
        %1466 = vmatpush1.bf16.msra.mxu0 %v1415
        %1467 = vmatprep.subr.bf16.mxu0 %v1414
        %1468 = vmatpush1.bf16.msra.mxu0 %v1413
        %1469 = vmatprep.subr.bf16.mxu0 %v1412
        %1470 = vmatpush1.bf16.msra.mxu0 %v1411
        %1471 = vmatprep.subr.bf16.mxu0 %v1410
        %1472 = vmatpush1.bf16.msra.mxu0 %v1409
        %1473 = vmatprep.subr.bf16.mxu0 %v1408
        %1474 = vmatpush1.bf16.msra.mxu0 %v1407
        %1475 = vmatprep.subr.bf16.mxu0 %v1406
        %1476 = vmatpush1.bf16.msra.mxu0 %v1405
        %1477 = vmatprep.subr.bf16.mxu0 %v1404
        %1478 = vmatpush1.bf16.msra.mxu0 %v1403
        %1479 = vmatprep.subr.bf16.mxu0 %v1402
        %1480 = vmatpush1.bf16.msra.mxu0 %v1401
        %1481 = vmatprep.subr.bf16.mxu0 %v1432
        %1482 = vmatpush2.bf16.msra.mxu0 %v1431
        %1483 = vmatprep.subr.bf16.mxu0 %v1430
        %1484 = vmatpush2.bf16.msra.mxu0 %v1429
        %1485 = vmatprep.subr.bf16.mxu0 %v1428
        %1486 = vmatpush2.bf16.msra.mxu0 %v1427
        %1487 = vmatprep.subr.bf16.mxu0 %v1426
        %1488 = vmatpush2.bf16.msra.mxu0 %v1425
        %1489 = vmatprep.subr.bf16.mxu0 %v1424
        %1490 = vmatpush2.bf16.msra.mxu0 %v1423
        %1491 = vmatprep.subr.bf16.mxu0 %v1422
        %1492 = vmatpush2.bf16.msra.mxu0 %v1421
        %1493 = vmatprep.subr.bf16.mxu0 %v1420
        %1494 = vmatpush2.bf16.msra.mxu0 %v1419
        %1495 = vmatprep.subr.bf16.mxu0 %v1418
        %1496 = vmatpush2.bf16.msra.mxu0 %v1417
        %1497 = vmatprep.mubr.bf16.mxu0 %v596
        %1498 = vmatmul.mubr.bf16.gmra.mxu0 %v595
        %v1499 = vpop.f32.mrf.mxu0
        %v1500 = vadd.f32 0.0, %v1499
        %v1501 = vpop.f32.mrf.mxu0
        %v1502 = vadd.f32 0.0, %v1501
        %v1503 = vpop.f32.mrf.mxu0
        %v1504 = vadd.f32 0.0, %v1503
        %v1505 = vpop.f32.mrf.mxu0
        %v1506 = vadd.f32 0.0, %v1505
        %1507 = vmatprep.mubr.bf16.mxu0 %v598
        %1508 = vmatmul.mubr.bf16.gmra.mxu0 %v597
        %v1509 = vpop.f32.mrf.mxu0
        %v1510 = vadd.f32 0.0, %v1509
        %v1511 = vpop.f32.mrf.mxu0
        %v1512 = vadd.f32 0.0, %v1511
        %v1513 = vpop.f32.mrf.mxu0
        %v1514 = vadd.f32 0.0, %v1513
        %v1515 = vpop.f32.mrf.mxu0
        %v1516 = vadd.f32 0.0, %v1515
        %1517 = vmatprep.mubr.bf16.mxu0 %v600
        %1518 = vmatmul.mubr.bf16.gmra.mxu0 %v599
        %v1519 = vpop.f32.mrf.mxu0
        %v1520 = vadd.f32 0.0, %v1519
        %v1521 = vpop.f32.mrf.mxu0
        %v1522 = vadd.f32 0.0, %v1521
        %v1523 = vpop.f32.mrf.mxu0
        %v1524 = vadd.f32 0.0, %v1523
        %v1525 = vpop.f32.mrf.mxu0
        %v1526 = vadd.f32 0.0, %v1525
        %1527 = vmatprep.mubr.bf16.mxu0 %v602
        %1528 = vmatmul.mubr.bf16.gmra.mxu0 %v601
        %v1529 = vpop.f32.mrf.mxu0
        %v1530 = vadd.f32 0.0, %v1529
        %v1531 = vpop.f32.mrf.mxu0
        %v1532 = vadd.f32 0.0, %v1531
        %v1533 = vpop.f32.mrf.mxu0
        %v1534 = vadd.f32 0.0, %v1533
        %v1535 = vpop.f32.mrf.mxu0
        %v1536 = vadd.f32 0.0, %v1535
        %1537 = vmatprep.mubr.bf16.mxu0 %v604
        %1538 = vmatmul.mubr.bf16.gmra.mxu0 %v603
        %v1539 = vpop.f32.mrf.mxu0
        %v1540 = vadd.f32 0.0, %v1539
        %v1541 = vpop.f32.mrf.mxu0
        %v1542 = vadd.f32 0.0, %v1541
        %v1543 = vpop.f32.mrf.mxu0
        %v1544 = vadd.f32 0.0, %v1543
        %v1545 = vpop.f32.mrf.mxu0
        %v1546 = vadd.f32 0.0, %v1545
        %1547 = vmatprep.mubr.bf16.mxu0 %v606
        %1548 = vmatmul.mubr.bf16.gmra.mxu0 %v605
        %v1549 = vpop.f32.mrf.mxu0
        %v1550 = vadd.f32 0.0, %v1549
        %v1551 = vpop.f32.mrf.mxu0
        %v1552 = vadd.f32 0.0, %v1551
        %v1553 = vpop.f32.mrf.mxu0
        %v1554 = vadd.f32 0.0, %v1553
        %v1555 = vpop.f32.mrf.mxu0
        %v1556 = vadd.f32 0.0, %v1555
        %1557 = vmatprep.mubr.bf16.mxu0 %v608
        %1558 = vmatmul.mubr.bf16.gmra.mxu0 %v607
        %v1559 = vpop.f32.mrf.mxu0
        %v1560 = vadd.f32 0.0, %v1559
        %v1561 = vpop.f32.mrf.mxu0
        %v1562 = vadd.f32 0.0, %v1561
        %v1563 = vpop.f32.mrf.mxu0
        %v1564 = vadd.f32 0.0, %v1563
        %v1565 = vpop.f32.mrf.mxu0
        %v1566 = vadd.f32 0.0, %v1565
        %1567 = vmatprep.mubr.bf16.mxu0 %v610
        %1568 = vmatmul.mubr.bf16.gmra.mxu0 %v609
        %v1569 = vpop.f32.mrf.mxu0
        %v1570 = vadd.f32 0.0, %v1569
        %v1571 = vpop.f32.mrf.mxu0
        %v1572 = vadd.f32 0.0, %v1571
        %v1573 = vpop.f32.mrf.mxu0
        %v1574 = vadd.f32 0.0, %v1573
        %v1575 = vpop.f32.mrf.mxu0
        %v1576 = vadd.f32 0.0, %v1575
        %1577 = vmatprep.mubr.bf16.mxu0 %v612
        %1578 = vmatmul.mubr.bf16.gmra.mxu0 %v611
        %v1579 = vpop.f32.mrf.mxu0
        %v1580 = vadd.f32 0.0, %v1579
        %v1581 = vpop.f32.mrf.mxu0
        %v1582 = vadd.f32 0.0, %v1581
        %v1583 = vpop.f32.mrf.mxu0
        %v1584 = vadd.f32 0.0, %v1583
        %v1585 = vpop.f32.mrf.mxu0
        %v1586 = vadd.f32 0.0, %v1585
        %1587 = vmatprep.mubr.bf16.mxu0 %v614
        %1588 = vmatmul.mubr.bf16.gmra.mxu0 %v613
        %v1589 = vpop.f32.mrf.mxu0
        %v1590 = vadd.f32 0.0, %v1589
        %v1591 = vpop.f32.mrf.mxu0
        %v1592 = vadd.f32 0.0, %v1591
        %v1593 = vpop.f32.mrf.mxu0
        %v1594 = vadd.f32 0.0, %v1593
        %v1595 = vpop.f32.mrf.mxu0
        %v1596 = vadd.f32 0.0, %v1595
        %1597 = vmatprep.mubr.bf16.mxu0 %v616
        %1598 = vmatmul.mubr.bf16.gmra.mxu0 %v615
        %v1599 = vpop.f32.mrf.mxu0
        %v1600 = vadd.f32 0.0, %v1599
        %v1601 = vpop.f32.mrf.mxu0
        %v1602 = vadd.f32 0.0, %v1601
        %v1603 = vpop.f32.mrf.mxu0
        %v1604 = vadd.f32 0.0, %v1603
        %v1605 = vpop.f32.mrf.mxu0
        %v1606 = vadd.f32 0.0, %v1605
        %1607 = vmatprep.mubr.bf16.mxu0 %v618
        %1608 = vmatmul.mubr.bf16.gmra.mxu0 %v617
        %v1609 = vpop.f32.mrf.mxu0
        %v1610 = vadd.f32 0.0, %v1609
        %v1611 = vpop.f32.mrf.mxu0
        %v1612 = vadd.f32 0.0, %v1611
        %v1613 = vpop.f32.mrf.mxu0
        %v1614 = vadd.f32 0.0, %v1613
        %v1615 = vpop.f32.mrf.mxu0
        %v1616 = vadd.f32 0.0, %v1615
        %1617 = vmatprep.mubr.bf16.mxu0 %v620
        %1618 = vmatmul.mubr.bf16.gmra.mxu0 %v619
        %v1619 = vpop.f32.mrf.mxu0
        %v1620 = vadd.f32 0.0, %v1619
        %v1621 = vpop.f32.mrf.mxu0
        %v1622 = vadd.f32 0.0, %v1621
        %v1623 = vpop.f32.mrf.mxu0
        %v1624 = vadd.f32 0.0, %v1623
        %v1625 = vpop.f32.mrf.mxu0
        %v1626 = vadd.f32 0.0, %v1625
        %1627 = vdwg.mxu0
        %v1628 = vpack.c.bf16 %v1504, %v1500
        %v1629 = vpack.c.bf16 %v1506, %v1502
        %v1630 = vpack.c.bf16 %v1514, %v1510
        %v1631 = vpack.c.bf16 %v1516, %v1512
        %v1632 = vpack.c.bf16 %v1524, %v1520
        %v1633 = vpack.c.bf16 %v1526, %v1522
        %v1634 = vpack.c.bf16 %v1534, %v1530
        %v1635 = vpack.c.bf16 %v1536, %v1532
        %v1636 = vpack.c.bf16 %v1544, %v1540
        %v1637 = vpack.c.bf16 %v1546, %v1542
        %v1638 = vpack.c.bf16 %v1554, %v1550
        %v1639 = vpack.c.bf16 %v1556, %v1552
        %v1640 = vpack.c.bf16 %v1564, %v1560
        %v1641 = vpack.c.bf16 %v1566, %v1562
        %v1642 = vpack.c.bf16 %v1574, %v1570
        %v1643 = vpack.c.bf16 %v1576, %v1572
        %v1644 = vpack.c.bf16 %v1584, %v1580
        %v1645 = vpack.c.bf16 %v1586, %v1582
        %v1646 = vpack.c.bf16 %v1594, %v1590
        %v1647 = vpack.c.bf16 %v1596, %v1592
        %v1648 = vpack.c.bf16 %v1604, %v1600
        %v1649 = vpack.c.bf16 %v1606, %v1602
        %v1650 = vpack.c.bf16 %v1614, %v1610
        %v1651 = vpack.c.bf16 %v1616, %v1612
        %v1652 = vpack.c.bf16 %v1624, %v1620
        %v1653 = vpack.c.bf16 %v1626, %v1622
        %v1654 = vpack.c.bf16 %v1231, %v1228
        %v1655 = vpack.c.bf16 %v1232, %v1229
        %v1656 = vpack.c.bf16 %v1237, %v1234
        %v1657 = vpack.c.bf16 %v1238, %v1235
        %v1658 = vpack.c.bf16 %v1243, %v1240
        %v1659 = vpack.c.bf16 %v1244, %v1241
        %v1660 = vpack.c.bf16 %v1249, %v1246
        %v1661 = vpack.c.bf16 %v1250, %v1247
        %v1662 = vpack.c.bf16 %v1255, %v1252
        %v1663 = vpack.c.bf16 %v1256, %v1253
        %v1664 = vpack.c.bf16 %v1261, %v1258
        %v1665 = vpack.c.bf16 %v1262, %v1259
        %v1666 = vpack.c.bf16 %v1267, %v1264
        %v1667 = vpack.c.bf16 %v1268, %v1265
        %v1668 = vpack.c.bf16 %v1273, %v1270
        %v1669 = vpack.c.bf16 %v1274, %v1271
        %v1670 = vpack.c.bf16 %v1279, %v1276
        %v1671 = vpack.c.bf16 %v1280, %v1277
        %v1672 = vpack.c.bf16 %v1285, %v1282
        %v1673 = vpack.c.bf16 %v1286, %v1283
        %v1674 = vpack.c.bf16 %v1291, %v1288
        %v1675 = vpack.c.bf16 %v1292, %v1289
        %v1676 = vpack.c.bf16 %v1297, %v1294
        %v1677 = vpack.c.bf16 %v1298, %v1295
        %v1678 = vpack.c.bf16 %v1303, %v1300
        %v1679 = vpack.c.bf16 %v1304, %v1301
        %v1681 = vlaneseq
        %v1682 = vshrl.u32 %v1681, 7
        %v1683 = vsub.s32 0, %v1682
        %v1684 = vrot.slane %v516, %v1683
        %v1685 = vlaneseq
        %v1686 = vshrl.u32 %v1685, 7
        %v1687 = vsub.s32 1, %v1686
        %v1688 = vrot.slane %v516, %v1687
        %v1692 = vsel %vm862, %v1655, 0
        %v1695 = vsel %vm862, %v1657, 0
        %v1698 = vsel %vm862, %v1659, 0
        %v1701 = vsel %vm862, %v1661, 0
        %v1704 = vsel %vm862, %v1663, 0
        %v1707 = vsel %vm862, %v1665, 0
        %v1710 = vsel %vm862, %v1667, 0
        %v1713 = vsel %vm862, %v1669, 0
        %v1716 = vsel %vm862, %v1671, 0
        %v1719 = vsel %vm862, %v1673, 0
        %v1722 = vsel %vm862, %v1675, 0
        %v1725 = vsel %vm862, %v1677, 0
        %v1728 = vsel %vm862, %v1679, 0
        %1730 = vmatprep.subr.bf16.mxu0 %v1643
        %1731 = vmatpush1.bf16.msra.mxu0 %v1642
        %1732 = vmatprep.subr.bf16.mxu0 %v1641
        %1733 = vmatpush1.bf16.msra.mxu0 %v1640
        %1734 = vmatprep.subr.bf16.mxu0 %v1639
        %1735 = vmatpush1.bf16.msra.mxu0 %v1638
        %1736 = vmatprep.subr.bf16.mxu0 %v1637
        %1737 = vmatpush1.bf16.msra.mxu0 %v1636
        %1738 = vmatprep.subr.bf16.mxu0 %v1635
        %1739 = vmatpush1.bf16.msra.mxu0 %v1634
        %1740 = vmatprep.subr.bf16.mxu0 %v1633
        %1741 = vmatpush1.bf16.msra.mxu0 %v1632
        %1742 = vmatprep.subr.bf16.mxu0 %v1631
        %1743 = vmatpush1.bf16.msra.mxu0 %v1630
        %1744 = vmatprep.subr.bf16.mxu0 %v1629
        %1745 = vmatpush1.bf16.msra.mxu0 %v1628
        %1746 = vmatprep.subr.bf16.mxu0 0
        %1747 = vmatpush2.bf16.msra.mxu0 0
        %1748 = vmatprep.subr.bf16.mxu0 0
        %1749 = vmatpush2.bf16.msra.mxu0 0
        %1750 = vmatprep.subr.bf16.mxu0 0
        %1751 = vmatpush2.bf16.msra.mxu0 0
        %1752 = vmatprep.subr.bf16.mxu0 %v1653
        %1753 = vmatpush2.bf16.msra.mxu0 %v1652
        %1754 = vmatprep.subr.bf16.mxu0 %v1651
        %1755 = vmatpush2.bf16.msra.mxu0 %v1650
        %1756 = vmatprep.subr.bf16.mxu0 %v1649
        %1757 = vmatpush2.bf16.msra.mxu0 %v1648
        %1758 = vmatprep.subr.bf16.mxu0 %v1647
        %1759 = vmatpush2.bf16.msra.mxu0 %v1646
        %1760 = vmatprep.subr.bf16.mxu0 %v1645
        %1761 = vmatpush2.bf16.msra.mxu0 %v1644
        %1762 = vmatprep.mubr.bf16.mxu0 %v1692
        %1763 = vmatmul.mubr.bf16.gmra.mxu0 %v1654
        %v1764 = vpop.f32.mrf.mxu0
        %v1765 = vadd.f32 %v1684, %v1764
        %v1766 = vpop.f32.mrf.mxu0
        %v1767 = vadd.f32 %v1688, %v1766
        %v1768 = vpop.f32.mrf.mxu0
        %v1769 = vadd.f32 %v1684, %v1768
        %v1770 = vpop.f32.mrf.mxu0
        %v1771 = vadd.f32 %v1688, %v1770
        %1772 = vmatprep.mubr.bf16.mxu0 %v1695
        %1773 = vmatmul.mubr.bf16.gmra.mxu0 %v1656
        %v1774 = vpop.f32.mrf.mxu0
        %v1775 = vadd.f32 %v1684, %v1774
        %v1776 = vpop.f32.mrf.mxu0
        %v1777 = vadd.f32 %v1688, %v1776
        %v1778 = vpop.f32.mrf.mxu0
        %v1779 = vadd.f32 %v1684, %v1778
        %v1780 = vpop.f32.mrf.mxu0
        %v1781 = vadd.f32 %v1688, %v1780
        %1782 = vmatprep.mubr.bf16.mxu0 %v1698
        %1783 = vmatmul.mubr.bf16.gmra.mxu0 %v1658
        %v1784 = vpop.f32.mrf.mxu0
        %v1785 = vadd.f32 %v1684, %v1784
        %v1786 = vpop.f32.mrf.mxu0
        %v1787 = vadd.f32 %v1688, %v1786
        %v1788 = vpop.f32.mrf.mxu0
        %v1789 = vadd.f32 %v1684, %v1788
        %v1790 = vpop.f32.mrf.mxu0
        %v1791 = vadd.f32 %v1688, %v1790
        %1792 = vmatprep.mubr.bf16.mxu0 %v1701
        %1793 = vmatmul.mubr.bf16.gmra.mxu0 %v1660
        %v1794 = vpop.f32.mrf.mxu0
        %v1795 = vadd.f32 %v1684, %v1794
        %v1796 = vpop.f32.mrf.mxu0
        %v1797 = vadd.f32 %v1688, %v1796
        %v1798 = vpop.f32.mrf.mxu0
        %v1799 = vadd.f32 %v1684, %v1798
        %v1800 = vpop.f32.mrf.mxu0
        %v1801 = vadd.f32 %v1688, %v1800
        %1802 = vmatprep.mubr.bf16.mxu0 %v1704
        %1803 = vmatmul.mubr.bf16.gmra.mxu0 %v1662
        %v1804 = vpop.f32.mrf.mxu0
        %v1805 = vadd.f32 %v1684, %v1804
        %v1806 = vpop.f32.mrf.mxu0
        %v1807 = vadd.f32 %v1688, %v1806
        %v1808 = vpop.f32.mrf.mxu0
        %v1809 = vadd.f32 %v1684, %v1808
        %v1810 = vpop.f32.mrf.mxu0
        %v1811 = vadd.f32 %v1688, %v1810
        %1812 = vmatprep.mubr.bf16.mxu0 %v1707
        %1813 = vmatmul.mubr.bf16.gmra.mxu0 %v1664
        %v1814 = vpop.f32.mrf.mxu0
        %v1815 = vadd.f32 %v1684, %v1814
        %v1816 = vpop.f32.mrf.mxu0
        %v1817 = vadd.f32 %v1688, %v1816
        %v1818 = vpop.f32.mrf.mxu0
        %v1819 = vadd.f32 %v1684, %v1818
        %v1820 = vpop.f32.mrf.mxu0
        %v1821 = vadd.f32 %v1688, %v1820
        %1822 = vmatprep.mubr.bf16.mxu0 %v1710
        %1823 = vmatmul.mubr.bf16.gmra.mxu0 %v1666
        %v1824 = vpop.f32.mrf.mxu0
        %v1825 = vadd.f32 %v1684, %v1824
        %v1826 = vpop.f32.mrf.mxu0
        %v1827 = vadd.f32 %v1688, %v1826
        %v1828 = vpop.f32.mrf.mxu0
        %v1829 = vadd.f32 %v1684, %v1828
        %v1830 = vpop.f32.mrf.mxu0
        %v1831 = vadd.f32 %v1688, %v1830
        %1832 = vmatprep.mubr.bf16.mxu0 %v1713
        %1833 = vmatmul.mubr.bf16.gmra.mxu0 %v1668
        %v1834 = vpop.f32.mrf.mxu0
        %v1835 = vadd.f32 %v1684, %v1834
        %v1836 = vpop.f32.mrf.mxu0
        %v1837 = vadd.f32 %v1688, %v1836
        %v1838 = vpop.f32.mrf.mxu0
        %v1839 = vadd.f32 %v1684, %v1838
        %v1840 = vpop.f32.mrf.mxu0
        %v1841 = vadd.f32 %v1688, %v1840
        %1842 = vmatprep.mubr.bf16.mxu0 %v1716
        %1843 = vmatmul.mubr.bf16.gmra.mxu0 %v1670
        %v1844 = vpop.f32.mrf.mxu0
        %v1845 = vadd.f32 %v1684, %v1844
        %v1846 = vpop.f32.mrf.mxu0
        %v1847 = vadd.f32 %v1688, %v1846
        %v1848 = vpop.f32.mrf.mxu0
        %v1849 = vadd.f32 %v1684, %v1848
        %v1850 = vpop.f32.mrf.mxu0
        %v1851 = vadd.f32 %v1688, %v1850
        %1852 = vmatprep.mubr.bf16.mxu0 %v1719
        %1853 = vmatmul.mubr.bf16.gmra.mxu0 %v1672
        %v1854 = vpop.f32.mrf.mxu0
        %v1855 = vadd.f32 %v1684, %v1854
        %v1856 = vpop.f32.mrf.mxu0
        %v1857 = vadd.f32 %v1688, %v1856
        %v1858 = vpop.f32.mrf.mxu0
        %v1859 = vadd.f32 %v1684, %v1858
        %v1860 = vpop.f32.mrf.mxu0
        %v1861 = vadd.f32 %v1688, %v1860
        %1862 = vmatprep.mubr.bf16.mxu0 %v1722
        %1863 = vmatmul.mubr.bf16.gmra.mxu0 %v1674
        %v1864 = vpop.f32.mrf.mxu0
        %v1865 = vadd.f32 %v1684, %v1864
        %v1866 = vpop.f32.mrf.mxu0
        %v1867 = vadd.f32 %v1688, %v1866
        %v1868 = vpop.f32.mrf.mxu0
        %v1869 = vadd.f32 %v1684, %v1868
        %v1870 = vpop.f32.mrf.mxu0
        %v1871 = vadd.f32 %v1688, %v1870
        %1872 = vmatprep.mubr.bf16.mxu0 %v1725
        %1873 = vmatmul.mubr.bf16.gmra.mxu0 %v1676
        %v1874 = vpop.f32.mrf.mxu0
        %v1875 = vadd.f32 %v1684, %v1874
        %v1876 = vpop.f32.mrf.mxu0
        %v1877 = vadd.f32 %v1688, %v1876
        %v1878 = vpop.f32.mrf.mxu0
        %v1879 = vadd.f32 %v1684, %v1878
        %v1880 = vpop.f32.mrf.mxu0
        %v1881 = vadd.f32 %v1688, %v1880
        %1882 = vmatprep.mubr.bf16.mxu0 %v1728
        %1883 = vmatmul.mubr.bf16.gmra.mxu0 %v1678
        %v1884 = vpop.f32.mrf.mxu0
        %v1885 = vadd.f32 %v1684, %v1884
        %v1886 = vpop.f32.mrf.mxu0
        %v1887 = vadd.f32 %v1688, %v1886
        %v1888 = vpop.f32.mrf.mxu0
        %v1889 = vadd.f32 %v1684, %v1888
        %v1890 = vpop.f32.mrf.mxu0
        %v1891 = vadd.f32 %v1688, %v1890
        %1892 = vdwg.mxu0
        %v1893 = vadd.f32 %v1765, %v1767
        %1894 = vadd.xlane.f32.xlu0 %v1893
        %v1895 = vpop.xlane.xlu0 %1894
        %v1896 = vadd.f32 %v1769, %v1771
        %1897 = vadd.xlane.f32.xlu0 %v1896
        %v1898 = vpop.xlane.xlu0 %1897
        %v1899 = vadd.f32 %v1775, %v1777
        %1900 = vadd.xlane.f32.xlu0 %v1899
        %v1901 = vpop.xlane.xlu0 %1900
        %v1902 = vadd.f32 %v1779, %v1781
        %1903 = vadd.xlane.f32.xlu0 %v1902
        %v1904 = vpop.xlane.xlu0 %1903
        %v1905 = vadd.f32 %v1785, %v1787
        %1906 = vadd.xlane.f32.xlu0 %v1905
        %v1907 = vpop.xlane.xlu0 %1906
        %v1908 = vadd.f32 %v1789, %v1791
        %1909 = vadd.xlane.f32.xlu0 %v1908
        %v1910 = vpop.xlane.xlu0 %1909
        %v1911 = vadd.f32 %v1795, %v1797
        %1912 = vadd.xlane.f32.xlu0 %v1911
        %v1913 = vpop.xlane.xlu0 %1912
        %v1914 = vadd.f32 %v1799, %v1801
        %1915 = vadd.xlane.f32.xlu0 %v1914
        %v1916 = vpop.xlane.xlu0 %1915
        %v1917 = vadd.f32 %v1805, %v1807
        %1918 = vadd.xlane.f32.xlu0 %v1917
        %v1919 = vpop.xlane.xlu0 %1918
        %v1920 = vadd.f32 %v1809, %v1811
        %1921 = vadd.xlane.f32.xlu0 %v1920
        %v1922 = vpop.xlane.xlu0 %1921
        %v1923 = vadd.f32 %v1815, %v1817
        %1924 = vadd.xlane.f32.xlu0 %v1923
        %v1925 = vpop.xlane.xlu0 %1924
        %v1926 = vadd.f32 %v1819, %v1821
        %1927 = vadd.xlane.f32.xlu0 %v1926
        %v1928 = vpop.xlane.xlu0 %1927
        %v1929 = vadd.f32 %v1825, %v1827
        %1930 = vadd.xlane.f32.xlu0 %v1929
        %v1931 = vpop.xlane.xlu0 %1930
        %v1932 = vadd.f32 %v1829, %v1831
        %1933 = vadd.xlane.f32.xlu0 %v1932
        %v1934 = vpop.xlane.xlu0 %1933
        %v1935 = vadd.f32 %v1835, %v1837
        %1936 = vadd.xlane.f32.xlu0 %v1935
        %v1937 = vpop.xlane.xlu0 %1936
        %v1938 = vadd.f32 %v1839, %v1841
        %1939 = vadd.xlane.f32.xlu0 %v1938
        %v1940 = vpop.xlane.xlu0 %1939
        %v1941 = vadd.f32 %v1845, %v1847
        %1942 = vadd.xlane.f32.xlu0 %v1941
        %v1943 = vpop.xlane.xlu0 %1942
        %v1944 = vadd.f32 %v1849, %v1851
        %1945 = vadd.xlane.f32.xlu0 %v1944
        %v1946 = vpop.xlane.xlu0 %1945
        %v1947 = vadd.f32 %v1855, %v1857
        %1948 = vadd.xlane.f32.xlu0 %v1947
        %v1949 = vpop.xlane.xlu0 %1948
        %v1950 = vadd.f32 %v1859, %v1861
        %1951 = vadd.xlane.f32.xlu0 %v1950
        %v1952 = vpop.xlane.xlu0 %1951
        %v1953 = vadd.f32 %v1865, %v1867
        %1954 = vadd.xlane.f32.xlu0 %v1953
        %v1955 = vpop.xlane.xlu0 %1954
        %v1956 = vadd.f32 %v1869, %v1871
        %1957 = vadd.xlane.f32.xlu0 %v1956
        %v1958 = vpop.xlane.xlu0 %1957
        %v1959 = vadd.f32 %v1875, %v1877
        %1960 = vadd.xlane.f32.xlu0 %v1959
        %v1961 = vpop.xlane.xlu0 %1960
        %v1962 = vadd.f32 %v1879, %v1881
        %1963 = vadd.xlane.f32.xlu0 %v1962
        %v1964 = vpop.xlane.xlu0 %1963
        %v1965 = vadd.f32 %v1885, %v1887
        %1966 = vadd.xlane.f32.xlu0 %v1965
        %v1967 = vpop.xlane.xlu0 %1966
        %v1968 = vadd.f32 %v1889, %v1891
        %1969 = vadd.xlane.f32.xlu0 %v1968
        %v1970 = vpop.xlane.xlu0 %1969
        %v1971 = vrcp.pop 256.0
        %v1972 = vmul.f32 %v1895, %v1971
        %v1973 = vmul.f32 %v1898, %v1971
        %v1974 = vmul.f32 %v1901, %v1971
        %v1975 = vmul.f32 %v1904, %v1971
        %v1976 = vmul.f32 %v1907, %v1971
        %v1977 = vmul.f32 %v1910, %v1971
        %v1978 = vmul.f32 %v1913, %v1971
        %v1979 = vmul.f32 %v1916, %v1971
        %v1980 = vmul.f32 %v1919, %v1971
        %v1981 = vmul.f32 %v1922, %v1971
        %v1982 = vmul.f32 %v1925, %v1971
        %v1983 = vmul.f32 %v1928, %v1971
        %v1984 = vmul.f32 %v1931, %v1971
        %v1985 = vmul.f32 %v1934, %v1971
        %v1986 = vmul.f32 %v1937, %v1971
        %v1987 = vmul.f32 %v1940, %v1971
        %v1988 = vmul.f32 %v1943, %v1971
        %v1989 = vmul.f32 %v1946, %v1971
        %v1990 = vmul.f32 %v1949, %v1971
        %v1991 = vmul.f32 %v1952, %v1971
        %v1992 = vmul.f32 %v1955, %v1971
        %v1993 = vmul.f32 %v1958, %v1971
        %v1994 = vmul.f32 %v1961, %v1971
        %v1995 = vmul.f32 %v1964, %v1971
        %v1996 = vmul.f32 %v1967, %v1971
        %v1997 = vmul.f32 %v1970, %v1971
        %v1998 = vsub.f32 %v1765, %v1972
        %v1999 = vsub.f32 %v1767, %v1972
        %v2000 = vsub.f32 %v1769, %v1973
        %v2001 = vsub.f32 %v1771, %v1973
        %v2002 = vsub.f32 %v1775, %v1974
        %v2003 = vsub.f32 %v1777, %v1974
        %v2004 = vsub.f32 %v1779, %v1975
        %v2005 = vsub.f32 %v1781, %v1975
        %v2006 = vsub.f32 %v1785, %v1976
        %v2007 = vsub.f32 %v1787, %v1976
        %v2008 = vsub.f32 %v1789, %v1977
        %v2009 = vsub.f32 %v1791, %v1977
        %v2010 = vsub.f32 %v1795, %v1978
        %v2011 = vsub.f32 %v1797, %v1978
        %v2012 = vsub.f32 %v1799, %v1979
        %v2013 = vsub.f32 %v1801, %v1979
        %v2014 = vsub.f32 %v1805, %v1980
        %v2015 = vsub.f32 %v1807, %v1980
        %v2016 = vsub.f32 %v1809, %v1981
        %v2017 = vsub.f32 %v1811, %v1981
        %v2018 = vsub.f32 %v1815, %v1982
        %v2019 = vsub.f32 %v1817, %v1982
        %v2020 = vsub.f32 %v1819, %v1983
        %v2021 = vsub.f32 %v1821, %v1983
        %v2022 = vsub.f32 %v1825, %v1984
        %v2023 = vsub.f32 %v1827, %v1984
        %v2024 = vsub.f32 %v1829, %v1985
        %v2025 = vsub.f32 %v1831, %v1985
        %v2026 = vsub.f32 %v1835, %v1986
        %v2027 = vsub.f32 %v1837, %v1986
        %v2028 = vsub.f32 %v1839, %v1987
        %v2029 = vsub.f32 %v1841, %v1987
        %v2030 = vsub.f32 %v1845, %v1988
        %v2031 = vsub.f32 %v1847, %v1988
        %v2032 = vsub.f32 %v1849, %v1989
        %v2033 = vsub.f32 %v1851, %v1989
        %v2034 = vsub.f32 %v1855, %v1990
        %v2035 = vsub.f32 %v1857, %v1990
        %v2036 = vsub.f32 %v1859, %v1991
        %v2037 = vsub.f32 %v1861, %v1991
        %v2038 = vsub.f32 %v1865, %v1992
        %v2039 = vsub.f32 %v1867, %v1992
        %v2040 = vsub.f32 %v1869, %v1993
        %v2041 = vsub.f32 %v1871, %v1993
        %v2042 = vsub.f32 %v1875, %v1994
        %v2043 = vsub.f32 %v1877, %v1994
        %v2044 = vsub.f32 %v1879, %v1995
        %v2045 = vsub.f32 %v1881, %v1995
        %v2046 = vsub.f32 %v1885, %v1996
        %v2047 = vsub.f32 %v1887, %v1996
        %v2048 = vsub.f32 %v1889, %v1997
        %v2049 = vsub.f32 %v1891, %v1997
        %v2050 = vmul.f32 %v1998, %v1998
        %v2051 = vmul.f32 %v1999, %v1999
        %v2052 = vmul.f32 %v2000, %v2000
        %v2053 = vmul.f32 %v2001, %v2001
        %v2054 = vmul.f32 %v2002, %v2002
        %v2055 = vmul.f32 %v2003, %v2003
        %v2056 = vmul.f32 %v2004, %v2004
        %v2057 = vmul.f32 %v2005, %v2005
        %v2058 = vmul.f32 %v2006, %v2006
        %v2059 = vmul.f32 %v2007, %v2007
        %v2060 = vmul.f32 %v2008, %v2008
        %v2061 = vmul.f32 %v2009, %v2009
        %v2062 = vmul.f32 %v2010, %v2010
        %v2063 = vmul.f32 %v2011, %v2011
        %v2064 = vmul.f32 %v2012, %v2012
        %v2065 = vmul.f32 %v2013, %v2013
        %v2066 = vmul.f32 %v2014, %v2014
        %v2067 = vmul.f32 %v2015, %v2015
        %v2068 = vmul.f32 %v2016, %v2016
        %v2069 = vmul.f32 %v2017, %v2017
        %v2070 = vmul.f32 %v2018, %v2018
        %v2071 = vmul.f32 %v2019, %v2019
        %v2072 = vmul.f32 %v2020, %v2020
        %v2073 = vmul.f32 %v2021, %v2021
        %v2074 = vmul.f32 %v2022, %v2022
        %v2075 = vmul.f32 %v2023, %v2023
        %v2076 = vmul.f32 %v2024, %v2024
        %v2077 = vmul.f32 %v2025, %v2025
        %v2078 = vmul.f32 %v2026, %v2026
        %v2079 = vmul.f32 %v2027, %v2027
        %v2080 = vmul.f32 %v2028, %v2028
        %v2081 = vmul.f32 %v2029, %v2029
        %v2082 = vmul.f32 %v2030, %v2030
        %v2083 = vmul.f32 %v2031, %v2031
        %v2084 = vmul.f32 %v2032, %v2032
        %v2085 = vmul.f32 %v2033, %v2033
        %v2086 = vmul.f32 %v2034, %v2034
        %v2087 = vmul.f32 %v2035, %v2035
        %v2088 = vmul.f32 %v2036, %v2036
        %v2089 = vmul.f32 %v2037, %v2037
        %v2090 = vmul.f32 %v2038, %v2038
        %v2091 = vmul.f32 %v2039, %v2039
        %v2092 = vmul.f32 %v2040, %v2040
        %v2093 = vmul.f32 %v2041, %v2041
        %v2094 = vmul.f32 %v2042, %v2042
        %v2095 = vmul.f32 %v2043, %v2043
        %v2096 = vmul.f32 %v2044, %v2044
        %v2097 = vmul.f32 %v2045, %v2045
        %v2098 = vmul.f32 %v2046, %v2046
        %v2099 = vmul.f32 %v2047, %v2047
        %v2100 = vmul.f32 %v2048, %v2048
        %v2101 = vmul.f32 %v2049, %v2049
        %v2102 = vadd.f32 %v2050, %v2051
        %2103 = vadd.xlane.f32.xlu0 %v2102
        %v2104 = vpop.xlane.xlu0 %2103
        %v2105 = vadd.f32 %v2052, %v2053
        %2106 = vadd.xlane.f32.xlu0 %v2105
        %v2107 = vpop.xlane.xlu0 %2106
        %v2108 = vadd.f32 %v2054, %v2055
        %2109 = vadd.xlane.f32.xlu0 %v2108
        %v2110 = vpop.xlane.xlu0 %2109
        %v2111 = vadd.f32 %v2056, %v2057
        %2112 = vadd.xlane.f32.xlu0 %v2111
        %v2113 = vpop.xlane.xlu0 %2112
        %v2114 = vadd.f32 %v2058, %v2059
        %2115 = vadd.xlane.f32.xlu0 %v2114
        %v2116 = vpop.xlane.xlu0 %2115
        %v2117 = vadd.f32 %v2060, %v2061
        %2118 = vadd.xlane.f32.xlu0 %v2117
        %v2119 = vpop.xlane.xlu0 %2118
        %v2120 = vadd.f32 %v2062, %v2063
        %2121 = vadd.xlane.f32.xlu0 %v2120
        %v2122 = vpop.xlane.xlu0 %2121
        %v2123 = vadd.f32 %v2064, %v2065
        %2124 = vadd.xlane.f32.xlu0 %v2123
        %v2125 = vpop.xlane.xlu0 %2124
        %v2126 = vadd.f32 %v2066, %v2067
        %2127 = vadd.xlane.f32.xlu0 %v2126
        %v2128 = vpop.xlane.xlu0 %2127
        %v2129 = vadd.f32 %v2068, %v2069
        %2130 = vadd.xlane.f32.xlu0 %v2129
        %v2131 = vpop.xlane.xlu0 %2130
        %v2132 = vadd.f32 %v2070, %v2071
        %2133 = vadd.xlane.f32.xlu0 %v2132
        %v2134 = vpop.xlane.xlu0 %2133
        %v2135 = vadd.f32 %v2072, %v2073
        %2136 = vadd.xlane.f32.xlu0 %v2135
        %v2137 = vpop.xlane.xlu0 %2136
        %v2138 = vadd.f32 %v2074, %v2075
        %2139 = vadd.xlane.f32.xlu0 %v2138
        %v2140 = vpop.xlane.xlu0 %2139
        %v2141 = vadd.f32 %v2076, %v2077
        %2142 = vadd.xlane.f32.xlu0 %v2141
        %v2143 = vpop.xlane.xlu0 %2142
        %v2144 = vadd.f32 %v2078, %v2079
        %2145 = vadd.xlane.f32.xlu0 %v2144
        %v2146 = vpop.xlane.xlu0 %2145
        %v2147 = vadd.f32 %v2080, %v2081
        %2148 = vadd.xlane.f32.xlu0 %v2147
        %v2149 = vpop.xlane.xlu0 %2148
        %v2150 = vadd.f32 %v2082, %v2083
        %2151 = vadd.xlane.f32.xlu0 %v2150
        %v2152 = vpop.xlane.xlu0 %2151
        %v2153 = vadd.f32 %v2084, %v2085
        %2154 = vadd.xlane.f32.xlu0 %v2153
        %v2155 = vpop.xlane.xlu0 %2154
        %v2156 = vadd.f32 %v2086, %v2087
        %2157 = vadd.xlane.f32.xlu0 %v2156
        %v2158 = vpop.xlane.xlu0 %2157
        %v2159 = vadd.f32 %v2088, %v2089
        %2160 = vadd.xlane.f32.xlu0 %v2159
        %v2161 = vpop.xlane.xlu0 %2160
        %v2162 = vadd.f32 %v2090, %v2091
        %2163 = vadd.xlane.f32.xlu0 %v2162
        %v2164 = vpop.xlane.xlu0 %2163
        %v2165 = vadd.f32 %v2092, %v2093
        %2166 = vadd.xlane.f32.xlu0 %v2165
        %v2167 = vpop.xlane.xlu0 %2166
        %v2168 = vadd.f32 %v2094, %v2095
        %2169 = vadd.xlane.f32.xlu0 %v2168
        %v2170 = vpop.xlane.xlu0 %2169
        %v2171 = vadd.f32 %v2096, %v2097
        %2172 = vadd.xlane.f32.xlu0 %v2171
        %v2173 = vpop.xlane.xlu0 %2172
        %v2174 = vadd.f32 %v2098, %v2099
        %2175 = vadd.xlane.f32.xlu0 %v2174
        %v2176 = vpop.xlane.xlu0 %2175
        %v2177 = vadd.f32 %v2100, %v2101
        %2178 = vadd.xlane.f32.xlu0 %v2177
        %v2179 = vpop.xlane.xlu0 %2178
        %v2180 = vmul.f32 %v2104, %v1971
        %v2181 = vmul.f32 %v2107, %v1971
        %v2182 = vmul.f32 %v2110, %v1971
        %v2183 = vmul.f32 %v2113, %v1971
        %v2184 = vmul.f32 %v2116, %v1971
        %v2185 = vmul.f32 %v2119, %v1971
        %v2186 = vmul.f32 %v2122, %v1971
        %v2187 = vmul.f32 %v2125, %v1971
        %v2188 = vmul.f32 %v2128, %v1971
        %v2189 = vmul.f32 %v2131, %v1971
        %v2190 = vmul.f32 %v2134, %v1971
        %v2191 = vmul.f32 %v2137, %v1971
        %v2192 = vmul.f32 %v2140, %v1971
        %v2193 = vmul.f32 %v2143, %v1971
        %v2194 = vmul.f32 %v2146, %v1971
        %v2195 = vmul.f32 %v2149, %v1971
        %v2196 = vmul.f32 %v2152, %v1971
        %v2197 = vmul.f32 %v2155, %v1971
        %v2198 = vmul.f32 %v2158, %v1971
        %v2199 = vmul.f32 %v2161, %v1971
        %v2200 = vmul.f32 %v2164, %v1971
        %v2201 = vmul.f32 %v2167, %v1971
        %v2202 = vmul.f32 %v2170, %v1971
        %v2203 = vmul.f32 %v2173, %v1971
        %v2204 = vmul.f32 %v2176, %v1971
        %v2205 = vmul.f32 %v2179, %v1971
        %v2206 = vadd.f32 %v2180, 1e-05
        %v2207 = vadd.f32 %v2181, 1e-05
        %v2208 = vadd.f32 %v2182, 1e-05
        %v2209 = vadd.f32 %v2183, 1e-05
        %v2210 = vadd.f32 %v2184, 1e-05
        %v2211 = vadd.f32 %v2185, 1e-05
        %v2212 = vadd.f32 %v2186, 1e-05
        %v2213 = vadd.f32 %v2187, 1e-05
        %v2214 = vadd.f32 %v2188, 1e-05
        %v2215 = vadd.f32 %v2189, 1e-05
        %v2216 = vadd.f32 %v2190, 1e-05
        %v2217 = vadd.f32 %v2191, 1e-05
        %v2218 = vadd.f32 %v2192, 1e-05
        %v2219 = vadd.f32 %v2193, 1e-05
        %v2220 = vadd.f32 %v2194, 1e-05
        %v2221 = vadd.f32 %v2195, 1e-05
        %v2222 = vadd.f32 %v2196, 1e-05
        %v2223 = vadd.f32 %v2197, 1e-05
        %v2224 = vadd.f32 %v2198, 1e-05
        %v2225 = vadd.f32 %v2199, 1e-05
        %v2226 = vadd.f32 %v2200, 1e-05
        %v2227 = vadd.f32 %v2201, 1e-05
        %v2228 = vadd.f32 %v2202, 1e-05
        %v2229 = vadd.f32 %v2203, 1e-05
        %v2230 = vadd.f32 %v2204, 1e-05
        %v2231 = vadd.f32 %v2205, 1e-05
        %v2232 = vrsqrt.pop %v2206
        %v2233 = vrsqrt.pop %v2207
        %v2234 = vrsqrt.pop %v2208
        %v2235 = vrsqrt.pop %v2209
        %v2236 = vrsqrt.pop %v2210
        %v2237 = vrsqrt.pop %v2211
        %v2238 = vrsqrt.pop %v2212
        %v2239 = vrsqrt.pop %v2213
        %v2240 = vrsqrt.pop %v2214
        %v2241 = vrsqrt.pop %v2215
        %v2242 = vrsqrt.pop %v2216
        %v2243 = vrsqrt.pop %v2217
        %v2244 = vrsqrt.pop %v2218
        %v2245 = vrsqrt.pop %v2219
        %v2246 = vrsqrt.pop %v2220
        %v2247 = vrsqrt.pop %v2221
        %v2248 = vrsqrt.pop %v2222
        %v2249 = vrsqrt.pop %v2223
        %v2250 = vrsqrt.pop %v2224
        %v2251 = vrsqrt.pop %v2225
        %v2252 = vrsqrt.pop %v2226
        %v2253 = vrsqrt.pop %v2227
        %v2254 = vrsqrt.pop %v2228
        %v2255 = vrsqrt.pop %v2229
        %v2256 = vrsqrt.pop %v2230
        %v2257 = vrsqrt.pop %v2231
        %v2258 = vmul.f32 %v1998, %v2232
        %v2259 = vmul.f32 %v1999, %v2232
        %v2260 = vmul.f32 %v2000, %v2233
        %v2261 = vmul.f32 %v2001, %v2233
        %v2262 = vmul.f32 %v2002, %v2234
        %v2263 = vmul.f32 %v2003, %v2234
        %v2264 = vmul.f32 %v2004, %v2235
        %v2265 = vmul.f32 %v2005, %v2235
        %v2266 = vmul.f32 %v2006, %v2236
        %v2267 = vmul.f32 %v2007, %v2236
        %v2268 = vmul.f32 %v2008, %v2237
        %v2269 = vmul.f32 %v2009, %v2237
        %v2270 = vmul.f32 %v2010, %v2238
        %v2271 = vmul.f32 %v2011, %v2238
        %v2272 = vmul.f32 %v2012, %v2239
        %v2273 = vmul.f32 %v2013, %v2239
        %v2274 = vmul.f32 %v2014, %v2240
        %v2275 = vmul.f32 %v2015, %v2240
        %v2276 = vmul.f32 %v2016, %v2241
        %v2277 = vmul.f32 %v2017, %v2241
        %v2278 = vmul.f32 %v2018, %v2242
        %v2279 = vmul.f32 %v2019, %v2242
        %v2280 = vmul.f32 %v2020, %v2243
        %v2281 = vmul.f32 %v2021, %v2243
        %v2282 = vmul.f32 %v2022, %v2244
        %v2283 = vmul.f32 %v2023, %v2244
        %v2284 = vmul.f32 %v2024, %v2245
        %v2285 = vmul.f32 %v2025, %v2245
        %v2286 = vmul.f32 %v2026, %v2246
        %v2287 = vmul.f32 %v2027, %v2246
        %v2288 = vmul.f32 %v2028, %v2247
        %v2289 = vmul.f32 %v2029, %v2247
        %v2290 = vmul.f32 %v2030, %v2248
        %v2291 = vmul.f32 %v2031, %v2248
        %v2292 = vmul.f32 %v2032, %v2249
        %v2293 = vmul.f32 %v2033, %v2249
        %v2294 = vmul.f32 %v2034, %v2250
        %v2295 = vmul.f32 %v2035, %v2250
        %v2296 = vmul.f32 %v2036, %v2251
        %v2297 = vmul.f32 %v2037, %v2251
        %v2298 = vmul.f32 %v2038, %v2252
        %v2299 = vmul.f32 %v2039, %v2252
        %v2300 = vmul.f32 %v2040, %v2253
        %v2301 = vmul.f32 %v2041, %v2253
        %v2302 = vmul.f32 %v2042, %v2254
        %v2303 = vmul.f32 %v2043, %v2254
        %v2304 = vmul.f32 %v2044, %v2255
        %v2305 = vmul.f32 %v2045, %v2255
        %v2306 = vmul.f32 %v2046, %v2256
        %v2307 = vmul.f32 %v2047, %v2256
        %v2308 = vmul.f32 %v2048, %v2257
        %v2309 = vmul.f32 %v2049, %v2257
        %v2310 = vld [vmem:[#allocation3] sm:$0xff]
        %v2311 = vld [vmem:[#allocation3 + $0x8] sm:$0xff]
        %v2312 = vld [vmem:[#allocation3 + $0x10] sm:$0xff]
        %v2313 = vld [vmem:[#allocation3 + $0x18] sm:$0xff]
        %v2314 = vld [vmem:[#allocation3 + $0x20] sm:$0xff]
        %v2315 = vld [vmem:[#allocation3 + $0x28] sm:$0xff]
        %v2316 = vld [vmem:[#allocation3 + $0x30] sm:$0xff]
        %v2317 = vld [vmem:[#allocation3 + $0x38] sm:$0xff]
        %v2318 = vld [vmem:[#allocation3 + $0x40] sm:$0xff]
        %v2319 = vld [vmem:[#allocation3 + $0x48] sm:$0xff]
        %v2320 = vld [vmem:[#allocation3 + $0x50] sm:$0xff]
        %v2321 = vld [vmem:[#allocation3 + $0x58] sm:$0xff]
        %v2322 = vld [vmem:[#allocation3 + $0x60] sm:$0xff]
        %v2323 = vld [vmem:[#allocation3 + $0x68] sm:$0xff]
        %v2324 = vld [vmem:[#allocation3 + $0x70] sm:$0xff]
        %v2325 = vld [vmem:[#allocation3 + $0x78] sm:$0xff]
        %v2326 = vld [vmem:[#allocation3 + $0x80] sm:$0xff]
        %v2327 = vld [vmem:[#allocation3 + $0x88] sm:$0xff]
        %v2328 = vld [vmem:[#allocation3 + $0x90] sm:$0xff]
        %v2329 = vld [vmem:[#allocation3 + $0x98] sm:$0xff]
        %v2330 = vld [vmem:[#allocation3 + $0xa0] sm:$0xff]
        %v2331 = vld [vmem:[#allocation3 + $0xa8] sm:$0xff]
        %v2332 = vld [vmem:[#allocation3 + $0xb0] sm:$0xff]
        %v2333 = vld [vmem:[#allocation3 + $0xb8] sm:$0xff]
        %v2334 = vld [vmem:[#allocation3 + $0xc0] sm:$0xff]
        %v2335 = vld [vmem:[#allocation3 + $0xc8] sm:$0xff]
        %v2362 = vunpack.c.l.b16 %v2310
        %v2363 = vunpack.c.h.b16 %v2310
        %v2364 = vunpack.c.l.b16 %v2311
        %v2365 = vunpack.c.h.b16 %v2311
        %v2366 = vunpack.c.l.b16 %v2312
        %v2367 = vunpack.c.h.b16 %v2312
        %v2368 = vunpack.c.l.b16 %v2313
        %v2369 = vunpack.c.h.b16 %v2313
        %v2370 = vunpack.c.l.b16 %v2314
        %v2371 = vunpack.c.h.b16 %v2314
        %v2372 = vunpack.c.l.b16 %v2315
        %v2373 = vunpack.c.h.b16 %v2315
        %v2374 = vunpack.c.l.b16 %v2316
        %v2375 = vunpack.c.h.b16 %v2316
        %v2376 = vunpack.c.l.b16 %v2317
        %v2377 = vunpack.c.h.b16 %v2317
        %v2378 = vunpack.c.l.b16 %v2318
        %v2379 = vunpack.c.h.b16 %v2318
        %v2380 = vunpack.c.l.b16 %v2319
        %v2381 = vunpack.c.h.b16 %v2319
        %v2382 = vunpack.c.l.b16 %v2320
        %v2383 = vunpack.c.h.b16 %v2320
        %v2384 = vunpack.c.l.b16 %v2321
        %v2385 = vunpack.c.h.b16 %v2321
        %v2386 = vunpack.c.l.b16 %v2322
        %v2387 = vunpack.c.h.b16 %v2322
        %v2388 = vunpack.c.l.b16 %v2323
        %v2389 = vunpack.c.h.b16 %v2323
        %v2390 = vunpack.c.l.b16 %v2324
        %v2391 = vunpack.c.h.b16 %v2324
        %v2392 = vunpack.c.l.b16 %v2325
        %v2393 = vunpack.c.h.b16 %v2325
        %v2394 = vunpack.c.l.b16 %v2326
        %v2395 = vunpack.c.h.b16 %v2326
        %v2396 = vunpack.c.l.b16 %v2327
        %v2397 = vunpack.c.h.b16 %v2327
        %v2398 = vunpack.c.l.b16 %v2328
        %v2399 = vunpack.c.h.b16 %v2328
        %v2400 = vunpack.c.l.b16 %v2329
        %v2401 = vunpack.c.h.b16 %v2329
        %v2402 = vunpack.c.l.b16 %v2330
        %v2403 = vunpack.c.h.b16 %v2330
        %v2404 = vunpack.c.l.b16 %v2331
        %v2405 = vunpack.c.h.b16 %v2331
        %v2406 = vunpack.c.l.b16 %v2332
        %v2407 = vunpack.c.h.b16 %v2332
        %v2408 = vunpack.c.l.b16 %v2333
        %v2409 = vunpack.c.h.b16 %v2333
        %v2410 = vunpack.c.l.b16 %v2334
        %v2411 = vunpack.c.h.b16 %v2334
        %v2412 = vunpack.c.l.b16 %v2335
        %v2413 = vunpack.c.h.b16 %v2335
        %v2414 = vpack.c.b16 %v2364, %v2362
        %v2415 = vpack.c.b16 %v2365, %v2363
        %v2416 = vpack.c.b16 %v2368, %v2366
        %v2417 = vpack.c.b16 %v2369, %v2367
        %v2418 = vpack.c.b16 %v2372, %v2370
        %v2419 = vpack.c.b16 %v2373, %v2371
        %v2420 = vpack.c.b16 %v2376, %v2374
        %v2421 = vpack.c.b16 %v2377, %v2375
        %v2422 = vpack.c.b16 %v2380, %v2378
        %v2423 = vpack.c.b16 %v2381, %v2379
        %v2424 = vpack.c.b16 %v2384, %v2382
        %v2425 = vpack.c.b16 %v2385, %v2383
        %v2426 = vpack.c.b16 %v2388, %v2386
        %v2427 = vpack.c.b16 %v2389, %v2387
        %v2428 = vpack.c.b16 %v2392, %v2390
        %v2429 = vpack.c.b16 %v2393, %v2391
        %v2430 = vpack.c.b16 %v2396, %v2394
        %v2431 = vpack.c.b16 %v2397, %v2395
        %v2432 = vpack.c.b16 %v2400, %v2398
        %v2433 = vpack.c.b16 %v2401, %v2399
        %v2434 = vpack.c.b16 %v2404, %v2402
        %v2435 = vpack.c.b16 %v2405, %v2403
        %v2436 = vpack.c.b16 %v2408, %v2406
        %v2437 = vpack.c.b16 %v2409, %v2407
        %v2438 = vpack.c.b16 %v2412, %v2410
        %v2439 = vpack.c.b16 %v2413, %v2411
        %2466 = vmatprep.subr.bf16.mxu0 %v2429
        %2467 = vmatpush1.bf16.xpose.msra.mxu0 %v2428
        %2468 = vmatprep.subr.bf16.mxu0 %v2427
        %2469 = vmatpush1.bf16.xpose.msra.mxu0 %v2426
        %2470 = vmatprep.subr.bf16.mxu0 %v2425
        %2471 = vmatpush1.bf16.xpose.msra.mxu0 %v2424
        %2472 = vmatprep.subr.bf16.mxu0 %v2423
        %2473 = vmatpush1.bf16.xpose.msra.mxu0 %v2422
        %2474 = vmatprep.subr.bf16.mxu0 %v2421
        %2475 = vmatpush1.bf16.xpose.msra.mxu0 %v2420
        %2476 = vmatprep.subr.bf16.mxu0 %v2419
        %2477 = vmatpush1.bf16.xpose.msra.mxu0 %v2418
        %2478 = vmatprep.subr.bf16.mxu0 %v2417
        %2479 = vmatpush1.bf16.xpose.msra.mxu0 %v2416
        %2480 = vmatprep.subr.bf16.mxu0 %v2415
        %2481 = vmatpush1.bf16.xpose.msra.mxu0 %v2414
        %2482 = vmatprep.subr.bf16.mxu0 0
        %2483 = vmatpush2.bf16.xpose.msra.mxu0 0
        %2484 = vmatprep.subr.bf16.mxu0 0
        %2485 = vmatpush2.bf16.xpose.msra.mxu0 0
        %2486 = vmatprep.subr.bf16.mxu0 0
        %2487 = vmatpush2.bf16.xpose.msra.mxu0 0
        %2488 = vmatprep.subr.bf16.mxu0 %v2439
        %2489 = vmatpush2.bf16.xpose.msra.mxu0 %v2438
        %2490 = vmatprep.subr.bf16.mxu0 %v2437
        %2491 = vmatpush2.bf16.xpose.msra.mxu0 %v2436
        %2492 = vmatprep.subr.bf16.mxu0 %v2435
        %2493 = vmatpush2.bf16.xpose.msra.mxu0 %v2434
        %2494 = vmatprep.subr.bf16.mxu0 %v2433
        %2495 = vmatpush2.bf16.xpose.msra.mxu0 %v2432
        %2496 = vmatprep.subr.bf16.mxu0 %v2431
        %2497 = vmatpush2.bf16.xpose.msra.mxu0 %v2430
        %2498 = vmatprep.mubr.bf16.mxu0 %v2415
        %2499 = vmatmul.mubr.bf16.gmra.mxu0 %v2414
        %v2500 = vpop.f32.mrf.mxu0
        %v2501 = vadd.f32 0.0, %v2500
        %v2502 = vpop.f32.mrf.mxu0
        %v2503 = vadd.f32 0.0, %v2502
        %v2504 = vpop.f32.mrf.mxu0
        %v2505 = vadd.f32 0.0, %v2504
        %v2506 = vpop.f32.mrf.mxu0
        %v2507 = vadd.f32 0.0, %v2506
        %2508 = vmatprep.mubr.bf16.mxu0 %v2417
        %2509 = vmatmul.mubr.bf16.gmra.mxu0 %v2416
        %v2510 = vpop.f32.mrf.mxu0
        %v2511 = vadd.f32 0.0, %v2510
        %v2512 = vpop.f32.mrf.mxu0
        %v2513 = vadd.f32 0.0, %v2512
        %v2514 = vpop.f32.mrf.mxu0
        %v2515 = vadd.f32 0.0, %v2514
        %v2516 = vpop.f32.mrf.mxu0
        %v2517 = vadd.f32 0.0, %v2516
        %2518 = vmatprep.mubr.bf16.mxu0 %v2419
        %2519 = vmatmul.mubr.bf16.gmra.mxu0 %v2418
        %v2520 = vpop.f32.mrf.mxu0
        %v2521 = vadd.f32 0.0, %v2520
        %v2522 = vpop.f32.mrf.mxu0
        %v2523 = vadd.f32 0.0, %v2522
        %v2524 = vpop.f32.mrf.mxu0
        %v2525 = vadd.f32 0.0, %v2524
        %v2526 = vpop.f32.mrf.mxu0
        %v2527 = vadd.f32 0.0, %v2526
        %2528 = vmatprep.mubr.bf16.mxu0 %v2421
        %2529 = vmatmul.mubr.bf16.gmra.mxu0 %v2420
        %v2530 = vpop.f32.mrf.mxu0
        %v2531 = vadd.f32 0.0, %v2530
        %v2532 = vpop.f32.mrf.mxu0
        %v2533 = vadd.f32 0.0, %v2532
        %v2534 = vpop.f32.mrf.mxu0
        %v2535 = vadd.f32 0.0, %v2534
        %v2536 = vpop.f32.mrf.mxu0
        %v2537 = vadd.f32 0.0, %v2536
        %2538 = vmatprep.mubr.bf16.mxu0 %v2423
        %2539 = vmatmul.mubr.bf16.gmra.mxu0 %v2422
        %v2540 = vpop.f32.mrf.mxu0
        %v2541 = vadd.f32 0.0, %v2540
        %v2542 = vpop.f32.mrf.mxu0
        %v2543 = vadd.f32 0.0, %v2542
        %v2544 = vpop.f32.mrf.mxu0
        %v2545 = vadd.f32 0.0, %v2544
        %v2546 = vpop.f32.mrf.mxu0
        %v2547 = vadd.f32 0.0, %v2546
        %2548 = vmatprep.mubr.bf16.mxu0 %v2425
        %2549 = vmatmul.mubr.bf16.gmra.mxu0 %v2424
        %v2550 = vpop.f32.mrf.mxu0
        %v2551 = vadd.f32 0.0, %v2550
        %v2552 = vpop.f32.mrf.mxu0
        %v2553 = vadd.f32 0.0, %v2552
        %v2554 = vpop.f32.mrf.mxu0
        %v2555 = vadd.f32 0.0, %v2554
        %v2556 = vpop.f32.mrf.mxu0
        %v2557 = vadd.f32 0.0, %v2556
        %2558 = vmatprep.mubr.bf16.mxu0 %v2427
        %2559 = vmatmul.mubr.bf16.gmra.mxu0 %v2426
        %v2560 = vpop.f32.mrf.mxu0
        %v2561 = vadd.f32 0.0, %v2560
        %v2562 = vpop.f32.mrf.mxu0
        %v2563 = vadd.f32 0.0, %v2562
        %v2564 = vpop.f32.mrf.mxu0
        %v2565 = vadd.f32 0.0, %v2564
        %v2566 = vpop.f32.mrf.mxu0
        %v2567 = vadd.f32 0.0, %v2566
        %2568 = vmatprep.mubr.bf16.mxu0 %v2429
        %2569 = vmatmul.mubr.bf16.gmra.mxu0 %v2428
        %v2570 = vpop.f32.mrf.mxu0
        %v2571 = vadd.f32 0.0, %v2570
        %v2572 = vpop.f32.mrf.mxu0
        %v2573 = vadd.f32 0.0, %v2572
        %v2574 = vpop.f32.mrf.mxu0
        %v2575 = vadd.f32 0.0, %v2574
        %v2576 = vpop.f32.mrf.mxu0
        %v2577 = vadd.f32 0.0, %v2576
        %2578 = vmatprep.mubr.bf16.mxu0 %v2431
        %2579 = vmatmul.mubr.bf16.gmra.mxu0 %v2430
        %v2580 = vpop.f32.mrf.mxu0
        %v2581 = vadd.f32 0.0, %v2580
        %v2582 = vpop.f32.mrf.mxu0
        %v2583 = vadd.f32 0.0, %v2582
        %v2584 = vpop.f32.mrf.mxu0
        %v2585 = vadd.f32 0.0, %v2584
        %v2586 = vpop.f32.mrf.mxu0
        %v2587 = vadd.f32 0.0, %v2586
        %2588 = vmatprep.mubr.bf16.mxu0 %v2433
        %2589 = vmatmul.mubr.bf16.gmra.mxu0 %v2432
        %v2590 = vpop.f32.mrf.mxu0
        %v2591 = vadd.f32 0.0, %v2590
        %v2592 = vpop.f32.mrf.mxu0
        %v2593 = vadd.f32 0.0, %v2592
        %v2594 = vpop.f32.mrf.mxu0
        %v2595 = vadd.f32 0.0, %v2594
        %v2596 = vpop.f32.mrf.mxu0
        %v2597 = vadd.f32 0.0, %v2596
        %2598 = vmatprep.mubr.bf16.mxu0 %v2435
        %2599 = vmatmul.mubr.bf16.gmra.mxu0 %v2434
        %v2600 = vpop.f32.mrf.mxu0
        %v2601 = vadd.f32 0.0, %v2600
        %v2602 = vpop.f32.mrf.mxu0
        %v2603 = vadd.f32 0.0, %v2602
        %v2604 = vpop.f32.mrf.mxu0
        %v2605 = vadd.f32 0.0, %v2604
        %v2606 = vpop.f32.mrf.mxu0
        %v2607 = vadd.f32 0.0, %v2606
        %2608 = vmatprep.mubr.bf16.mxu0 %v2437
        %2609 = vmatmul.mubr.bf16.gmra.mxu0 %v2436
        %v2610 = vpop.f32.mrf.mxu0
        %v2611 = vadd.f32 0.0, %v2610
        %v2612 = vpop.f32.mrf.mxu0
        %v2613 = vadd.f32 0.0, %v2612
        %v2614 = vpop.f32.mrf.mxu0
        %v2615 = vadd.f32 0.0, %v2614
        %v2616 = vpop.f32.mrf.mxu0
        %v2617 = vadd.f32 0.0, %v2616
        %2618 = vmatprep.mubr.bf16.mxu0 %v2439
        %2619 = vmatmul.mubr.bf16.gmra.mxu0 %v2438
        %v2620 = vpop.f32.mrf.mxu0
        %v2621 = vadd.f32 0.0, %v2620
        %v2622 = vpop.f32.mrf.mxu0
        %v2623 = vadd.f32 0.0, %v2622
        %v2624 = vpop.f32.mrf.mxu0
        %v2625 = vadd.f32 0.0, %v2624
        %v2626 = vpop.f32.mrf.mxu0
        %v2627 = vadd.f32 0.0, %v2626
        %2628 = vdwg.mxu0
        %v2629 = vsel %vm456, %v2501, -inf
        %v2630 = vsel %vm457, %v2503, -inf
        %v2631 = vsel %vm456, %v2505, -inf
        %v2632 = vsel %vm457, %v2507, -inf
        %v2633 = vsel %vm456, %v2511, -inf
        %v2634 = vsel %vm457, %v2513, -inf
        %v2635 = vsel %vm456, %v2515, -inf
        %v2636 = vsel %vm457, %v2517, -inf
        %v2637 = vsel %vm456, %v2521, -inf
        %v2638 = vsel %vm457, %v2523, -inf
        %v2639 = vsel %vm456, %v2525, -inf
        %v2640 = vsel %vm457, %v2527, -inf
        %v2641 = vsel %vm456, %v2531, -inf
        %v2642 = vsel %vm457, %v2533, -inf
        %v2643 = vsel %vm456, %v2535, -inf
        %v2644 = vsel %vm457, %v2537, -inf
        %v2645 = vsel %vm456, %v2541, -inf
        %v2646 = vsel %vm457, %v2543, -inf
        %v2647 = vsel %vm456, %v2545, -inf
        %v2648 = vsel %vm457, %v2547, -inf
        %v2649 = vsel %vm456, %v2551, -inf
        %v2650 = vsel %vm457, %v2553, -inf
        %v2651 = vsel %vm456, %v2555, -inf
        %v2652 = vsel %vm457, %v2557, -inf
        %v2653 = vsel %vm456, %v2561, -inf
        %v2654 = vsel %vm457, %v2563, -inf
        %v2655 = vsel %vm456, %v2565, -inf
        %v2656 = vsel %vm457, %v2567, -inf
        %v2657 = vsel %vm456, %v2571, -inf
        %v2658 = vsel %vm457, %v2573, -inf
        %v2659 = vsel %vm456, %v2575, -inf
        %v2660 = vsel %vm457, %v2577, -inf
        %v2661 = vsel %vm456, %v2581, -inf
        %v2662 = vsel %vm457, %v2583, -inf
        %v2663 = vsel %vm456, %v2585, -inf
        %v2664 = vsel %vm457, %v2587, -inf
        %v2665 = vsel %vm456, %v2591, -inf
        %v2666 = vsel %vm457, %v2593, -inf
        %v2667 = vsel %vm456, %v2595, -inf
        %v2668 = vsel %vm457, %v2597, -inf
        %v2669 = vsel %vm456, %v2601, -inf
        %v2670 = vsel %vm457, %v2603, -inf
        %v2671 = vsel %vm456, %v2605, -inf
        %v2672 = vsel %vm457, %v2607, -inf
        %v2673 = vsel %vm456, %v2611, -inf
        %v2674 = vsel %vm457, %v2613, -inf
        %v2675 = vsel %vm456, %v2615, -inf
        %v2676 = vsel %vm457, %v2617, -inf
        %v2677 = vsel %vm456, %v2621, -inf
        %v2678 = vsel %vm457, %v2623, -inf
        %v2679 = vsel %vm456, %v2625, -inf
        %v2680 = vsel %vm457, %v2627, -inf
        %v2681 = vsel %vm862, %v2630, -inf
        %v2682 = vmax.f32 %v2629, %v2681
        %2683 = vmax.xlane.f32.xlu0 %v2682
        %v2684 = vpop.xlane.xlu0 %2683
        %v2685 = vsel %vm862, %v2632, -inf
        %v2686 = vmax.f32 %v2631, %v2685
        %2687 = vmax.xlane.f32.xlu0 %v2686
        %v2688 = vpop.xlane.xlu0 %2687
        %v2689 = vsel %vm862, %v2634, -inf
        %v2690 = vmax.f32 %v2633, %v2689
        %2691 = vmax.xlane.f32.xlu0 %v2690
        %v2692 = vpop.xlane.xlu0 %2691
        %v2693 = vsel %vm862, %v2636, -inf
        %v2694 = vmax.f32 %v2635, %v2693
        %2695 = vmax.xlane.f32.xlu0 %v2694
        %v2696 = vpop.xlane.xlu0 %2695
        %v2697 = vsel %vm862, %v2638, -inf
        %v2698 = vmax.f32 %v2637, %v2697
        %2699 = vmax.xlane.f32.xlu0 %v2698
        %v2700 = vpop.xlane.xlu0 %2699
        %v2701 = vsel %vm862, %v2640, -inf
        %v2702 = vmax.f32 %v2639, %v2701
        %2703 = vmax.xlane.f32.xlu0 %v2702
        %v2704 = vpop.xlane.xlu0 %2703
        %v2705 = vsel %vm862, %v2642, -inf
        %v2706 = vmax.f32 %v2641, %v2705
        %2707 = vmax.xlane.f32.xlu0 %v2706
        %v2708 = vpop.xlane.xlu0 %2707
        %v2709 = vsel %vm862, %v2644, -inf
        %v2710 = vmax.f32 %v2643, %v2709
        %2711 = vmax.xlane.f32.xlu0 %v2710
        %v2712 = vpop.xlane.xlu0 %2711
        %v2713 = vsel %vm862, %v2646, -inf
        %v2714 = vmax.f32 %v2645, %v2713
        %2715 = vmax.xlane.f32.xlu0 %v2714
        %v2716 = vpop.xlane.xlu0 %2715
        %v2717 = vsel %vm862, %v2648, -inf
        %v2718 = vmax.f32 %v2647, %v2717
        %2719 = vmax.xlane.f32.xlu0 %v2718
        %v2720 = vpop.xlane.xlu0 %2719
        %v2721 = vsel %vm862, %v2650, -inf
        %v2722 = vmax.f32 %v2649, %v2721
        %2723 = vmax.xlane.f32.xlu0 %v2722
        %v2724 = vpop.xlane.xlu0 %2723
        %v2725 = vsel %vm862, %v2652, -inf
        %v2726 = vmax.f32 %v2651, %v2725
        %2727 = vmax.xlane.f32.xlu0 %v2726
        %v2728 = vpop.xlane.xlu0 %2727
        %v2729 = vsel %vm862, %v2654, -inf
        %v2730 = vmax.f32 %v2653, %v2729
        %2731 = vmax.xlane.f32.xlu0 %v2730
        %v2732 = vpop.xlane.xlu0 %2731
        %v2733 = vsel %vm862, %v2656, -inf
        %v2734 = vmax.f32 %v2655, %v2733
        %2735 = vmax.xlane.f32.xlu0 %v2734
        %v2736 = vpop.xlane.xlu0 %2735
        %v2737 = vsel %vm862, %v2658, -inf
        %v2738 = vmax.f32 %v2657, %v2737
        %2739 = vmax.xlane.f32.xlu0 %v2738
        %v2740 = vpop.xlane.xlu0 %2739
        %v2741 = vsel %vm862, %v2660, -inf
        %v2742 = vmax.f32 %v2659, %v2741
        %2743 = vmax.xlane.f32.xlu0 %v2742
        %v2744 = vpop.xlane.xlu0 %2743
        %v2745 = vsel %vm862, %v2662, -inf
        %v2746 = vmax.f32 %v2661, %v2745
        %2747 = vmax.xlane.f32.xlu0 %v2746
        %v2748 = vpop.xlane.xlu0 %2747
        %v2749 = vsel %vm862, %v2664, -inf
        %v2750 = vmax.f32 %v2663, %v2749
        %2751 = vmax.xlane.f32.xlu0 %v2750
        %v2752 = vpop.xlane.xlu0 %2751
        %v2753 = vsel %vm862, %v2666, -inf
        %v2754 = vmax.f32 %v2665, %v2753
        %2755 = vmax.xlane.f32.xlu0 %v2754
        %v2756 = vpop.xlane.xlu0 %2755
        %v2757 = vsel %vm862, %v2668, -inf
        %v2758 = vmax.f32 %v2667, %v2757
        %2759 = vmax.xlane.f32.xlu0 %v2758
        %v2760 = vpop.xlane.xlu0 %2759
        %v2761 = vsel %vm862, %v2670, -inf
        %v2762 = vmax.f32 %v2669, %v2761
        %2763 = vmax.xlane.f32.xlu0 %v2762
        %v2764 = vpop.xlane.xlu0 %2763
        %v2765 = vsel %vm862, %v2672, -inf
        %v2766 = vmax.f32 %v2671, %v2765
        %2767 = vmax.xlane.f32.xlu0 %v2766
        %v2768 = vpop.xlane.xlu0 %2767
        %v2769 = vsel %vm862, %v2674, -inf
        %v2770 = vmax.f32 %v2673, %v2769
        %2771 = vmax.xlane.f32.xlu0 %v2770
        %v2772 = vpop.xlane.xlu0 %2771
        %v2773 = vsel %vm862, %v2676, -inf
        %v2774 = vmax.f32 %v2675, %v2773
        %2775 = vmax.xlane.f32.xlu0 %v2774
        %v2776 = vpop.xlane.xlu0 %2775
        %v2777 = vsel %vm862, %v2678, -inf
        %v2778 = vmax.f32 %v2677, %v2777
        %2779 = vmax.xlane.f32.xlu0 %v2778
        %v2780 = vpop.xlane.xlu0 %2779
        %v2781 = vsel %vm862, %v2680, -inf
        %v2782 = vmax.f32 %v2679, %v2781
        %2783 = vmax.xlane.f32.xlu0 %v2782
        %v2784 = vpop.xlane.xlu0 %2783
        %v2785 = vsub.f32 %v2629, %v2684
        %v2786 = vsub.f32 %v2630, %v2684
        %v2787 = vsub.f32 %v2631, %v2688
        %v2788 = vsub.f32 %v2632, %v2688
        %v2789 = vsub.f32 %v2633, %v2692
        %v2790 = vsub.f32 %v2634, %v2692
        %v2791 = vsub.f32 %v2635, %v2696
        %v2792 = vsub.f32 %v2636, %v2696
        %v2793 = vsub.f32 %v2637, %v2700
        %v2794 = vsub.f32 %v2638, %v2700
        %v2795 = vsub.f32 %v2639, %v2704
        %v2796 = vsub.f32 %v2640, %v2704
        %v2797 = vsub.f32 %v2641, %v2708
        %v2798 = vsub.f32 %v2642, %v2708
        %v2799 = vsub.f32 %v2643, %v2712
        %v2800 = vsub.f32 %v2644, %v2712
        %v2801 = vsub.f32 %v2645, %v2716
        %v2802 = vsub.f32 %v2646, %v2716
        %v2803 = vsub.f32 %v2647, %v2720
        %v2804 = vsub.f32 %v2648, %v2720
        %v2805 = vsub.f32 %v2649, %v2724
        %v2806 = vsub.f32 %v2650, %v2724
        %v2807 = vsub.f32 %v2651, %v2728
        %v2808 = vsub.f32 %v2652, %v2728
        %v2809 = vsub.f32 %v2653, %v2732
        %v2810 = vsub.f32 %v2654, %v2732
        %v2811 = vsub.f32 %v2655, %v2736
        %v2812 = vsub.f32 %v2656, %v2736
        %v2813 = vsub.f32 %v2657, %v2740
        %v2814 = vsub.f32 %v2658, %v2740
        %v2815 = vsub.f32 %v2659, %v2744
        %v2816 = vsub.f32 %v2660, %v2744
        %v2817 = vsub.f32 %v2661, %v2748
        %v2818 = vsub.f32 %v2662, %v2748
        %v2819 = vsub.f32 %v2663, %v2752
        %v2820 = vsub.f32 %v2664, %v2752
        %v2821 = vsub.f32 %v2665, %v2756
        %v2822 = vsub.f32 %v2666, %v2756
        %v2823 = vsub.f32 %v2667, %v2760
        %v2824 = vsub.f32 %v2668, %v2760
        %v2825 = vsub.f32 %v2669, %v2764
        %v2826 = vsub.f32 %v2670, %v2764
        %v2827 = vsub.f32 %v2671, %v2768
        %v2828 = vsub.f32 %v2672, %v2768
        %v2829 = vsub.f32 %v2673, %v2772
        %v2830 = vsub.f32 %v2674, %v2772
        %v2831 = vsub.f32 %v2675, %v2776
        %v2832 = vsub.f32 %v2676, %v2776
        %v2833 = vsub.f32 %v2677, %v2780
        %v2834 = vsub.f32 %v2678, %v2780
        %v2835 = vsub.f32 %v2679, %v2784
        %v2836 = vsub.f32 %v2680, %v2784
        %v2837 = vmul.f32 %v2785, 1.442695
        %v2838 = vpow.pop %v2837
        %v2839 = vmul.f32 %v2786, 1.442695
        %v2840 = vpow.pop %v2839
        %v2841 = vmul.f32 %v2787, 1.442695
        %v2842 = vpow.pop %v2841
        %v2843 = vmul.f32 %v2788, 1.442695
        %v2844 = vpow.pop %v2843
        %v2845 = vmul.f32 %v2789, 1.442695
        %v2846 = vpow.pop %v2845
        %v2847 = vmul.f32 %v2790, 1.442695
        %v2848 = vpow.pop %v2847
        %v2849 = vmul.f32 %v2791, 1.442695
        %v2850 = vpow.pop %v2849
        %v2851 = vmul.f32 %v2792, 1.442695
        %v2852 = vpow.pop %v2851
        %v2853 = vmul.f32 %v2793, 1.442695
        %v2854 = vpow.pop %v2853
        %v2855 = vmul.f32 %v2794, 1.442695
        %v2856 = vpow.pop %v2855
        %v2857 = vmul.f32 %v2795, 1.442695
        %v2858 = vpow.pop %v2857
        %v2859 = vmul.f32 %v2796, 1.442695
        %v2860 = vpow.pop %v2859
        %v2861 = vmul.f32 %v2797, 1.442695
        %v2862 = vpow.pop %v2861
        %v2863 = vmul.f32 %v2798, 1.442695
        %v2864 = vpow.pop %v2863
        %v2865 = vmul.f32 %v2799, 1.442695
        %v2866 = vpow.pop %v2865
        %v2867 = vmul.f32 %v2800, 1.442695
        %v2868 = vpow.pop %v2867
        %v2869 = vmul.f32 %v2801, 1.442695
        %v2870 = vpow.pop %v2869
        %v2871 = vmul.f32 %v2802, 1.442695
        %v2872 = vpow.pop %v2871
        %v2873 = vmul.f32 %v2803, 1.442695
        %v2874 = vpow.pop %v2873
        %v2875 = vmul.f32 %v2804, 1.442695
        %v2876 = vpow.pop %v2875
        %v2877 = vmul.f32 %v2805, 1.442695
        %v2878 = vpow.pop %v2877
        %v2879 = vmul.f32 %v2806, 1.442695
        %v2880 = vpow.pop %v2879
        %v2881 = vmul.f32 %v2807, 1.442695
        %v2882 = vpow.pop %v2881
        %v2883 = vmul.f32 %v2808, 1.442695
        %v2884 = vpow.pop %v2883
        %v2885 = vmul.f32 %v2809, 1.442695
        %v2886 = vpow.pop %v2885
        %v2887 = vmul.f32 %v2810, 1.442695
        %v2888 = vpow.pop %v2887
        %v2889 = vmul.f32 %v2811, 1.442695
        %v2890 = vpow.pop %v2889
        %v2891 = vmul.f32 %v2812, 1.442695
        %v2892 = vpow.pop %v2891
        %v2893 = vmul.f32 %v2813, 1.442695
        %v2894 = vpow.pop %v2893
        %v2895 = vmul.f32 %v2814, 1.442695
        %v2896 = vpow.pop %v2895
        %v2897 = vmul.f32 %v2815, 1.442695
        %v2898 = vpow.pop %v2897
        %v2899 = vmul.f32 %v2816, 1.442695
        %v2900 = vpow.pop %v2899
        %v2901 = vmul.f32 %v2817, 1.442695
        %v2902 = vpow.pop %v2901
        %v2903 = vmul.f32 %v2818, 1.442695
        %v2904 = vpow.pop %v2903
        %v2905 = vmul.f32 %v2819, 1.442695
        %v2906 = vpow.pop %v2905
        %v2907 = vmul.f32 %v2820, 1.442695
        %v2908 = vpow.pop %v2907
        %v2909 = vmul.f32 %v2821, 1.442695
        %v2910 = vpow.pop %v2909
        %v2911 = vmul.f32 %v2822, 1.442695
        %v2912 = vpow.pop %v2911
        %v2913 = vmul.f32 %v2823, 1.442695
        %v2914 = vpow.pop %v2913
        %v2915 = vmul.f32 %v2824, 1.442695
        %v2916 = vpow.pop %v2915
        %v2917 = vmul.f32 %v2825, 1.442695
        %v2918 = vpow.pop %v2917
        %v2919 = vmul.f32 %v2826, 1.442695
        %v2920 = vpow.pop %v2919
        %v2921 = vmul.f32 %v2827, 1.442695
        %v2922 = vpow.pop %v2921
        %v2923 = vmul.f32 %v2828, 1.442695
        %v2924 = vpow.pop %v2923
        %v2925 = vmul.f32 %v2829, 1.442695
        %v2926 = vpow.pop %v2925
        %v2927 = vmul.f32 %v2830, 1.442695
        %v2928 = vpow.pop %v2927
        %v2929 = vmul.f32 %v2831, 1.442695
        %v2930 = vpow.pop %v2929
        %v2931 = vmul.f32 %v2832, 1.442695
        %v2932 = vpow.pop %v2931
        %v2933 = vmul.f32 %v2833, 1.442695
        %v2934 = vpow.pop %v2933
        %v2935 = vmul.f32 %v2834, 1.442695
        %v2936 = vpow.pop %v2935
        %v2937 = vmul.f32 %v2835, 1.442695
        %v2938 = vpow.pop %v2937
        %v2939 = vmul.f32 %v2836, 1.442695
        %v2940 = vpow.pop %v2939
        %v2941 = vsel %vm862, %v2840, 0.0
        %v2942 = vadd.f32 %v2838, %v2941
        %2943 = vadd.xlane.f32.xlu0 %v2942
        %v2944 = vpop.xlane.xlu0 %2943
        %v2945 = vsel %vm862, %v2844, 0.0
        %v2946 = vadd.f32 %v2842, %v2945
        %2947 = vadd.xlane.f32.xlu0 %v2946
        %v2948 = vpop.xlane.xlu0 %2947
        %v2949 = vsel %vm862, %v2848, 0.0
        %v2950 = vadd.f32 %v2846, %v2949
        %2951 = vadd.xlane.f32.xlu0 %v2950
        %v2952 = vpop.xlane.xlu0 %2951
        %v2953 = vsel %vm862, %v2852, 0.0
        %v2954 = vadd.f32 %v2850, %v2953
        %2955 = vadd.xlane.f32.xlu0 %v2954
        %v2956 = vpop.xlane.xlu0 %2955
        %v2957 = vsel %vm862, %v2856, 0.0
        %v2958 = vadd.f32 %v2854, %v2957
        %2959 = vadd.xlane.f32.xlu0 %v2958
        %v2960 = vpop.xlane.xlu0 %2959
        %v2961 = vsel %vm862, %v2860, 0.0
        %v2962 = vadd.f32 %v2858, %v2961
        %2963 = vadd.xlane.f32.xlu0 %v2962
        %v2964 = vpop.xlane.xlu0 %2963
        %v2965 = vsel %vm862, %v2864, 0.0
        %v2966 = vadd.f32 %v2862, %v2965
        %2967 = vadd.xlane.f32.xlu0 %v2966
        %v2968 = vpop.xlane.xlu0 %2967
        %v2969 = vsel %vm862, %v2868, 0.0
        %v2970 = vadd.f32 %v2866, %v2969
        %2971 = vadd.xlane.f32.xlu0 %v2970
        %v2972 = vpop.xlane.xlu0 %2971
        %v2973 = vsel %vm862, %v2872, 0.0
        %v2974 = vadd.f32 %v2870, %v2973
        %2975 = vadd.xlane.f32.xlu0 %v2974
        %v2976 = vpop.xlane.xlu0 %2975
        %v2977 = vsel %vm862, %v2876, 0.0
        %v2978 = vadd.f32 %v2874, %v2977
        %2979 = vadd.xlane.f32.xlu0 %v2978
        %v2980 = vpop.xlane.xlu0 %2979
        %v2981 = vsel %vm862, %v2880, 0.0
        %v2982 = vadd.f32 %v2878, %v2981
        %2983 = vadd.xlane.f32.xlu0 %v2982
        %v2984 = vpop.xlane.xlu0 %2983
        %v2985 = vsel %vm862, %v2884, 0.0
        %v2986 = vadd.f32 %v2882, %v2985
        %2987 = vadd.xlane.f32.xlu0 %v2986
        %v2988 = vpop.xlane.xlu0 %2987
        %v2989 = vsel %vm862, %v2888, 0.0
        %v2990 = vadd.f32 %v2886, %v2989
        %2991 = vadd.xlane.f32.xlu0 %v2990
        %v2992 = vpop.xlane.xlu0 %2991
        %v2993 = vsel %vm862, %v2892, 0.0
        %v2994 = vadd.f32 %v2890, %v2993
        %2995 = vadd.xlane.f32.xlu0 %v2994
        %v2996 = vpop.xlane.xlu0 %2995
        %v2997 = vsel %vm862, %v2896, 0.0
        %v2998 = vadd.f32 %v2894, %v2997
        %2999 = vadd.xlane.f32.xlu0 %v2998
        %v3000 = vpop.xlane.xlu0 %2999
        %v3001 = vsel %vm862, %v2900, 0.0
        %v3002 = vadd.f32 %v2898, %v3001
        %3003 = vadd.xlane.f32.xlu0 %v3002
        %v3004 = vpop.xlane.xlu0 %3003
        %v3005 = vsel %vm862, %v2904, 0.0
        %v3006 = vadd.f32 %v2902, %v3005
        %3007 = vadd.xlane.f32.xlu0 %v3006
        %v3008 = vpop.xlane.xlu0 %3007
        %v3009 = vsel %vm862, %v2908, 0.0
        %v3010 = vadd.f32 %v2906, %v3009
        %3011 = vadd.xlane.f32.xlu0 %v3010
        %v3012 = vpop.xlane.xlu0 %3011
        %v3013 = vsel %vm862, %v2912, 0.0
        %v3014 = vadd.f32 %v2910, %v3013
        %3015 = vadd.xlane.f32.xlu0 %v3014
        %v3016 = vpop.xlane.xlu0 %3015
        %v3017 = vsel %vm862, %v2916, 0.0
        %v3018 = vadd.f32 %v2914, %v3017
        %3019 = vadd.xlane.f32.xlu0 %v3018
        %v3020 = vpop.xlane.xlu0 %3019
        %v3021 = vsel %vm862, %v2920, 0.0
        %v3022 = vadd.f32 %v2918, %v3021
        %3023 = vadd.xlane.f32.xlu0 %v3022
        %v3024 = vpop.xlane.xlu0 %3023
        %v3025 = vsel %vm862, %v2924, 0.0
        %v3026 = vadd.f32 %v2922, %v3025
        %3027 = vadd.xlane.f32.xlu0 %v3026
        %v3028 = vpop.xlane.xlu0 %3027
        %v3029 = vsel %vm862, %v2928, 0.0
        %v3030 = vadd.f32 %v2926, %v3029
        %3031 = vadd.xlane.f32.xlu0 %v3030
        %v3032 = vpop.xlane.xlu0 %3031
        %v3033 = vsel %vm862, %v2932, 0.0
        %v3034 = vadd.f32 %v2930, %v3033
        %3035 = vadd.xlane.f32.xlu0 %v3034
        %v3036 = vpop.xlane.xlu0 %3035
        %v3037 = vsel %vm862, %v2936, 0.0
        %v3038 = vadd.f32 %v2934, %v3037
        %3039 = vadd.xlane.f32.xlu0 %v3038
        %v3040 = vpop.xlane.xlu0 %3039
        %v3041 = vsel %vm862, %v2940, 0.0
        %v3042 = vadd.f32 %v2938, %v3041
        %3043 = vadd.xlane.f32.xlu0 %v3042
        %v3044 = vpop.xlane.xlu0 %3043
        %v3045 = vrcp.pop %v2944
        %v3046 = vmul.f32 %v2838, %v3045
        %v3047 = vmul.f32 %v2840, %v3045
        %v3048 = vrcp.pop %v2948
        %v3049 = vmul.f32 %v2842, %v3048
        %v3050 = vmul.f32 %v2844, %v3048
        %v3051 = vrcp.pop %v2952
        %v3052 = vmul.f32 %v2846, %v3051
        %v3053 = vmul.f32 %v2848, %v3051
        %v3054 = vrcp.pop %v2956
        %v3055 = vmul.f32 %v2850, %v3054
        %v3056 = vmul.f32 %v2852, %v3054
        %v3057 = vrcp.pop %v2960
        %v3058 = vmul.f32 %v2854, %v3057
        %v3059 = vmul.f32 %v2856, %v3057
        %v3060 = vrcp.pop %v2964
        %v3061 = vmul.f32 %v2858, %v3060
        %v3062 = vmul.f32 %v2860, %v3060
        %v3063 = vrcp.pop %v2968
        %v3064 = vmul.f32 %v2862, %v3063
        %v3065 = vmul.f32 %v2864, %v3063
        %v3066 = vrcp.pop %v2972
        %v3067 = vmul.f32 %v2866, %v3066
        %v3068 = vmul.f32 %v2868, %v3066
        %v3069 = vrcp.pop %v2976
        %v3070 = vmul.f32 %v2870, %v3069
        %v3071 = vmul.f32 %v2872, %v3069
        %v3072 = vrcp.pop %v2980
        %v3073 = vmul.f32 %v2874, %v3072
        %v3074 = vmul.f32 %v2876, %v3072
        %v3075 = vrcp.pop %v2984
        %v3076 = vmul.f32 %v2878, %v3075
        %v3077 = vmul.f32 %v2880, %v3075
        %v3078 = vrcp.pop %v2988
        %v3079 = vmul.f32 %v2882, %v3078
        %v3080 = vmul.f32 %v2884, %v3078
        %v3081 = vrcp.pop %v2992
        %v3082 = vmul.f32 %v2886, %v3081
        %v3083 = vmul.f32 %v2888, %v3081
        %v3084 = vrcp.pop %v2996
        %v3085 = vmul.f32 %v2890, %v3084
        %v3086 = vmul.f32 %v2892, %v3084
        %v3087 = vrcp.pop %v3000
        %v3088 = vmul.f32 %v2894, %v3087
        %v3089 = vmul.f32 %v2896, %v3087
        %v3090 = vrcp.pop %v3004
        %v3091 = vmul.f32 %v2898, %v3090
        %v3092 = vmul.f32 %v2900, %v3090
        %v3093 = vrcp.pop %v3008
        %v3094 = vmul.f32 %v2902, %v3093
        %v3095 = vmul.f32 %v2904, %v3093
        %v3096 = vrcp.pop %v3012
        %v3097 = vmul.f32 %v2906, %v3096
        %v3098 = vmul.f32 %v2908, %v3096
        %v3099 = vrcp.pop %v3016
        %v3100 = vmul.f32 %v2910, %v3099
        %v3101 = vmul.f32 %v2912, %v3099
        %v3102 = vrcp.pop %v3020
        %v3103 = vmul.f32 %v2914, %v3102
        %v3104 = vmul.f32 %v2916, %v3102
        %v3105 = vrcp.pop %v3024
        %v3106 = vmul.f32 %v2918, %v3105
        %v3107 = vmul.f32 %v2920, %v3105
        %v3108 = vrcp.pop %v3028
        %v3109 = vmul.f32 %v2922, %v3108
        %v3110 = vmul.f32 %v2924, %v3108
        %v3111 = vrcp.pop %v3032
        %v3112 = vmul.f32 %v2926, %v3111
        %v3113 = vmul.f32 %v2928, %v3111
        %v3114 = vrcp.pop %v3036
        %v3115 = vmul.f32 %v2930, %v3114
        %v3116 = vmul.f32 %v2932, %v3114
        %v3117 = vrcp.pop %v3040
        %v3118 = vmul.f32 %v2934, %v3117
        %v3119 = vmul.f32 %v2936, %v3117
        %v3120 = vrcp.pop %v3044
        %v3121 = vmul.f32 %v2938, %v3120
        %v3122 = vmul.f32 %v2940, %v3120
        %3123 = vmatprep.subr.bf16.mxu0 %v1416
        %3124 = vmatpush1.bf16.msra.mxu0 %v1415
        %3125 = vmatprep.subr.bf16.mxu0 %v1414
        %3126 = vmatpush1.bf16.msra.mxu0 %v1413
        %3127 = vmatprep.subr.bf16.mxu0 %v1412
        %3128 = vmatpush1.bf16.msra.mxu0 %v1411
        %3129 = vmatprep.subr.bf16.mxu0 %v1410
        %3130 = vmatpush1.bf16.msra.mxu0 %v1409
        %3131 = vmatprep.subr.bf16.mxu0 %v1408
        %3132 = vmatpush1.bf16.msra.mxu0 %v1407
        %3133 = vmatprep.subr.bf16.mxu0 %v1406
        %3134 = vmatpush1.bf16.msra.mxu0 %v1405
        %3135 = vmatprep.subr.bf16.mxu0 %v1404
        %3136 = vmatpush1.bf16.msra.mxu0 %v1403
        %3137 = vmatprep.subr.bf16.mxu0 %v1402
        %3138 = vmatpush1.bf16.msra.mxu0 %v1401
        %3139 = vmatprep.subr.bf16.mxu0 %v1432
        %3140 = vmatpush2.bf16.msra.mxu0 %v1431
        %3141 = vmatprep.subr.bf16.mxu0 %v1430
        %3142 = vmatpush2.bf16.msra.mxu0 %v1429
        %3143 = vmatprep.subr.bf16.mxu0 %v1428
        %3144 = vmatpush2.bf16.msra.mxu0 %v1427
        %3145 = vmatprep.subr.bf16.mxu0 %v1426
        %3146 = vmatpush2.bf16.msra.mxu0 %v1425
        %3147 = vmatprep.subr.bf16.mxu0 %v1424
        %3148 = vmatpush2.bf16.msra.mxu0 %v1423
        %3149 = vmatprep.subr.bf16.mxu0 %v1422
        %3150 = vmatpush2.bf16.msra.mxu0 %v1421
        %3151 = vmatprep.subr.bf16.mxu0 %v1420
        %3152 = vmatpush2.bf16.msra.mxu0 %v1419
        %3153 = vmatprep.subr.bf16.mxu0 %v1418
        %3154 = vmatpush2.bf16.msra.mxu0 %v1417
        %3155 = vmatprep.mubr.bf16.mxu0 %v2415
        %3156 = vmatmul.mubr.bf16.gmra.mxu0 %v2414
        %v3157 = vpop.f32.mrf.mxu0
        %v3158 = vadd.f32 0.0, %v3157
        %v3159 = vpop.f32.mrf.mxu0
        %v3160 = vadd.f32 0.0, %v3159
        %v3161 = vpop.f32.mrf.mxu0
        %v3162 = vadd.f32 0.0, %v3161
        %v3163 = vpop.f32.mrf.mxu0
        %v3164 = vadd.f32 0.0, %v3163
        %3165 = vmatprep.mubr.bf16.mxu0 %v2417
        %3166 = vmatmul.mubr.bf16.gmra.mxu0 %v2416
        %v3167 = vpop.f32.mrf.mxu0
        %v3168 = vadd.f32 0.0, %v3167
        %v3169 = vpop.f32.mrf.mxu0
        %v3170 = vadd.f32 0.0, %v3169
        %v3171 = vpop.f32.mrf.mxu0
        %v3172 = vadd.f32 0.0, %v3171
        %v3173 = vpop.f32.mrf.mxu0
        %v3174 = vadd.f32 0.0, %v3173
        %3175 = vmatprep.mubr.bf16.mxu0 %v2419
        %3176 = vmatmul.mubr.bf16.gmra.mxu0 %v2418
        %v3177 = vpop.f32.mrf.mxu0
        %v3178 = vadd.f32 0.0, %v3177
        %v3179 = vpop.f32.mrf.mxu0
        %v3180 = vadd.f32 0.0, %v3179
        %v3181 = vpop.f32.mrf.mxu0
        %v3182 = vadd.f32 0.0, %v3181
        %v3183 = vpop.f32.mrf.mxu0
        %v3184 = vadd.f32 0.0, %v3183
        %3185 = vmatprep.mubr.bf16.mxu0 %v2421
        %3186 = vmatmul.mubr.bf16.gmra.mxu0 %v2420
        %v3187 = vpop.f32.mrf.mxu0
        %v3188 = vadd.f32 0.0, %v3187
        %v3189 = vpop.f32.mrf.mxu0
        %v3190 = vadd.f32 0.0, %v3189
        %v3191 = vpop.f32.mrf.mxu0
        %v3192 = vadd.f32 0.0, %v3191
        %v3193 = vpop.f32.mrf.mxu0
        %v3194 = vadd.f32 0.0, %v3193
        %3195 = vmatprep.mubr.bf16.mxu0 %v2423
        %3196 = vmatmul.mubr.bf16.gmra.mxu0 %v2422
        %v3197 = vpop.f32.mrf.mxu0
        %v3198 = vadd.f32 0.0, %v3197
        %v3199 = vpop.f32.mrf.mxu0
        %v3200 = vadd.f32 0.0, %v3199
        %v3201 = vpop.f32.mrf.mxu0
        %v3202 = vadd.f32 0.0, %v3201
        %v3203 = vpop.f32.mrf.mxu0
        %v3204 = vadd.f32 0.0, %v3203
        %3205 = vmatprep.mubr.bf16.mxu0 %v2425
        %3206 = vmatmul.mubr.bf16.gmra.mxu0 %v2424
        %v3207 = vpop.f32.mrf.mxu0
        %v3208 = vadd.f32 0.0, %v3207
        %v3209 = vpop.f32.mrf.mxu0
        %v3210 = vadd.f32 0.0, %v3209
        %v3211 = vpop.f32.mrf.mxu0
        %v3212 = vadd.f32 0.0, %v3211
        %v3213 = vpop.f32.mrf.mxu0
        %v3214 = vadd.f32 0.0, %v3213
        %3215 = vmatprep.mubr.bf16.mxu0 %v2427
        %3216 = vmatmul.mubr.bf16.gmra.mxu0 %v2426
        %v3217 = vpop.f32.mrf.mxu0
        %v3218 = vadd.f32 0.0, %v3217
        %v3219 = vpop.f32.mrf.mxu0
        %v3220 = vadd.f32 0.0, %v3219
        %v3221 = vpop.f32.mrf.mxu0
        %v3222 = vadd.f32 0.0, %v3221
        %v3223 = vpop.f32.mrf.mxu0
        %v3224 = vadd.f32 0.0, %v3223
        %3225 = vmatprep.mubr.bf16.mxu0 %v2429
        %3226 = vmatmul.mubr.bf16.gmra.mxu0 %v2428
        %v3227 = vpop.f32.mrf.mxu0
        %v3228 = vadd.f32 0.0, %v3227
        %v3229 = vpop.f32.mrf.mxu0
        %v3230 = vadd.f32 0.0, %v3229
        %v3231 = vpop.f32.mrf.mxu0
        %v3232 = vadd.f32 0.0, %v3231
        %v3233 = vpop.f32.mrf.mxu0
        %v3234 = vadd.f32 0.0, %v3233
        %3235 = vmatprep.mubr.bf16.mxu0 %v2431
        %3236 = vmatmul.mubr.bf16.gmra.mxu0 %v2430
        %v3237 = vpop.f32.mrf.mxu0
        %v3238 = vadd.f32 0.0, %v3237
        %v3239 = vpop.f32.mrf.mxu0
        %v3240 = vadd.f32 0.0, %v3239
        %v3241 = vpop.f32.mrf.mxu0
        %v3242 = vadd.f32 0.0, %v3241
        %v3243 = vpop.f32.mrf.mxu0
        %v3244 = vadd.f32 0.0, %v3243
        %3245 = vmatprep.mubr.bf16.mxu0 %v2433
        %3246 = vmatmul.mubr.bf16.gmra.mxu0 %v2432
        %v3247 = vpop.f32.mrf.mxu0
        %v3248 = vadd.f32 0.0, %v3247
        %v3249 = vpop.f32.mrf.mxu0
        %v3250 = vadd.f32 0.0, %v3249
        %v3251 = vpop.f32.mrf.mxu0
        %v3252 = vadd.f32 0.0, %v3251
        %v3253 = vpop.f32.mrf.mxu0
        %v3254 = vadd.f32 0.0, %v3253
        %3255 = vmatprep.mubr.bf16.mxu0 %v2435
        %3256 = vmatmul.mubr.bf16.gmra.mxu0 %v2434
        %v3257 = vpop.f32.mrf.mxu0
        %v3258 = vadd.f32 0.0, %v3257
        %v3259 = vpop.f32.mrf.mxu0
        %v3260 = vadd.f32 0.0, %v3259
        %v3261 = vpop.f32.mrf.mxu0
        %v3262 = vadd.f32 0.0, %v3261
        %v3263 = vpop.f32.mrf.mxu0
        %v3264 = vadd.f32 0.0, %v3263
        %3265 = vmatprep.mubr.bf16.mxu0 %v2437
        %3266 = vmatmul.mubr.bf16.gmra.mxu0 %v2436
        %v3267 = vpop.f32.mrf.mxu0
        %v3268 = vadd.f32 0.0, %v3267
        %v3269 = vpop.f32.mrf.mxu0
        %v3270 = vadd.f32 0.0, %v3269
        %v3271 = vpop.f32.mrf.mxu0
        %v3272 = vadd.f32 0.0, %v3271
        %v3273 = vpop.f32.mrf.mxu0
        %v3274 = vadd.f32 0.0, %v3273
        %3275 = vmatprep.mubr.bf16.mxu0 %v2439
        %3276 = vmatmul.mubr.bf16.gmra.mxu0 %v2438
        %v3277 = vpop.f32.mrf.mxu0
        %v3278 = vadd.f32 0.0, %v3277
        %v3279 = vpop.f32.mrf.mxu0
        %v3280 = vadd.f32 0.0, %v3279
        %v3281 = vpop.f32.mrf.mxu0
        %v3282 = vadd.f32 0.0, %v3281
        %v3283 = vpop.f32.mrf.mxu0
        %v3284 = vadd.f32 0.0, %v3283
        %3285 = vdwg.mxu0
        %v3286 = vpack.c.bf16 %v3162, %v3158
        %v3287 = vpack.c.bf16 %v3164, %v3160
        %v3288 = vpack.c.bf16 %v3172, %v3168
        %v3289 = vpack.c.bf16 %v3174, %v3170
        %v3290 = vpack.c.bf16 %v3182, %v3178
        %v3291 = vpack.c.bf16 %v3184, %v3180
        %v3292 = vpack.c.bf16 %v3192, %v3188
        %v3293 = vpack.c.bf16 %v3194, %v3190
        %v3294 = vpack.c.bf16 %v3202, %v3198
        %v3295 = vpack.c.bf16 %v3204, %v3200
        %v3296 = vpack.c.bf16 %v3212, %v3208
        %v3297 = vpack.c.bf16 %v3214, %v3210
        %v3298 = vpack.c.bf16 %v3222, %v3218
        %v3299 = vpack.c.bf16 %v3224, %v3220
        %v3300 = vpack.c.bf16 %v3232, %v3228
        %v3301 = vpack.c.bf16 %v3234, %v3230
        %v3302 = vpack.c.bf16 %v3242, %v3238
        %v3303 = vpack.c.bf16 %v3244, %v3240
        %v3304 = vpack.c.bf16 %v3252, %v3248
        %v3305 = vpack.c.bf16 %v3254, %v3250
        %v3306 = vpack.c.bf16 %v3262, %v3258
        %v3307 = vpack.c.bf16 %v3264, %v3260
        %v3308 = vpack.c.bf16 %v3272, %v3268
        %v3309 = vpack.c.bf16 %v3274, %v3270
        %v3310 = vpack.c.bf16 %v3282, %v3278
        %v3311 = vpack.c.bf16 %v3284, %v3280
        %v3312 = vpack.c.bf16 %v3049, %v3046
        %v3313 = vpack.c.bf16 %v3050, %v3047
        %v3314 = vpack.c.bf16 %v3055, %v3052
        %v3315 = vpack.c.bf16 %v3056, %v3053
        %v3316 = vpack.c.bf16 %v3061, %v3058
        %v3317 = vpack.c.bf16 %v3062, %v3059
        %v3318 = vpack.c.bf16 %v3067, %v3064
        %v3319 = vpack.c.bf16 %v3068, %v3065
        %v3320 = vpack.c.bf16 %v3073, %v3070
        %v3321 = vpack.c.bf16 %v3074, %v3071
        %v3322 = vpack.c.bf16 %v3079, %v3076
        %v3323 = vpack.c.bf16 %v3080, %v3077
        %v3324 = vpack.c.bf16 %v3085, %v3082
        %v3325 = vpack.c.bf16 %v3086, %v3083
        %v3326 = vpack.c.bf16 %v3091, %v3088
        %v3327 = vpack.c.bf16 %v3092, %v3089
        %v3328 = vpack.c.bf16 %v3097, %v3094
        %v3329 = vpack.c.bf16 %v3098, %v3095
        %v3330 = vpack.c.bf16 %v3103, %v3100
        %v3331 = vpack.c.bf16 %v3104, %v3101
        %v3332 = vpack.c.bf16 %v3109, %v3106
        %v3333 = vpack.c.bf16 %v3110, %v3107
        %v3334 = vpack.c.bf16 %v3115, %v3112
        %v3335 = vpack.c.bf16 %v3116, %v3113
        %v3336 = vpack.c.bf16 %v3121, %v3118
        %v3337 = vpack.c.bf16 %v3122, %v3119
        %v3339 = vsel %vm862, %v3313, 0
        %v3342 = vsel %vm862, %v3315, 0
        %v3345 = vsel %vm862, %v3317, 0
        %v3348 = vsel %vm862, %v3319, 0
        %v3351 = vsel %vm862, %v3321, 0
        %v3354 = vsel %vm862, %v3323, 0
        %v3357 = vsel %vm862, %v3325, 0
        %v3360 = vsel %vm862, %v3327, 0
        %v3363 = vsel %vm862, %v3329, 0
        %v3366 = vsel %vm862, %v3331, 0
        %v3369 = vsel %vm862, %v3333, 0
        %v3372 = vsel %vm862, %v3335, 0
        %v3375 = vsel %vm862, %v3337, 0
        %3377 = vmatprep.subr.bf16.mxu0 %v3301
        %3378 = vmatpush1.bf16.msra.mxu0 %v3300
        %3379 = vmatprep.subr.bf16.mxu0 %v3299
        %3380 = vmatpush1.bf16.msra.mxu0 %v3298
        %3381 = vmatprep.subr.bf16.mxu0 %v3297
        %3382 = vmatpush1.bf16.msra.mxu0 %v3296
        %3383 = vmatprep.subr.bf16.mxu0 %v3295
        %3384 = vmatpush1.bf16.msra.mxu0 %v3294
        %3385 = vmatprep.subr.bf16.mxu0 %v3293
        %3386 = vmatpush1.bf16.msra.mxu0 %v3292
        %3387 = vmatprep.subr.bf16.mxu0 %v3291
        %3388 = vmatpush1.bf16.msra.mxu0 %v3290
        %3389 = vmatprep.subr.bf16.mxu0 %v3289
        %3390 = vmatpush1.bf16.msra.mxu0 %v3288
        %3391 = vmatprep.subr.bf16.mxu0 %v3287
        %3392 = vmatpush1.bf16.msra.mxu0 %v3286
        %3393 = vmatprep.subr.bf16.mxu0 0
        %3394 = vmatpush2.bf16.msra.mxu0 0
        %3395 = vmatprep.subr.bf16.mxu0 0
        %3396 = vmatpush2.bf16.msra.mxu0 0
        %3397 = vmatprep.subr.bf16.mxu0 0
        %3398 = vmatpush2.bf16.msra.mxu0 0
        %3399 = vmatprep.subr.bf16.mxu0 %v3311
        %3400 = vmatpush2.bf16.msra.mxu0 %v3310
        %3401 = vmatprep.subr.bf16.mxu0 %v3309
        %3402 = vmatpush2.bf16.msra.mxu0 %v3308
        %3403 = vmatprep.subr.bf16.mxu0 %v3307
        %3404 = vmatpush2.bf16.msra.mxu0 %v3306
        %3405 = vmatprep.subr.bf16.mxu0 %v3305
        %3406 = vmatpush2.bf16.msra.mxu0 %v3304
        %3407 = vmatprep.subr.bf16.mxu0 %v3303
        %3408 = vmatpush2.bf16.msra.mxu0 %v3302
        %3409 = vmatprep.mubr.bf16.mxu0 %v3339
        %3410 = vmatmul.mubr.bf16.gmra.mxu0 %v3312
        %v3411 = vpop.f32.mrf.mxu0
        %v3412 = vadd.f32 %v1684, %v3411
        %v3413 = vpop.f32.mrf.mxu0
        %v3414 = vadd.f32 %v1688, %v3413
        %v3415 = vpop.f32.mrf.mxu0
        %v3416 = vadd.f32 %v1684, %v3415
        %v3417 = vpop.f32.mrf.mxu0
        %v3418 = vadd.f32 %v1688, %v3417
        %3419 = vmatprep.mubr.bf16.mxu0 %v3342
        %3420 = vmatmul.mubr.bf16.gmra.mxu0 %v3314
        %v3421 = vpop.f32.mrf.mxu0
        %v3422 = vadd.f32 %v1684, %v3421
        %v3423 = vpop.f32.mrf.mxu0
        %v3424 = vadd.f32 %v1688, %v3423
        %v3425 = vpop.f32.mrf.mxu0
        %v3426 = vadd.f32 %v1684, %v3425
        %v3427 = vpop.f32.mrf.mxu0
        %v3428 = vadd.f32 %v1688, %v3427
        %3429 = vmatprep.mubr.bf16.mxu0 %v3345
        %3430 = vmatmul.mubr.bf16.gmra.mxu0 %v3316
        %v3431 = vpop.f32.mrf.mxu0
        %v3432 = vadd.f32 %v1684, %v3431
        %v3433 = vpop.f32.mrf.mxu0
        %v3434 = vadd.f32 %v1688, %v3433
        %v3435 = vpop.f32.mrf.mxu0
        %v3436 = vadd.f32 %v1684, %v3435
        %v3437 = vpop.f32.mrf.mxu0
        %v3438 = vadd.f32 %v1688, %v3437
        %3439 = vmatprep.mubr.bf16.mxu0 %v3348
        %3440 = vmatmul.mubr.bf16.gmra.mxu0 %v3318
        %v3441 = vpop.f32.mrf.mxu0
        %v3442 = vadd.f32 %v1684, %v3441
        %v3443 = vpop.f32.mrf.mxu0
        %v3444 = vadd.f32 %v1688, %v3443
        %v3445 = vpop.f32.mrf.mxu0
        %v3446 = vadd.f32 %v1684, %v3445
        %v3447 = vpop.f32.mrf.mxu0
        %v3448 = vadd.f32 %v1688, %v3447
        %3449 = vmatprep.mubr.bf16.mxu0 %v3351
        %3450 = vmatmul.mubr.bf16.gmra.mxu0 %v3320
        %v3451 = vpop.f32.mrf.mxu0
        %v3452 = vadd.f32 %v1684, %v3451
        %v3453 = vpop.f32.mrf.mxu0
        %v3454 = vadd.f32 %v1688, %v3453
        %v3455 = vpop.f32.mrf.mxu0
        %v3456 = vadd.f32 %v1684, %v3455
        %v3457 = vpop.f32.mrf.mxu0
        %v3458 = vadd.f32 %v1688, %v3457
        %3459 = vmatprep.mubr.bf16.mxu0 %v3354
        %3460 = vmatmul.mubr.bf16.gmra.mxu0 %v3322
        %v3461 = vpop.f32.mrf.mxu0
        %v3462 = vadd.f32 %v1684, %v3461
        %v3463 = vpop.f32.mrf.mxu0
        %v3464 = vadd.f32 %v1688, %v3463
        %v3465 = vpop.f32.mrf.mxu0
        %v3466 = vadd.f32 %v1684, %v3465
        %v3467 = vpop.f32.mrf.mxu0
        %v3468 = vadd.f32 %v1688, %v3467
        %3469 = vmatprep.mubr.bf16.mxu0 %v3357
        %3470 = vmatmul.mubr.bf16.gmra.mxu0 %v3324
        %v3471 = vpop.f32.mrf.mxu0
        %v3472 = vadd.f32 %v1684, %v3471
        %v3473 = vpop.f32.mrf.mxu0
        %v3474 = vadd.f32 %v1688, %v3473
        %v3475 = vpop.f32.mrf.mxu0
        %v3476 = vadd.f32 %v1684, %v3475
        %v3477 = vpop.f32.mrf.mxu0
        %v3478 = vadd.f32 %v1688, %v3477
        %3479 = vmatprep.mubr.bf16.mxu0 %v3360
        %3480 = vmatmul.mubr.bf16.gmra.mxu0 %v3326
        %v3481 = vpop.f32.mrf.mxu0
        %v3482 = vadd.f32 %v1684, %v3481
        %v3483 = vpop.f32.mrf.mxu0
        %v3484 = vadd.f32 %v1688, %v3483
        %v3485 = vpop.f32.mrf.mxu0
        %v3486 = vadd.f32 %v1684, %v3485
        %v3487 = vpop.f32.mrf.mxu0
        %v3488 = vadd.f32 %v1688, %v3487
        %3489 = vmatprep.mubr.bf16.mxu0 %v3363
        %3490 = vmatmul.mubr.bf16.gmra.mxu0 %v3328
        %v3491 = vpop.f32.mrf.mxu0
        %v3492 = vadd.f32 %v1684, %v3491
        %v3493 = vpop.f32.mrf.mxu0
        %v3494 = vadd.f32 %v1688, %v3493
        %v3495 = vpop.f32.mrf.mxu0
        %v3496 = vadd.f32 %v1684, %v3495
        %v3497 = vpop.f32.mrf.mxu0
        %v3498 = vadd.f32 %v1688, %v3497
        %3499 = vmatprep.mubr.bf16.mxu0 %v3366
        %3500 = vmatmul.mubr.bf16.gmra.mxu0 %v3330
        %v3501 = vpop.f32.mrf.mxu0
        %v3502 = vadd.f32 %v1684, %v3501
        %v3503 = vpop.f32.mrf.mxu0
        %v3504 = vadd.f32 %v1688, %v3503
        %v3505 = vpop.f32.mrf.mxu0
        %v3506 = vadd.f32 %v1684, %v3505
        %v3507 = vpop.f32.mrf.mxu0
        %v3508 = vadd.f32 %v1688, %v3507
        %3509 = vmatprep.mubr.bf16.mxu0 %v3369
        %3510 = vmatmul.mubr.bf16.gmra.mxu0 %v3332
        %v3511 = vpop.f32.mrf.mxu0
        %v3512 = vadd.f32 %v1684, %v3511
        %v3513 = vpop.f32.mrf.mxu0
        %v3514 = vadd.f32 %v1688, %v3513
        %v3515 = vpop.f32.mrf.mxu0
        %v3516 = vadd.f32 %v1684, %v3515
        %v3517 = vpop.f32.mrf.mxu0
        %v3518 = vadd.f32 %v1688, %v3517
        %3519 = vmatprep.mubr.bf16.mxu0 %v3372
        %3520 = vmatmul.mubr.bf16.gmra.mxu0 %v3334
        %v3521 = vpop.f32.mrf.mxu0
        %v3522 = vadd.f32 %v1684, %v3521
        %v3523 = vpop.f32.mrf.mxu0
        %v3524 = vadd.f32 %v1688, %v3523
        %v3525 = vpop.f32.mrf.mxu0
        %v3526 = vadd.f32 %v1684, %v3525
        %v3527 = vpop.f32.mrf.mxu0
        %v3528 = vadd.f32 %v1688, %v3527
        %3529 = vmatprep.mubr.bf16.mxu0 %v3375
        %3530 = vmatmul.mubr.bf16.gmra.mxu0 %v3336
        %v3531 = vpop.f32.mrf.mxu0
        %v3532 = vadd.f32 %v1684, %v3531
        %v3533 = vpop.f32.mrf.mxu0
        %v3534 = vadd.f32 %v1688, %v3533
        %v3535 = vpop.f32.mrf.mxu0
        %v3536 = vadd.f32 %v1684, %v3535
        %v3537 = vpop.f32.mrf.mxu0
        %v3538 = vadd.f32 %v1688, %v3537
        %3539 = vdwg.mxu0
        %v3540 = vadd.f32 %v3412, %v3414
        %3541 = vadd.xlane.f32.xlu0 %v3540
        %v3542 = vpop.xlane.xlu0 %3541
        %v3543 = vadd.f32 %v3416, %v3418
        %3544 = vadd.xlane.f32.xlu0 %v3543
        %v3545 = vpop.xlane.xlu0 %3544
        %v3546 = vadd.f32 %v3422, %v3424
        %3547 = vadd.xlane.f32.xlu0 %v3546
        %v3548 = vpop.xlane.xlu0 %3547
        %v3549 = vadd.f32 %v3426, %v3428
        %3550 = vadd.xlane.f32.xlu0 %v3549
        %v3551 = vpop.xlane.xlu0 %3550
        %v3552 = vadd.f32 %v3432, %v3434
        %3553 = vadd.xlane.f32.xlu0 %v3552
        %v3554 = vpop.xlane.xlu0 %3553
        %v3555 = vadd.f32 %v3436, %v3438
        %3556 = vadd.xlane.f32.xlu0 %v3555
        %v3557 = vpop.xlane.xlu0 %3556
        %v3558 = vadd.f32 %v3442, %v3444
        %3559 = vadd.xlane.f32.xlu0 %v3558
        %v3560 = vpop.xlane.xlu0 %3559
        %v3561 = vadd.f32 %v3446, %v3448
        %3562 = vadd.xlane.f32.xlu0 %v3561
        %v3563 = vpop.xlane.xlu0 %3562
        %v3564 = vadd.f32 %v3452, %v3454
        %3565 = vadd.xlane.f32.xlu0 %v3564
        %v3566 = vpop.xlane.xlu0 %3565
        %v3567 = vadd.f32 %v3456, %v3458
        %3568 = vadd.xlane.f32.xlu0 %v3567
        %v3569 = vpop.xlane.xlu0 %3568
        %v3570 = vadd.f32 %v3462, %v3464
        %3571 = vadd.xlane.f32.xlu0 %v3570
        %v3572 = vpop.xlane.xlu0 %3571
        %v3573 = vadd.f32 %v3466, %v3468
        %3574 = vadd.xlane.f32.xlu0 %v3573
        %v3575 = vpop.xlane.xlu0 %3574
        %v3576 = vadd.f32 %v3472, %v3474
        %3577 = vadd.xlane.f32.xlu0 %v3576
        %v3578 = vpop.xlane.xlu0 %3577
        %v3579 = vadd.f32 %v3476, %v3478
        %3580 = vadd.xlane.f32.xlu0 %v3579
        %v3581 = vpop.xlane.xlu0 %3580
        %v3582 = vadd.f32 %v3482, %v3484
        %3583 = vadd.xlane.f32.xlu0 %v3582
        %v3584 = vpop.xlane.xlu0 %3583
        %v3585 = vadd.f32 %v3486, %v3488
        %3586 = vadd.xlane.f32.xlu0 %v3585
        %v3587 = vpop.xlane.xlu0 %3586
        %v3588 = vadd.f32 %v3492, %v3494
        %3589 = vadd.xlane.f32.xlu0 %v3588
        %v3590 = vpop.xlane.xlu0 %3589
        %v3591 = vadd.f32 %v3496, %v3498
        %3592 = vadd.xlane.f32.xlu0 %v3591
        %v3593 = vpop.xlane.xlu0 %3592
        %v3594 = vadd.f32 %v3502, %v3504
        %3595 = vadd.xlane.f32.xlu0 %v3594
        %v3596 = vpop.xlane.xlu0 %3595
        %v3597 = vadd.f32 %v3506, %v3508
        %3598 = vadd.xlane.f32.xlu0 %v3597
        %v3599 = vpop.xlane.xlu0 %3598
        %v3600 = vadd.f32 %v3512, %v3514
        %3601 = vadd.xlane.f32.xlu0 %v3600
        %v3602 = vpop.xlane.xlu0 %3601
        %v3603 = vadd.f32 %v3516, %v3518
        %3604 = vadd.xlane.f32.xlu0 %v3603
        %v3605 = vpop.xlane.xlu0 %3604
        %v3606 = vadd.f32 %v3522, %v3524
        %3607 = vadd.xlane.f32.xlu0 %v3606
        %v3608 = vpop.xlane.xlu0 %3607
        %v3609 = vadd.f32 %v3526, %v3528
        %3610 = vadd.xlane.f32.xlu0 %v3609
        %v3611 = vpop.xlane.xlu0 %3610
        %v3612 = vadd.f32 %v3532, %v3534
        %3613 = vadd.xlane.f32.xlu0 %v3612
        %v3614 = vpop.xlane.xlu0 %3613
        %v3615 = vadd.f32 %v3536, %v3538
        %3616 = vadd.xlane.f32.xlu0 %v3615
        %v3617 = vpop.xlane.xlu0 %3616
        %v3618 = vmul.f32 %v3542, %v1971
        %v3619 = vmul.f32 %v3545, %v1971
        %v3620 = vmul.f32 %v3548, %v1971
        %v3621 = vmul.f32 %v3551, %v1971
        %v3622 = vmul.f32 %v3554, %v1971
        %v3623 = vmul.f32 %v3557, %v1971
        %v3624 = vmul.f32 %v3560, %v1971
        %v3625 = vmul.f32 %v3563, %v1971
        %v3626 = vmul.f32 %v3566, %v1971
        %v3627 = vmul.f32 %v3569, %v1971
        %v3628 = vmul.f32 %v3572, %v1971
        %v3629 = vmul.f32 %v3575, %v1971
        %v3630 = vmul.f32 %v3578, %v1971
        %v3631 = vmul.f32 %v3581, %v1971
        %v3632 = vmul.f32 %v3584, %v1971
        %v3633 = vmul.f32 %v3587, %v1971
        %v3634 = vmul.f32 %v3590, %v1971
        %v3635 = vmul.f32 %v3593, %v1971
        %v3636 = vmul.f32 %v3596, %v1971
        %v3637 = vmul.f32 %v3599, %v1971
        %v3638 = vmul.f32 %v3602, %v1971
        %v3639 = vmul.f32 %v3605, %v1971
        %v3640 = vmul.f32 %v3608, %v1971
        %v3641 = vmul.f32 %v3611, %v1971
        %v3642 = vmul.f32 %v3614, %v1971
        %v3643 = vmul.f32 %v3617, %v1971
        %v3644 = vsub.f32 %v3412, %v3618
        %v3645 = vsub.f32 %v3414, %v3618
        %v3646 = vsub.f32 %v3416, %v3619
        %v3647 = vsub.f32 %v3418, %v3619
        %v3648 = vsub.f32 %v3422, %v3620
        %v3649 = vsub.f32 %v3424, %v3620
        %v3650 = vsub.f32 %v3426, %v3621
        %v3651 = vsub.f32 %v3428, %v3621
        %v3652 = vsub.f32 %v3432, %v3622
        %v3653 = vsub.f32 %v3434, %v3622
        %v3654 = vsub.f32 %v3436, %v3623
        %v3655 = vsub.f32 %v3438, %v3623
        %v3656 = vsub.f32 %v3442, %v3624
        %v3657 = vsub.f32 %v3444, %v3624
        %v3658 = vsub.f32 %v3446, %v3625
        %v3659 = vsub.f32 %v3448, %v3625
        %v3660 = vsub.f32 %v3452, %v3626
        %v3661 = vsub.f32 %v3454, %v3626
        %v3662 = vsub.f32 %v3456, %v3627
        %v3663 = vsub.f32 %v3458, %v3627
        %v3664 = vsub.f32 %v3462, %v3628
        %v3665 = vsub.f32 %v3464, %v3628
        %v3666 = vsub.f32 %v3466, %v3629
        %v3667 = vsub.f32 %v3468, %v3629
        %v3668 = vsub.f32 %v3472, %v3630
        %v3669 = vsub.f32 %v3474, %v3630
        %v3670 = vsub.f32 %v3476, %v3631
        %v3671 = vsub.f32 %v3478, %v3631
        %v3672 = vsub.f32 %v3482, %v3632
        %v3673 = vsub.f32 %v3484, %v3632
        %v3674 = vsub.f32 %v3486, %v3633
        %v3675 = vsub.f32 %v3488, %v3633
        %v3676 = vsub.f32 %v3492, %v3634
        %v3677 = vsub.f32 %v3494, %v3634
        %v3678 = vsub.f32 %v3496, %v3635
        %v3679 = vsub.f32 %v3498, %v3635
        %v3680 = vsub.f32 %v3502, %v3636
        %v3681 = vsub.f32 %v3504, %v3636
        %v3682 = vsub.f32 %v3506, %v3637
        %v3683 = vsub.f32 %v3508, %v3637
        %v3684 = vsub.f32 %v3512, %v3638
        %v3685 = vsub.f32 %v3514, %v3638
        %v3686 = vsub.f32 %v3516, %v3639
        %v3687 = vsub.f32 %v3518, %v3639
        %v3688 = vsub.f32 %v3522, %v3640
        %v3689 = vsub.f32 %v3524, %v3640
        %v3690 = vsub.f32 %v3526, %v3641
        %v3691 = vsub.f32 %v3528, %v3641
        %v3692 = vsub.f32 %v3532, %v3642
        %v3693 = vsub.f32 %v3534, %v3642
        %v3694 = vsub.f32 %v3536, %v3643
        %v3695 = vsub.f32 %v3538, %v3643
        %v3696 = vmul.f32 %v3644, %v3644
        %v3697 = vmul.f32 %v3645, %v3645
        %v3698 = vmul.f32 %v3646, %v3646
        %v3699 = vmul.f32 %v3647, %v3647
        %v3700 = vmul.f32 %v3648, %v3648
        %v3701 = vmul.f32 %v3649, %v3649
        %v3702 = vmul.f32 %v3650, %v3650
        %v3703 = vmul.f32 %v3651, %v3651
        %v3704 = vmul.f32 %v3652, %v3652
        %v3705 = vmul.f32 %v3653, %v3653
        %v3706 = vmul.f32 %v3654, %v3654
        %v3707 = vmul.f32 %v3655, %v3655
        %v3708 = vmul.f32 %v3656, %v3656
        %v3709 = vmul.f32 %v3657, %v3657
        %v3710 = vmul.f32 %v3658, %v3658
        %v3711 = vmul.f32 %v3659, %v3659
        %v3712 = vmul.f32 %v3660, %v3660
        %v3713 = vmul.f32 %v3661, %v3661
        %v3714 = vmul.f32 %v3662, %v3662
        %v3715 = vmul.f32 %v3663, %v3663
        %v3716 = vmul.f32 %v3664, %v3664
        %v3717 = vmul.f32 %v3665, %v3665
        %v3718 = vmul.f32 %v3666, %v3666
        %v3719 = vmul.f32 %v3667, %v3667
        %v3720 = vmul.f32 %v3668, %v3668
        %v3721 = vmul.f32 %v3669, %v3669
        %v3722 = vmul.f32 %v3670, %v3670
        %v3723 = vmul.f32 %v3671, %v3671
        %v3724 = vmul.f32 %v3672, %v3672
        %v3725 = vmul.f32 %v3673, %v3673
        %v3726 = vmul.f32 %v3674, %v3674
        %v3727 = vmul.f32 %v3675, %v3675
        %v3728 = vmul.f32 %v3676, %v3676
        %v3729 = vmul.f32 %v3677, %v3677
        %v3730 = vmul.f32 %v3678, %v3678
        %v3731 = vmul.f32 %v3679, %v3679
        %v3732 = vmul.f32 %v3680, %v3680
        %v3733 = vmul.f32 %v3681, %v3681
        %v3734 = vmul.f32 %v3682, %v3682
        %v3735 = vmul.f32 %v3683, %v3683
        %v3736 = vmul.f32 %v3684, %v3684
        %v3737 = vmul.f32 %v3685, %v3685
        %v3738 = vmul.f32 %v3686, %v3686
        %v3739 = vmul.f32 %v3687, %v3687
        %v3740 = vmul.f32 %v3688, %v3688
        %v3741 = vmul.f32 %v3689, %v3689
        %v3742 = vmul.f32 %v3690, %v3690
        %v3743 = vmul.f32 %v3691, %v3691
        %v3744 = vmul.f32 %v3692, %v3692
        %v3745 = vmul.f32 %v3693, %v3693
        %v3746 = vmul.f32 %v3694, %v3694
        %v3747 = vmul.f32 %v3695, %v3695
        %v3748 = vadd.f32 %v3696, %v3697
        %3749 = vadd.xlane.f32.xlu0 %v3748
        %v3750 = vpop.xlane.xlu0 %3749
        %v3751 = vadd.f32 %v3698, %v3699
        %3752 = vadd.xlane.f32.xlu0 %v3751
        %v3753 = vpop.xlane.xlu0 %3752
        %v3754 = vadd.f32 %v3700, %v3701
        %3755 = vadd.xlane.f32.xlu0 %v3754
        %v3756 = vpop.xlane.xlu0 %3755
        %v3757 = vadd.f32 %v3702, %v3703
        %3758 = vadd.xlane.f32.xlu0 %v3757
        %v3759 = vpop.xlane.xlu0 %3758
        %v3760 = vadd.f32 %v3704, %v3705
        %3761 = vadd.xlane.f32.xlu0 %v3760
        %v3762 = vpop.xlane.xlu0 %3761
        %v3763 = vadd.f32 %v3706, %v3707
        %3764 = vadd.xlane.f32.xlu0 %v3763
        %v3765 = vpop.xlane.xlu0 %3764
        %v3766 = vadd.f32 %v3708, %v3709
        %3767 = vadd.xlane.f32.xlu0 %v3766
        %v3768 = vpop.xlane.xlu0 %3767
        %v3769 = vadd.f32 %v3710, %v3711
        %3770 = vadd.xlane.f32.xlu0 %v3769
        %v3771 = vpop.xlane.xlu0 %3770
        %v3772 = vadd.f32 %v3712, %v3713
        %3773 = vadd.xlane.f32.xlu0 %v3772
        %v3774 = vpop.xlane.xlu0 %3773
        %v3775 = vadd.f32 %v3714, %v3715
        %3776 = vadd.xlane.f32.xlu0 %v3775
        %v3777 = vpop.xlane.xlu0 %3776
        %v3778 = vadd.f32 %v3716, %v3717
        %3779 = vadd.xlane.f32.xlu0 %v3778
        %v3780 = vpop.xlane.xlu0 %3779
        %v3781 = vadd.f32 %v3718, %v3719
        %3782 = vadd.xlane.f32.xlu0 %v3781
        %v3783 = vpop.xlane.xlu0 %3782
        %v3784 = vadd.f32 %v3720, %v3721
        %3785 = vadd.xlane.f32.xlu0 %v3784
        %v3786 = vpop.xlane.xlu0 %3785
        %v3787 = vadd.f32 %v3722, %v3723
        %3788 = vadd.xlane.f32.xlu0 %v3787
        %v3789 = vpop.xlane.xlu0 %3788
        %v3790 = vadd.f32 %v3724, %v3725
        %3791 = vadd.xlane.f32.xlu0 %v3790
        %v3792 = vpop.xlane.xlu0 %3791
        %v3793 = vadd.f32 %v3726, %v3727
        %3794 = vadd.xlane.f32.xlu0 %v3793
        %v3795 = vpop.xlane.xlu0 %3794
        %v3796 = vadd.f32 %v3728, %v3729
        %3797 = vadd.xlane.f32.xlu0 %v3796
        %v3798 = vpop.xlane.xlu0 %3797
        %v3799 = vadd.f32 %v3730, %v3731
        %3800 = vadd.xlane.f32.xlu0 %v3799
        %v3801 = vpop.xlane.xlu0 %3800
        %v3802 = vadd.f32 %v3732, %v3733
        %3803 = vadd.xlane.f32.xlu0 %v3802
        %v3804 = vpop.xlane.xlu0 %3803
        %v3805 = vadd.f32 %v3734, %v3735
        %3806 = vadd.xlane.f32.xlu0 %v3805
        %v3807 = vpop.xlane.xlu0 %3806
        %v3808 = vadd.f32 %v3736, %v3737
        %3809 = vadd.xlane.f32.xlu0 %v3808
        %v3810 = vpop.xlane.xlu0 %3809
        %v3811 = vadd.f32 %v3738, %v3739
        %3812 = vadd.xlane.f32.xlu0 %v3811
        %v3813 = vpop.xlane.xlu0 %3812
        %v3814 = vadd.f32 %v3740, %v3741
        %3815 = vadd.xlane.f32.xlu0 %v3814
        %v3816 = vpop.xlane.xlu0 %3815
        %v3817 = vadd.f32 %v3742, %v3743
        %3818 = vadd.xlane.f32.xlu0 %v3817
        %v3819 = vpop.xlane.xlu0 %3818
        %v3820 = vadd.f32 %v3744, %v3745
        %3821 = vadd.xlane.f32.xlu0 %v3820
        %v3822 = vpop.xlane.xlu0 %3821
        %v3823 = vadd.f32 %v3746, %v3747
        %3824 = vadd.xlane.f32.xlu0 %v3823
        %v3825 = vpop.xlane.xlu0 %3824
        %v3826 = vmul.f32 %v3750, %v1971
        %v3827 = vmul.f32 %v3753, %v1971
        %v3828 = vmul.f32 %v3756, %v1971
        %v3829 = vmul.f32 %v3759, %v1971
        %v3830 = vmul.f32 %v3762, %v1971
        %v3831 = vmul.f32 %v3765, %v1971
        %v3832 = vmul.f32 %v3768, %v1971
        %v3833 = vmul.f32 %v3771, %v1971
        %v3834 = vmul.f32 %v3774, %v1971
        %v3835 = vmul.f32 %v3777, %v1971
        %v3836 = vmul.f32 %v3780, %v1971
        %v3837 = vmul.f32 %v3783, %v1971
        %v3838 = vmul.f32 %v3786, %v1971
        %v3839 = vmul.f32 %v3789, %v1971
        %v3840 = vmul.f32 %v3792, %v1971
        %v3841 = vmul.f32 %v3795, %v1971
        %v3842 = vmul.f32 %v3798, %v1971
        %v3843 = vmul.f32 %v3801, %v1971
        %v3844 = vmul.f32 %v3804, %v1971
        %v3845 = vmul.f32 %v3807, %v1971
        %v3846 = vmul.f32 %v3810, %v1971
        %v3847 = vmul.f32 %v3813, %v1971
        %v3848 = vmul.f32 %v3816, %v1971
        %v3849 = vmul.f32 %v3819, %v1971
        %v3850 = vmul.f32 %v3822, %v1971
        %v3851 = vmul.f32 %v3825, %v1971
        %v3852 = vadd.f32 %v3826, 1e-05
        %v3853 = vadd.f32 %v3827, 1e-05
        %v3854 = vadd.f32 %v3828, 1e-05
        %v3855 = vadd.f32 %v3829, 1e-05
        %v3856 = vadd.f32 %v3830, 1e-05
        %v3857 = vadd.f32 %v3831, 1e-05
        %v3858 = vadd.f32 %v3832, 1e-05
        %v3859 = vadd.f32 %v3833, 1e-05
        %v3860 = vadd.f32 %v3834, 1e-05
        %v3861 = vadd.f32 %v3835, 1e-05
        %v3862 = vadd.f32 %v3836, 1e-05
        %v3863 = vadd.f32 %v3837, 1e-05
        %v3864 = vadd.f32 %v3838, 1e-05
        %v3865 = vadd.f32 %v3839, 1e-05
        %v3866 = vadd.f32 %v3840, 1e-05
        %v3867 = vadd.f32 %v3841, 1e-05
        %v3868 = vadd.f32 %v3842, 1e-05
        %v3869 = vadd.f32 %v3843, 1e-05
        %v3870 = vadd.f32 %v3844, 1e-05
        %v3871 = vadd.f32 %v3845, 1e-05
        %v3872 = vadd.f32 %v3846, 1e-05
        %v3873 = vadd.f32 %v3847, 1e-05
        %v3874 = vadd.f32 %v3848, 1e-05
        %v3875 = vadd.f32 %v3849, 1e-05
        %v3876 = vadd.f32 %v3850, 1e-05
        %v3877 = vadd.f32 %v3851, 1e-05
        %v3878 = vrsqrt.pop %v3852
        %v3879 = vrsqrt.pop %v3853
        %v3880 = vrsqrt.pop %v3854
        %v3881 = vrsqrt.pop %v3855
        %v3882 = vrsqrt.pop %v3856
        %v3883 = vrsqrt.pop %v3857
        %v3884 = vrsqrt.pop %v3858
        %v3885 = vrsqrt.pop %v3859
        %v3886 = vrsqrt.pop %v3860
        %v3887 = vrsqrt.pop %v3861
        %v3888 = vrsqrt.pop %v3862
        %v3889 = vrsqrt.pop %v3863
        %v3890 = vrsqrt.pop %v3864
        %v3891 = vrsqrt.pop %v3865
        %v3892 = vrsqrt.pop %v3866
        %v3893 = vrsqrt.pop %v3867
        %v3894 = vrsqrt.pop %v3868
        %v3895 = vrsqrt.pop %v3869
        %v3896 = vrsqrt.pop %v3870
        %v3897 = vrsqrt.pop %v3871
        %v3898 = vrsqrt.pop %v3872
        %v3899 = vrsqrt.pop %v3873
        %v3900 = vrsqrt.pop %v3874
        %v3901 = vrsqrt.pop %v3875
        %v3902 = vrsqrt.pop %v3876
        %v3903 = vrsqrt.pop %v3877
        %v3904 = vmul.f32 %v3644, %v3878
        %v3905 = vmul.f32 %v3645, %v3878
        %v3906 = vmul.f32 %v3646, %v3879
        %v3907 = vmul.f32 %v3647, %v3879
        %v3908 = vmul.f32 %v3648, %v3880
        %v3909 = vmul.f32 %v3649, %v3880
        %v3910 = vmul.f32 %v3650, %v3881
        %v3911 = vmul.f32 %v3651, %v3881
        %v3912 = vmul.f32 %v3652, %v3882
        %v3913 = vmul.f32 %v3653, %v3882
        %v3914 = vmul.f32 %v3654, %v3883
        %v3915 = vmul.f32 %v3655, %v3883
        %v3916 = vmul.f32 %v3656, %v3884
        %v3917 = vmul.f32 %v3657, %v3884
        %v3918 = vmul.f32 %v3658, %v3885
        %v3919 = vmul.f32 %v3659, %v3885
        %v3920 = vmul.f32 %v3660, %v3886
        %v3921 = vmul.f32 %v3661, %v3886
        %v3922 = vmul.f32 %v3662, %v3887
        %v3923 = vmul.f32 %v3663, %v3887
        %v3924 = vmul.f32 %v3664, %v3888
        %v3925 = vmul.f32 %v3665, %v3888
        %v3926 = vmul.f32 %v3666, %v3889
        %v3927 = vmul.f32 %v3667, %v3889
        %v3928 = vmul.f32 %v3668, %v3890
        %v3929 = vmul.f32 %v3669, %v3890
        %v3930 = vmul.f32 %v3670, %v3891
        %v3931 = vmul.f32 %v3671, %v3891
        %v3932 = vmul.f32 %v3672, %v3892
        %v3933 = vmul.f32 %v3673, %v3892
        %v3934 = vmul.f32 %v3674, %v3893
        %v3935 = vmul.f32 %v3675, %v3893
        %v3936 = vmul.f32 %v3676, %v3894
        %v3937 = vmul.f32 %v3677, %v3894
        %v3938 = vmul.f32 %v3678, %v3895
        %v3939 = vmul.f32 %v3679, %v3895
        %v3940 = vmul.f32 %v3680, %v3896
        %v3941 = vmul.f32 %v3681, %v3896
        %v3942 = vmul.f32 %v3682, %v3897
        %v3943 = vmul.f32 %v3683, %v3897
        %v3944 = vmul.f32 %v3684, %v3898
        %v3945 = vmul.f32 %v3685, %v3898
        %v3946 = vmul.f32 %v3686, %v3899
        %v3947 = vmul.f32 %v3687, %v3899
        %v3948 = vmul.f32 %v3688, %v3900
        %v3949 = vmul.f32 %v3689, %v3900
        %v3950 = vmul.f32 %v3690, %v3901
        %v3951 = vmul.f32 %v3691, %v3901
        %v3952 = vmul.f32 %v3692, %v3902
        %v3953 = vmul.f32 %v3693, %v3902
        %v3954 = vmul.f32 %v3694, %v3903
        %v3955 = vmul.f32 %v3695, %v3903
        %v3956 = vlaneseq
        %v3957 = vshrl.u32 %v3956, 7
        %v3958 = vadd.s32 %v3957, 8
        %v3959 = vadd.s32 %v3957, 16
        %v3960 = vadd.s32 %v3957, 24
        %v3961 = vadd.s32 %v3957, 32
        %v3962 = vadd.s32 %v3957, 40
        %v3963 = vadd.s32 %v3957, 48
        %v3964 = vadd.s32 %v3957, 56
        %v3965 = vadd.s32 %v3957, 64
        %v3966 = vadd.s32 %v3957, 72
        %v3967 = vadd.s32 %v3957, 80
        %v3968 = vadd.s32 %v3957, 88
        %v3969 = vadd.s32 %v3957, 96
        %v3970 = vadd.s32 %v3957, 104
        %v3971 = vadd.s32 %v3957, 112
        %v3972 = vadd.s32 %v3957, 120
        %v3973 = vadd.s32 %v3957, 128
        %v3974 = vadd.s32 %v3957, 136
        %v3975 = vadd.s32 %v3957, 144
        %v3976 = vadd.s32 %v3957, 152
        %v3977 = vadd.s32 %v3957, 160
        %v3978 = vadd.s32 %v3957, 168
        %v3979 = vadd.s32 %v3957, 176
        %v3980 = vadd.s32 %v3957, 184
        %v3981 = vadd.s32 %v3957, 192
        %v3982 = vadd.s32 %v3957, 200
        %vm3983 = vcmp.lt.s32.totalorder %v3957, 202
        %vm3984 = vcmp.lt.s32.totalorder %v3958, 202
        %vm3985 = vcmp.lt.s32.totalorder %v3959, 202
        %vm3986 = vcmp.lt.s32.totalorder %v3960, 202
        %vm3987 = vcmp.lt.s32.totalorder %v3961, 202
        %vm3988 = vcmp.lt.s32.totalorder %v3962, 202
        %vm3989 = vcmp.lt.s32.totalorder %v3963, 202
        %vm3990 = vcmp.lt.s32.totalorder %v3964, 202
        %vm3991 = vcmp.lt.s32.totalorder %v3965, 202
        %vm3992 = vcmp.lt.s32.totalorder %v3966, 202
        %vm3993 = vcmp.lt.s32.totalorder %v3967, 202
        %vm3994 = vcmp.lt.s32.totalorder %v3968, 202
        %vm3995 = vcmp.lt.s32.totalorder %v3969, 202
        %vm3996 = vcmp.lt.s32.totalorder %v3970, 202
        %vm3997 = vcmp.lt.s32.totalorder %v3971, 202
        %vm3998 = vcmp.lt.s32.totalorder %v3972, 202
        %vm3999 = vcmp.lt.s32.totalorder %v3973, 202
        %vm4000 = vcmp.lt.s32.totalorder %v3974, 202
        %vm4001 = vcmp.lt.s32.totalorder %v3975, 202
        %vm4002 = vcmp.lt.s32.totalorder %v3976, 202
        %vm4003 = vcmp.lt.s32.totalorder %v3977, 202
        %vm4004 = vcmp.lt.s32.totalorder %v3978, 202
        %vm4005 = vcmp.lt.s32.totalorder %v3979, 202
        %vm4006 = vcmp.lt.s32.totalorder %v3980, 202
        %vm4007 = vcmp.lt.s32.totalorder %v3981, 202
        %vm4008 = vcmp.lt.s32.totalorder %v3982, 202
        %v4009 = vsub.f32 %v2258, %v3904
        %v4010 = vsub.f32 %v2259, %v3905
        %v4011 = vsub.f32 %v2260, %v3906
        %v4012 = vsub.f32 %v2261, %v3907
        %v4013 = vsub.f32 %v2262, %v3908
        %v4014 = vsub.f32 %v2263, %v3909
        %v4015 = vsub.f32 %v2264, %v3910
        %v4016 = vsub.f32 %v2265, %v3911
        %v4017 = vsub.f32 %v2266, %v3912
        %v4018 = vsub.f32 %v2267, %v3913
        %v4019 = vsub.f32 %v2268, %v3914
        %v4020 = vsub.f32 %v2269, %v3915
        %v4021 = vsub.f32 %v2270, %v3916
        %v4022 = vsub.f32 %v2271, %v3917
        %v4023 = vsub.f32 %v2272, %v3918
        %v4024 = vsub.f32 %v2273, %v3919
        %v4025 = vsub.f32 %v2274, %v3920
        %v4026 = vsub.f32 %v2275, %v3921
        %v4027 = vsub.f32 %v2276, %v3922
        %v4028 = vsub.f32 %v2277, %v3923
        %v4029 = vsub.f32 %v2278, %v3924
        %v4030 = vsub.f32 %v2279, %v3925
        %v4031 = vsub.f32 %v2280, %v3926
        %v4032 = vsub.f32 %v2281, %v3927
        %v4033 = vsub.f32 %v2282, %v3928
        %v4034 = vsub.f32 %v2283, %v3929
        %v4035 = vsub.f32 %v2284, %v3930
        %v4036 = vsub.f32 %v2285, %v3931
        %v4037 = vsub.f32 %v2286, %v3932
        %v4038 = vsub.f32 %v2287, %v3933
        %v4039 = vsub.f32 %v2288, %v3934
        %v4040 = vsub.f32 %v2289, %v3935
        %v4041 = vsub.f32 %v2290, %v3936
        %v4042 = vsub.f32 %v2291, %v3937
        %v4043 = vsub.f32 %v2292, %v3938
        %v4044 = vsub.f32 %v2293, %v3939
        %v4045 = vsub.f32 %v2294, %v3940
        %v4046 = vsub.f32 %v2295, %v3941
        %v4047 = vsub.f32 %v2296, %v3942
        %v4048 = vsub.f32 %v2297, %v3943
        %v4049 = vsub.f32 %v2298, %v3944
        %v4050 = vsub.f32 %v2299, %v3945
        %v4051 = vsub.f32 %v2300, %v3946
        %v4052 = vsub.f32 %v2301, %v3947
        %v4053 = vsub.f32 %v2302, %v3948
        %v4054 = vsub.f32 %v2303, %v3949
        %v4055 = vsub.f32 %v2304, %v3950
        %v4056 = vsub.f32 %v2305, %v3951
        %v4057 = vsub.f32 %v2306, %v3952
        %v4058 = vsub.f32 %v2307, %v3953
        %v4059 = vsub.f32 %v2308, %v3954
        %v4060 = vsub.f32 %v2309, %v3955
        %v4061 = vsel %vm3983, 1, 0
        %v4062 = vsel %vm3984, 1, 0
        %v4063 = vsel %vm3985, 1, 0
        %v4064 = vsel %vm3986, 1, 0
        %v4065 = vsel %vm3987, 1, 0
        %v4066 = vsel %vm3988, 1, 0
        %v4067 = vsel %vm3989, 1, 0
        %v4068 = vsel %vm3990, 1, 0
        %v4069 = vsel %vm3991, 1, 0
        %v4070 = vsel %vm3992, 1, 0
        %v4071 = vsel %vm3993, 1, 0
        %v4072 = vsel %vm3994, 1, 0
        %v4073 = vsel %vm3995, 1, 0
        %v4074 = vsel %vm3996, 1, 0
        %v4075 = vsel %vm3997, 1, 0
        %v4076 = vsel %vm3998, 1, 0
        %v4077 = vsel %vm3999, 1, 0
        %v4078 = vsel %vm4000, 1, 0
        %v4079 = vsel %vm4001, 1, 0
        %v4080 = vsel %vm4002, 1, 0
        %v4081 = vsel %vm4003, 1, 0
        %v4082 = vsel %vm4004, 1, 0
        %v4083 = vsel %vm4005, 1, 0
        %v4084 = vsel %vm4006, 1, 0
        %v4085 = vsel %vm4007, 1, 0
        %v4086 = vsel %vm4008, 1, 0
        %vm4087 = vcmp.eq.s32.totalorder %v4061, 1
        %vm4088 = vcmp.eq.s32.totalorder %v4062, 1
        %vm4089 = vcmp.eq.s32.totalorder %v4063, 1
        %vm4090 = vcmp.eq.s32.totalorder %v4064, 1
        %vm4091 = vcmp.eq.s32.totalorder %v4065, 1
        %vm4092 = vcmp.eq.s32.totalorder %v4066, 1
        %vm4093 = vcmp.eq.s32.totalorder %v4067, 1
        %vm4094 = vcmp.eq.s32.totalorder %v4068, 1
        %vm4095 = vcmp.eq.s32.totalorder %v4069, 1
        %vm4096 = vcmp.eq.s32.totalorder %v4070, 1
        %vm4097 = vcmp.eq.s32.totalorder %v4071, 1
        %vm4098 = vcmp.eq.s32.totalorder %v4072, 1
        %vm4099 = vcmp.eq.s32.totalorder %v4073, 1
        %vm4100 = vcmp.eq.s32.totalorder %v4074, 1
        %vm4101 = vcmp.eq.s32.totalorder %v4075, 1
        %vm4102 = vcmp.eq.s32.totalorder %v4076, 1
        %vm4103 = vcmp.eq.s32.totalorder %v4077, 1
        %vm4104 = vcmp.eq.s32.totalorder %v4078, 1
        %vm4105 = vcmp.eq.s32.totalorder %v4079, 1
        %vm4106 = vcmp.eq.s32.totalorder %v4080, 1
        %vm4107 = vcmp.eq.s32.totalorder %v4081, 1
        %vm4108 = vcmp.eq.s32.totalorder %v4082, 1
        %vm4109 = vcmp.eq.s32.totalorder %v4083, 1
        %vm4110 = vcmp.eq.s32.totalorder %v4084, 1
        %vm4111 = vcmp.eq.s32.totalorder %v4085, 1
        %vm4112 = vcmp.eq.s32.totalorder %v4086, 1
        %v4113 = vsel %vm4087, %v4009, 0.0
        %v4114 = vsel %vm4087, %v4010, 0.0
        %v4115 = vsel %vm4088, %v4011, 0.0
        %v4116 = vsel %vm4088, %v4012, 0.0
        %v4117 = vsel %vm4089, %v4013, 0.0
        %v4118 = vsel %vm4089, %v4014, 0.0
        %v4119 = vsel %vm4090, %v4015, 0.0
        %v4120 = vsel %vm4090, %v4016, 0.0
        %v4121 = vsel %vm4091, %v4017, 0.0
        %v4122 = vsel %vm4091, %v4018, 0.0
        %v4123 = vsel %vm4092, %v4019, 0.0
        %v4124 = vsel %vm4092, %v4020, 0.0
        %v4125 = vsel %vm4093, %v4021, 0.0
        %v4126 = vsel %vm4093, %v4022, 0.0
        %v4127 = vsel %vm4094, %v4023, 0.0
        %v4128 = vsel %vm4094, %v4024, 0.0
        %v4129 = vsel %vm4095, %v4025, 0.0
        %v4130 = vsel %vm4095, %v4026, 0.0
        %v4131 = vsel %vm4096, %v4027, 0.0
        %v4132 = vsel %vm4096, %v4028, 0.0
        %v4133 = vsel %vm4097, %v4029, 0.0
        %v4134 = vsel %vm4097, %v4030, 0.0
        %v4135 = vsel %vm4098, %v4031, 0.0
        %v4136 = vsel %vm4098, %v4032, 0.0
        %v4137 = vsel %vm4099, %v4033, 0.0
        %v4138 = vsel %vm4099, %v4034, 0.0
        %v4139 = vsel %vm4100, %v4035, 0.0
        %v4140 = vsel %vm4100, %v4036, 0.0
        %v4141 = vsel %vm4101, %v4037, 0.0
        %v4142 = vsel %vm4101, %v4038, 0.0
        %v4143 = vsel %vm4102, %v4039, 0.0
        %v4144 = vsel %vm4102, %v4040, 0.0
        %v4145 = vsel %vm4103, %v4041, 0.0
        %v4146 = vsel %vm4103, %v4042, 0.0
        %v4147 = vsel %vm4104, %v4043, 0.0
        %v4148 = vsel %vm4104, %v4044, 0.0
        %v4149 = vsel %vm4105, %v4045, 0.0
        %v4150 = vsel %vm4105, %v4046, 0.0
        %v4151 = vsel %vm4106, %v4047, 0.0
        %v4152 = vsel %vm4106, %v4048, 0.0
        %v4153 = vsel %vm4107, %v4049, 0.0
        %v4154 = vsel %vm4107, %v4050, 0.0
        %v4155 = vsel %vm4108, %v4051, 0.0
        %v4156 = vsel %vm4108, %v4052, 0.0
        %v4157 = vsel %vm4109, %v4053, 0.0
        %v4158 = vsel %vm4109, %v4054, 0.0
        %v4159 = vsel %vm4110, %v4055, 0.0
        %v4160 = vsel %vm4110, %v4056, 0.0
        %v4161 = vsel %vm4111, %v4057, 0.0
        %v4162 = vsel %vm4111, %v4058, 0.0
        %v4163 = vsel %vm4112, %v4059, 0.0
        %v4164 = vsel %vm4112, %v4060, 0.0
        %s4165 = sld [smem:[#allocation6]]
        %v4166 = vmul.f32 %v4113, %v4113
        %v4167 = vmul.f32 %v4114, %v4114
        %v4168 = vmul.f32 %v4115, %v4115
        %v4169 = vmul.f32 %v4116, %v4116
        %v4170 = vmul.f32 %v4117, %v4117
        %v4171 = vmul.f32 %v4118, %v4118
        %v4172 = vmul.f32 %v4119, %v4119
        %v4173 = vmul.f32 %v4120, %v4120
        %v4174 = vmul.f32 %v4121, %v4121
        %v4175 = vmul.f32 %v4122, %v4122
        %v4176 = vmul.f32 %v4123, %v4123
        %v4177 = vmul.f32 %v4124, %v4124
        %v4178 = vmul.f32 %v4125, %v4125
        %v4179 = vmul.f32 %v4126, %v4126
        %v4180 = vmul.f32 %v4127, %v4127
        %v4181 = vmul.f32 %v4128, %v4128
        %v4182 = vmul.f32 %v4129, %v4129
        %v4183 = vmul.f32 %v4130, %v4130
        %v4184 = vmul.f32 %v4131, %v4131
        %v4185 = vmul.f32 %v4132, %v4132
        %v4186 = vmul.f32 %v4133, %v4133
        %v4187 = vmul.f32 %v4134, %v4134
        %v4188 = vmul.f32 %v4135, %v4135
        %v4189 = vmul.f32 %v4136, %v4136
        %v4190 = vmul.f32 %v4137, %v4137
        %v4191 = vmul.f32 %v4138, %v4138
        %v4192 = vmul.f32 %v4139, %v4139
        %v4193 = vmul.f32 %v4140, %v4140
        %v4194 = vmul.f32 %v4141, %v4141
        %v4195 = vmul.f32 %v4142, %v4142
        %v4196 = vmul.f32 %v4143, %v4143
        %v4197 = vmul.f32 %v4144, %v4144
        %v4198 = vmul.f32 %v4145, %v4145
        %v4199 = vmul.f32 %v4146, %v4146
        %v4200 = vmul.f32 %v4147, %v4147
        %v4201 = vmul.f32 %v4148, %v4148
        %v4202 = vmul.f32 %v4149, %v4149
        %v4203 = vmul.f32 %v4150, %v4150
        %v4204 = vmul.f32 %v4151, %v4151
        %v4205 = vmul.f32 %v4152, %v4152
        %v4206 = vmul.f32 %v4153, %v4153
        %v4207 = vmul.f32 %v4154, %v4154
        %v4208 = vmul.f32 %v4155, %v4155
        %v4209 = vmul.f32 %v4156, %v4156
        %v4210 = vmul.f32 %v4157, %v4157
        %v4211 = vmul.f32 %v4158, %v4158
        %v4212 = vmul.f32 %v4159, %v4159
        %v4213 = vmul.f32 %v4160, %v4160
        %v4214 = vmul.f32 %v4161, %v4161
        %v4215 = vmul.f32 %v4162, %v4162
        %v4216 = vmul.f32 %v4163, %v4163
        %v4217 = vmul.f32 %v4164, %v4164
        %v4218 = vadd.f32 %v4166, %v4167
        %v4219 = vadd.f32 %v4218, %v4168
        %v4220 = vadd.f32 %v4219, %v4169
        %v4221 = vadd.f32 %v4220, %v4170
        %v4222 = vadd.f32 %v4221, %v4171
        %v4223 = vadd.f32 %v4222, %v4172
        %v4224 = vadd.f32 %v4223, %v4173
        %v4225 = vadd.f32 %v4224, %v4174
        %v4226 = vadd.f32 %v4225, %v4175
        %v4227 = vadd.f32 %v4226, %v4176
        %v4228 = vadd.f32 %v4227, %v4177
        %v4229 = vadd.f32 %v4228, %v4178
        %v4230 = vadd.f32 %v4229, %v4179
        %v4231 = vadd.f32 %v4230, %v4180
        %v4232 = vadd.f32 %v4231, %v4181
        %v4233 = vadd.f32 %v4232, %v4182
        %v4234 = vadd.f32 %v4233, %v4183
        %v4235 = vadd.f32 %v4234, %v4184
        %v4236 = vadd.f32 %v4235, %v4185
        %v4237 = vadd.f32 %v4236, %v4186
        %v4238 = vadd.f32 %v4237, %v4187
        %v4239 = vadd.f32 %v4238, %v4188
        %v4240 = vadd.f32 %v4239, %v4189
        %v4241 = vadd.f32 %v4240, %v4190
        %v4242 = vadd.f32 %v4241, %v4191
        %v4243 = vadd.f32 %v4242, %v4192
        %v4244 = vadd.f32 %v4243, %v4193
        %v4245 = vadd.f32 %v4244, %v4194
        %v4246 = vadd.f32 %v4245, %v4195
        %v4247 = vadd.f32 %v4246, %v4196
        %v4248 = vadd.f32 %v4247, %v4197
        %v4249 = vadd.f32 %v4248, %v4198
        %v4250 = vadd.f32 %v4249, %v4199
        %v4251 = vadd.f32 %v4250, %v4200
        %v4252 = vadd.f32 %v4251, %v4201
        %v4253 = vadd.f32 %v4252, %v4202
        %v4254 = vadd.f32 %v4253, %v4203
        %v4255 = vadd.f32 %v4254, %v4204
        %v4256 = vadd.f32 %v4255, %v4205
        %v4257 = vadd.f32 %v4256, %v4206
        %v4258 = vadd.f32 %v4257, %v4207
        %v4259 = vadd.f32 %v4258, %v4208
        %v4260 = vadd.f32 %v4259, %v4209
        %v4261 = vadd.f32 %v4260, %v4210
        %v4262 = vadd.f32 %v4261, %v4211
        %v4263 = vadd.f32 %v4262, %v4212
        %v4264 = vadd.f32 %v4263, %v4213
        %v4265 = vadd.f32 %v4264, %v4214
        %v4266 = vadd.f32 %v4265, %v4215
        %v4267 = vadd.f32 %v4266, %v4216
        %v4268 = vadd.f32 %v4267, %v4217
        %4269 = vadd.xlane.f32.xlu0 %v4268
        %v4270 = vpop.xlane.xlu0 %4269
        %v4271 = vrot.slane %v4270, 4
        %v4272 = vadd.f32 %v4270, %v4271
        %v4273 = vrot.slane %v4272, 2
        %v4274 = vadd.f32 %v4272, %v4273
        %v4275 = vrot.slane %v4274, 1
        %v4276 = vadd.f32 %v4274, %v4275
        %s4277 = vtos %v4276
        %s4278 = sadd.f32 %s4165, %s4277
        %s4279 = scalar_lea.smem [#allocation6], 0
        %4280 = sst [smem:[%s4279]] %s4278
        %s4281 = smul.u32 %s20, 8
        %s4282 = sshra.s32 %s4281, 3
        %s4283 = sand.u32 %s4281, 7
        %s4284 = smul.u32 %s4282, 2
        %s4285 = smul.addr %s4284, 8
        %s4286 = scalar_lea.vmem [#allocation4], %s4285
        %4287 = vst [vmem:[%s4286] sm:$0xff] %v1889
        %4288 = vst [vmem:[%s4286 + $0x8] sm:$0xff] %v1891
        %s4289 = smul.addr %s4284, 8
        %s4290 = scalar_lea.vmem [#allocation5], %s4289
        %4291 = vst [vmem:[%s4290] sm:$0xff] %v3536
        %4292 = vst [vmem:[%s4290 + $0x8] sm:$0xff] %v3538
        %p4293 = scmp.eq.s32.totalorder %s20, 3
        // Predicated region
        $region57: #{distill_forward.3} parent=51 // pred_check
          %p4294 = pneg %p4293
        $region58: #{distill_forward.3} parent=51 // pred_check_branch
          %4296 = sbr.rel (%p4294) target = $region60
        $region59: #{distill_forward.3} parent=51 // pred_region
          %v4297 = vld [vmem:[#allocation4] sm:$0xff]
          %v4298 = vld [vmem:[#allocation4 + $0x8] sm:$0xff]
          %v4299 = vld [vmem:[#allocation4 + $0x10] sm:$0xff]
          %v4300 = vld [vmem:[#allocation4 + $0x18] sm:$0xff]
          %v4301 = vld [vmem:[#allocation4 + $0x20] sm:$0xff]
          %v4302 = vld [vmem:[#allocation4 + $0x28] sm:$0xff]
          %v4303 = vld [vmem:[#allocation4 + $0x30] sm:$0xff]
          %v4304 = vld [vmem:[#allocation4 + $0x38] sm:$0xff]
          %v4305 = vpack.c.bf16 %v4299, %v4297
          %v4306 = vpack.c.bf16 %v4300, %v4298
          %v4307 = vpack.c.bf16 %v4303, %v4301
          %v4308 = vpack.c.bf16 %v4304, %v4302
          %v4309 = vld [vmem:[#allocation5] sm:$0xff]
          %v4310 = vld [vmem:[#allocation5 + $0x8] sm:$0xff]
          %v4311 = vld [vmem:[#allocation5 + $0x10] sm:$0xff]
          %v4312 = vld [vmem:[#allocation5 + $0x18] sm:$0xff]
          %v4313 = vld [vmem:[#allocation5 + $0x20] sm:$0xff]
          %v4314 = vld [vmem:[#allocation5 + $0x28] sm:$0xff]
          %v4315 = vld [vmem:[#allocation5 + $0x30] sm:$0xff]
          %v4316 = vld [vmem:[#allocation5 + $0x38] sm:$0xff]
          %v4317 = vpack.c.bf16 %v4311, %v4309
          %v4318 = vpack.c.bf16 %v4312, %v4310
          %v4319 = vpack.c.bf16 %v4315, %v4313
          %v4320 = vpack.c.bf16 %v4316, %v4314
          %vm4321 = vcmp.lt.s32.totalorder %v454, 0
          %v4322 = vsub.s32 0, %v454
          %v4323 = vsel %vm4321, %v4322, %v454
          %v4324 = vshrl.u32 %v4323, 3
          %v4325 = vand.u32 %v4323, 7
          %v4326 = vsub.s32 0, %v4325
          %v4327 = vsel %vm4321, %v4326, %v4325
          %vm4328 = vcmp.ne.s32.totalorder %v4327, 0
          %vm4329 = vcmp.lt.s32.totalorder %v4327, 0
          %vm4330 = vmand %vm4329, %vm4328
          %v4331 = vadd.s32 %v4327, 8
          %v4332 = vsel %vm4330, %v4331, %v4327
          %vm4333 = vcmp.lt.s32.totalorder %v4332, 2
          %v4334 = vld [vmem:[%s6] sm:$0xff]
          %v4335 = vld [vmem:[%s6 + $0x8] sm:$0xff]
          %v4336 = vld [vmem:[%s6 + $0x10] sm:$0xff]
          %v4337 = vld [vmem:[%s6 + $0x18] sm:$0xff]
          %v4338 = vld [vmem:[%s6 + $0x20] sm:$0xff]
          %v4339 = vld [vmem:[%s6 + $0x28] sm:$0xff]
          %v4340 = vld [vmem:[%s6 + $0x30] sm:$0xff]
          %v4341 = vld [vmem:[%s6 + $0x38] sm:$0xff]
          %v4342 = vld [vmem:[%s6 + $0x40] sm:$0xff]
          %v4343 = vld [vmem:[%s6 + $0x48] sm:$0xff]
          %v4344 = vld [vmem:[%s6 + $0x50] sm:$0xff]
          %v4345 = vld [vmem:[%s6 + $0x58] sm:$0xff]
          %v4346 = vld [vmem:[%s6 + $0x60] sm:$0xff]
          %v4347 = vld [vmem:[%s6 + $0x68] sm:$0xff]
          %v4348 = vld [vmem:[%s6 + $0x70] sm:$0xff]
          %v4349 = vld [vmem:[%s6 + $0x78] sm:$0xff]
          %v4350 = vld [vmem:[%s6 + $0x80] sm:$0xff]
          %v4351 = vld [vmem:[%s6 + $0x88] sm:$0xff]
          %v4352 = vld [vmem:[%s6 + $0x90] sm:$0xff]
          %v4353 = vld [vmem:[%s6 + $0x98] sm:$0xff]
          %v4354 = vld [vmem:[%s6 + $0xa0] sm:$0xff]
          %v4355 = vld [vmem:[%s6 + $0xa8] sm:$0xff]
          %v4356 = vld [vmem:[%s6 + $0xb0] sm:$0xff]
          %v4357 = vld [vmem:[%s6 + $0xb8] sm:$0xff]
          %v4358 = vld [vmem:[%s6 + $0xc0] sm:$0xff]
          %v4359 = vld [vmem:[%s6 + $0xc8] sm:$0xff]
          %v4360 = vld [vmem:[%s6 + $0xd0] sm:$0xff]
          %v4361 = vld [vmem:[%s6 + $0xd8] sm:$0xff]
          %v4362 = vld [vmem:[%s6 + $0xe0] sm:$0xff]
          %v4363 = vld [vmem:[%s6 + $0xe8] sm:$0xff]
          %v4364 = vld [vmem:[%s6 + $0xf0] sm:$0xff]
          %v4365 = vld [vmem:[%s6 + $0xf8] sm:$0xff]
          %v4366 = vld [vmem:[%s7] sm:$0x3]
          %4367 = vmatprep.subr.bf16.mxu0 0
          %4368 = vmatpush1.bf16.xpose.msra.mxu0 0
          %4369 = vmatprep.subr.bf16.mxu0 0
          %4370 = vmatpush1.bf16.xpose.msra.mxu0 0
          %4371 = vmatprep.subr.bf16.mxu0 0
          %4372 = vmatpush1.bf16.xpose.msra.mxu0 0
          %4373 = vmatprep.subr.bf16.mxu0 0
          %4374 = vmatpush1.bf16.xpose.msra.mxu0 0
          %4375 = vmatprep.subr.bf16.mxu0 0
          %4376 = vmatpush1.bf16.xpose.msra.mxu0 0
          %4377 = vmatprep.subr.bf16.mxu0 0
          %4378 = vmatpush1.bf16.xpose.msra.mxu0 0
          %4379 = vmatprep.subr.bf16.mxu0 %v4308
          %4380 = vmatpush1.bf16.xpose.msra.mxu0 %v4307
          %4381 = vmatprep.subr.bf16.mxu0 %v4306
          %4382 = vmatpush1.bf16.xpose.msra.mxu0 %v4305
          %4383 = vmatprep.subr.bf16.mxu0 0
          %4384 = vmatpush2.bf16.xpose.msra.mxu0 0
          %4385 = vmatprep.subr.bf16.mxu0 0
          %4386 = vmatpush2.bf16.xpose.msra.mxu0 0
          %4387 = vmatprep.subr.bf16.mxu0 0
          %4388 = vmatpush2.bf16.xpose.msra.mxu0 0
          %4389 = vmatprep.subr.bf16.mxu0 0
          %4390 = vmatpush2.bf16.xpose.msra.mxu0 0
          %4391 = vmatprep.subr.bf16.mxu0 0
          %4392 = vmatpush2.bf16.xpose.msra.mxu0 0
          %4393 = vmatprep.subr.bf16.mxu0 0
          %4394 = vmatpush2.bf16.xpose.msra.mxu0 0
          %4395 = vmatprep.subr.bf16.mxu0 0
          %4396 = vmatpush2.bf16.xpose.msra.mxu0 0
          %4397 = vmatprep.subr.bf16.mxu0 0
          %4398 = vmatpush2.bf16.xpose.msra.mxu0 0
          %4399 = vmatprep.mubr.bf16.mxu0 %v4306
          %4400 = vmatmul.mubr.bf16.gmra.mxu0 %v4305
          %v4401 = vpop.f32.mrf.mxu0
          %v4402 = vadd.f32 0.0, %v4401
          %v4403 = vpop.f32.mrf.mxu0
          %v4404 = vpop.f32.mrf.mxu0
          %v4405 = vadd.f32 0.0, %v4404
          %v4406 = vpop.f32.mrf.mxu0
          %4407 = vmatprep.mubr.bf16.mxu0 %v4308
          %4408 = vmatmul.mubr.bf16.gmra.mxu0 %v4307
          %v4409 = vpop.f32.mrf.mxu0
          %v4410 = vadd.f32 0.0, %v4409
          %v4411 = vpop.f32.mrf.mxu0
          %v4412 = vpop.f32.mrf.mxu0
          %v4413 = vadd.f32 0.0, %v4412
          %v4414 = vpop.f32.mrf.mxu0
          %4415 = vdwg.mxu0
          %v4416 = vsel %vm4333, %v4402, -inf
          %v4417 = vsel %vm4333, %v4405, -inf
          %v4418 = vsel %vm4333, %v4410, -inf
          %v4419 = vsel %vm4333, %v4413, -inf
          %vm4420 = vcmask 261120
          %v4421 = vsel %vm4420, %v4416, -inf
          %4422 = vmax.xlane.f32.xlu0 %v4421
          %v4423 = vpop.xlane.xlu0 %4422
          %v4424 = vsel %vm4420, %v4417, -inf
          %4425 = vmax.xlane.f32.xlu0 %v4424
          %v4426 = vpop.xlane.xlu0 %4425
          %v4427 = vsel %vm4420, %v4418, -inf
          %4428 = vmax.xlane.f32.xlu0 %v4427
          %v4429 = vpop.xlane.xlu0 %4428
          %v4430 = vsel %vm4420, %v4419, -inf
          %4431 = vmax.xlane.f32.xlu0 %v4430
          %v4432 = vpop.xlane.xlu0 %4431
          %v4433 = vsub.f32 %v4416, %v4423
          %v4434 = vsub.f32 %v4417, %v4426
          %v4435 = vsub.f32 %v4418, %v4429
          %v4436 = vsub.f32 %v4419, %v4432
          %v4437 = vmul.f32 %v4433, 1.442695
          %v4438 = vpow.pop %v4437
          %v4439 = vmul.f32 %v4434, 1.442695
          %v4440 = vpow.pop %v4439
          %v4441 = vmul.f32 %v4435, 1.442695
          %v4442 = vpow.pop %v4441
          %v4443 = vmul.f32 %v4436, 1.442695
          %v4444 = vpow.pop %v4443
          %v4445 = vsel %vm4420, %v4438, 0.0
          %4446 = vadd.xlane.f32.xlu0 %v4445
          %v4447 = vpop.xlane.xlu0 %4446
          %v4448 = vsel %vm4420, %v4440, 0.0
          %4449 = vadd.xlane.f32.xlu0 %v4448
          %v4450 = vpop.xlane.xlu0 %4449
          %v4451 = vsel %vm4420, %v4442, 0.0
          %4452 = vadd.xlane.f32.xlu0 %v4451
          %v4453 = vpop.xlane.xlu0 %4452
          %v4454 = vsel %vm4420, %v4444, 0.0
          %4455 = vadd.xlane.f32.xlu0 %v4454
          %v4456 = vpop.xlane.xlu0 %4455
          %v4457 = vrcp.pop %v4447
          %v4458 = vmul.f32 %v4438, %v4457
          %v4459 = vrcp.pop %v4450
          %v4460 = vmul.f32 %v4440, %v4459
          %v4461 = vrcp.pop %v4453
          %v4462 = vmul.f32 %v4442, %v4461
          %v4463 = vrcp.pop %v4456
          %v4464 = vmul.f32 %v4444, %v4463
          %v4497 = vunpack.c.l.b16 %v4334
          %v4498 = vunpack.c.h.b16 %v4334
          %v4499 = vunpack.c.l.b16 %v4335
          %v4500 = vunpack.c.h.b16 %v4335
          %v4501 = vunpack.c.l.b16 %v4336
          %v4502 = vunpack.c.h.b16 %v4336
          %v4503 = vunpack.c.l.b16 %v4337
          %v4504 = vunpack.c.h.b16 %v4337
          %v4505 = vunpack.c.l.b16 %v4338
          %v4506 = vunpack.c.h.b16 %v4338
          %v4507 = vunpack.c.l.b16 %v4339
          %v4508 = vunpack.c.h.b16 %v4339
          %v4509 = vunpack.c.l.b16 %v4340
          %v4510 = vunpack.c.h.b16 %v4340
          %v4511 = vunpack.c.l.b16 %v4341
          %v4512 = vunpack.c.h.b16 %v4341
          %v4513 = vunpack.c.l.b16 %v4342
          %v4514 = vunpack.c.h.b16 %v4342
          %v4515 = vunpack.c.l.b16 %v4343
          %v4516 = vunpack.c.h.b16 %v4343
          %v4517 = vunpack.c.l.b16 %v4344
          %v4518 = vunpack.c.h.b16 %v4344
          %v4519 = vunpack.c.l.b16 %v4345
          %v4520 = vunpack.c.h.b16 %v4345
          %v4521 = vunpack.c.l.b16 %v4346
          %v4522 = vunpack.c.h.b16 %v4346
          %v4523 = vunpack.c.l.b16 %v4347
          %v4524 = vunpack.c.h.b16 %v4347
          %v4525 = vunpack.c.l.b16 %v4348
          %v4526 = vunpack.c.h.b16 %v4348
          %v4527 = vunpack.c.l.b16 %v4349
          %v4528 = vunpack.c.h.b16 %v4349
          %v4529 = vunpack.c.l.b16 %v4350
          %v4530 = vunpack.c.h.b16 %v4350
          %v4531 = vunpack.c.l.b16 %v4351
          %v4532 = vunpack.c.h.b16 %v4351
          %v4533 = vunpack.c.l.b16 %v4352
          %v4534 = vunpack.c.h.b16 %v4352
          %v4535 = vunpack.c.l.b16 %v4353
          %v4536 = vunpack.c.h.b16 %v4353
          %v4537 = vunpack.c.l.b16 %v4354
          %v4538 = vunpack.c.h.b16 %v4354
          %v4539 = vunpack.c.l.b16 %v4355
          %v4540 = vunpack.c.h.b16 %v4355
          %v4541 = vunpack.c.l.b16 %v4356
          %v4542 = vunpack.c.h.b16 %v4356
          %v4543 = vunpack.c.l.b16 %v4357
          %v4544 = vunpack.c.h.b16 %v4357
          %v4545 = vunpack.c.l.b16 %v4358
          %v4546 = vunpack.c.h.b16 %v4358
          %v4547 = vunpack.c.l.b16 %v4359
          %v4548 = vunpack.c.h.b16 %v4359
          %v4549 = vunpack.c.l.b16 %v4360
          %v4550 = vunpack.c.h.b16 %v4360
          %v4551 = vunpack.c.l.b16 %v4361
          %v4552 = vunpack.c.h.b16 %v4361
          %v4553 = vunpack.c.l.b16 %v4362
          %v4554 = vunpack.c.h.b16 %v4362
          %v4555 = vunpack.c.l.b16 %v4363
          %v4556 = vunpack.c.h.b16 %v4363
          %v4557 = vunpack.c.l.b16 %v4364
          %v4558 = vunpack.c.h.b16 %v4364
          %v4559 = vunpack.c.l.b16 %v4365
          %v4560 = vunpack.c.h.b16 %v4365
          %v4561 = vpack.c.b16 %v4499, %v4497
          %v4562 = vpack.c.b16 %v4500, %v4498
          %v4563 = vpack.c.b16 %v4503, %v4501
          %v4564 = vpack.c.b16 %v4504, %v4502
          %v4565 = vpack.c.b16 %v4507, %v4505
          %v4566 = vpack.c.b16 %v4508, %v4506
          %v4567 = vpack.c.b16 %v4511, %v4509
          %v4568 = vpack.c.b16 %v4512, %v4510
          %v4569 = vpack.c.b16 %v4515, %v4513
          %v4570 = vpack.c.b16 %v4516, %v4514
          %v4571 = vpack.c.b16 %v4519, %v4517
          %v4572 = vpack.c.b16 %v4520, %v4518
          %v4573 = vpack.c.b16 %v4523, %v4521
          %v4574 = vpack.c.b16 %v4524, %v4522
          %v4575 = vpack.c.b16 %v4527, %v4525
          %v4576 = vpack.c.b16 %v4528, %v4526
          %v4577 = vpack.c.b16 %v4531, %v4529
          %v4578 = vpack.c.b16 %v4532, %v4530
          %v4579 = vpack.c.b16 %v4535, %v4533
          %v4580 = vpack.c.b16 %v4536, %v4534
          %v4581 = vpack.c.b16 %v4539, %v4537
          %v4582 = vpack.c.b16 %v4540, %v4538
          %v4583 = vpack.c.b16 %v4543, %v4541
          %v4584 = vpack.c.b16 %v4544, %v4542
          %v4585 = vpack.c.b16 %v4547, %v4545
          %v4586 = vpack.c.b16 %v4548, %v4546
          %v4587 = vpack.c.b16 %v4551, %v4549
          %v4588 = vpack.c.b16 %v4552, %v4550
          %v4589 = vpack.c.b16 %v4555, %v4553
          %v4590 = vpack.c.b16 %v4556, %v4554
          %v4591 = vpack.c.b16 %v4559, %v4557
          %v4592 = vpack.c.b16 %v4560, %v4558
          %4625 = vmatprep.subr.bf16.mxu0 %v4576
          %4626 = vmatpush1.bf16.msra.mxu0 %v4575
          %4627 = vmatprep.subr.bf16.mxu0 %v4574
          %4628 = vmatpush1.bf16.msra.mxu0 %v4573
          %4629 = vmatprep.subr.bf16.mxu0 %v4572
          %4630 = vmatpush1.bf16.msra.mxu0 %v4571
          %4631 = vmatprep.subr.bf16.mxu0 %v4570
          %4632 = vmatpush1.bf16.msra.mxu0 %v4569
          %4633 = vmatprep.subr.bf16.mxu0 %v4568
          %4634 = vmatpush1.bf16.msra.mxu0 %v4567
          %4635 = vmatprep.subr.bf16.mxu0 %v4566
          %4636 = vmatpush1.bf16.msra.mxu0 %v4565
          %4637 = vmatprep.subr.bf16.mxu0 %v4564
          %4638 = vmatpush1.bf16.msra.mxu0 %v4563
          %4639 = vmatprep.subr.bf16.mxu0 %v4562
          %4640 = vmatpush1.bf16.msra.mxu0 %v4561
          %4641 = vmatprep.subr.bf16.mxu0 %v4592
          %4642 = vmatpush2.bf16.msra.mxu0 %v4591
          %4643 = vmatprep.subr.bf16.mxu0 %v4590
          %4644 = vmatpush2.bf16.msra.mxu0 %v4589
          %4645 = vmatprep.subr.bf16.mxu0 %v4588
          %4646 = vmatpush2.bf16.msra.mxu0 %v4587
          %4647 = vmatprep.subr.bf16.mxu0 %v4586
          %4648 = vmatpush2.bf16.msra.mxu0 %v4585
          %4649 = vmatprep.subr.bf16.mxu0 %v4584
          %4650 = vmatpush2.bf16.msra.mxu0 %v4583
          %4651 = vmatprep.subr.bf16.mxu0 %v4582
          %4652 = vmatpush2.bf16.msra.mxu0 %v4581
          %4653 = vmatprep.subr.bf16.mxu0 %v4580
          %4654 = vmatpush2.bf16.msra.mxu0 %v4579
          %4655 = vmatprep.subr.bf16.mxu0 %v4578
          %4656 = vmatpush2.bf16.msra.mxu0 %v4577
          %4657 = vmatprep.mubr.bf16.mxu0 %v4306
          %4658 = vmatmul.mubr.bf16.gmra.mxu0 %v4305
          %v4659 = vpop.f32.mrf.mxu0
          %v4660 = vadd.f32 0.0, %v4659
          %v4661 = vpop.f32.mrf.mxu0
          %v4662 = vadd.f32 0.0, %v4661
          %v4663 = vpop.f32.mrf.mxu0
          %v4664 = vadd.f32 0.0, %v4663
          %v4665 = vpop.f32.mrf.mxu0
          %v4666 = vadd.f32 0.0, %v4665
          %4667 = vmatprep.mubr.bf16.mxu0 %v4308
          %4668 = vmatmul.mubr.bf16.gmra.mxu0 %v4307
          %v4669 = vpop.f32.mrf.mxu0
          %v4670 = vadd.f32 0.0, %v4669
          %v4671 = vpop.f32.mrf.mxu0
          %v4672 = vadd.f32 0.0, %v4671
          %v4673 = vpop.f32.mrf.mxu0
          %v4674 = vadd.f32 0.0, %v4673
          %v4675 = vpop.f32.mrf.mxu0
          %v4676 = vadd.f32 0.0, %v4675
          %4677 = vdwg.mxu0
          %v4678 = vpack.c.bf16 %v4664, %v4660
          %v4679 = vpack.c.bf16 %v4666, %v4662
          %v4680 = vpack.c.bf16 %v4674, %v4670
          %v4681 = vpack.c.bf16 %v4676, %v4672
          %v4682 = vpack.c.bf16 %v4460, %v4458
          %v4683 = vpack.c.bf16 %v4464, %v4462
          %v4685 = vlaneseq
          %v4686 = vshrl.u32 %v4685, 7
          %v4687 = vsub.s32 0, %v4686
          %v4688 = vrot.slane %v4366, %v4687
          %v4689 = vlaneseq
          %v4690 = vshrl.u32 %v4689, 7
          %v4691 = vsub.s32 1, %v4690
          %v4692 = vrot.slane %v4366, %v4691
          %v4696 = vsel %vm4420, %v4682, 0
          %v4699 = vsel %vm4420, %v4683, 0
          %4701 = vmatprep.subr.bf16.mxu0 0
          %4702 = vmatpush1.bf16.msra.mxu0 0
          %4703 = vmatprep.subr.bf16.mxu0 0
          %4704 = vmatpush1.bf16.msra.mxu0 0
          %4705 = vmatprep.subr.bf16.mxu0 0
          %4706 = vmatpush1.bf16.msra.mxu0 0
          %4707 = vmatprep.subr.bf16.mxu0 0
          %4708 = vmatpush1.bf16.msra.mxu0 0
          %4709 = vmatprep.subr.bf16.mxu0 0
          %4710 = vmatpush1.bf16.msra.mxu0 0
          %4711 = vmatprep.subr.bf16.mxu0 0
          %4712 = vmatpush1.bf16.msra.mxu0 0
          %4713 = vmatprep.subr.bf16.mxu0 %v4681
          %4714 = vmatpush1.bf16.msra.mxu0 %v4680
          %4715 = vmatprep.subr.bf16.mxu0 %v4679
          %4716 = vmatpush1.bf16.msra.mxu0 %v4678
          %4717 = vmatprep.subr.bf16.mxu0 0
          %4718 = vmatpush2.bf16.msra.mxu0 0
          %4719 = vmatprep.subr.bf16.mxu0 0
          %4720 = vmatpush2.bf16.msra.mxu0 0
          %4721 = vmatprep.subr.bf16.mxu0 0
          %4722 = vmatpush2.bf16.msra.mxu0 0
          %4723 = vmatprep.subr.bf16.mxu0 0
          %4724 = vmatpush2.bf16.msra.mxu0 0
          %4725 = vmatprep.subr.bf16.mxu0 0
          %4726 = vmatpush2.bf16.msra.mxu0 0
          %4727 = vmatprep.subr.bf16.mxu0 0
          %4728 = vmatpush2.bf16.msra.mxu0 0
          %4729 = vmatprep.subr.bf16.mxu0 0
          %4730 = vmatpush2.bf16.msra.mxu0 0
          %4731 = vmatprep.subr.bf16.mxu0 0
          %4732 = vmatpush2.bf16.msra.mxu0 0
          %4733 = vmatprep.mubr.bf16.mxu0 0
          %4734 = vmatmul.mubr.bf16.gmra.mxu0 %v4696
          %v4735 = vpop.f32.mrf.mxu0
          %v4736 = vadd.f32 %v4688, %v4735
          %v4737 = vpop.f32.mrf.mxu0
          %v4738 = vadd.f32 %v4692, %v4737
          %v4739 = vpop.f32.mrf.mxu0
          %v4740 = vadd.f32 %v4688, %v4739
          %v4741 = vpop.f32.mrf.mxu0
          %v4742 = vadd.f32 %v4692, %v4741
          %4743 = vmatprep.mubr.bf16.mxu0 0
          %4744 = vmatmul.mubr.bf16.gmra.mxu0 %v4699
          %v4745 = vpop.f32.mrf.mxu0
          %v4746 = vadd.f32 %v4688, %v4745
          %v4747 = vpop.f32.mrf.mxu0
          %v4748 = vadd.f32 %v4692, %v4747
          %v4749 = vpop.f32.mrf.mxu0
          %v4750 = vadd.f32 %v4688, %v4749
          %v4751 = vpop.f32.mrf.mxu0
          %v4752 = vadd.f32 %v4692, %v4751
          %4753 = vdwg.mxu0
          %v4754 = vadd.f32 %v4736, %v4738
          %4755 = vadd.xlane.f32.xlu0 %v4754
          %v4756 = vpop.xlane.xlu0 %4755
          %v4757 = vadd.f32 %v4740, %v4742
          %4758 = vadd.xlane.f32.xlu0 %v4757
          %v4759 = vpop.xlane.xlu0 %4758
          %v4760 = vadd.f32 %v4746, %v4748
          %4761 = vadd.xlane.f32.xlu0 %v4760
          %v4762 = vpop.xlane.xlu0 %4761
          %v4763 = vadd.f32 %v4750, %v4752
          %4764 = vadd.xlane.f32.xlu0 %v4763
          %v4765 = vpop.xlane.xlu0 %4764
          %v4766 = vmul.f32 %v4756, %v1971
          %v4767 = vmul.f32 %v4759, %v1971
          %v4768 = vmul.f32 %v4762, %v1971
          %v4769 = vmul.f32 %v4765, %v1971
          %v4770 = vsub.f32 %v4736, %v4766
          %v4771 = vsub.f32 %v4738, %v4766
          %v4772 = vsub.f32 %v4740, %v4767
          %v4773 = vsub.f32 %v4742, %v4767
          %v4774 = vsub.f32 %v4746, %v4768
          %v4775 = vsub.f32 %v4748, %v4768
          %v4776 = vsub.f32 %v4750, %v4769
          %v4777 = vsub.f32 %v4752, %v4769
          %v4778 = vmul.f32 %v4770, %v4770
          %v4779 = vmul.f32 %v4771, %v4771
          %v4780 = vmul.f32 %v4772, %v4772
          %v4781 = vmul.f32 %v4773, %v4773
          %v4782 = vmul.f32 %v4774, %v4774
          %v4783 = vmul.f32 %v4775, %v4775
          %v4784 = vmul.f32 %v4776, %v4776
          %v4785 = vmul.f32 %v4777, %v4777
          %v4786 = vadd.f32 %v4778, %v4779
          %4787 = vadd.xlane.f32.xlu0 %v4786
          %v4788 = vpop.xlane.xlu0 %4787
          %v4789 = vadd.f32 %v4780, %v4781
          %4790 = vadd.xlane.f32.xlu0 %v4789
          %v4791 = vpop.xlane.xlu0 %4790
          %v4792 = vadd.f32 %v4782, %v4783
          %4793 = vadd.xlane.f32.xlu0 %v4792
          %v4794 = vpop.xlane.xlu0 %4793
          %v4795 = vadd.f32 %v4784, %v4785
          %4796 = vadd.xlane.f32.xlu0 %v4795
          %v4797 = vpop.xlane.xlu0 %4796
          %v4798 = vmul.f32 %v4788, %v1971
          %v4799 = vmul.f32 %v4791, %v1971
          %v4800 = vmul.f32 %v4794, %v1971
          %v4801 = vmul.f32 %v4797, %v1971
          %v4802 = vadd.f32 %v4798, 1e-05
          %v4803 = vadd.f32 %v4799, 1e-05
          %v4804 = vadd.f32 %v4800, 1e-05
          %v4805 = vadd.f32 %v4801, 1e-05
          %v4806 = vrsqrt.pop %v4802
          %v4807 = vrsqrt.pop %v4803
          %v4808 = vrsqrt.pop %v4804
          %v4809 = vrsqrt.pop %v4805
          %v4810 = vmul.f32 %v4770, %v4806
          %v4811 = vmul.f32 %v4771, %v4806
          %v4812 = vmul.f32 %v4772, %v4807
          %v4813 = vmul.f32 %v4773, %v4807
          %v4814 = vmul.f32 %v4774, %v4808
          %v4815 = vmul.f32 %v4775, %v4808
          %v4816 = vmul.f32 %v4776, %v4809
          %v4817 = vmul.f32 %v4777, %v4809
          %4818 = vmatprep.subr.bf16.mxu0 0
          %4819 = vmatpush1.bf16.xpose.msra.mxu0 0
          %4820 = vmatprep.subr.bf16.mxu0 0
          %4821 = vmatpush1.bf16.xpose.msra.mxu0 0
          %4822 = vmatprep.subr.bf16.mxu0 0
          %4823 = vmatpush1.bf16.xpose.msra.mxu0 0
          %4824 = vmatprep.subr.bf16.mxu0 0
          %4825 = vmatpush1.bf16.xpose.msra.mxu0 0
          %4826 = vmatprep.subr.bf16.mxu0 0
          %4827 = vmatpush1.bf16.xpose.msra.mxu0 0
          %4828 = vmatprep.subr.bf16.mxu0 0
          %4829 = vmatpush1.bf16.xpose.msra.mxu0 0
          %4830 = vmatprep.subr.bf16.mxu0 %v4320
          %4831 = vmatpush1.bf16.xpose.msra.mxu0 %v4319
          %4832 = vmatprep.subr.bf16.mxu0 %v4318
          %4833 = vmatpush1.bf16.xpose.msra.mxu0 %v4317
          %4834 = vmatprep.subr.bf16.mxu0 0
          %4835 = vmatpush2.bf16.xpose.msra.mxu0 0
          %4836 = vmatprep.subr.bf16.mxu0 0
          %4837 = vmatpush2.bf16.xpose.msra.mxu0 0
          %4838 = vmatprep.subr.bf16.mxu0 0
          %4839 = vmatpush2.bf16.xpose.msra.mxu0 0
          %4840 = vmatprep.subr.bf16.mxu0 0
          %4841 = vmatpush2.bf16.xpose.msra.mxu0 0
          %4842 = vmatprep.subr.bf16.mxu0 0
          %4843 = vmatpush2.bf16.xpose.msra.mxu0 0
          %4844 = vmatprep.subr.bf16.mxu0 0
          %4845 = vmatpush2.bf16.xpose.msra.mxu0 0
          %4846 = vmatprep.subr.bf16.mxu0 0
          %4847 = vmatpush2.bf16.xpose.msra.mxu0 0
          %4848 = vmatprep.subr.bf16.mxu0 0
          %4849 = vmatpush2.bf16.xpose.msra.mxu0 0
          %4850 = vmatprep.mubr.bf16.mxu0 %v4318
          %4851 = vmatmul.mubr.bf16.gmra.mxu0 %v4317
          %v4852 = vpop.f32.mrf.mxu0
          %v4853 = vadd.f32 0.0, %v4852
          %v4854 = vpop.f32.mrf.mxu0
          %v4855 = vpop.f32.mrf.mxu0
          %v4856 = vadd.f32 0.0, %v4855
          %v4857 = vpop.f32.mrf.mxu0
          %4858 = vmatprep.mubr.bf16.mxu0 %v4320
          %4859 = vmatmul.mubr.bf16.gmra.mxu0 %v4319
          %v4860 = vpop.f32.mrf.mxu0
          %v4861 = vadd.f32 0.0, %v4860
          %v4862 = vpop.f32.mrf.mxu0
          %v4863 = vpop.f32.mrf.mxu0
          %v4864 = vadd.f32 0.0, %v4863
          %v4865 = vpop.f32.mrf.mxu0
          %4866 = vdwg.mxu0
          %v4867 = vsel %vm4333, %v4853, -inf
          %v4868 = vsel %vm4333, %v4856, -inf
          %v4869 = vsel %vm4333, %v4861, -inf
          %v4870 = vsel %vm4333, %v4864, -inf
          %v4871 = vsel %vm4420, %v4867, -inf
          %4872 = vmax.xlane.f32.xlu0 %v4871
          %v4873 = vpop.xlane.xlu0 %4872
          %v4874 = vsel %vm4420, %v4868, -inf
          %4875 = vmax.xlane.f32.xlu0 %v4874
          %v4876 = vpop.xlane.xlu0 %4875
          %v4877 = vsel %vm4420, %v4869, -inf
          %4878 = vmax.xlane.f32.xlu0 %v4877
          %v4879 = vpop.xlane.xlu0 %4878
          %v4880 = vsel %vm4420, %v4870, -inf
          %4881 = vmax.xlane.f32.xlu0 %v4880
          %v4882 = vpop.xlane.xlu0 %4881
          %v4883 = vsub.f32 %v4867, %v4873
          %v4884 = vsub.f32 %v4868, %v4876
          %v4885 = vsub.f32 %v4869, %v4879
          %v4886 = vsub.f32 %v4870, %v4882
          %v4887 = vmul.f32 %v4883, 1.442695
          %v4888 = vpow.pop %v4887
          %v4889 = vmul.f32 %v4884, 1.442695
          %v4890 = vpow.pop %v4889
          %v4891 = vmul.f32 %v4885, 1.442695
          %v4892 = vpow.pop %v4891
          %v4893 = vmul.f32 %v4886, 1.442695
          %v4894 = vpow.pop %v4893
          %v4895 = vsel %vm4420, %v4888, 0.0
          %4896 = vadd.xlane.f32.xlu0 %v4895
          %v4897 = vpop.xlane.xlu0 %4896
          %v4898 = vsel %vm4420, %v4890, 0.0
          %4899 = vadd.xlane.f32.xlu0 %v4898
          %v4900 = vpop.xlane.xlu0 %4899
          %v4901 = vsel %vm4420, %v4892, 0.0
          %4902 = vadd.xlane.f32.xlu0 %v4901
          %v4903 = vpop.xlane.xlu0 %4902
          %v4904 = vsel %vm4420, %v4894, 0.0
          %4905 = vadd.xlane.f32.xlu0 %v4904
          %v4906 = vpop.xlane.xlu0 %4905
          %v4907 = vrcp.pop %v4897
          %v4908 = vmul.f32 %v4888, %v4907
          %v4909 = vrcp.pop %v4900
          %v4910 = vmul.f32 %v4890, %v4909
          %v4911 = vrcp.pop %v4903
          %v4912 = vmul.f32 %v4892, %v4911
          %v4913 = vrcp.pop %v4906
          %v4914 = vmul.f32 %v4894, %v4913
          %4915 = vmatprep.subr.bf16.mxu0 %v4576
          %4916 = vmatpush1.bf16.msra.mxu0 %v4575
          %4917 = vmatprep.subr.bf16.mxu0 %v4574
          %4918 = vmatpush1.bf16.msra.mxu0 %v4573
          %4919 = vmatprep.subr.bf16.mxu0 %v4572
          %4920 = vmatpush1.bf16.msra.mxu0 %v4571
          %4921 = vmatprep.subr.bf16.mxu0 %v4570
          %4922 = vmatpush1.bf16.msra.mxu0 %v4569
          %4923 = vmatprep.subr.bf16.mxu0 %v4568
          %4924 = vmatpush1.bf16.msra.mxu0 %v4567
          %4925 = vmatprep.subr.bf16.mxu0 %v4566
          %4926 = vmatpush1.bf16.msra.mxu0 %v4565
          %4927 = vmatprep.subr.bf16.mxu0 %v4564
          %4928 = vmatpush1.bf16.msra.mxu0 %v4563
          %4929 = vmatprep.subr.bf16.mxu0 %v4562
          %4930 = vmatpush1.bf16.msra.mxu0 %v4561
          %4931 = vmatprep.subr.bf16.mxu0 %v4592
          %4932 = vmatpush2.bf16.msra.mxu0 %v4591
          %4933 = vmatprep.subr.bf16.mxu0 %v4590
          %4934 = vmatpush2.bf16.msra.mxu0 %v4589
          %4935 = vmatprep.subr.bf16.mxu0 %v4588
          %4936 = vmatpush2.bf16.msra.mxu0 %v4587
          %4937 = vmatprep.subr.bf16.mxu0 %v4586
          %4938 = vmatpush2.bf16.msra.mxu0 %v4585
          %4939 = vmatprep.subr.bf16.mxu0 %v4584
          %4940 = vmatpush2.bf16.msra.mxu0 %v4583
          %4941 = vmatprep.subr.bf16.mxu0 %v4582
          %4942 = vmatpush2.bf16.msra.mxu0 %v4581
          %4943 = vmatprep.subr.bf16.mxu0 %v4580
          %4944 = vmatpush2.bf16.msra.mxu0 %v4579
          %4945 = vmatprep.subr.bf16.mxu0 %v4578
          %4946 = vmatpush2.bf16.msra.mxu0 %v4577
          %4947 = vmatprep.mubr.bf16.mxu0 %v4318
          %4948 = vmatmul.mubr.bf16.gmra.mxu0 %v4317
          %v4949 = vpop.f32.mrf.mxu0
          %v4950 = vadd.f32 0.0, %v4949
          %v4951 = vpop.f32.mrf.mxu0
          %v4952 = vadd.f32 0.0, %v4951
          %v4953 = vpop.f32.mrf.mxu0
          %v4954 = vadd.f32 0.0, %v4953
          %v4955 = vpop.f32.mrf.mxu0
          %v4956 = vadd.f32 0.0, %v4955
          %4957 = vmatprep.mubr.bf16.mxu0 %v4320
          %4958 = vmatmul.mubr.bf16.gmra.mxu0 %v4319
          %v4959 = vpop.f32.mrf.mxu0
          %v4960 = vadd.f32 0.0, %v4959
          %v4961 = vpop.f32.mrf.mxu0
          %v4962 = vadd.f32 0.0, %v4961
          %v4963 = vpop.f32.mrf.mxu0
          %v4964 = vadd.f32 0.0, %v4963
          %v4965 = vpop.f32.mrf.mxu0
          %v4966 = vadd.f32 0.0, %v4965
          %4967 = vdwg.mxu0
          %v4968 = vpack.c.bf16 %v4954, %v4950
          %v4969 = vpack.c.bf16 %v4956, %v4952
          %v4970 = vpack.c.bf16 %v4964, %v4960
          %v4971 = vpack.c.bf16 %v4966, %v4962
          %v4972 = vpack.c.bf16 %v4910, %v4908
          %v4973 = vpack.c.bf16 %v4914, %v4912
          %v4975 = vsel %vm4420, %v4972, 0
          %v4978 = vsel %vm4420, %v4973, 0
          %4980 = vmatprep.subr.bf16.mxu0 0
          %4981 = vmatpush1.bf16.msra.mxu0 0
          %4982 = vmatprep.subr.bf16.mxu0 0
          %4983 = vmatpush1.bf16.msra.mxu0 0
          %4984 = vmatprep.subr.bf16.mxu0 0
          %4985 = vmatpush1.bf16.msra.mxu0 0
          %4986 = vmatprep.subr.bf16.mxu0 0
          %4987 = vmatpush1.bf16.msra.mxu0 0
          %4988 = vmatprep.subr.bf16.mxu0 0
          %4989 = vmatpush1.bf16.msra.mxu0 0
          %4990 = vmatprep.subr.bf16.mxu0 0
          %4991 = vmatpush1.bf16.msra.mxu0 0
          %4992 = vmatprep.subr.bf16.mxu0 %v4971
          %4993 = vmatpush1.bf16.msra.mxu0 %v4970
          %4994 = vmatprep.subr.bf16.mxu0 %v4969
          %4995 = vmatpush1.bf16.msra.mxu0 %v4968
          %4996 = vmatprep.subr.bf16.mxu0 0
          %4997 = vmatpush2.bf16.msra.mxu0 0
          %4998 = vmatprep.subr.bf16.mxu0 0
          %4999 = vmatpush2.bf16.msra.mxu0 0
          %5000 = vmatprep.subr.bf16.mxu0 0
          %5001 = vmatpush2.bf16.msra.mxu0 0
          %5002 = vmatprep.subr.bf16.mxu0 0
          %5003 = vmatpush2.bf16.msra.mxu0 0
          %5004 = vmatprep.subr.bf16.mxu0 0
          %5005 = vmatpush2.bf16.msra.mxu0 0
          %5006 = vmatprep.subr.bf16.mxu0 0
          %5007 = vmatpush2.bf16.msra.mxu0 0
          %5008 = vmatprep.subr.bf16.mxu0 0
          %5009 = vmatpush2.bf16.msra.mxu0 0
          %5010 = vmatprep.subr.bf16.mxu0 0
          %5011 = vmatpush2.bf16.msra.mxu0 0
          %5012 = vmatprep.mubr.bf16.mxu0 0
          %5013 = vmatmul.mubr.bf16.gmra.mxu0 %v4975
          %v5014 = vpop.f32.mrf.mxu0
          %v5015 = vadd.f32 %v4688, %v5014
          %v5016 = vpop.f32.mrf.mxu0
          %v5017 = vadd.f32 %v4692, %v5016
          %v5018 = vpop.f32.mrf.mxu0
          %v5019 = vadd.f32 %v4688, %v5018
          %v5020 = vpop.f32.mrf.mxu0
          %v5021 = vadd.f32 %v4692, %v5020
          %5022 = vmatprep.mubr.bf16.mxu0 0
          %5023 = vmatmul.mubr.bf16.gmra.mxu0 %v4978
          %v5024 = vpop.f32.mrf.mxu0
          %v5025 = vadd.f32 %v4688, %v5024
          %v5026 = vpop.f32.mrf.mxu0
          %v5027 = vadd.f32 %v4692, %v5026
          %v5028 = vpop.f32.mrf.mxu0
          %v5029 = vadd.f32 %v4688, %v5028
          %v5030 = vpop.f32.mrf.mxu0
          %v5031 = vadd.f32 %v4692, %v5030
          %5032 = vdwg.mxu0
          %v5033 = vadd.f32 %v5015, %v5017
          %5034 = vadd.xlane.f32.xlu0 %v5033
          %v5035 = vpop.xlane.xlu0 %5034
          %v5036 = vadd.f32 %v5019, %v5021
          %5037 = vadd.xlane.f32.xlu0 %v5036
          %v5038 = vpop.xlane.xlu0 %5037
          %v5039 = vadd.f32 %v5025, %v5027
          %5040 = vadd.xlane.f32.xlu0 %v5039
          %v5041 = vpop.xlane.xlu0 %5040
          %v5042 = vadd.f32 %v5029, %v5031
          %5043 = vadd.xlane.f32.xlu0 %v5042
          %v5044 = vpop.xlane.xlu0 %5043
          %v5045 = vmul.f32 %v5035, %v1971
          %v5046 = vmul.f32 %v5038, %v1971
          %v5047 = vmul.f32 %v5041, %v1971
          %v5048 = vmul.f32 %v5044, %v1971
          %v5049 = vsub.f32 %v5015, %v5045
          %v5050 = vsub.f32 %v5017, %v5045
          %v5051 = vsub.f32 %v5019, %v5046
          %v5052 = vsub.f32 %v5021, %v5046
          %v5053 = vsub.f32 %v5025, %v5047
          %v5054 = vsub.f32 %v5027, %v5047
          %v5055 = vsub.f32 %v5029, %v5048
          %v5056 = vsub.f32 %v5031, %v5048
          %v5057 = vmul.f32 %v5049, %v5049
          %v5058 = vmul.f32 %v5050, %v5050
          %v5059 = vmul.f32 %v5051, %v5051
          %v5060 = vmul.f32 %v5052, %v5052
          %v5061 = vmul.f32 %v5053, %v5053
          %v5062 = vmul.f32 %v5054, %v5054
          %v5063 = vmul.f32 %v5055, %v5055
          %v5064 = vmul.f32 %v5056, %v5056
          %v5065 = vadd.f32 %v5057, %v5058
          %5066 = vadd.xlane.f32.xlu0 %v5065
          %v5067 = vpop.xlane.xlu0 %5066
          %v5068 = vadd.f32 %v5059, %v5060
          %5069 = vadd.xlane.f32.xlu0 %v5068
          %v5070 = vpop.xlane.xlu0 %5069
          %v5071 = vadd.f32 %v5061, %v5062
          %5072 = vadd.xlane.f32.xlu0 %v5071
          %v5073 = vpop.xlane.xlu0 %5072
          %v5074 = vadd.f32 %v5063, %v5064
          %5075 = vadd.xlane.f32.xlu0 %v5074
          %v5076 = vpop.xlane.xlu0 %5075
          %v5077 = vmul.f32 %v5067, %v1971
          %v5078 = vmul.f32 %v5070, %v1971
          %v5079 = vmul.f32 %v5073, %v1971
          %v5080 = vmul.f32 %v5076, %v1971
          %v5081 = vadd.f32 %v5077, 1e-05
          %v5082 = vadd.f32 %v5078, 1e-05
          %v5083 = vadd.f32 %v5079, 1e-05
          %v5084 = vadd.f32 %v5080, 1e-05
          %v5085 = vrsqrt.pop %v5081
          %v5086 = vrsqrt.pop %v5082
          %v5087 = vrsqrt.pop %v5083
          %v5088 = vrsqrt.pop %v5084
          %v5089 = vmul.f32 %v5049, %v5085
          %v5090 = vmul.f32 %v5050, %v5085
          %v5091 = vmul.f32 %v5051, %v5086
          %v5092 = vmul.f32 %v5052, %v5086
          %v5093 = vmul.f32 %v5053, %v5087
          %v5094 = vmul.f32 %v5054, %v5087
          %v5095 = vmul.f32 %v5055, %v5088
          %v5096 = vmul.f32 %v5056, %v5088
          %vm5097 = vcmp.lt.s32.totalorder %v3957, 0
          %v5098 = vsub.s32 0, %v3957
          %v5099 = vsel %vm5097, %v5098, %v3957
          %v5100 = vshrl.u32 %v5099, 3
          %v5101 = vand.u32 %v5099, 7
          %v5102 = vsub.s32 0, %v5101
          %v5103 = vsel %vm5097, %v5102, %v5101
          %vm5104 = vcmp.lt.s32.totalorder %v3958, 0
          %v5105 = vsub.s32 0, %v3958
          %v5106 = vsel %vm5104, %v5105, %v3958
          %v5107 = vshrl.u32 %v5106, 3
          %v5108 = vand.u32 %v5106, 7
          %v5109 = vsub.s32 0, %v5108
          %v5110 = vsel %vm5104, %v5109, %v5108
          %vm5111 = vcmp.lt.s32.totalorder %v3959, 0
          %v5112 = vsub.s32 0, %v3959
          %v5113 = vsel %vm5111, %v5112, %v3959
          %v5114 = vshrl.u32 %v5113, 3
          %v5115 = vand.u32 %v5113, 7
          %v5116 = vsub.s32 0, %v5115
          %v5117 = vsel %vm5111, %v5116, %v5115
          %vm5118 = vcmp.lt.s32.totalorder %v3960, 0
          %v5119 = vsub.s32 0, %v3960
          %v5120 = vsel %vm5118, %v5119, %v3960
          %v5121 = vshrl.u32 %v5120, 3
          %v5122 = vand.u32 %v5120, 7
          %v5123 = vsub.s32 0, %v5122
          %v5124 = vsel %vm5118, %v5123, %v5122
          %vm5125 = vcmp.ne.s32.totalorder %v5103, 0
          %vm5126 = vcmp.ne.s32.totalorder %v5110, 0
          %vm5127 = vcmp.ne.s32.totalorder %v5117, 0
          %vm5128 = vcmp.ne.s32.totalorder %v5124, 0
          %vm5129 = vcmp.lt.s32.totalorder %v5103, 0
          %vm5130 = vcmp.lt.s32.totalorder %v5110, 0
          %vm5131 = vcmp.lt.s32.totalorder %v5117, 0
          %vm5132 = vcmp.lt.s32.totalorder %v5124, 0
          %vm5133 = vmand %vm5129, %vm5125
          %vm5134 = vmand %vm5130, %vm5126
          %vm5135 = vmand %vm5131, %vm5127
          %vm5136 = vmand %vm5132, %vm5128
          %v5137 = vadd.s32 %v5103, 8
          %v5138 = vadd.s32 %v5110, 8
          %v5139 = vadd.s32 %v5117, 8
          %v5140 = vadd.s32 %v5124, 8
          %v5141 = vsel %vm5133, %v5137, %v5103
          %v5142 = vsel %vm5134, %v5138, %v5110
          %v5143 = vsel %vm5135, %v5139, %v5117
          %v5144 = vsel %vm5136, %v5140, %v5124
          %vm5145 = vcmp.lt.s32.totalorder %v5141, 2
          %vm5146 = vcmp.lt.s32.totalorder %v5142, 2
          %vm5147 = vcmp.lt.s32.totalorder %v5143, 2
          %vm5148 = vcmp.lt.s32.totalorder %v5144, 2
          %v5149 = vsub.f32 %v4810, %v5089
          %v5150 = vsub.f32 %v4811, %v5090
          %v5151 = vsub.f32 %v4812, %v5091
          %v5152 = vsub.f32 %v4813, %v5092
          %v5153 = vsub.f32 %v4814, %v5093
          %v5154 = vsub.f32 %v4815, %v5094
          %v5155 = vsub.f32 %v4816, %v5095
          %v5156 = vsub.f32 %v4817, %v5096
          %v5157 = vsel %vm5145, 1, 0
          %v5158 = vsel %vm5146, 1, 0
          %v5159 = vsel %vm5147, 1, 0
          %v5160 = vsel %vm5148, 1, 0
          %vm5161 = vcmp.eq.s32.totalorder %v5157, 1
          %vm5162 = vcmp.eq.s32.totalorder %v5158, 1
          %vm5163 = vcmp.eq.s32.totalorder %v5159, 1
          %vm5164 = vcmp.eq.s32.totalorder %v5160, 1
          %v5165 = vsel %vm5161, %v5149, 0.0
          %v5166 = vsel %vm5161, %v5150, 0.0
          %v5167 = vsel %vm5162, %v5151, 0.0
          %v5168 = vsel %vm5162, %v5152, 0.0
          %v5169 = vsel %vm5163, %v5153, 0.0
          %v5170 = vsel %vm5163, %v5154, 0.0
          %v5171 = vsel %vm5164, %v5155, 0.0
          %v5172 = vsel %vm5164, %v5156, 0.0
          %v5173 = vmul.f32 %v5165, %v5165
          %v5174 = vmul.f32 %v5166, %v5166
          %v5175 = vmul.f32 %v5167, %v5167
          %v5176 = vmul.f32 %v5168, %v5168
          %v5177 = vmul.f32 %v5169, %v5169
          %v5178 = vmul.f32 %v5170, %v5170
          %v5179 = vmul.f32 %v5171, %v5171
          %v5180 = vmul.f32 %v5172, %v5172
          %v5181 = vadd.f32 %v5173, %v5174
          %v5182 = vadd.f32 %v5181, %v5175
          %v5183 = vadd.f32 %v5182, %v5176
          %v5184 = vadd.f32 %v5183, %v5177
          %v5185 = vadd.f32 %v5184, %v5178
          %v5186 = vadd.f32 %v5185, %v5179
          %v5187 = vadd.f32 %v5186, %v5180
          %5188 = vadd.xlane.f32.xlu0 %v5187
          %v5189 = vpop.xlane.xlu0 %5188
          %v5190 = vrot.slane %v5189, 4
          %v5191 = vadd.f32 %v5189, %v5190
          %v5192 = vrot.slane %v5191, 2
          %v5193 = vadd.f32 %v5191, %v5192
          %v5194 = vrot.slane %v5193, 1
          %v5195 = vadd.f32 %v5193, %v5194
          %s5196 = vtos %v5195
          %v5197 = vrcp.pop 2048.0
          %s5198 = vtos %v5197
          %s5199 = smul.f32 %s5196, %s5198
          %s5200 = sld [smem:[#allocation6]]
          %v5201 = vrcp.pop 206848.0
          %s5202 = vtos %v5201
          %s5203 = smul.f32 %s5200, %s5202
          %s5204 = sadd.f32 %s5203, %s5199
          %s5205 = scalar_lea.smem [#allocation7], 0
          %5206 = sst [smem:[%s5205]] %s5204
        $region60: #{distill_forward.3} parent=51 // pred_fallthru
          _
        // Predicated region
        $region61: #{distill_forward.3} parent=51 // pred_check
          %p5207 = pneg %p211
        $region62: #{distill_forward.3} parent=51 // pred_check_branch
          %5209 = sbr.rel (%p5207) target = $region64
        $region63: #{distill_forward.3} parent=51 // pred_region
          %s5211 = ssub.s32 16, 16
          %5212 = vsyncadd [#allocation8], %s5211
          %5215 = dma.smem_to_hbm [#allocation7], 16, %s8, [#allocation8]
        $region64: #{distill_forward.3} parent=51 // pred_fallthru
          _
        // Predicated region
        $region65: #{distill_forward.3} parent=51 // pred_check
          %p5216 = pneg %p211
        $region66: #{distill_forward.3} parent=51 // pred_check_branch
          %5218 = sbr.rel (%p5216) target = $region68
        $region67: #{distill_forward.3} parent=51 // pred_region
          %5219 = dma.done [#allocation8], 16
        $region68: #{distill_forward.3} parent=51 // pred_fallthru
          _
        %5220 = sfence
      $region52: #{distill_forward.3} parent=5 // pred_fallthru
        _
      %p5221 = scmp.le.s32.totalorder 2, %s15
      // Predicated region
      $region69: #{distill_forward.3} parent=5 // pred_check
        %p5222 = pneg %p5221
      $region70: #{distill_forward.3} parent=5 // pred_check_branch
        %5224 = sbr.rel (%p5222) target = $region72
      $region71: #{distill_forward.3} parent=5 // pred_region
        %s5225 = ssub.s32 %s15, 2
      $region72: #{distill_forward.3} parent=5 // pred_fallthru
        _
    $region6: #{distill_forward.3} parent=1 // loop_footer
      %s19 = sadd.s32 1, %s15
    $region7: #{distill_forward.3} parent=1 // loop_footer_branch
      %14 = sbr.rel target = $region3
    $region8: #{distill_forward.3} parent=1 // loop_exit
      _
    %5226 = vsyncpa [#allocation8], 1
    %s5227 = scalar_lea.sflag [#allocation8], 1
    %5228 = vsyncpa %s5227, 1

</llo_original>
